<compile_context>
chip_gen: v6e
topology: v6e:2x2x1
jax: 0.10.0
libtpu: 0.0.40
codegen_flags: <defaults>
</compile_context>

<pallas_src>
import functools

import jax
import jax.numpy as jnp
from jax import lax
from jax.experimental import pallas as pl
from jax.experimental.pallas import tpu as pltpu


def _round_up(x, m):
    return ((x + m - 1) // m) * m


# ----------------------------------------------------------------------------
# Kernel 1: hoisted input projection  xg = X @ W_ih^T + (b_ih + b_hh)
# One big matmul over all timesteps (no time dependence) -> full MXU rows.
# ----------------------------------------------------------------------------
def _input_proj_kernel(x_ref, w_ref, b_ref, o_ref):
    o_ref[...] = (
        jnp.dot(x_ref[...], w_ref[...], preferred_element_type=jnp.float32)
        + b_ref[...])


def input_projection(x2d, w_t, b):
    """x2d: (M, K) f32, w_t: (K, N) f32, b: (1, N) f32 -> (M, N) f32."""
    M, K = x2d.shape
    N = w_t.shape[1]
    tm = M
    for cand in (512, 256, 128, 64, 32, 16, 8):
        if M % cand == 0:
            tm = cand
            break
    return pl.pallas_call(
        _input_proj_kernel,
        out_shape=jax.ShapeDtypeStruct((M, N), jnp.float32),
        grid_spec=pltpu.PrefetchScalarGridSpec(
            num_scalar_prefetch=0,
            grid=(M // tm,),
            in_specs=[
                pl.BlockSpec((tm, K), lambda i: (i, 0)),
                pl.BlockSpec((K, N), lambda i: (0, 0)),
                pl.BlockSpec((1, N), lambda i: (0, 0)),
            ],
            out_specs=pl.BlockSpec((tm, N), lambda i: (i, 0)),
        ),
        compiler_params=pltpu.CompilerParams(
            dimension_semantics=("parallel",)),
    )(x2d, w_t, b)


# ----------------------------------------------------------------------------
# Kernel 2: time-chunked LSTM recurrence.  h/c carried in VMEM scratch.
# ----------------------------------------------------------------------------
def _lstm_recurrence_kernel(xg_ref, w_hh_ref, h0_ref, c0_ref,
                            y_ref, hN_ref, cN_ref, h_sc, c_sc,
                            *, Hp, Tc, seq_len, mask_tail):
    chunk = pl.program_id(0)

    @pl.when(chunk == 0)
    def _():
        h_sc[...] = h0_ref[...]
        c_sc[...] = c0_ref[...]

    def step(s, carry):
        h, c = carry
        # gates = (x_t @ W_ih^T + b) [precomputed] + h @ W_hh^T   -> (B, 4*Hp)
        gates = xg_ref[s] + jnp.dot(h, w_hh_ref[...],
                                    preferred_element_type=jnp.float32)
        # Hp = 128-aligned -> each gate slice is a full lane tile.
        i_g = jax.nn.sigmoid(gates[:, 0 * Hp:1 * Hp])
        f_g = jax.nn.sigmoid(gates[:, 1 * Hp:2 * Hp])
        g_g = jnp.tanh(gates[:, 2 * Hp:3 * Hp])
        o_g = jax.nn.sigmoid(gates[:, 3 * Hp:4 * Hp])
        c_new = f_g * c + i_g * g_g
        h_new = o_g * jnp.tanh(c_new)
        if mask_tail:                     # only when T_pad != seq_len
            valid = (chunk * Tc + s) < seq_len
            h_new = jnp.where(valid, h_new, h)
            c_new = jnp.where(valid, c_new, c)
        y_ref[s] = h_new
        return h_new, c_new

    h_fin, c_fin = lax.fori_loop(0, Tc, step, (h_sc[...], c_sc[...]),
                                 unroll=True)
    h_sc[...] = h_fin
    c_sc[...] = c_fin

    # Final state written once, on the last chunk only.
    @pl.when(chunk == pl.num_programs(0) - 1)
    def _():
        hN_ref[...] = h_fin
        cN_ref[...] = c_fin


def lstm_recurrence(xg, w_hh_t, h0, c0, *, seq_len, time_chunk):
    """xg: (T_pad, B, 4*Hp) precomputed gates; returns (y, h_n, c_n)."""
    T_pad, B, G = xg.shape
    Hp = G // 4
    n_chunks = T_pad // time_chunk
    kernel = functools.partial(
        _lstm_recurrence_kernel, Hp=Hp, Tc=time_chunk, seq_len=seq_len,
        mask_tail=(seq_len != T_pad))
    return pl.pallas_call(
        kernel,
        out_shape=(
            jax.ShapeDtypeStruct((T_pad, B, Hp), jnp.float32),
            jax.ShapeDtypeStruct((B, Hp), jnp.float32),
            jax.ShapeDtypeStruct((B, Hp), jnp.float32),
        ),
        grid_spec=pltpu.PrefetchScalarGridSpec(
            num_scalar_prefetch=0,
            grid=(n_chunks,),
            in_specs=[
                pl.BlockSpec((time_chunk, B, G), lambda c: (c, 0, 0)),  # gates
                pl.BlockSpec((Hp, G), lambda c: (0, 0)),                # W_hh^T
                pl.BlockSpec((B, Hp), lambda c: (0, 0)),                # h0
                pl.BlockSpec((B, Hp), lambda c: (0, 0)),                # c0
            ],
            out_specs=[
                pl.BlockSpec((time_chunk, B, Hp), lambda c: (c, 0, 0)),  # y
                pl.BlockSpec((B, Hp), lambda c: (0, 0)),                 # h_n
                pl.BlockSpec((B, Hp), lambda c: (0, 0)),                 # c_n
            ],
            scratch_shapes=[
                pltpu.VMEM((B, Hp), jnp.float32),   # h carry
                pltpu.VMEM((B, Hp), jnp.float32),   # c carry
            ],
        ),
        compiler_params=pltpu.CompilerParams(
            dimension_semantics=("arbitrary",)),    # recurrent axis
    )(xg, w_hh_t, h0, c0)


# ----------------------------------------------------------------------------
# Kernel 3: classifier head on the final hidden state only: sigmoid(h @ W + b)
# ----------------------------------------------------------------------------
def _fc_sigmoid_kernel(h_ref, w_ref, b_ref, o_ref):
    o_ref[...] = jax.nn.sigmoid(
        jnp.dot(h_ref[...], w_ref[...], preferred_element_type=jnp.float32)
        + b_ref[...])


def fc_sigmoid(h, w_t, b):
    B = h.shape[0]
    O = w_t.shape[-1]
    return pl.pallas_call(
        _fc_sigmoid_kernel,
        out_shape=jax.ShapeDtypeStruct((B, O), jnp.float32),
    )(h, w_t, b)


# ----------------------------------------------------------------------------
# Full forward: embedding (glue gather) -> per-layer [hoisted projection +
# recurrence] -> fc+sigmoid on h_n[last] -> last column.
# ----------------------------------------------------------------------------
@functools.partial(jax.jit, static_argnames=("no_layers",))
def movie_reviews_forward(tokens, hidden, params, *, no_layers):
    """tokens: (B, T) int32; hidden: (h0, c0) each (no_layers, B, H)."""
    h0_all, c0_all = hidden
    B, T = tokens.shape
    H = h0_all.shape[-1]
    Hp = _round_up(H, 128)

    # Embedding lookup (gather) kept in plain JAX glue; time-major layout.
    embeds = params["embedding"][tokens]             # (B, T, E) f32
    x = jnp.transpose(embeds, (1, 0, 2))             # (T, B, E)

    # Time-chunk size: prefer an exact divisor of T (no tail masking).
    Tc = 1
    for cand in range(min(T, 32), 0, -1):
        if T % cand == 0:
            Tc = cand
            break
    if Tc < 8 and T > 8:
        Tc = min(T, 32)                              # mask the tail instead
    n_chunks = pl.cdiv(T, Tc)
    T_pad = n_chunks * Tc
    if T_pad != T:
        x = jnp.pad(x, ((0, T_pad - T), (0, 0), (0, 0)))

    # Zero-pad hidden state lanes H -> Hp (padded lanes provably stay zero).
    h_pad = jnp.pad(h0_all, ((0, 0), (0, 0), (0, Hp - H)))
    c_pad = jnp.pad(c0_all, ((0, 0), (0, 0), (0, Hp - H)))

    h_finals, c_finals = [], []
    for layer in range(no_layers):
        lp = params["lstm"][layer]
        d_in = x.shape[-1]
        # Hoisted input projection for the whole (padded) sequence.
        xg = input_projection(x.reshape(T_pad * B, d_in), lp["w_ih_t"],
                              lp["b"]).reshape(T_pad, B, 4 * Hp)
        y, h_n, c_n = lstm_recurrence(xg, lp["w_hh_t"], h_pad[layer],
                                      c_pad[layer], seq_len=T, time_chunk=Tc)
        h_finals.append(h_n)
        c_finals.append(c_n)
        x = y                                        # (T_pad, B, Hp)

    # TODO(synk): nn.Dropout treated as inference-mode identity (no RNG drop).
    # sigmoid(fc(lstm_out)).view(B,-1)[:, -1] == sigmoid(fc(h_n[last]))[:, -1]
    sig = fc_sigmoid(h_finals[-1], params["fc"]["w_t"], params["fc"]["b"])
    sig_out = sig[:, -1]

    h_n = jnp.stack(h_finals, axis=0)[:, :, :H]
    c_n = jnp.stack(c_finals, axis=0)[:, :, :H]
    return sig_out, (h_n, c_n)


# ----------------------------------------------------------------------------
# Deterministic parameter construction (shapes match the nn.Module __init__),
# with lane-padded / pre-transposed kernel layouts + raw copies for reference.
# ----------------------------------------------------------------------------
def init_params(key, *, no_layers, vocab_size, hidden_dim, embedding_dim,
                output_dim):
    H = hidden_dim
    Hp = _round_up(H, 128)
    keys = jax.random.split(key, 1 + 4 * no_layers + 2)
    k_iter = iter(keys)
    scale = 1.0 / jnp.sqrt(jnp.float32(hidden_dim))

    def pad_gates_t(w, in_dim, in_pad):
        # w: PyTorch layout (4H, in_dim) -> transposed, gate-lane-padded.
        out = jnp.zeros((in_pad, 4 * Hp), jnp.float32)
        for g in range(4):
            out = out.at[:in_dim, g * Hp:g * Hp + H].set(
                w[g * H:(g + 1) * H, :].T)
        return out

    def pad_gate_bias(b):
        out = jnp.zeros((4 * Hp,), jnp.float32)
        for g in range(4):
            out = out.at[g * Hp:g * Hp + H].set(b[g * H:(g + 1) * H])
        return out[None, :]

    emb = jax.random.normal(next(k_iter), (vocab_size, embedding_dim),
                            jnp.float32)
    params = {"embedding": emb, "lstm": []}
    raw = {"embedding": emb, "lstm": []}
    for layer in range(no_layers):
        in_dim = embedding_dim if layer == 0 else hidden_dim
        in_pad = embedding_dim if layer == 0 else Hp
        w_ih = jax.random.uniform(next(k_iter), (4 * H, in_dim),
                                  jnp.float32, -scale, scale)
        w_hh = jax.random.uniform(next(k_iter), (4 * H, H),
                                  jnp.float32, -scale, scale)
        b_ih = jax.random.uniform(next(k_iter), (4 * H,),
                                  jnp.float32, -scale, scale)
        b_hh = jax.random.uniform(next(k_iter), (4 * H,),
                                  jnp.float32, -scale, scale)
        params["lstm"].append({
            "w_ih_t": pad_gates_t(w_ih, in_dim, in_pad),   # (in_pad, 4Hp)
            "w_hh_t": pad_gates_t(w_hh, H, Hp),            # (Hp, 4Hp)
            "b": pad_gate_bias(b_ih + b_hh),               # (1, 4Hp)
        })
        raw["lstm"].append({"w_ih": w_ih, "w_hh": w_hh,
                            "b_ih": b_ih, "b_hh": b_hh})
    w_fc = jax.random.uniform(next(k_iter), (output_dim, hidden_dim),
                              jnp.float32, -scale, scale)
    b_fc = jax.random.uniform(next(k_iter), (output_dim,),
                              jnp.float32, -scale, scale)
    params["fc"] = {
        "w_t": jnp.zeros((Hp, output_dim), jnp.float32).at[:H, :].set(w_fc.T),
        "b": b_fc[None, :],
    }
    raw["fc_w"] = w_fc
    raw["fc_b"] = b_fc
    return params, raw


# ----------------------------------------------------------------------------
# Pure-JAX reference (mirrors the PyTorch module exactly) for validation.
# ----------------------------------------------------------------------------
def _reference_forward(tokens, hidden, raw, *, no_layers):
    h0, c0 = hidden
    B = tokens.shape[0]
    x = raw["embedding"][tokens]                      # (B, T, E)
    h_all, c_all = [], []
    for layer in range(no_layers):
        lw = raw["lstm"][layer]
        w_ih, w_hh = lw["w_ih"], lw["w_hh"]
        bias = lw["b_ih"] + lw["b_hh"]

        def step(carry, x_t):
            h, c = carry
            g = x_t @ w_ih.T + h @ w_hh.T + bias
            i, f, gg, o = jnp.split(g, 4, axis=-1)
            c = jax.nn.sigmoid(f) * c + jax.nn.sigmoid(i) * jnp.tanh(gg)
            h = jax.nn.sigmoid(o) * jnp.tanh(c)
            return (h, c), h

        (h_f, c_f), ys = lax.scan(step, (h0[layer], c0[layer]),
                                  jnp.transpose(x, (1, 0, 2)))
        x = jnp.transpose(ys, (1, 0, 2))              # (B, T, H)
        h_all.append(h_f)
        c_all.append(c_f)
    H = x.shape[-1]
    out = jax.nn.sigmoid(x.reshape(-1, H) @ raw["fc_w"].T + raw["fc_b"])
    sig_out = out.reshape(B, -1)[:, -1]
    return sig_out, (jnp.stack(h_all), jnp.stack(c_all))


if __name__ == "__main__":
    no_layers = 2
    vocab_size = 64
    hidden_dim = 32
    embedding_dim = 32
    output_dim = 1
    batch = 2
    seq = 8

    key = jax.random.PRNGKey(0)
    k_param, k_tok = jax.random.split(key)
    params, raw = init_params(k_param, no_layers=no_layers,
                              vocab_size=vocab_size, hidden_dim=hidden_dim,
                              embedding_dim=embedding_dim,
                              output_dim=output_dim)

    tokens = jax.random.randint(k_tok, (batch, seq), 0, vocab_size, jnp.int32)
    # init_hidden(): zeros
    h0 = jnp.zeros((no_layers, batch, hidden_dim), jnp.float32)
    c0 = jnp.zeros((no_layers, batch, hidden_dim), jnp.float32)

    sig_out, (h_n, c_n) = movie_reviews_forward(
        tokens, (h0, c0), params, no_layers=no_layers)
    jax.block_until_ready((sig_out, h_n, c_n))

    # Validate against the pure-JAX reference of the PyTorch module.
    ref_sig, (ref_h, ref_c) = _reference_forward(tokens, (h0, c0), raw,
                                                 no_layers=no_layers)
    assert jnp.allclose(sig_out, ref_sig, rtol=1e-4, atol=1e-4)
    assert jnp.allclose(h_n, ref_h, rtol=1e-4, atol=1e-4)
    assert jnp.allclose(c_n, ref_c, rtol=1e-4, atol=1e-4)

    assert sig_out.shape == (batch,)
    assert h_n.shape == (no_layers, batch, hidden_dim)
    assert c_n.shape == (no_layers, batch, hidden_dim)
    print("KERNEL_OK")
</pallas_src>

<mosaic_0001>
module attributes {stable_mosaic.version = 11 : i64} {
  func.func @_input_proj_kernel(%arg0: i32, %arg1: memref<16x32xf32, #tpu.memory_space<vmem>>, %arg2: memref<32x512xf32, #tpu.memory_space<vmem>>, %arg3: memref<1x512xf32, #tpu.memory_space<vmem>>, %arg4: memref<16x512xf32, #tpu.memory_space<vmem>>) attributes {dimension_semantics = [#tpu.dimension_semantics<parallel>], iteration_bounds = array<i64: 1>, scalar_prefetch = 0 : i64, scratch_operands = 0 : i64, tpu.core_type = #tpu.core_type<tc>, window_params = [{transform_indices = @transform_0, window_bounds = array<i64: 16, 32>}, {pipeline_mode = #tpu.pipeline_mode<synchronous>, transform_indices = @transform_1, window_bounds = array<i64: 32, 512>}, {pipeline_mode = #tpu.pipeline_mode<synchronous>, transform_indices = @transform_2, window_bounds = array<i64: 1, 512>}, {transform_indices = @transform_3, window_bounds = array<i64: 16, 512>}]} {
    %c0 = arith.constant 0 : index
    %c0_0 = arith.constant 0 : index
    %0 = vector.load %arg1[%c0, %c0_0] : memref<16x32xf32, #tpu.memory_space<vmem>>, vector<16x32xf32>
    %c0_1 = arith.constant 0 : index
    %c0_2 = arith.constant 0 : index
    %1 = vector.load %arg2[%c0_1, %c0_2] : memref<32x512xf32, #tpu.memory_space<vmem>>, vector<32x512xf32>
    %cst = arith.constant dense<0.000000e+00> : vector<16x512xf32>
    %2 = tpu.matmul %0, %1, %cst {dimension_numbers = #tpu.dot_dimension_numbers<[1], [0], [0], [1], [0, 0, 1, 1], [], []>} : vector<16x32xf32>, vector<32x512xf32>, vector<16x512xf32> -> vector<16x512xf32>
    %c0_3 = arith.constant 0 : index
    %c0_4 = arith.constant 0 : index
    %3 = vector.load %arg3[%c0_3, %c0_4] : memref<1x512xf32, #tpu.memory_space<vmem>>, vector<1x512xf32>
    %4 = vector.broadcast %3 : vector<1x512xf32> to vector<16x512xf32>
    %5 = arith.addf %2, %4 : vector<16x512xf32>
    %c0_5 = arith.constant 0 : index
    %c0_6 = arith.constant 0 : index
    %6 = vector.load %arg4[%c0_5, %c0_6] : memref<16x512xf32, #tpu.memory_space<vmem>>, vector<16x512xf32>
    tpu.vector_store %arg4[%c0_5, %c0_6], %5 {strides = array<i32>} : memref<16x512xf32, #tpu.memory_space<vmem>>, vector<16x512xf32>,
    return
  }
  func.func @transform_0(%arg0: i32) -> (i32, i32) {
    %c0_i32 = arith.constant 0 : i32
    %c0_i32_0 = arith.constant 0 : i32
    return %arg0, %c0_i32 : i32, i32
  }
  func.func @transform_1(%arg0: i32) -> (i32, i32) {
    %c0_i32 = arith.constant 0 : i32
    %c0_i32_0 = arith.constant 0 : i32
    %c0_i32_1 = arith.constant 0 : i32
    return %c0_i32, %c0_i32_0 : i32, i32
  }
  func.func @transform_2(%arg0: i32) -> (i32, i32) {
    %c0_i32 = arith.constant 0 : i32
    %c0_i32_0 = arith.constant 0 : i32
    %c0_i32_1 = arith.constant 0 : i32
    return %c0_i32, %c0_i32_0 : i32, i32
  }
  func.func @transform_3(%arg0: i32) -> (i32, i32) {
    %c0_i32 = arith.constant 0 : i32
    %c0_i32_0 = arith.constant 0 : i32
    return %arg0, %c0_i32 : i32, i32
  }
}

module attributes {stable_mosaic.version = 11 : i64} {
  func.func @_lstm_recurrence_kernel(%arg0: i32, %arg1: memref<8x2x512xf32, #tpu.memory_space<vmem>>, %arg2: memref<128x512xf32, #tpu.memory_space<vmem>>, %arg3: memref<2x128xf32, #tpu.memory_space<vmem>>, %arg4: memref<2x128xf32, #tpu.memory_space<vmem>>, %arg5: memref<8x2x128xf32, #tpu.memory_space<vmem>>, %arg6: memref<2x128xf32, #tpu.memory_space<vmem>>, %arg7: memref<2x128xf32, #tpu.memory_space<vmem>>, %arg8: memref<2x128xf32, #tpu.memory_space<vmem>>, %arg9: memref<2x128xf32, #tpu.memory_space<vmem>>) attributes {dimension_semantics = [#tpu.dimension_semantics<arbitrary>], iteration_bounds = array<i64: 1>, scalar_prefetch = 0 : i64, scratch_operands = 2 : i64, tpu.core_type = #tpu.core_type<tc>, window_params = [{transform_indices = @transform_0, window_bounds = array<i64: 8, 2, 512>}, {pipeline_mode = #tpu.pipeline_mode<synchronous>, transform_indices = @transform_1, window_bounds = array<i64: 128, 512>}, {pipeline_mode = #tpu.pipeline_mode<synchronous>, transform_indices = @transform_2, window_bounds = array<i64: 2, 128>}, {pipeline_mode = #tpu.pipeline_mode<synchronous>, transform_indices = @transform_3, window_bounds = array<i64: 2, 128>}, {transform_indices = @transform_4, window_bounds = array<i64: 8, 2, 128>}, {pipeline_mode = #tpu.pipeline_mode<synchronous>, transform_indices = @transform_5, window_bounds = array<i64: 2, 128>}, {pipeline_mode = #tpu.pipeline_mode<synchronous>, transform_indices = @transform_6, window_bounds = array<i64: 2, 128>}]} {
    %c0_i32 = arith.constant 0 : i32
    %0 = arith.cmpi eq, %arg0, %c0_i32 : i32
    %1 = arith.extui %0 : i1 to i32
    %c0_i32_0 = arith.constant 0 : i32
    %2 = arith.cmpi ne, %1, %c0_i32_0 : i32
    scf.if %2 {
      %c0_90 = arith.constant 0 : index
      %c0_91 = arith.constant 0 : index
      %290 = vector.load %arg3[%c0_90, %c0_91] : memref<2x128xf32, #tpu.memory_space<vmem>>, vector<2x128xf32>
      %c0_92 = arith.constant 0 : index
      %c0_93 = arith.constant 0 : index
      %291 = vector.load %arg8[%c0_92, %c0_93] : memref<2x128xf32, #tpu.memory_space<vmem>>, vector<2x128xf32>
      tpu.vector_store %arg8[%c0_92, %c0_93], %290 {strides = array<i32>} : memref<2x128xf32, #tpu.memory_space<vmem>>, vector<2x128xf32>,
      %c0_94 = arith.constant 0 : index
      %c0_95 = arith.constant 0 : index
      %292 = vector.load %arg4[%c0_94, %c0_95] : memref<2x128xf32, #tpu.memory_space<vmem>>, vector<2x128xf32>
      %c0_96 = arith.constant 0 : index
      %c0_97 = arith.constant 0 : index
      %293 = vector.load %arg9[%c0_96, %c0_97] : memref<2x128xf32, #tpu.memory_space<vmem>>, vector<2x128xf32>
      tpu.vector_store %arg9[%c0_96, %c0_97], %292 {strides = array<i32>} : memref<2x128xf32, #tpu.memory_space<vmem>>, vector<2x128xf32>,
    } else {
    }
    %c0 = arith.constant 0 : index
    %c0_1 = arith.constant 0 : index
    %3 = vector.load %arg8[%c0, %c0_1] : memref<2x128xf32, #tpu.memory_space<vmem>>, vector<2x128xf32>
    %c0_2 = arith.constant 0 : index
    %c0_3 = arith.constant 0 : index
    %4 = vector.load %arg9[%c0_2, %c0_3] : memref<2x128xf32, #tpu.memory_space<vmem>>, vector<2x128xf32>
    %c0_i32_4 = arith.constant 0 : i32
    %5 = arith.index_cast %c0_i32_4 : i32 to index
    %c0_5 = arith.constant 0 : index
    %c0_6 = arith.constant 0 : index
    %6 = vector.load %arg1[%5, %c0_5, %c0_6] : memref<8x2x512xf32, #tpu.memory_space<vmem>>, vector<1x2x512xf32>
    %7 = vector.shape_cast %6 : vector<1x2x512xf32> to vector<2x512xf32>
    %c0_7 = arith.constant 0 : index
    %c0_8 = arith.constant 0 : index
    %8 = vector.load %arg2[%c0_7, %c0_8] : memref<128x512xf32, #tpu.memory_space<vmem>>, vector<128x512xf32>
    %cst = arith.constant dense<0.000000e+00> : vector<2x512xf32>
    %9 = tpu.matmul %3, %8, %cst {dimension_numbers = #tpu.dot_dimension_numbers<[1], [0], [0], [1], [0, 0, 1, 1], [], []>} : vector<2x128xf32>, vector<128x512xf32>, vector<2x512xf32> -> vector<2x512xf32>
    %10 = arith.addf %7, %9 : vector<2x512xf32>
    %11 = vector.extract_strided_slice %10 {offsets = [0, 0], sizes = [2, 128], strides = [1, 1]} : vector<2x512xf32> to vector<2x128xf32>
    %12 = arith.negf %11 : vector<2x128xf32>
    %13 = math.exp %12 : vector<2x128xf32>
    %cst_9 = arith.constant 1.000000e+00 : f32
    %14 = vector.broadcast %cst_9 : f32 to vector<2x128xf32>
    %15 = arith.addf %14, %13 : vector<2x128xf32>
    %16 = arith.divf %14, %15 : vector<2x128xf32>
    %17 = vector.extract_strided_slice %10 {offsets = [0, 128], sizes = [2, 128], strides = [1, 1]} : vector<2x512xf32> to vector<2x128xf32>
    %18 = arith.negf %17 : vector<2x128xf32>
    %19 = math.exp %18 : vector<2x128xf32>
    %cst_10 = arith.constant 1.000000e+00 : f32
    %20 = vector.broadcast %cst_10 : f32 to vector<2x128xf32>
    %21 = arith.addf %20, %19 : vector<2x128xf32>
    %22 = arith.divf %20, %21 : vector<2x128xf32>
    %23 = vector.extract_strided_slice %10 {offsets = [0, 256], sizes = [2, 128], strides = [1, 1]} : vector<2x512xf32> to vector<2x128xf32>
    %24 = math.tanh %23 : vector<2x128xf32>
    %25 = vector.extract_strided_slice %10 {offsets = [0, 384], sizes = [2, 128], strides = [1, 1]} : vector<2x512xf32> to vector<2x128xf32>
    %26 = arith.negf %25 : vector<2x128xf32>
    %27 = math.exp %26 : vector<2x128xf32>
    %cst_11 = arith.constant 1.000000e+00 : f32
    %28 = vector.broadcast %cst_11 : f32 to vector<2x128xf32>
    %29 = arith.addf %28, %27 : vector<2x128xf32>
    %30 = arith.divf %28, %29 : vector<2x128xf32>
    %31 = arith.mulf %22, %4 : vector<2x128xf32>
    %32 = arith.mulf %16, %24 : vector<2x128xf32>
    %33 = arith.addf %31, %32 : vector<2x128xf32>
    %34 = math.tanh %33 : vector<2x128xf32>
    %35 = arith.mulf %30, %34 : vector<2x128xf32>
    %36 = arith.index_cast %c0_i32_4 : i32 to index
    %c0_12 = arith.constant 0 : index
    %c0_13 = arith.constant 0 : index
    %37 = vector.load %arg5[%36, %c0_12, %c0_13] : memref<8x2x128xf32, #tpu.memory_space<vmem>>, vector<1x2x128xf32>
    %38 = vector.shape_cast %37 : vector<1x2x128xf32> to vector<2x128xf32>
    %39 = vector.shape_cast %35 : vector<2x128xf32> to vector<1x2x128xf32>
    tpu.vector_store %arg5[%36, %c0_12, %c0_13], %39 {strides = array<i32>} : memref<8x2x128xf32, #tpu.memory_space<vmem>>, vector<1x2x128xf32>,
    %c1_i32 = arith.constant 1 : i32
    %40 = arith.index_cast %c1_i32 : i32 to index
    %c0_14 = arith.constant 0 : index
    %c0_15 = arith.constant 0 : index
    %41 = vector.load %arg1[%40, %c0_14, %c0_15] : memref<8x2x512xf32, #tpu.memory_space<vmem>>, vector<1x2x512xf32>
    %42 = vector.shape_cast %41 : vector<1x2x512xf32> to vector<2x512xf32>
    %c0_16 = arith.constant 0 : index
    %c0_17 = arith.constant 0 : index
    %43 = vector.load %arg2[%c0_16, %c0_17] : memref<128x512xf32, #tpu.memory_space<vmem>>, vector<128x512xf32>
    %cst_18 = arith.constant dense<0.000000e+00> : vector<2x512xf32>
    %44 = tpu.matmul %35, %43, %cst_18 {dimension_numbers = #tpu.dot_dimension_numbers<[1], [0], [0], [1], [0, 0, 1, 1], [], []>} : vector<2x128xf32>, vector<128x512xf32>, vector<2x512xf32> -> vector<2x512xf32>
    %45 = arith.addf %42, %44 : vector<2x512xf32>
    %46 = vector.extract_strided_slice %45 {offsets = [0, 0], sizes = [2, 128], strides = [1, 1]} : vector<2x512xf32> to vector<2x128xf32>
    %47 = arith.negf %46 : vector<2x128xf32>
    %48 = math.exp %47 : vector<2x128xf32>
    %cst_19 = arith.constant 1.000000e+00 : f32
    %49 = vector.broadcast %cst_19 : f32 to vector<2x128xf32>
    %50 = arith.addf %49, %48 : vector<2x128xf32>
    %51 = arith.divf %49, %50 : vector<2x128xf32>
    %52 = vector.extract_strided_slice %45 {offsets = [0, 128], sizes = [2, 128], strides = [1, 1]} : vector<2x512xf32> to vector<2x128xf32>
    %53 = arith.negf %52 : vector<2x128xf32>
    %54 = math.exp %53 : vector<2x128xf32>
    %cst_20 = arith.constant 1.000000e+00 : f32
    %55 = vector.broadcast %cst_20 : f32 to vector<2x128xf32>
    %56 = arith.addf %55, %54 : vector<2x128xf32>
    %57 = arith.divf %55, %56 : vector<2x128xf32>
    %58 = vector.extract_strided_slice %45 {offsets = [0, 256], sizes = [2, 128], strides = [1, 1]} : vector<2x512xf32> to vector<2x128xf32>
    %59 = math.tanh %58 : vector<2x128xf32>
    %60 = vector.extract_strided_slice %45 {offsets = [0, 384], sizes = [2, 128], strides = [1, 1]} : vector<2x512xf32> to vector<2x128xf32>
    %61 = arith.negf %60 : vector<2x128xf32>
    %62 = math.exp %61 : vector<2x128xf32>
    %cst_21 = arith.constant 1.000000e+00 : f32
    %63 = vector.broadcast %cst_21 : f32 to vector<2x128xf32>
    %64 = arith.addf %63, %62 : vector<2x128xf32>
    %65 = arith.divf %63, %64 : vector<2x128xf32>
    %66 = arith.mulf %57, %33 : vector<2x128xf32>
    %67 = arith.mulf %51, %59 : vector<2x128xf32>
    %68 = arith.addf %66, %67 : vector<2x128xf32>
    %69 = math.tanh %68 : vector<2x128xf32>
    %70 = arith.mulf %65, %69 : vector<2x128xf32>
    %71 = arith.index_cast %c1_i32 : i32 to index
    %c0_22 = arith.constant 0 : index
    %c0_23 = arith.constant 0 : index
    %72 = vector.load %arg5[%71, %c0_22, %c0_23] : memref<8x2x128xf32, #tpu.memory_space<vmem>>, vector<1x2x128xf32>
    %73 = vector.shape_cast %72 : vector<1x2x128xf32> to vector<2x128xf32>
    %74 = vector.shape_cast %70 : vector<2x128xf32> to vector<1x2x128xf32>
    tpu.vector_store %arg5[%71, %c0_22, %c0_23], %74 {strides = array<i32>} : memref<8x2x128xf32, #tpu.memory_space<vmem>>, vector<1x2x128xf32>,
    %c2_i32 = arith.constant 2 : i32
    %75 = arith.index_cast %c2_i32 : i32 to index
    %c0_24 = arith.constant 0 : index
    %c0_25 = arith.constant 0 : index
    %76 = vector.load %arg1[%75, %c0_24, %c0_25] : memref<8x2x512xf32, #tpu.memory_space<vmem>>, vector<1x2x512xf32>
    %77 = vector.shape_cast %76 : vector<1x2x512xf32> to vector<2x512xf32>
    %c0_26 = arith.constant 0 : index
    %c0_27 = arith.constant 0 : index
    %78 = vector.load %arg2[%c0_26, %c0_27] : memref<128x512xf32, #tpu.memory_space<vmem>>, vector<128x512xf32>
    %cst_28 = arith.constant dense<0.000000e+00> : vector<2x512xf32>
    %79 = tpu.matmul %70, %78, %cst_28 {dimension_numbers = #tpu.dot_dimension_numbers<[1], [0], [0], [1], [0, 0, 1, 1], [], []>} : vector<2x128xf32>, vector<128x512xf32>, vector<2x512xf32> -> vector<2x512xf32>
    %80 = arith.addf %77, %79 : vector<2x512xf32>
    %81 = vector.extract_strided_slice %80 {offsets = [0, 0], sizes = [2, 128], strides = [1, 1]} : vector<2x512xf32> to vector<2x128xf32>
    %82 = arith.negf %81 : vector<2x128xf32>
    %83 = math.exp %82 : vector<2x128xf32>
    %cst_29 = arith.constant 1.000000e+00 : f32
    %84 = vector.broadcast %cst_29 : f32 to vector<2x128xf32>
    %85 = arith.addf %84, %83 : vector<2x128xf32>
    %86 = arith.divf %84, %85 : vector<2x128xf32>
    %87 = vector.extract_strided_slice %80 {offsets = [0, 128], sizes = [2, 128], strides = [1, 1]} : vector<2x512xf32> to vector<2x128xf32>
    %88 = arith.negf %87 : vector<2x128xf32>
    %89 = math.exp %88 : vector<2x128xf32>
    %cst_30 = arith.constant 1.000000e+00 : f32
    %90 = vector.broadcast %cst_30 : f32 to vector<2x128xf32>
    %91 = arith.addf %90, %89 : vector<2x128xf32>
    %92 = arith.divf %90, %91 : vector<2x128xf32>
    %93 = vector.extract_strided_slice %80 {offsets = [0, 256], sizes = [2, 128], strides = [1, 1]} : vector<2x512xf32> to vector<2x128xf32>
    %94 = math.tanh %93 : vector<2x128xf32>
    %95 = vector.extract_strided_slice %80 {offsets = [0, 384], sizes = [2, 128], strides = [1, 1]} : vector<2x512xf32> to vector<2x128xf32>
    %96 = arith.negf %95 : vector<2x128xf32>
    %97 = math.exp %96 : vector<2x128xf32>
    %cst_31 = arith.constant 1.000000e+00 : f32
    %98 = vector.broadcast %cst_31 : f32 to vector<2x128xf32>
    %99 = arith.addf %98, %97 : vector<2x128xf32>
    %100 = arith.divf %98, %99 : vector<2x128xf32>
    %101 = arith.mulf %92, %68 : vector<2x128xf32>
    %102 = arith.mulf %86, %94 : vector<2x128xf32>
    %103 = arith.addf %101, %102 : vector<2x128xf32>
    %104 = math.tanh %103 : vector<2x128xf32>
    %105 = arith.mulf %100, %104 : vector<2x128xf32>
    %106 = arith.index_cast %c2_i32 : i32 to index
    %c0_32 = arith.constant 0 : index
    %c0_33 = arith.constant 0 : index
    %107 = vector.load %arg5[%106, %c0_32, %c0_33] : memref<8x2x128xf32, #tpu.memory_space<vmem>>, vector<1x2x128xf32>
    %108 = vector.shape_cast %107 : vector<1x2x128xf32> to vector<2x128xf32>
    %109 = vector.shape_cast %105 : vector<2x128xf32> to vector<1x2x128xf32>
    tpu.vector_store %arg5[%106, %c0_32, %c0_33], %109 {strides = array<i32>} : memref<8x2x128xf32, #tpu.memory_space<vmem>>, vector<1x2x128xf32>,
    %c3_i32 = arith.constant 3 : i32
    %110 = arith.index_cast %c3_i32 : i32 to index
    %c0_34 = arith.constant 0 : index
    %c0_35 = arith.constant 0 : index
    %111 = vector.load %arg1[%110, %c0_34, %c0_35] : memref<8x2x512xf32, #tpu.memory_space<vmem>>, vector<1x2x512xf32>
    %112 = vector.shape_cast %111 : vector<1x2x512xf32> to vector<2x512xf32>
    %c0_36 = arith.constant 0 : index
    %c0_37 = arith.constant 0 : index
    %113 = vector.load %arg2[%c0_36, %c0_37] : memref<128x512xf32, #tpu.memory_space<vmem>>, vector<128x512xf32>
    %cst_38 = arith.constant dense<0.000000e+00> : vector<2x512xf32>
    %114 = tpu.matmul %105, %113, %cst_38 {dimension_numbers = #tpu.dot_dimension_numbers<[1], [0], [0], [1], [0, 0, 1, 1], [], []>} : vector<2x128xf32>, vector<128x512xf32>, vector<2x512xf32> -> vector<2x512xf32>
    %115 = arith.addf %112, %114 : vector<2x512xf32>
    %116 = vector.extract_strided_slice %115 {offsets = [0, 0], sizes = [2, 128], strides = [1, 1]} : vector<2x512xf32> to vector<2x128xf32>
    %117 = arith.negf %116 : vector<2x128xf32>
    %118 = math.exp %117 : vector<2x128xf32>
    %cst_39 = arith.constant 1.000000e+00 : f32
    %119 = vector.broadcast %cst_39 : f32 to vector<2x128xf32>
    %120 = arith.addf %119, %118 : vector<2x128xf32>
    %121 = arith.divf %119, %120 : vector<2x128xf32>
    %122 = vector.extract_strided_slice %115 {offsets = [0, 128], sizes = [2, 128], strides = [1, 1]} : vector<2x512xf32> to vector<2x128xf32>
    %123 = arith.negf %122 : vector<2x128xf32>
    %124 = math.exp %123 : vector<2x128xf32>
    %cst_40 = arith.constant 1.000000e+00 : f32
    %125 = vector.broadcast %cst_40 : f32 to vector<2x128xf32>
    %126 = arith.addf %125, %124 : vector<2x128xf32>
    %127 = arith.divf %125, %126 : vector<2x128xf32>
    %128 = vector.extract_strided_slice %115 {offsets = [0, 256], sizes = [2, 128], strides = [1, 1]} : vector<2x512xf32> to vector<2x128xf32>
    %129 = math.tanh %128 : vector<2x128xf32>
    %130 = vector.extract_strided_slice %115 {offsets = [0, 384], sizes = [2, 128], strides = [1, 1]} : vector<2x512xf32> to vector<2x128xf32>
    %131 = arith.negf %130 : vector<2x128xf32>
    %132 = math.exp %131 : vector<2x128xf32>
    %cst_41 = arith.constant 1.000000e+00 : f32
    %133 = vector.broadcast %cst_41 : f32 to vector<2x128xf32>
    %134 = arith.addf %133, %132 : vector<2x128xf32>
    %135 = arith.divf %133, %134 : vector<2x128xf32>
    %136 = arith.mulf %127, %103 : vector<2x128xf32>
    %137 = arith.mulf %121, %129 : vector<2x128xf32>
    %138 = arith.addf %136, %137 : vector<2x128xf32>
    %139 = math.tanh %138 : vector<2x128xf32>
    %140 = arith.mulf %135, %139 : vector<2x128xf32>
    %141 = arith.index_cast %c3_i32 : i32 to index
    %c0_42 = arith.constant 0 : index
    %c0_43 = arith.constant 0 : index
    %142 = vector.load %arg5[%141, %c0_42, %c0_43] : memref<8x2x128xf32, #tpu.memory_space<vmem>>, vector<1x2x128xf32>
    %143 = vector.shape_cast %142 : vector<1x2x128xf32> to vector<2x128xf32>
    %144 = vector.shape_cast %140 : vector<2x128xf32> to vector<1x2x128xf32>
    tpu.vector_store %arg5[%141, %c0_42, %c0_43], %144 {strides = array<i32>} : memref<8x2x128xf32, #tpu.memory_space<vmem>>, vector<1x2x128xf32>,
    %c4_i32 = arith.constant 4 : i32
    %145 = arith.index_cast %c4_i32 : i32 to index
    %c0_44 = arith.constant 0 : index
    %c0_45 = arith.constant 0 : index
    %146 = vector.load %arg1[%145, %c0_44, %c0_45] : memref<8x2x512xf32, #tpu.memory_space<vmem>>, vector<1x2x512xf32>
    %147 = vector.shape_cast %146 : vector<1x2x512xf32> to vector<2x512xf32>
    %c0_46 = arith.constant 0 : index
    %c0_47 = arith.constant 0 : index
    %148 = vector.load %arg2[%c0_46, %c0_47] : memref<128x512xf32, #tpu.memory_space<vmem>>, vector<128x512xf32>
    %cst_48 = arith.constant dense<0.000000e+00> : vector<2x512xf32>
    %149 = tpu.matmul %140, %148, %cst_48 {dimension_numbers = #tpu.dot_dimension_numbers<[1], [0], [0], [1], [0, 0, 1, 1], [], []>} : vector<2x128xf32>, vector<128x512xf32>, vector<2x512xf32> -> vector<2x512xf32>
    %150 = arith.addf %147, %149 : vector<2x512xf32>
    %151 = vector.extract_strided_slice %150 {offsets = [0, 0], sizes = [2, 128], strides = [1, 1]} : vector<2x512xf32> to vector<2x128xf32>
    %152 = arith.negf %151 : vector<2x128xf32>
    %153 = math.exp %152 : vector<2x128xf32>
    %cst_49 = arith.constant 1.000000e+00 : f32
    %154 = vector.broadcast %cst_49 : f32 to vector<2x128xf32>
    %155 = arith.addf %154, %153 : vector<2x128xf32>
    %156 = arith.divf %154, %155 : vector<2x128xf32>
    %157 = vector.extract_strided_slice %150 {offsets = [0, 128], sizes = [2, 128], strides = [1, 1]} : vector<2x512xf32> to vector<2x128xf32>
    %158 = arith.negf %157 : vector<2x128xf32>
    %159 = math.exp %158 : vector<2x128xf32>
    %cst_50 = arith.constant 1.000000e+00 : f32
    %160 = vector.broadcast %cst_50 : f32 to vector<2x128xf32>
    %161 = arith.addf %160, %159 : vector<2x128xf32>
    %162 = arith.divf %160, %161 : vector<2x128xf32>
    %163 = vector.extract_strided_slice %150 {offsets = [0, 256], sizes = [2, 128], strides = [1, 1]} : vector<2x512xf32> to vector<2x128xf32>
    %164 = math.tanh %163 : vector<2x128xf32>
    %165 = vector.extract_strided_slice %150 {offsets = [0, 384], sizes = [2, 128], strides = [1, 1]} : vector<2x512xf32> to vector<2x128xf32>
    %166 = arith.negf %165 : vector<2x128xf32>
    %167 = math.exp %166 : vector<2x128xf32>
    %cst_51 = arith.constant 1.000000e+00 : f32
    %168 = vector.broadcast %cst_51 : f32 to vector<2x128xf32>
    %169 = arith.addf %168, %167 : vector<2x128xf32>
    %170 = arith.divf %168, %169 : vector<2x128xf32>
    %171 = arith.mulf %162, %138 : vector<2x128xf32>
    %172 = arith.mulf %156, %164 : vector<2x128xf32>
    %173 = arith.addf %171, %172 : vector<2x128xf32>
    %174 = math.tanh %173 : vector<2x128xf32>
    %175 = arith.mulf %170, %174 : vector<2x128xf32>
    %176 = arith.index_cast %c4_i32 : i32 to index
    %c0_52 = arith.constant 0 : index
    %c0_53 = arith.constant 0 : index
    %177 = vector.load %arg5[%176, %c0_52, %c0_53] : memref<8x2x128xf32, #tpu.memory_space<vmem>>, vector<1x2x128xf32>
    %178 = vector.shape_cast %177 : vector<1x2x128xf32> to vector<2x128xf32>
    %179 = vector.shape_cast %175 : vector<2x128xf32> to vector<1x2x128xf32>
    tpu.vector_store %arg5[%176, %c0_52, %c0_53], %179 {strides = array<i32>} : memref<8x2x128xf32, #tpu.memory_space<vmem>>, vector<1x2x128xf32>,
    %c5_i32 = arith.constant 5 : i32
    %180 = arith.index_cast %c5_i32 : i32 to index
    %c0_54 = arith.constant 0 : index
    %c0_55 = arith.constant 0 : index
    %181 = vector.load %arg1[%180, %c0_54, %c0_55] : memref<8x2x512xf32, #tpu.memory_space<vmem>>, vector<1x2x512xf32>
    %182 = vector.shape_cast %181 : vector<1x2x512xf32> to vector<2x512xf32>
    %c0_56 = arith.constant 0 : index
    %c0_57 = arith.constant 0 : index
    %183 = vector.load %arg2[%c0_56, %c0_57] : memref<128x512xf32, #tpu.memory_space<vmem>>, vector<128x512xf32>
    %cst_58 = arith.constant dense<0.000000e+00> : vector<2x512xf32>
    %184 = tpu.matmul %175, %183, %cst_58 {dimension_numbers = #tpu.dot_dimension_numbers<[1], [0], [0], [1], [0, 0, 1, 1], [], []>} : vector<2x128xf32>, vector<128x512xf32>, vector<2x512xf32> -> vector<2x512xf32>
    %185 = arith.addf %182, %184 : vector<2x512xf32>
    %186 = vector.extract_strided_slice %185 {offsets = [0, 0], sizes = [2, 128], strides = [1, 1]} : vector<2x512xf32> to vector<2x128xf32>
    %187 = arith.negf %186 : vector<2x128xf32>
    %188 = math.exp %187 : vector<2x128xf32>
    %cst_59 = arith.constant 1.000000e+00 : f32
    %189 = vector.broadcast %cst_59 : f32 to vector<2x128xf32>
    %190 = arith.addf %189, %188 : vector<2x128xf32>
    %191 = arith.divf %189, %190 : vector<2x128xf32>
    %192 = vector.extract_strided_slice %185 {offsets = [0, 128], sizes = [2, 128], strides = [1, 1]} : vector<2x512xf32> to vector<2x128xf32>
    %193 = arith.negf %192 : vector<2x128xf32>
    %194 = math.exp %193 : vector<2x128xf32>
    %cst_60 = arith.constant 1.000000e+00 : f32
    %195 = vector.broadcast %cst_60 : f32 to vector<2x128xf32>
    %196 = arith.addf %195, %194 : vector<2x128xf32>
    %197 = arith.divf %195, %196 : vector<2x128xf32>
    %198 = vector.extract_strided_slice %185 {offsets = [0, 256], sizes = [2, 128], strides = [1, 1]} : vector<2x512xf32> to vector<2x128xf32>
    %199 = math.tanh %198 : vector<2x128xf32>
    %200 = vector.extract_strided_slice %185 {offsets = [0, 384], sizes = [2, 128], strides = [1, 1]} : vector<2x512xf32> to vector<2x128xf32>
    %201 = arith.negf %200 : vector<2x128xf32>
    %202 = math.exp %201 : vector<2x128xf32>
    %cst_61 = arith.constant 1.000000e+00 : f32
    %203 = vector.broadcast %cst_61 : f32 to vector<2x128xf32>
    %204 = arith.addf %203, %202 : vector<2x128xf32>
    %205 = arith.divf %203, %204 : vector<2x128xf32>
    %206 = arith.mulf %197, %173 : vector<2x128xf32>
    %207 = arith.mulf %191, %199 : vector<2x128xf32>
    %208 = arith.addf %206, %207 : vector<2x128xf32>
    %209 = math.tanh %208 : vector<2x128xf32>
    %210 = arith.mulf %205, %209 : vector<2x128xf32>
    %211 = arith.index_cast %c5_i32 : i32 to index
    %c0_62 = arith.constant 0 : index
    %c0_63 = arith.constant 0 : index
    %212 = vector.load %arg5[%211, %c0_62, %c0_63] : memref<8x2x128xf32, #tpu.memory_space<vmem>>, vector<1x2x128xf32>
    %213 = vector.shape_cast %212 : vector<1x2x128xf32> to vector<2x128xf32>
    %214 = vector.shape_cast %210 : vector<2x128xf32> to vector<1x2x128xf32>
    tpu.vector_store %arg5[%211, %c0_62, %c0_63], %214 {strides = array<i32>} : memref<8x2x128xf32, #tpu.memory_space<vmem>>, vector<1x2x128xf32>,
    %c6_i32 = arith.constant 6 : i32
    %215 = arith.index_cast %c6_i32 : i32 to index
    %c0_64 = arith.constant 0 : index
    %c0_65 = arith.constant 0 : index
    %216 = vector.load %arg1[%215, %c0_64, %c0_65] : memref<8x2x512xf32, #tpu.memory_space<vmem>>, vector<1x2x512xf32>
    %217 = vector.shape_cast %216 : vector<1x2x512xf32> to vector<2x512xf32>
    %c0_66 = arith.constant 0 : index
    %c0_67 = arith.constant 0 : index
    %218 = vector.load %arg2[%c0_66, %c0_67] : memref<128x512xf32, #tpu.memory_space<vmem>>, vector<128x512xf32>
    %cst_68 = arith.constant dense<0.000000e+00> : vector<2x512xf32>
    %219 = tpu.matmul %210, %218, %cst_68 {dimension_numbers = #tpu.dot_dimension_numbers<[1], [0], [0], [1], [0, 0, 1, 1], [], []>} : vector<2x128xf32>, vector<128x512xf32>, vector<2x512xf32> -> vector<2x512xf32>
    %220 = arith.addf %217, %219 : vector<2x512xf32>
    %221 = vector.extract_strided_slice %220 {offsets = [0, 0], sizes = [2, 128], strides = [1, 1]} : vector<2x512xf32> to vector<2x128xf32>
    %222 = arith.negf %221 : vector<2x128xf32>
    %223 = math.exp %222 : vector<2x128xf32>
    %cst_69 = arith.constant 1.000000e+00 : f32
    %224 = vector.broadcast %cst_69 : f32 to vector<2x128xf32>
    %225 = arith.addf %224, %223 : vector<2x128xf32>
    %226 = arith.divf %224, %225 : vector<2x128xf32>
    %227 = vector.extract_strided_slice %220 {offsets = [0, 128], sizes = [2, 128], strides = [1, 1]} : vector<2x512xf32> to vector<2x128xf32>
    %228 = arith.negf %227 : vector<2x128xf32>
    %229 = math.exp %228 : vector<2x128xf32>
    %cst_70 = arith.constant 1.000000e+00 : f32
    %230 = vector.broadcast %cst_70 : f32 to vector<2x128xf32>
    %231 = arith.addf %230, %229 : vector<2x128xf32>
    %232 = arith.divf %230, %231 : vector<2x128xf32>
    %233 = vector.extract_strided_slice %220 {offsets = [0, 256], sizes = [2, 128], strides = [1, 1]} : vector<2x512xf32> to vector<2x128xf32>
    %234 = math.tanh %233 : vector<2x128xf32>
    %235 = vector.extract_strided_slice %220 {offsets = [0, 384], sizes = [2, 128], strides = [1, 1]} : vector<2x512xf32> to vector<2x128xf32>
    %236 = arith.negf %235 : vector<2x128xf32>
    %237 = math.exp %236 : vector<2x128xf32>
    %cst_71 = arith.constant 1.000000e+00 : f32
    %238 = vector.broadcast %cst_71 : f32 to vector<2x128xf32>
    %239 = arith.addf %238, %237 : vector<2x128xf32>
    %240 = arith.divf %238, %239 : vector<2x128xf32>
    %241 = arith.mulf %232, %208 : vector<2x128xf32>
    %242 = arith.mulf %226, %234 : vector<2x128xf32>
    %243 = arith.addf %241, %242 : vector<2x128xf32>
    %244 = math.tanh %243 : vector<2x128xf32>
    %245 = arith.mulf %240, %244 : vector<2x128xf32>
    %246 = arith.index_cast %c6_i32 : i32 to index
    %c0_72 = arith.constant 0 : index
    %c0_73 = arith.constant 0 : index
    %247 = vector.load %arg5[%246, %c0_72, %c0_73] : memref<8x2x128xf32, #tpu.memory_space<vmem>>, vector<1x2x128xf32>
    %248 = vector.shape_cast %247 : vector<1x2x128xf32> to vector<2x128xf32>
    %249 = vector.shape_cast %245 : vector<2x128xf32> to vector<1x2x128xf32>
    tpu.vector_store %arg5[%246, %c0_72, %c0_73], %249 {strides = array<i32>} : memref<8x2x128xf32, #tpu.memory_space<vmem>>, vector<1x2x128xf32>,
    %c7_i32 = arith.constant 7 : i32
    %250 = arith.index_cast %c7_i32 : i32 to index
    %c0_74 = arith.constant 0 : index
    %c0_75 = arith.constant 0 : index
    %251 = vector.load %arg1[%250, %c0_74, %c0_75] : memref<8x2x512xf32, #tpu.memory_space<vmem>>, vector<1x2x512xf32>
    %252 = vector.shape_cast %251 : vector<1x2x512xf32> to vector<2x512xf32>
    %c0_76 = arith.constant 0 : index
    %c0_77 = arith.constant 0 : index
    %253 = vector.load %arg2[%c0_76, %c0_77] : memref<128x512xf32, #tpu.memory_space<vmem>>, vector<128x512xf32>
    %cst_78 = arith.constant dense<0.000000e+00> : vector<2x512xf32>
    %254 = tpu.matmul %245, %253, %cst_78 {dimension_numbers = #tpu.dot_dimension_numbers<[1], [0], [0], [1], [0, 0, 1, 1], [], []>} : vector<2x128xf32>, vector<128x512xf32>, vector<2x512xf32> -> vector<2x512xf32>
    %255 = arith.addf %252, %254 : vector<2x512xf32>
    %256 = vector.extract_strided_slice %255 {offsets = [0, 0], sizes = [2, 128], strides = [1, 1]} : vector<2x512xf32> to vector<2x128xf32>
    %257 = arith.negf %256 : vector<2x128xf32>
    %258 = math.exp %257 : vector<2x128xf32>
    %cst_79 = arith.constant 1.000000e+00 : f32
    %259 = vector.broadcast %cst_79 : f32 to vector<2x128xf32>
    %260 = arith.addf %259, %258 : vector<2x128xf32>
    %261 = arith.divf %259, %260 : vector<2x128xf32>
    %262 = vector.extract_strided_slice %255 {offsets = [0, 128], sizes = [2, 128], strides = [1, 1]} : vector<2x512xf32> to vector<2x128xf32>
    %263 = arith.negf %262 : vector<2x128xf32>
    %264 = math.exp %263 : vector<2x128xf32>
    %cst_80 = arith.constant 1.000000e+00 : f32
    %265 = vector.broadcast %cst_80 : f32 to vector<2x128xf32>
    %266 = arith.addf %265, %264 : vector<2x128xf32>
    %267 = arith.divf %265, %266 : vector<2x128xf32>
    %268 = vector.extract_strided_slice %255 {offsets = [0, 256], sizes = [2, 128], strides = [1, 1]} : vector<2x512xf32> to vector<2x128xf32>
    %269 = math.tanh %268 : vector<2x128xf32>
    %270 = vector.extract_strided_slice %255 {offsets = [0, 384], sizes = [2, 128], strides = [1, 1]} : vector<2x512xf32> to vector<2x128xf32>
    %271 = arith.negf %270 : vector<2x128xf32>
    %272 = math.exp %271 : vector<2x128xf32>
    %cst_81 = arith.constant 1.000000e+00 : f32
    %273 = vector.broadcast %cst_81 : f32 to vector<2x128xf32>
    %274 = arith.addf %273, %272 : vector<2x128xf32>
    %275 = arith.divf %273, %274 : vector<2x128xf32>
    %276 = arith.mulf %267, %243 : vector<2x128xf32>
    %277 = arith.mulf %261, %269 : vector<2x128xf32>
    %278 = arith.addf %276, %277 : vector<2x128xf32>
    %279 = math.tanh %278 : vector<2x128xf32>
    %280 = arith.mulf %275, %279 : vector<2x128xf32>
    %281 = arith.index_cast %c7_i32 : i32 to index
    %c0_82 = arith.constant 0 : index
    %c0_83 = arith.constant 0 : index
    %282 = vector.load %arg5[%281, %c0_82, %c0_83] : memref<8x2x128xf32, #tpu.memory_space<vmem>>, vector<1x2x128xf32>
    %283 = vector.shape_cast %282 : vector<1x2x128xf32> to vector<2x128xf32>
    %284 = vector.shape_cast %280 : vector<2x128xf32> to vector<1x2x128xf32>
    tpu.vector_store %arg5[%281, %c0_82, %c0_83], %284 {strides = array<i32>} : memref<8x2x128xf32, #tpu.memory_space<vmem>>, vector<1x2x128xf32>,
    %c8_i32 = arith.constant 8 : i32
    %c0_84 = arith.constant 0 : index
    %c0_85 = arith.constant 0 : index
    %285 = vector.load %arg8[%c0_84, %c0_85] : memref<2x128xf32, #tpu.memory_space<vmem>>, vector<2x128xf32>
    tpu.vector_store %arg8[%c0_84, %c0_85], %280 {strides = array<i32>} : memref<2x128xf32, #tpu.memory_space<vmem>>, vector<2x128xf32>,
    %c0_86 = arith.constant 0 : index
    %c0_87 = arith.constant 0 : index
    %286 = vector.load %arg9[%c0_86, %c0_87] : memref<2x128xf32, #tpu.memory_space<vmem>>, vector<2x128xf32>
    tpu.vector_store %arg9[%c0_86, %c0_87], %278 {strides = array<i32>} : memref<2x128xf32, #tpu.memory_space<vmem>>, vector<2x128xf32>,
    %c0_i32_88 = arith.constant 0 : i32
    %287 = arith.cmpi eq, %arg0, %c0_i32_88 : i32
    %288 = arith.extui %287 : i1 to i32
    %c0_i32_89 = arith.constant 0 : i32
    %289 = arith.cmpi ne, %288, %c0_i32_89 : i32
    scf.if %289 {
      %c0_90 = arith.constant 0 : index
      %c0_91 = arith.constant 0 : index
      %290 = vector.load %arg6[%c0_90, %c0_91] : memref<2x128xf32, #tpu.memory_space<vmem>>, vector<2x128xf32>
      tpu.vector_store %arg6[%c0_90, %c0_91], %280 {strides = array<i32>} : memref<2x128xf32, #tpu.memory_space<vmem>>, vector<2x128xf32>,
      %c0_92 = arith.constant 0 : index
      %c0_93 = arith.constant 0 : index
      %291 = vector.load %arg7[%c0_92, %c0_93] : memref<2x128xf32, #tpu.memory_space<vmem>>, vector<2x128xf32>
      tpu.vector_store %arg7[%c0_92, %c0_93], %278 {strides = array<i32>} : memref<2x128xf32, #tpu.memory_space<vmem>>, vector<2x128xf32>,
    } else {
    }
    return
  }
  func.func @transform_0(%arg0: i32) -> (i32, i32, i32) {
    %c0_i32 = arith.constant 0 : i32
    %c0_i32_0 = arith.constant 0 : i32
    %c0_i32_1 = arith.constant 0 : i32
    return %arg0, %c0_i32, %c0_i32_0 : i32, i32, i32
  }
  func.func @transform_1(%arg0: i32) -> (i32, i32) {
    %c0_i32 = arith.constant 0 : i32
    %c0_i32_0 = arith.constant 0 : i32
    %c0_i32_1 = arith.constant 0 : i32
    return %c0_i32, %c0_i32_0 : i32, i32
  }
  func.func @transform_2(%arg0: i32) -> (i32, i32) {
    %c0_i32 = arith.constant 0 : i32
    %c0_i32_0 = arith.constant 0 : i32
    %c0_i32_1 = arith.constant 0 : i32
    return %c0_i32, %c0_i32_0 : i32, i32
  }
  func.func @transform_3(%arg0: i32) -> (i32, i32) {
    %c0_i32 = arith.constant 0 : i32
    %c0_i32_0 = arith.constant 0 : i32
    %c0_i32_1 = arith.constant 0 : i32
    return %c0_i32, %c0_i32_0 : i32, i32
  }
  func.func @transform_4(%arg0: i32) -> (i32, i32, i32) {
    %c0_i32 = arith.constant 0 : i32
    %c0_i32_0 = arith.constant 0 : i32
    %c0_i32_1 = arith.constant 0 : i32
    return %arg0, %c0_i32, %c0_i32_0 : i32, i32, i32
  }
  func.func @transform_5(%arg0: i32) -> (i32, i32) {
    %c0_i32 = arith.constant 0 : i32
    %c0_i32_0 = arith.constant 0 : i32
    %c0_i32_1 = arith.constant 0 : i32
    return %c0_i32, %c0_i32_0 : i32, i32
  }
  func.func @transform_6(%arg0: i32) -> (i32, i32) {
    %c0_i32 = arith.constant 0 : i32
    %c0_i32_0 = arith.constant 0 : i32
    %c0_i32_1 = arith.constant 0 : i32
    return %c0_i32, %c0_i32_0 : i32, i32
  }
}

module attributes {stable_mosaic.version = 11 : i64} {
  func.func @_input_proj_kernel(%arg0: i32, %arg1: memref<16x128xf32, #tpu.memory_space<vmem>>, %arg2: memref<128x512xf32, #tpu.memory_space<vmem>>, %arg3: memref<1x512xf32, #tpu.memory_space<vmem>>, %arg4: memref<16x512xf32, #tpu.memory_space<vmem>>) attributes {dimension_semantics = [#tpu.dimension_semantics<parallel>], iteration_bounds = array<i64: 1>, scalar_prefetch = 0 : i64, scratch_operands = 0 : i64, tpu.core_type = #tpu.core_type<tc>, window_params = [{transform_indices = @transform_0, window_bounds = array<i64: 16, 128>}, {pipeline_mode = #tpu.pipeline_mode<synchronous>, transform_indices = @transform_1, window_bounds = array<i64: 128, 512>}, {pipeline_mode = #tpu.pipeline_mode<synchronous>, transform_indices = @transform_2, window_bounds = array<i64: 1, 512>}, {transform_indices = @transform_3, window_bounds = array<i64: 16, 512>}]} {
    %c0 = arith.constant 0 : index
    %c0_0 = arith.constant 0 : index
    %0 = vector.load %arg1[%c0, %c0_0] : memref<16x128xf32, #tpu.memory_space<vmem>>, vector<16x128xf32>
    %c0_1 = arith.constant 0 : index
    %c0_2 = arith.constant 0 : index
    %1 = vector.load %arg2[%c0_1, %c0_2] : memref<128x512xf32, #tpu.memory_space<vmem>>, vector<128x512xf32>
    %cst = arith.constant dense<0.000000e+00> : vector<16x512xf32>
    %2 = tpu.matmul %0, %1, %cst {dimension_numbers = #tpu.dot_dimension_numbers<[1], [0], [0], [1], [0, 0, 1, 1], [], []>} : vector<16x128xf32>, vector<128x512xf32>, vector<16x512xf32> -> vector<16x512xf32>
    %c0_3 = arith.constant 0 : index
    %c0_4 = arith.constant 0 : index
    %3 = vector.load %arg3[%c0_3, %c0_4] : memref<1x512xf32, #tpu.memory_space<vmem>>, vector<1x512xf32>
    %4 = vector.broadcast %3 : vector<1x512xf32> to vector<16x512xf32>
    %5 = arith.addf %2, %4 : vector<16x512xf32>
    %c0_5 = arith.constant 0 : index
    %c0_6 = arith.constant 0 : index
    %6 = vector.load %arg4[%c0_5, %c0_6] : memref<16x512xf32, #tpu.memory_space<vmem>>, vector<16x512xf32>
    tpu.vector_store %arg4[%c0_5, %c0_6], %5 {strides = array<i32>} : memref<16x512xf32, #tpu.memory_space<vmem>>, vector<16x512xf32>,
    return
  }
  func.func @transform_0(%arg0: i32) -> (i32, i32) {
    %c0_i32 = arith.constant 0 : i32
    %c0_i32_0 = arith.constant 0 : i32
    return %arg0, %c0_i32 : i32, i32
  }
  func.func @transform_1(%arg0: i32) -> (i32, i32) {
    %c0_i32 = arith.constant 0 : i32
    %c0_i32_0 = arith.constant 0 : i32
    %c0_i32_1 = arith.constant 0 : i32
    return %c0_i32, %c0_i32_0 : i32, i32
  }
  func.func @transform_2(%arg0: i32) -> (i32, i32) {
    %c0_i32 = arith.constant 0 : i32
    %c0_i32_0 = arith.constant 0 : i32
    %c0_i32_1 = arith.constant 0 : i32
    return %c0_i32, %c0_i32_0 : i32, i32
  }
  func.func @transform_3(%arg0: i32) -> (i32, i32) {
    %c0_i32 = arith.constant 0 : i32
    %c0_i32_0 = arith.constant 0 : i32
    return %arg0, %c0_i32 : i32, i32
  }
}

module attributes {stable_mosaic.version = 11 : i64} {
  func.func @_lstm_recurrence_kernel(%arg0: i32, %arg1: memref<8x2x512xf32, #tpu.memory_space<vmem>>, %arg2: memref<128x512xf32, #tpu.memory_space<vmem>>, %arg3: memref<2x128xf32, #tpu.memory_space<vmem>>, %arg4: memref<2x128xf32, #tpu.memory_space<vmem>>, %arg5: memref<8x2x128xf32, #tpu.memory_space<vmem>>, %arg6: memref<2x128xf32, #tpu.memory_space<vmem>>, %arg7: memref<2x128xf32, #tpu.memory_space<vmem>>, %arg8: memref<2x128xf32, #tpu.memory_space<vmem>>, %arg9: memref<2x128xf32, #tpu.memory_space<vmem>>) attributes {dimension_semantics = [#tpu.dimension_semantics<arbitrary>], iteration_bounds = array<i64: 1>, scalar_prefetch = 0 : i64, scratch_operands = 2 : i64, tpu.core_type = #tpu.core_type<tc>, window_params = [{transform_indices = @transform_0, window_bounds = array<i64: 8, 2, 512>}, {pipeline_mode = #tpu.pipeline_mode<synchronous>, transform_indices = @transform_1, window_bounds = array<i64: 128, 512>}, {pipeline_mode = #tpu.pipeline_mode<synchronous>, transform_indices = @transform_2, window_bounds = array<i64: 2, 128>}, {pipeline_mode = #tpu.pipeline_mode<synchronous>, transform_indices = @transform_3, window_bounds = array<i64: 2, 128>}, {transform_indices = @transform_4, window_bounds = array<i64: 8, 2, 128>}, {pipeline_mode = #tpu.pipeline_mode<synchronous>, transform_indices = @transform_5, window_bounds = array<i64: 2, 128>}, {pipeline_mode = #tpu.pipeline_mode<synchronous>, transform_indices = @transform_6, window_bounds = array<i64: 2, 128>}]} {
    %c0_i32 = arith.constant 0 : i32
    %0 = arith.cmpi eq, %arg0, %c0_i32 : i32
    %1 = arith.extui %0 : i1 to i32
    %c0_i32_0 = arith.constant 0 : i32
    %2 = arith.cmpi ne, %1, %c0_i32_0 : i32
    scf.if %2 {
      %c0_90 = arith.constant 0 : index
      %c0_91 = arith.constant 0 : index
      %290 = vector.load %arg3[%c0_90, %c0_91] : memref<2x128xf32, #tpu.memory_space<vmem>>, vector<2x128xf32>
      %c0_92 = arith.constant 0 : index
      %c0_93 = arith.constant 0 : index
      %291 = vector.load %arg8[%c0_92, %c0_93] : memref<2x128xf32, #tpu.memory_space<vmem>>, vector<2x128xf32>
      tpu.vector_store %arg8[%c0_92, %c0_93], %290 {strides = array<i32>} : memref<2x128xf32, #tpu.memory_space<vmem>>, vector<2x128xf32>,
      %c0_94 = arith.constant 0 : index
      %c0_95 = arith.constant 0 : index
      %292 = vector.load %arg4[%c0_94, %c0_95] : memref<2x128xf32, #tpu.memory_space<vmem>>, vector<2x128xf32>
      %c0_96 = arith.constant 0 : index
      %c0_97 = arith.constant 0 : index
      %293 = vector.load %arg9[%c0_96, %c0_97] : memref<2x128xf32, #tpu.memory_space<vmem>>, vector<2x128xf32>
      tpu.vector_store %arg9[%c0_96, %c0_97], %292 {strides = array<i32>} : memref<2x128xf32, #tpu.memory_space<vmem>>, vector<2x128xf32>,
    } else {
    }
    %c0 = arith.constant 0 : index
    %c0_1 = arith.constant 0 : index
    %3 = vector.load %arg8[%c0, %c0_1] : memref<2x128xf32, #tpu.memory_space<vmem>>, vector<2x128xf32>
    %c0_2 = arith.constant 0 : index
    %c0_3 = arith.constant 0 : index
    %4 = vector.load %arg9[%c0_2, %c0_3] : memref<2x128xf32, #tpu.memory_space<vmem>>, vector<2x128xf32>
    %c0_i32_4 = arith.constant 0 : i32
    %5 = arith.index_cast %c0_i32_4 : i32 to index
    %c0_5 = arith.constant 0 : index
    %c0_6 = arith.constant 0 : index
    %6 = vector.load %arg1[%5, %c0_5, %c0_6] : memref<8x2x512xf32, #tpu.memory_space<vmem>>, vector<1x2x512xf32>
    %7 = vector.shape_cast %6 : vector<1x2x512xf32> to vector<2x512xf32>
    %c0_7 = arith.constant 0 : index
    %c0_8 = arith.constant 0 : index
    %8 = vector.load %arg2[%c0_7, %c0_8] : memref<128x512xf32, #tpu.memory_space<vmem>>, vector<128x512xf32>
    %cst = arith.constant dense<0.000000e+00> : vector<2x512xf32>
    %9 = tpu.matmul %3, %8, %cst {dimension_numbers = #tpu.dot_dimension_numbers<[1], [0], [0], [1], [0, 0, 1, 1], [], []>} : vector<2x128xf32>, vector<128x512xf32>, vector<2x512xf32> -> vector<2x512xf32>
    %10 = arith.addf %7, %9 : vector<2x512xf32>
    %11 = vector.extract_strided_slice %10 {offsets = [0, 0], sizes = [2, 128], strides = [1, 1]} : vector<2x512xf32> to vector<2x128xf32>
    %12 = arith.negf %11 : vector<2x128xf32>
    %13 = math.exp %12 : vector<2x128xf32>
    %cst_9 = arith.constant 1.000000e+00 : f32
    %14 = vector.broadcast %cst_9 : f32 to vector<2x128xf32>
    %15 = arith.addf %14, %13 : vector<2x128xf32>
    %16 = arith.divf %14, %15 : vector<2x128xf32>
    %17 = vector.extract_strided_slice %10 {offsets = [0, 128], sizes = [2, 128], strides = [1, 1]} : vector<2x512xf32> to vector<2x128xf32>
    %18 = arith.negf %17 : vector<2x128xf32>
    %19 = math.exp %18 : vector<2x128xf32>
    %cst_10 = arith.constant 1.000000e+00 : f32
    %20 = vector.broadcast %cst_10 : f32 to vector<2x128xf32>
    %21 = arith.addf %20, %19 : vector<2x128xf32>
    %22 = arith.divf %20, %21 : vector<2x128xf32>
    %23 = vector.extract_strided_slice %10 {offsets = [0, 256], sizes = [2, 128], strides = [1, 1]} : vector<2x512xf32> to vector<2x128xf32>
    %24 = math.tanh %23 : vector<2x128xf32>
    %25 = vector.extract_strided_slice %10 {offsets = [0, 384], sizes = [2, 128], strides = [1, 1]} : vector<2x512xf32> to vector<2x128xf32>
    %26 = arith.negf %25 : vector<2x128xf32>
    %27 = math.exp %26 : vector<2x128xf32>
    %cst_11 = arith.constant 1.000000e+00 : f32
    %28 = vector.broadcast %cst_11 : f32 to vector<2x128xf32>
    %29 = arith.addf %28, %27 : vector<2x128xf32>
    %30 = arith.divf %28, %29 : vector<2x128xf32>
    %31 = arith.mulf %22, %4 : vector<2x128xf32>
    %32 = arith.mulf %16, %24 : vector<2x128xf32>
    %33 = arith.addf %31, %32 : vector<2x128xf32>
    %34 = math.tanh %33 : vector<2x128xf32>
    %35 = arith.mulf %30, %34 : vector<2x128xf32>
    %36 = arith.index_cast %c0_i32_4 : i32 to index
    %c0_12 = arith.constant 0 : index
    %c0_13 = arith.constant 0 : index
    %37 = vector.load %arg5[%36, %c0_12, %c0_13] : memref<8x2x128xf32, #tpu.memory_space<vmem>>, vector<1x2x128xf32>
    %38 = vector.shape_cast %37 : vector<1x2x128xf32> to vector<2x128xf32>
    %39 = vector.shape_cast %35 : vector<2x128xf32> to vector<1x2x128xf32>
    tpu.vector_store %arg5[%36, %c0_12, %c0_13], %39 {strides = array<i32>} : memref<8x2x128xf32, #tpu.memory_space<vmem>>, vector<1x2x128xf32>,
    %c1_i32 = arith.constant 1 : i32
    %40 = arith.index_cast %c1_i32 : i32 to index
    %c0_14 = arith.constant 0 : index
    %c0_15 = arith.constant 0 : index
    %41 = vector.load %arg1[%40, %c0_14, %c0_15] : memref<8x2x512xf32, #tpu.memory_space<vmem>>, vector<1x2x512xf32>
    %42 = vector.shape_cast %41 : vector<1x2x512xf32> to vector<2x512xf32>
    %c0_16 = arith.constant 0 : index
    %c0_17 = arith.constant 0 : index
    %43 = vector.load %arg2[%c0_16, %c0_17] : memref<128x512xf32, #tpu.memory_space<vmem>>, vector<128x512xf32>
    %cst_18 = arith.constant dense<0.000000e+00> : vector<2x512xf32>
    %44 = tpu.matmul %35, %43, %cst_18 {dimension_numbers = #tpu.dot_dimension_numbers<[1], [0], [0], [1], [0, 0, 1, 1], [], []>} : vector<2x128xf32>, vector<128x512xf32>, vector<2x512xf32> -> vector<2x512xf32>
    %45 = arith.addf %42, %44 : vector<2x512xf32>
    %46 = vector.extract_strided_slice %45 {offsets = [0, 0], sizes = [2, 128], strides = [1, 1]} : vector<2x512xf32> to vector<2x128xf32>
    %47 = arith.negf %46 : vector<2x128xf32>
    %48 = math.exp %47 : vector<2x128xf32>
    %cst_19 = arith.constant 1.000000e+00 : f32
    %49 = vector.broadcast %cst_19 : f32 to vector<2x128xf32>
    %50 = arith.addf %49, %48 : vector<2x128xf32>
    %51 = arith.divf %49, %50 : vector<2x128xf32>
    %52 = vector.extract_strided_slice %45 {offsets = [0, 128], sizes = [2, 128], strides = [1, 1]} : vector<2x512xf32> to vector<2x128xf32>
    %53 = arith.negf %52 : vector<2x128xf32>
    %54 = math.exp %53 : vector<2x128xf32>
    %cst_20 = arith.constant 1.000000e+00 : f32
    %55 = vector.broadcast %cst_20 : f32 to vector<2x128xf32>
    %56 = arith.addf %55, %54 : vector<2x128xf32>
    %57 = arith.divf %55, %56 : vector<2x128xf32>
    %58 = vector.extract_strided_slice %45 {offsets = [0, 256], sizes = [2, 128], strides = [1, 1]} : vector<2x512xf32> to vector<2x128xf32>
    %59 = math.tanh %58 : vector<2x128xf32>
    %60 = vector.extract_strided_slice %45 {offsets = [0, 384], sizes = [2, 128], strides = [1, 1]} : vector<2x512xf32> to vector<2x128xf32>
    %61 = arith.negf %60 : vector<2x128xf32>
    %62 = math.exp %61 : vector<2x128xf32>
    %cst_21 = arith.constant 1.000000e+00 : f32
    %63 = vector.broadcast %cst_21 : f32 to vector<2x128xf32>
    %64 = arith.addf %63, %62 : vector<2x128xf32>
    %65 = arith.divf %63, %64 : vector<2x128xf32>
    %66 = arith.mulf %57, %33 : vector<2x128xf32>
    %67 = arith.mulf %51, %59 : vector<2x128xf32>
    %68 = arith.addf %66, %67 : vector<2x128xf32>
    %69 = math.tanh %68 : vector<2x128xf32>
    %70 = arith.mulf %65, %69 : vector<2x128xf32>
    %71 = arith.index_cast %c1_i32 : i32 to index
    %c0_22 = arith.constant 0 : index
    %c0_23 = arith.constant 0 : index
    %72 = vector.load %arg5[%71, %c0_22, %c0_23] : memref<8x2x128xf32, #tpu.memory_space<vmem>>, vector<1x2x128xf32>
    %73 = vector.shape_cast %72 : vector<1x2x128xf32> to vector<2x128xf32>
    %74 = vector.shape_cast %70 : vector<2x128xf32> to vector<1x2x128xf32>
    tpu.vector_store %arg5[%71, %c0_22, %c0_23], %74 {strides = array<i32>} : memref<8x2x128xf32, #tpu.memory_space<vmem>>, vector<1x2x128xf32>,
    %c2_i32 = arith.constant 2 : i32
    %75 = arith.index_cast %c2_i32 : i32 to index
    %c0_24 = arith.constant 0 : index
    %c0_25 = arith.constant 0 : index
    %76 = vector.load %arg1[%75, %c0_24, %c0_25] : memref<8x2x512xf32, #tpu.memory_space<vmem>>, vector<1x2x512xf32>
    %77 = vector.shape_cast %76 : vector<1x2x512xf32> to vector<2x512xf32>
    %c0_26 = arith.constant 0 : index
    %c0_27 = arith.constant 0 : index
    %78 = vector.load %arg2[%c0_26, %c0_27] : memref<128x512xf32, #tpu.memory_space<vmem>>, vector<128x512xf32>
    %cst_28 = arith.constant dense<0.000000e+00> : vector<2x512xf32>
    %79 = tpu.matmul %70, %78, %cst_28 {dimension_numbers = #tpu.dot_dimension_numbers<[1], [0], [0], [1], [0, 0, 1, 1], [], []>} : vector<2x128xf32>, vector<128x512xf32>, vector<2x512xf32> -> vector<2x512xf32>
    %80 = arith.addf %77, %79 : vector<2x512xf32>
    %81 = vector.extract_strided_slice %80 {offsets = [0, 0], sizes = [2, 128], strides = [1, 1]} : vector<2x512xf32> to vector<2x128xf32>
    %82 = arith.negf %81 : vector<2x128xf32>
    %83 = math.exp %82 : vector<2x128xf32>
    %cst_29 = arith.constant 1.000000e+00 : f32
    %84 = vector.broadcast %cst_29 : f32 to vector<2x128xf32>
    %85 = arith.addf %84, %83 : vector<2x128xf32>
    %86 = arith.divf %84, %85 : vector<2x128xf32>
    %87 = vector.extract_strided_slice %80 {offsets = [0, 128], sizes = [2, 128], strides = [1, 1]} : vector<2x512xf32> to vector<2x128xf32>
    %88 = arith.negf %87 : vector<2x128xf32>
    %89 = math.exp %88 : vector<2x128xf32>
    %cst_30 = arith.constant 1.000000e+00 : f32
    %90 = vector.broadcast %cst_30 : f32 to vector<2x128xf32>
    %91 = arith.addf %90, %89 : vector<2x128xf32>
    %92 = arith.divf %90, %91 : vector<2x128xf32>
    %93 = vector.extract_strided_slice %80 {offsets = [0, 256], sizes = [2, 128], strides = [1, 1]} : vector<2x512xf32> to vector<2x128xf32>
    %94 = math.tanh %93 : vector<2x128xf32>
    %95 = vector.extract_strided_slice %80 {offsets = [0, 384], sizes = [2, 128], strides = [1, 1]} : vector<2x512xf32> to vector<2x128xf32>
    %96 = arith.negf %95 : vector<2x128xf32>
    %97 = math.exp %96 : vector<2x128xf32>
    %cst_31 = arith.constant 1.000000e+00 : f32
    %98 = vector.broadcast %cst_31 : f32 to vector<2x128xf32>
    %99 = arith.addf %98, %97 : vector<2x128xf32>
    %100 = arith.divf %98, %99 : vector<2x128xf32>
    %101 = arith.mulf %92, %68 : vector<2x128xf32>
    %102 = arith.mulf %86, %94 : vector<2x128xf32>
    %103 = arith.addf %101, %102 : vector<2x128xf32>
    %104 = math.tanh %103 : vector<2x128xf32>
    %105 = arith.mulf %100, %104 : vector<2x128xf32>
    %106 = arith.index_cast %c2_i32 : i32 to index
    %c0_32 = arith.constant 0 : index
    %c0_33 = arith.constant 0 : index
    %107 = vector.load %arg5[%106, %c0_32, %c0_33] : memref<8x2x128xf32, #tpu.memory_space<vmem>>, vector<1x2x128xf32>
    %108 = vector.shape_cast %107 : vector<1x2x128xf32> to vector<2x128xf32>
    %109 = vector.shape_cast %105 : vector<2x128xf32> to vector<1x2x128xf32>
    tpu.vector_store %arg5[%106, %c0_32, %c0_33], %109 {strides = array<i32>} : memref<8x2x128xf32, #tpu.memory_space<vmem>>, vector<1x2x128xf32>,
    %c3_i32 = arith.constant 3 : i32
    %110 = arith.index_cast %c3_i32 : i32 to index
    %c0_34 = arith.constant 0 : index
    %c0_35 = arith.constant 0 : index
    %111 = vector.load %arg1[%110, %c0_34, %c0_35] : memref<8x2x512xf32, #tpu.memory_space<vmem>>, vector<1x2x512xf32>
    %112 = vector.shape_cast %111 : vector<1x2x512xf32> to vector<2x512xf32>
    %c0_36 = arith.constant 0 : index
    %c0_37 = arith.constant 0 : index
    %113 = vector.load %arg2[%c0_36, %c0_37] : memref<128x512xf32, #tpu.memory_space<vmem>>, vector<128x512xf32>
    %cst_38 = arith.constant dense<0.000000e+00> : vector<2x512xf32>
    %114 = tpu.matmul %105, %113, %cst_38 {dimension_numbers = #tpu.dot_dimension_numbers<[1], [0], [0], [1], [0, 0, 1, 1], [], []>} : vector<2x128xf32>, vector<128x512xf32>, vector<2x512xf32> -> vector<2x512xf32>
    %115 = arith.addf %112, %114 : vector<2x512xf32>
    %116 = vector.extract_strided_slice %115 {offsets = [0, 0], sizes = [2, 128], strides = [1, 1]} : vector<2x512xf32> to vector<2x128xf32>
    %117 = arith.negf %116 : vector<2x128xf32>
    %118 = math.exp %117 : vector<2x128xf32>
    %cst_39 = arith.constant 1.000000e+00 : f32
    %119 = vector.broadcast %cst_39 : f32 to vector<2x128xf32>
    %120 = arith.addf %119, %118 : vector<2x128xf32>
    %121 = arith.divf %119, %120 : vector<2x128xf32>
    %122 = vector.extract_strided_slice %115 {offsets = [0, 128], sizes = [2, 128], strides = [1, 1]} : vector<2x512xf32> to vector<2x128xf32>
    %123 = arith.negf %122 : vector<2x128xf32>
    %124 = math.exp %123 : vector<2x128xf32>
    %cst_40 = arith.constant 1.000000e+00 : f32
    %125 = vector.broadcast %cst_40 : f32 to vector<2x128xf32>
    %126 = arith.addf %125, %124 : vector<2x128xf32>
    %127 = arith.divf %125, %126 : vector<2x128xf32>
    %128 = vector.extract_strided_slice %115 {offsets = [0, 256], sizes = [2, 128], strides = [1, 1]} : vector<2x512xf32> to vector<2x128xf32>
    %129 = math.tanh %128 : vector<2x128xf32>
    %130 = vector.extract_strided_slice %115 {offsets = [0, 384], sizes = [2, 128], strides = [1, 1]} : vector<2x512xf32> to vector<2x128xf32>
    %131 = arith.negf %130 : vector<2x128xf32>
    %132 = math.exp %131 : vector<2x128xf32>
    %cst_41 = arith.constant 1.000000e+00 : f32
    %133 = vector.broadcast %cst_41 : f32 to vector<2x128xf32>
    %134 = arith.addf %133, %132 : vector<2x128xf32>
    %135 = arith.divf %133, %134 : vector<2x128xf32>
    %136 = arith.mulf %127, %103 : vector<2x128xf32>
    %137 = arith.mulf %121, %129 : vector<2x128xf32>
    %138 = arith.addf %136, %137 : vector<2x128xf32>
    %139 = math.tanh %138 : vector<2x128xf32>
    %140 = arith.mulf %135, %139 : vector<2x128xf32>
    %141 = arith.index_cast %c3_i32 : i32 to index
    %c0_42 = arith.constant 0 : index
    %c0_43 = arith.constant 0 : index
    %142 = vector.load %arg5[%141, %c0_42, %c0_43] : memref<8x2x128xf32, #tpu.memory_space<vmem>>, vector<1x2x128xf32>
    %143 = vector.shape_cast %142 : vector<1x2x128xf32> to vector<2x128xf32>
    %144 = vector.shape_cast %140 : vector<2x128xf32> to vector<1x2x128xf32>
    tpu.vector_store %arg5[%141, %c0_42, %c0_43], %144 {strides = array<i32>} : memref<8x2x128xf32, #tpu.memory_space<vmem>>, vector<1x2x128xf32>,
    %c4_i32 = arith.constant 4 : i32
    %145 = arith.index_cast %c4_i32 : i32 to index
    %c0_44 = arith.constant 0 : index
    %c0_45 = arith.constant 0 : index
    %146 = vector.load %arg1[%145, %c0_44, %c0_45] : memref<8x2x512xf32, #tpu.memory_space<vmem>>, vector<1x2x512xf32>
    %147 = vector.shape_cast %146 : vector<1x2x512xf32> to vector<2x512xf32>
    %c0_46 = arith.constant 0 : index
    %c0_47 = arith.constant 0 : index
    %148 = vector.load %arg2[%c0_46, %c0_47] : memref<128x512xf32, #tpu.memory_space<vmem>>, vector<128x512xf32>
    %cst_48 = arith.constant dense<0.000000e+00> : vector<2x512xf32>
    %149 = tpu.matmul %140, %148, %cst_48 {dimension_numbers = #tpu.dot_dimension_numbers<[1], [0], [0], [1], [0, 0, 1, 1], [], []>} : vector<2x128xf32>, vector<128x512xf32>, vector<2x512xf32> -> vector<2x512xf32>
    %150 = arith.addf %147, %149 : vector<2x512xf32>
    %151 = vector.extract_strided_slice %150 {offsets = [0, 0], sizes = [2, 128], strides = [1, 1]} : vector<2x512xf32> to vector<2x128xf32>
    %152 = arith.negf %151 : vector<2x128xf32>
    %153 = math.exp %152 : vector<2x128xf32>
    %cst_49 = arith.constant 1.000000e+00 : f32
    %154 = vector.broadcast %cst_49 : f32 to vector<2x128xf32>
    %155 = arith.addf %154, %153 : vector<2x128xf32>
    %156 = arith.divf %154, %155 : vector<2x128xf32>
    %157 = vector.extract_strided_slice %150 {offsets = [0, 128], sizes = [2, 128], strides = [1, 1]} : vector<2x512xf32> to vector<2x128xf32>
    %158 = arith.negf %157 : vector<2x128xf32>
    %159 = math.exp %158 : vector<2x128xf32>
    %cst_50 = arith.constant 1.000000e+00 : f32
    %160 = vector.broadcast %cst_50 : f32 to vector<2x128xf32>
    %161 = arith.addf %160, %159 : vector<2x128xf32>
    %162 = arith.divf %160, %161 : vector<2x128xf32>
    %163 = vector.extract_strided_slice %150 {offsets = [0, 256], sizes = [2, 128], strides = [1, 1]} : vector<2x512xf32> to vector<2x128xf32>
    %164 = math.tanh %163 : vector<2x128xf32>
    %165 = vector.extract_strided_slice %150 {offsets = [0, 384], sizes = [2, 128], strides = [1, 1]} : vector<2x512xf32> to vector<2x128xf32>
    %166 = arith.negf %165 : vector<2x128xf32>
    %167 = math.exp %166 : vector<2x128xf32>
    %cst_51 = arith.constant 1.000000e+00 : f32
    %168 = vector.broadcast %cst_51 : f32 to vector<2x128xf32>
    %169 = arith.addf %168, %167 : vector<2x128xf32>
    %170 = arith.divf %168, %169 : vector<2x128xf32>
    %171 = arith.mulf %162, %138 : vector<2x128xf32>
    %172 = arith.mulf %156, %164 : vector<2x128xf32>
    %173 = arith.addf %171, %172 : vector<2x128xf32>
    %174 = math.tanh %173 : vector<2x128xf32>
    %175 = arith.mulf %170, %174 : vector<2x128xf32>
    %176 = arith.index_cast %c4_i32 : i32 to index
    %c0_52 = arith.constant 0 : index
    %c0_53 = arith.constant 0 : index
    %177 = vector.load %arg5[%176, %c0_52, %c0_53] : memref<8x2x128xf32, #tpu.memory_space<vmem>>, vector<1x2x128xf32>
    %178 = vector.shape_cast %177 : vector<1x2x128xf32> to vector<2x128xf32>
    %179 = vector.shape_cast %175 : vector<2x128xf32> to vector<1x2x128xf32>
    tpu.vector_store %arg5[%176, %c0_52, %c0_53], %179 {strides = array<i32>} : memref<8x2x128xf32, #tpu.memory_space<vmem>>, vector<1x2x128xf32>,
    %c5_i32 = arith.constant 5 : i32
    %180 = arith.index_cast %c5_i32 : i32 to index
    %c0_54 = arith.constant 0 : index
    %c0_55 = arith.constant 0 : index
    %181 = vector.load %arg1[%180, %c0_54, %c0_55] : memref<8x2x512xf32, #tpu.memory_space<vmem>>, vector<1x2x512xf32>
    %182 = vector.shape_cast %181 : vector<1x2x512xf32> to vector<2x512xf32>
    %c0_56 = arith.constant 0 : index
    %c0_57 = arith.constant 0 : index
    %183 = vector.load %arg2[%c0_56, %c0_57] : memref<128x512xf32, #tpu.memory_space<vmem>>, vector<128x512xf32>
    %cst_58 = arith.constant dense<0.000000e+00> : vector<2x512xf32>
    %184 = tpu.matmul %175, %183, %cst_58 {dimension_numbers = #tpu.dot_dimension_numbers<[1], [0], [0], [1], [0, 0, 1, 1], [], []>} : vector<2x128xf32>, vector<128x512xf32>, vector<2x512xf32> -> vector<2x512xf32>
    %185 = arith.addf %182, %184 : vector<2x512xf32>
    %186 = vector.extract_strided_slice %185 {offsets = [0, 0], sizes = [2, 128], strides = [1, 1]} : vector<2x512xf32> to vector<2x128xf32>
    %187 = arith.negf %186 : vector<2x128xf32>
    %188 = math.exp %187 : vector<2x128xf32>
    %cst_59 = arith.constant 1.000000e+00 : f32
    %189 = vector.broadcast %cst_59 : f32 to vector<2x128xf32>
    %190 = arith.addf %189, %188 : vector<2x128xf32>
    %191 = arith.divf %189, %190 : vector<2x128xf32>
    %192 = vector.extract_strided_slice %185 {offsets = [0, 128], sizes = [2, 128], strides = [1, 1]} : vector<2x512xf32> to vector<2x128xf32>
    %193 = arith.negf %192 : vector<2x128xf32>
    %194 = math.exp %193 : vector<2x128xf32>
    %cst_60 = arith.constant 1.000000e+00 : f32
    %195 = vector.broadcast %cst_60 : f32 to vector<2x128xf32>
    %196 = arith.addf %195, %194 : vector<2x128xf32>
    %197 = arith.divf %195, %196 : vector<2x128xf32>
    %198 = vector.extract_strided_slice %185 {offsets = [0, 256], sizes = [2, 128], strides = [1, 1]} : vector<2x512xf32> to vector<2x128xf32>
    %199 = math.tanh %198 : vector<2x128xf32>
    %200 = vector.extract_strided_slice %185 {offsets = [0, 384], sizes = [2, 128], strides = [1, 1]} : vector<2x512xf32> to vector<2x128xf32>
    %201 = arith.negf %200 : vector<2x128xf32>
    %202 = math.exp %201 : vector<2x128xf32>
    %cst_61 = arith.constant 1.000000e+00 : f32
    %203 = vector.broadcast %cst_61 : f32 to vector<2x128xf32>
    %204 = arith.addf %203, %202 : vector<2x128xf32>
    %205 = arith.divf %203, %204 : vector<2x128xf32>
    %206 = arith.mulf %197, %173 : vector<2x128xf32>
    %207 = arith.mulf %191, %199 : vector<2x128xf32>
    %208 = arith.addf %206, %207 : vector<2x128xf32>
    %209 = math.tanh %208 : vector<2x128xf32>
    %210 = arith.mulf %205, %209 : vector<2x128xf32>
    %211 = arith.index_cast %c5_i32 : i32 to index
    %c0_62 = arith.constant 0 : index
    %c0_63 = arith.constant 0 : index
    %212 = vector.load %arg5[%211, %c0_62, %c0_63] : memref<8x2x128xf32, #tpu.memory_space<vmem>>, vector<1x2x128xf32>
    %213 = vector.shape_cast %212 : vector<1x2x128xf32> to vector<2x128xf32>
    %214 = vector.shape_cast %210 : vector<2x128xf32> to vector<1x2x128xf32>
    tpu.vector_store %arg5[%211, %c0_62, %c0_63], %214 {strides = array<i32>} : memref<8x2x128xf32, #tpu.memory_space<vmem>>, vector<1x2x128xf32>,
    %c6_i32 = arith.constant 6 : i32
    %215 = arith.index_cast %c6_i32 : i32 to index
    %c0_64 = arith.constant 0 : index
    %c0_65 = arith.constant 0 : index
    %216 = vector.load %arg1[%215, %c0_64, %c0_65] : memref<8x2x512xf32, #tpu.memory_space<vmem>>, vector<1x2x512xf32>
    %217 = vector.shape_cast %216 : vector<1x2x512xf32> to vector<2x512xf32>
    %c0_66 = arith.constant 0 : index
    %c0_67 = arith.constant 0 : index
    %218 = vector.load %arg2[%c0_66, %c0_67] : memref<128x512xf32, #tpu.memory_space<vmem>>, vector<128x512xf32>
    %cst_68 = arith.constant dense<0.000000e+00> : vector<2x512xf32>
    %219 = tpu.matmul %210, %218, %cst_68 {dimension_numbers = #tpu.dot_dimension_numbers<[1], [0], [0], [1], [0, 0, 1, 1], [], []>} : vector<2x128xf32>, vector<128x512xf32>, vector<2x512xf32> -> vector<2x512xf32>
    %220 = arith.addf %217, %219 : vector<2x512xf32>
    %221 = vector.extract_strided_slice %220 {offsets = [0, 0], sizes = [2, 128], strides = [1, 1]} : vector<2x512xf32> to vector<2x128xf32>
    %222 = arith.negf %221 : vector<2x128xf32>
    %223 = math.exp %222 : vector<2x128xf32>
    %cst_69 = arith.constant 1.000000e+00 : f32
    %224 = vector.broadcast %cst_69 : f32 to vector<2x128xf32>
    %225 = arith.addf %224, %223 : vector<2x128xf32>
    %226 = arith.divf %224, %225 : vector<2x128xf32>
    %227 = vector.extract_strided_slice %220 {offsets = [0, 128], sizes = [2, 128], strides = [1, 1]} : vector<2x512xf32> to vector<2x128xf32>
    %228 = arith.negf %227 : vector<2x128xf32>
    %229 = math.exp %228 : vector<2x128xf32>
    %cst_70 = arith.constant 1.000000e+00 : f32
    %230 = vector.broadcast %cst_70 : f32 to vector<2x128xf32>
    %231 = arith.addf %230, %229 : vector<2x128xf32>
    %232 = arith.divf %230, %231 : vector<2x128xf32>
    %233 = vector.extract_strided_slice %220 {offsets = [0, 256], sizes = [2, 128], strides = [1, 1]} : vector<2x512xf32> to vector<2x128xf32>
    %234 = math.tanh %233 : vector<2x128xf32>
    %235 = vector.extract_strided_slice %220 {offsets = [0, 384], sizes = [2, 128], strides = [1, 1]} : vector<2x512xf32> to vector<2x128xf32>
    %236 = arith.negf %235 : vector<2x128xf32>
    %237 = math.exp %236 : vector<2x128xf32>
    %cst_71 = arith.constant 1.000000e+00 : f32
    %238 = vector.broadcast %cst_71 : f32 to vector<2x128xf32>
    %239 = arith.addf %238, %237 : vector<2x128xf32>
    %240 = arith.divf %238, %239 : vector<2x128xf32>
    %241 = arith.mulf %232, %208 : vector<2x128xf32>
    %242 = arith.mulf %226, %234 : vector<2x128xf32>
    %243 = arith.addf %241, %242 : vector<2x128xf32>
    %244 = math.tanh %243 : vector<2x128xf32>
    %245 = arith.mulf %240, %244 : vector<2x128xf32>
    %246 = arith.index_cast %c6_i32 : i32 to index
    %c0_72 = arith.constant 0 : index
    %c0_73 = arith.constant 0 : index
    %247 = vector.load %arg5[%246, %c0_72, %c0_73] : memref<8x2x128xf32, #tpu.memory_space<vmem>>, vector<1x2x128xf32>
    %248 = vector.shape_cast %247 : vector<1x2x128xf32> to vector<2x128xf32>
    %249 = vector.shape_cast %245 : vector<2x128xf32> to vector<1x2x128xf32>
    tpu.vector_store %arg5[%246, %c0_72, %c0_73], %249 {strides = array<i32>} : memref<8x2x128xf32, #tpu.memory_space<vmem>>, vector<1x2x128xf32>,
    %c7_i32 = arith.constant 7 : i32
    %250 = arith.index_cast %c7_i32 : i32 to index
    %c0_74 = arith.constant 0 : index
    %c0_75 = arith.constant 0 : index
    %251 = vector.load %arg1[%250, %c0_74, %c0_75] : memref<8x2x512xf32, #tpu.memory_space<vmem>>, vector<1x2x512xf32>
    %252 = vector.shape_cast %251 : vector<1x2x512xf32> to vector<2x512xf32>
    %c0_76 = arith.constant 0 : index
    %c0_77 = arith.constant 0 : index
    %253 = vector.load %arg2[%c0_76, %c0_77] : memref<128x512xf32, #tpu.memory_space<vmem>>, vector<128x512xf32>
    %cst_78 = arith.constant dense<0.000000e+00> : vector<2x512xf32>
    %254 = tpu.matmul %245, %253, %cst_78 {dimension_numbers = #tpu.dot_dimension_numbers<[1], [0], [0], [1], [0, 0, 1, 1], [], []>} : vector<2x128xf32>, vector<128x512xf32>, vector<2x512xf32> -> vector<2x512xf32>
    %255 = arith.addf %252, %254 : vector<2x512xf32>
    %256 = vector.extract_strided_slice %255 {offsets = [0, 0], sizes = [2, 128], strides = [1, 1]} : vector<2x512xf32> to vector<2x128xf32>
    %257 = arith.negf %256 : vector<2x128xf32>
    %258 = math.exp %257 : vector<2x128xf32>
    %cst_79 = arith.constant 1.000000e+00 : f32
    %259 = vector.broadcast %cst_79 : f32 to vector<2x128xf32>
    %260 = arith.addf %259, %258 : vector<2x128xf32>
    %261 = arith.divf %259, %260 : vector<2x128xf32>
    %262 = vector.extract_strided_slice %255 {offsets = [0, 128], sizes = [2, 128], strides = [1, 1]} : vector<2x512xf32> to vector<2x128xf32>
    %263 = arith.negf %262 : vector<2x128xf32>
    %264 = math.exp %263 : vector<2x128xf32>
    %cst_80 = arith.constant 1.000000e+00 : f32
    %265 = vector.broadcast %cst_80 : f32 to vector<2x128xf32>
    %266 = arith.addf %265, %264 : vector<2x128xf32>
    %267 = arith.divf %265, %266 : vector<2x128xf32>
    %268 = vector.extract_strided_slice %255 {offsets = [0, 256], sizes = [2, 128], strides = [1, 1]} : vector<2x512xf32> to vector<2x128xf32>
    %269 = math.tanh %268 : vector<2x128xf32>
    %270 = vector.extract_strided_slice %255 {offsets = [0, 384], sizes = [2, 128], strides = [1, 1]} : vector<2x512xf32> to vector<2x128xf32>
    %271 = arith.negf %270 : vector<2x128xf32>
    %272 = math.exp %271 : vector<2x128xf32>
    %cst_81 = arith.constant 1.000000e+00 : f32
    %273 = vector.broadcast %cst_81 : f32 to vector<2x128xf32>
    %274 = arith.addf %273, %272 : vector<2x128xf32>
    %275 = arith.divf %273, %274 : vector<2x128xf32>
    %276 = arith.mulf %267, %243 : vector<2x128xf32>
    %277 = arith.mulf %261, %269 : vector<2x128xf32>
    %278 = arith.addf %276, %277 : vector<2x128xf32>
    %279 = math.tanh %278 : vector<2x128xf32>
    %280 = arith.mulf %275, %279 : vector<2x128xf32>
    %281 = arith.index_cast %c7_i32 : i32 to index
    %c0_82 = arith.constant 0 : index
    %c0_83 = arith.constant 0 : index
    %282 = vector.load %arg5[%281, %c0_82, %c0_83] : memref<8x2x128xf32, #tpu.memory_space<vmem>>, vector<1x2x128xf32>
    %283 = vector.shape_cast %282 : vector<1x2x128xf32> to vector<2x128xf32>
    %284 = vector.shape_cast %280 : vector<2x128xf32> to vector<1x2x128xf32>
    tpu.vector_store %arg5[%281, %c0_82, %c0_83], %284 {strides = array<i32>} : memref<8x2x128xf32, #tpu.memory_space<vmem>>, vector<1x2x128xf32>,
    %c8_i32 = arith.constant 8 : i32
    %c0_84 = arith.constant 0 : index
    %c0_85 = arith.constant 0 : index
    %285 = vector.load %arg8[%c0_84, %c0_85] : memref<2x128xf32, #tpu.memory_space<vmem>>, vector<2x128xf32>
    tpu.vector_store %arg8[%c0_84, %c0_85], %280 {strides = array<i32>} : memref<2x128xf32, #tpu.memory_space<vmem>>, vector<2x128xf32>,
    %c0_86 = arith.constant 0 : index
    %c0_87 = arith.constant 0 : index
    %286 = vector.load %arg9[%c0_86, %c0_87] : memref<2x128xf32, #tpu.memory_space<vmem>>, vector<2x128xf32>
    tpu.vector_store %arg9[%c0_86, %c0_87], %278 {strides = array<i32>} : memref<2x128xf32, #tpu.memory_space<vmem>>, vector<2x128xf32>,
    %c0_i32_88 = arith.constant 0 : i32
    %287 = arith.cmpi eq, %arg0, %c0_i32_88 : i32
    %288 = arith.extui %287 : i1 to i32
    %c0_i32_89 = arith.constant 0 : i32
    %289 = arith.cmpi ne, %288, %c0_i32_89 : i32
    scf.if %289 {
      %c0_90 = arith.constant 0 : index
      %c0_91 = arith.constant 0 : index
      %290 = vector.load %arg6[%c0_90, %c0_91] : memref<2x128xf32, #tpu.memory_space<vmem>>, vector<2x128xf32>
      tpu.vector_store %arg6[%c0_90, %c0_91], %280 {strides = array<i32>} : memref<2x128xf32, #tpu.memory_space<vmem>>, vector<2x128xf32>,
      %c0_92 = arith.constant 0 : index
      %c0_93 = arith.constant 0 : index
      %291 = vector.load %arg7[%c0_92, %c0_93] : memref<2x128xf32, #tpu.memory_space<vmem>>, vector<2x128xf32>
      tpu.vector_store %arg7[%c0_92, %c0_93], %278 {strides = array<i32>} : memref<2x128xf32, #tpu.memory_space<vmem>>, vector<2x128xf32>,
    } else {
    }
    return
  }
  func.func @transform_0(%arg0: i32) -> (i32, i32, i32) {
    %c0_i32 = arith.constant 0 : i32
    %c0_i32_0 = arith.constant 0 : i32
    %c0_i32_1 = arith.constant 0 : i32
    return %arg0, %c0_i32, %c0_i32_0 : i32, i32, i32
  }
  func.func @transform_1(%arg0: i32) -> (i32, i32) {
    %c0_i32 = arith.constant 0 : i32
    %c0_i32_0 = arith.constant 0 : i32
    %c0_i32_1 = arith.constant 0 : i32
    return %c0_i32, %c0_i32_0 : i32, i32
  }
  func.func @transform_2(%arg0: i32) -> (i32, i32) {
    %c0_i32 = arith.constant 0 : i32
    %c0_i32_0 = arith.constant 0 : i32
    %c0_i32_1 = arith.constant 0 : i32
    return %c0_i32, %c0_i32_0 : i32, i32
  }
  func.func @transform_3(%arg0: i32) -> (i32, i32) {
    %c0_i32 = arith.constant 0 : i32
    %c0_i32_0 = arith.constant 0 : i32
    %c0_i32_1 = arith.constant 0 : i32
    return %c0_i32, %c0_i32_0 : i32, i32
  }
  func.func @transform_4(%arg0: i32) -> (i32, i32, i32) {
    %c0_i32 = arith.constant 0 : i32
    %c0_i32_0 = arith.constant 0 : i32
    %c0_i32_1 = arith.constant 0 : i32
    return %arg0, %c0_i32, %c0_i32_0 : i32, i32, i32
  }
  func.func @transform_5(%arg0: i32) -> (i32, i32) {
    %c0_i32 = arith.constant 0 : i32
    %c0_i32_0 = arith.constant 0 : i32
    %c0_i32_1 = arith.constant 0 : i32
    return %c0_i32, %c0_i32_0 : i32, i32
  }
  func.func @transform_6(%arg0: i32) -> (i32, i32) {
    %c0_i32 = arith.constant 0 : i32
    %c0_i32_0 = arith.constant 0 : i32
    %c0_i32_1 = arith.constant 0 : i32
    return %c0_i32, %c0_i32_0 : i32, i32
  }
}

module attributes {stable_mosaic.version = 11 : i64} {
  func.func @_fc_sigmoid_kernel(%arg0: memref<2x128xf32, #tpu.memory_space<vmem>>, %arg1: memref<128x1xf32, #tpu.memory_space<vmem>>, %arg2: memref<1x1xf32, #tpu.memory_space<vmem>>, %arg3: memref<2x1xf32, #tpu.memory_space<vmem>>) attributes {dimension_semantics = [], scalar_prefetch = 0 : i64, scratch_operands = 0 : i64, tpu.core_type = #tpu.core_type<tc>} {
    %c0 = arith.constant 0 : index
    %c0_0 = arith.constant 0 : index
    %0 = vector.load %arg0[%c0, %c0_0] : memref<2x128xf32, #tpu.memory_space<vmem>>, vector<2x128xf32>
    %c0_1 = arith.constant 0 : index
    %c0_2 = arith.constant 0 : index
    %1 = vector.load %arg1[%c0_1, %c0_2] : memref<128x1xf32, #tpu.memory_space<vmem>>, vector<128x1xf32>
    %cst = arith.constant dense<0.000000e+00> : vector<2x1xf32>
    %2 = tpu.matmul %0, %1, %cst {dimension_numbers = #tpu.dot_dimension_numbers<[1], [0], [0], [1], [0, 0, 1, 1], [], []>} : vector<2x128xf32>, vector<128x1xf32>, vector<2x1xf32> -> vector<2x1xf32>
    %c0_3 = arith.constant 0 : index
    %c0_4 = arith.constant 0 : index
    %3 = vector.load %arg2[%c0_3, %c0_4] : memref<1x1xf32, #tpu.memory_space<vmem>>, vector<1x1xf32>
    %4 = vector.broadcast %3 : vector<1x1xf32> to vector<2x1xf32>
    %5 = arith.addf %2, %4 : vector<2x1xf32>
    %6 = arith.negf %5 : vector<2x1xf32>
    %7 = math.exp %6 : vector<2x1xf32>
    %cst_5 = arith.constant 1.000000e+00 : f32
    %8 = vector.broadcast %cst_5 : f32 to vector<2x1xf32>
    %9 = arith.addf %8, %7 : vector<2x1xf32>
    %10 = arith.divf %8, %9 : vector<2x1xf32>
    %c0_6 = arith.constant 0 : index
    %c0_7 = arith.constant 0 : index
    %11 = vector.load %arg3[%c0_6, %c0_7] : memref<2x1xf32, #tpu.memory_space<vmem>>, vector<2x1xf32>
    tpu.vector_store %arg3[%c0_6, %c0_7], %10 {strides = array<i32>} : memref<2x1xf32, #tpu.memory_space<vmem>>, vector<2x1xf32>,
    return
  }
}

</mosaic_0001>

<llo_original>
// kernel: movie_reviews_forward.7
$region0: #{movie_reviews_forward.7}
  #allocation0 [shape = 'u32[]', space=smem, size = 0x4, offset = 0x4, fixed_abs, tag = 'smem constant byte address 0x4 - core index']
  #allocation1 [shape = 'u32[144,128]{1,0:T(1,128)}', space=vmem, size = 0x12000, scoped, tag = 'internal scratch']
  %s0 = inlined_call_operand.vmem [shape: f32[16,128], index: 0, kind: input, shape index: {}]
  %s1 = inlined_call_operand.vmem [shape: f32[128,512], index: 1, kind: input, shape index: {}]
  %s2 = inlined_call_operand.vmem [shape: f32[1,512], index: 2, kind: input, shape index: {}]
  %s3 = inlined_call_operand.vmem [shape: f32[16,512], index: 3, kind: output, shape index: {}]
  %s4 = sld [smem:[#allocation0]]
  $region22: #{movie_reviews_forward.7} parent=0
    _
  %s6 = ssub.s32 1, %s4
  %s7 = scalar_select 0, %s6, %s4
  // Predicated region
  $region2: #{movie_reviews_forward.7} parent=0 // pred_check
    _
  $region3: #{movie_reviews_forward.7} parent=0 // pred_check_branch
    %9 = sbr.rel (0) target = $region5
  $region4: #{movie_reviews_forward.7} parent=0 // pred_region
    _
  $region5: #{movie_reviews_forward.7} parent=0 // pred_fallthru
    _
  // Predicated region
  $region6: #{movie_reviews_forward.7} parent=0 // pred_check
    _
  $region7: #{movie_reviews_forward.7} parent=0 // pred_check_branch
    %11 = sbr.rel (0) target = $region9
  $region8: #{movie_reviews_forward.7} parent=0 // pred_region
    _
  $region9: #{movie_reviews_forward.7} parent=0 // pred_fallthru
    _
  // Predicated region
  $region10: #{movie_reviews_forward.7} parent=0 // pred_check
    _
  $region11: #{movie_reviews_forward.7} parent=0 // pred_check_branch
    %13 = sbr.rel (0) target = $region13
  $region12: #{movie_reviews_forward.7} parent=0 // pred_region
    _
  $region13: #{movie_reviews_forward.7} parent=0 // pred_fallthru
    _
  %v14 = vld [vmem:[%s0] sm:$0xff]
  %v15 = vld [vmem:[%s0 + $0x8] sm:$0xff]
  %v16 = vld [vmem:[%s1] sm:$0xff]
  %v17 = vld [vmem:[%s1 + $0x8] sm:$0xff]
  %v18 = vld [vmem:[%s1 + $0x10] sm:$0xff]
  %v19 = vld [vmem:[%s1 + $0x18] sm:$0xff]
  %v20 = vld [vmem:[%s1 + $0x20] sm:$0xff]
  %v21 = vld [vmem:[%s1 + $0x28] sm:$0xff]
  %v22 = vld [vmem:[%s1 + $0x30] sm:$0xff]
  %v23 = vld [vmem:[%s1 + $0x38] sm:$0xff]
  %v24 = vld [vmem:[%s1 + $0x40] sm:$0xff]
  %v25 = vld [vmem:[%s1 + $0x48] sm:$0xff]
  %v26 = vld [vmem:[%s1 + $0x50] sm:$0xff]
  %v27 = vld [vmem:[%s1 + $0x58] sm:$0xff]
  %v28 = vld [vmem:[%s1 + $0x60] sm:$0xff]
  %v29 = vld [vmem:[%s1 + $0x68] sm:$0xff]
  %v30 = vld [vmem:[%s1 + $0x70] sm:$0xff]
  %v31 = vld [vmem:[%s1 + $0x78] sm:$0xff]
  %v32 = vld [vmem:[%s1 + $0x80] sm:$0xff]
  %v33 = vld [vmem:[%s1 + $0x88] sm:$0xff]
  %v34 = vld [vmem:[%s1 + $0x90] sm:$0xff]
  %v35 = vld [vmem:[%s1 + $0x98] sm:$0xff]
  %v36 = vld [vmem:[%s1 + $0xa0] sm:$0xff]
  %v37 = vld [vmem:[%s1 + $0xa8] sm:$0xff]
  %v38 = vld [vmem:[%s1 + $0xb0] sm:$0xff]
  %v39 = vld [vmem:[%s1 + $0xb8] sm:$0xff]
  %v40 = vld [vmem:[%s1 + $0xc0] sm:$0xff]
  %v41 = vld [vmem:[%s1 + $0xc8] sm:$0xff]
  %v42 = vld [vmem:[%s1 + $0xd0] sm:$0xff]
  %v43 = vld [vmem:[%s1 + $0xd8] sm:$0xff]
  %v44 = vld [vmem:[%s1 + $0xe0] sm:$0xff]
  %v45 = vld [vmem:[%s1 + $0xe8] sm:$0xff]
  %v46 = vld [vmem:[%s1 + $0xf0] sm:$0xff]
  %v47 = vld [vmem:[%s1 + $0xf8] sm:$0xff]
  %v48 = vld [vmem:[%s1 + $0x100] sm:$0xff]
  %v49 = vld [vmem:[%s1 + $0x108] sm:$0xff]
  %v50 = vld [vmem:[%s1 + $0x110] sm:$0xff]
  %v51 = vld [vmem:[%s1 + $0x118] sm:$0xff]
  %v52 = vld [vmem:[%s1 + $0x120] sm:$0xff]
  %v53 = vld [vmem:[%s1 + $0x128] sm:$0xff]
  %v54 = vld [vmem:[%s1 + $0x130] sm:$0xff]
  %v55 = vld [vmem:[%s1 + $0x138] sm:$0xff]
  %v56 = vld [vmem:[%s1 + $0x140] sm:$0xff]
  %v57 = vld [vmem:[%s1 + $0x148] sm:$0xff]
  %v58 = vld [vmem:[%s1 + $0x150] sm:$0xff]
  %v59 = vld [vmem:[%s1 + $0x158] sm:$0xff]
  %v60 = vld [vmem:[%s1 + $0x160] sm:$0xff]
  %v61 = vld [vmem:[%s1 + $0x168] sm:$0xff]
  %v62 = vld [vmem:[%s1 + $0x170] sm:$0xff]
  %v63 = vld [vmem:[%s1 + $0x178] sm:$0xff]
  %v64 = vld [vmem:[%s1 + $0x180] sm:$0xff]
  %v65 = vld [vmem:[%s1 + $0x188] sm:$0xff]
  %v66 = vld [vmem:[%s1 + $0x190] sm:$0xff]
  %v67 = vld [vmem:[%s1 + $0x198] sm:$0xff]
  %v68 = vld [vmem:[%s1 + $0x1a0] sm:$0xff]
  %v69 = vld [vmem:[%s1 + $0x1a8] sm:$0xff]
  %v70 = vld [vmem:[%s1 + $0x1b0] sm:$0xff]
  %v71 = vld [vmem:[%s1 + $0x1b8] sm:$0xff]
  %v72 = vld [vmem:[%s1 + $0x1c0] sm:$0xff]
  %v73 = vld [vmem:[%s1 + $0x1c8] sm:$0xff]
  %v74 = vld [vmem:[%s1 + $0x1d0] sm:$0xff]
  %v75 = vld [vmem:[%s1 + $0x1d8] sm:$0xff]
  %v76 = vld [vmem:[%s1 + $0x1e0] sm:$0xff]
  %v77 = vld [vmem:[%s1 + $0x1e8] sm:$0xff]
  %v78 = vld [vmem:[%s1 + $0x1f0] sm:$0xff]
  %v79 = vld [vmem:[%s1 + $0x1f8] sm:$0xff]
  %v80 = vld [vmem:[%s2] sm:$0xf]
  %v82 = vlaneseq
  %v83 = vshrl.u32 %v82, 7
  %v84 = vsub.s32 0, %v83
  %v85 = vrot.slane %v80, %v84
  %v86 = vlaneseq
  %v87 = vshrl.u32 %v86, 7
  %v88 = vsub.s32 1, %v87
  %v89 = vrot.slane %v80, %v88
  %v90 = vlaneseq
  %v91 = vshrl.u32 %v90, 7
  %v92 = vsub.s32 2, %v91
  %v93 = vrot.slane %v80, %v92
  %v94 = vlaneseq
  %v95 = vshrl.u32 %v94, 7
  %v96 = vsub.s32 3, %v95
  %v97 = vrot.slane %v80, %v96
  %102 = vmatprep.subr.mxu0 %v77
  %103 = vmatpush1.msra.mxu0 %v76
  %104 = vmatprep.subr.mxu0 %v73
  %105 = vmatpush1.msra.mxu0 %v72
  %106 = vmatprep.subr.mxu0 %v69
  %107 = vmatpush1.msra.mxu0 %v68
  %108 = vmatprep.subr.mxu0 %v65
  %109 = vmatpush1.msra.mxu0 %v64
  %110 = vmatprep.subr.mxu0 %v61
  %111 = vmatpush1.msra.mxu0 %v60
  %112 = vmatprep.subr.mxu0 %v57
  %113 = vmatpush1.msra.mxu0 %v56
  %114 = vmatprep.subr.mxu0 %v53
  %115 = vmatpush1.msra.mxu0 %v52
  %116 = vmatprep.subr.mxu0 %v49
  %117 = vmatpush1.msra.mxu0 %v48
  %118 = vmatprep.subr.mxu0 %v45
  %119 = vmatpush1.msra.mxu0 %v44
  %120 = vmatprep.subr.mxu0 %v41
  %121 = vmatpush1.msra.mxu0 %v40
  %122 = vmatprep.subr.mxu0 %v37
  %123 = vmatpush1.msra.mxu0 %v36
  %124 = vmatprep.subr.mxu0 %v33
  %125 = vmatpush1.msra.mxu0 %v32
  %126 = vmatprep.subr.mxu0 %v29
  %127 = vmatpush1.msra.mxu0 %v28
  %128 = vmatprep.subr.mxu0 %v25
  %129 = vmatpush1.msra.mxu0 %v24
  %130 = vmatprep.subr.mxu0 %v21
  %131 = vmatpush1.msra.mxu0 %v20
  %132 = vmatprep.subr.mxu0 %v17
  %133 = vmatpush1.msra.mxu0 %v16
  %134 = vmatprep.subr.mxu0 0.0
  %135 = vmatpush2.msra.mxu0 0.0
  %136 = vmatprep.subr.mxu0 0.0
  %137 = vmatpush2.msra.mxu0 0.0
  %138 = vmatprep.subr.mxu0 0.0
  %139 = vmatpush2.msra.mxu0 0.0
  %140 = vmatprep.subr.mxu0 0.0
  %141 = vmatpush2.msra.mxu0 0.0
  %142 = vmatprep.subr.mxu0 0.0
  %143 = vmatpush2.msra.mxu0 0.0
  %144 = vmatprep.subr.mxu0 0.0
  %145 = vmatpush2.msra.mxu0 0.0
  %146 = vmatprep.subr.mxu0 0.0
  %147 = vmatpush2.msra.mxu0 0.0
  %148 = vmatprep.subr.mxu0 0.0
  %149 = vmatpush2.msra.mxu0 0.0
  %150 = vmatprep.subr.mxu0 0.0
  %151 = vmatpush2.msra.mxu0 0.0
  %152 = vmatprep.subr.mxu0 0.0
  %153 = vmatpush2.msra.mxu0 0.0
  %154 = vmatprep.subr.mxu0 0.0
  %155 = vmatpush2.msra.mxu0 0.0
  %156 = vmatprep.subr.mxu0 0.0
  %157 = vmatpush2.msra.mxu0 0.0
  %158 = vmatprep.subr.mxu0 0.0
  %159 = vmatpush2.msra.mxu0 0.0
  %160 = vmatprep.subr.mxu0 0.0
  %161 = vmatpush2.msra.mxu0 0.0
  %162 = vmatprep.subr.mxu0 0.0
  %163 = vmatpush2.msra.mxu0 0.0
  %164 = vmatprep.subr.mxu0 0.0
  %165 = vmatpush2.msra.mxu0 0.0
  %166 = vmatprep.mubr.f32.mxu0 0.0
  %167 = vmatmul.mubr.f32.gmra.mxu0 %v14
  %v168 = vpop.f32.mrf.mxu0
  %v169 = vadd.f32 %v85, %v168
  %v170 = vpop.f32.mrf.mxu0
  %v171 = vadd.f32 %v89, %v170
  %172 = vmatprep.mubr.f32.mxu0 0.0
  %173 = vmatmul.mubr.f32.gmra.mxu0 %v15
  %v174 = vpop.f32.mrf.mxu0
  %v175 = vadd.f32 %v85, %v174
  %v176 = vpop.f32.mrf.mxu0
  %v177 = vadd.f32 %v89, %v176
  %178 = vdwg.mxu0
  %179 = vmatprep.subr.mxu0 %v79
  %180 = vmatpush1.msra.mxu0 %v78
  %181 = vmatprep.subr.mxu0 %v75
  %182 = vmatpush1.msra.mxu0 %v74
  %183 = vmatprep.subr.mxu0 %v71
  %184 = vmatpush1.msra.mxu0 %v70
  %185 = vmatprep.subr.mxu0 %v67
  %186 = vmatpush1.msra.mxu0 %v66
  %187 = vmatprep.subr.mxu0 %v63
  %188 = vmatpush1.msra.mxu0 %v62
  %189 = vmatprep.subr.mxu0 %v59
  %190 = vmatpush1.msra.mxu0 %v58
  %191 = vmatprep.subr.mxu0 %v55
  %192 = vmatpush1.msra.mxu0 %v54
  %193 = vmatprep.subr.mxu0 %v51
  %194 = vmatpush1.msra.mxu0 %v50
  %195 = vmatprep.subr.mxu0 %v47
  %196 = vmatpush1.msra.mxu0 %v46
  %197 = vmatprep.subr.mxu0 %v43
  %198 = vmatpush1.msra.mxu0 %v42
  %199 = vmatprep.subr.mxu0 %v39
  %200 = vmatpush1.msra.mxu0 %v38
  %201 = vmatprep.subr.mxu0 %v35
  %202 = vmatpush1.msra.mxu0 %v34
  %203 = vmatprep.subr.mxu0 %v31
  %204 = vmatpush1.msra.mxu0 %v30
  %205 = vmatprep.subr.mxu0 %v27
  %206 = vmatpush1.msra.mxu0 %v26
  %207 = vmatprep.subr.mxu0 %v23
  %208 = vmatpush1.msra.mxu0 %v22
  %209 = vmatprep.subr.mxu0 %v19
  %210 = vmatpush1.msra.mxu0 %v18
  %211 = vmatprep.subr.mxu0 0.0
  %212 = vmatpush2.msra.mxu0 0.0
  %213 = vmatprep.subr.mxu0 0.0
  %214 = vmatpush2.msra.mxu0 0.0
  %215 = vmatprep.subr.mxu0 0.0
  %216 = vmatpush2.msra.mxu0 0.0
  %217 = vmatprep.subr.mxu0 0.0
  %218 = vmatpush2.msra.mxu0 0.0
  %219 = vmatprep.subr.mxu0 0.0
  %220 = vmatpush2.msra.mxu0 0.0
  %221 = vmatprep.subr.mxu0 0.0
  %222 = vmatpush2.msra.mxu0 0.0
  %223 = vmatprep.subr.mxu0 0.0
  %224 = vmatpush2.msra.mxu0 0.0
  %225 = vmatprep.subr.mxu0 0.0
  %226 = vmatpush2.msra.mxu0 0.0
  %227 = vmatprep.subr.mxu0 0.0
  %228 = vmatpush2.msra.mxu0 0.0
  %229 = vmatprep.subr.mxu0 0.0
  %230 = vmatpush2.msra.mxu0 0.0
  %231 = vmatprep.subr.mxu0 0.0
  %232 = vmatpush2.msra.mxu0 0.0
  %233 = vmatprep.subr.mxu0 0.0
  %234 = vmatpush2.msra.mxu0 0.0
  %235 = vmatprep.subr.mxu0 0.0
  %236 = vmatpush2.msra.mxu0 0.0
  %237 = vmatprep.subr.mxu0 0.0
  %238 = vmatpush2.msra.mxu0 0.0
  %239 = vmatprep.subr.mxu0 0.0
  %240 = vmatpush2.msra.mxu0 0.0
  %241 = vmatprep.subr.mxu0 0.0
  %242 = vmatpush2.msra.mxu0 0.0
  %243 = vmatprep.mubr.f32.mxu0 0.0
  %244 = vmatmul.mubr.f32.gmra.mxu0 %v14
  %v245 = vpop.f32.mrf.mxu0
  %v246 = vadd.f32 %v93, %v245
  %v247 = vpop.f32.mrf.mxu0
  %v248 = vadd.f32 %v97, %v247
  %249 = vmatprep.mubr.f32.mxu0 0.0
  %250 = vmatmul.mubr.f32.gmra.mxu0 %v15
  %v251 = vpop.f32.mrf.mxu0
  %v252 = vadd.f32 %v93, %v251
  %v253 = vpop.f32.mrf.mxu0
  %v254 = vadd.f32 %v97, %v253
  %255 = vdwg.mxu0
  %256 = vst [vmem:[%s3] sm:$0xff] %v169
  %257 = vst [vmem:[%s3 + $0x8] sm:$0xff] %v171
  %258 = vst [vmem:[%s3 + $0x10] sm:$0xff] %v246
  %259 = vst [vmem:[%s3 + $0x18] sm:$0xff] %v248
  %260 = vst [vmem:[%s3 + $0x20] sm:$0xff] %v175
  %261 = vst [vmem:[%s3 + $0x28] sm:$0xff] %v177
  %262 = vst [vmem:[%s3 + $0x30] sm:$0xff] %v252
  %263 = vst [vmem:[%s3 + $0x38] sm:$0xff] %v254
  // Predicated region
  $region14: #{movie_reviews_forward.7} parent=0 // pred_check
    _
  $region15: #{movie_reviews_forward.7} parent=0 // pred_check_branch
    %265 = sbr.rel (0) target = $region17
  $region16: #{movie_reviews_forward.7} parent=0 // pred_region
    _
  $region17: #{movie_reviews_forward.7} parent=0 // pred_fallthru
    _
  // Predicated region
  $region18: #{movie_reviews_forward.7} parent=0 // pred_check
    _
  $region19: #{movie_reviews_forward.7} parent=0 // pred_check_branch
    %267 = sbr.rel (0) target = $region21
  $region20: #{movie_reviews_forward.7} parent=0 // pred_region
    _
  $region21: #{movie_reviews_forward.7} parent=0 // pred_fallthru
    _

// kernel: movie_reviews_forward.5
$region0: #{movie_reviews_forward.5}
  #allocation0 [shape = 'u32[]', space=smem, size = 0x4, offset = 0x4, fixed_abs, tag = 'smem constant byte address 0x4 - core index']
  #allocation1 [shape = 'u32[144,128]{1,0:T(1,128)}', space=vmem, size = 0x12000, scoped, tag = 'internal scratch']
  %s0 = inlined_call_operand.vmem [shape: f32[16,32], index: 0, kind: input, shape index: {}]
  %s1 = inlined_call_operand.vmem [shape: f32[32,512], index: 1, kind: input, shape index: {}]
  %s2 = inlined_call_operand.hbm [shape: f32[1,512], index: 2, kind: input, shape index: {}]
  %s3 = inlined_call_operand.vmem [shape: f32[16,512], index: 3, kind: output, shape index: {}]
  %s4 = sld [smem:[#allocation0]]
  $region26: #{movie_reviews_forward.5} parent=0
    _
  %s6 = ssub.s32 1, %s4
  %s7 = scalar_select 0, %s6, %s4
  $region1: #{movie_reviews_forward.5} parent=0
    #allocation2 [shape = 'u8[2048]{0}', space=vmem, size = 0x800, scoped, tag = 'input window, operand 2, single buffered']
    #allocation3 [shape = 's32[1]{0}', space=sflag, size = 0x4, scoped, tag = 'scoped memory for movie_reviews_forward.5']
    %8 = vsyncpa [#allocation3], 0
    // Predicated region
    $region2: #{movie_reviews_forward.5} parent=1 // pred_check
      _
    $region3: #{movie_reviews_forward.5} parent=1 // pred_check_branch
      %10 = sbr.rel (0) target = $region5
    $region4: #{movie_reviews_forward.5} parent=1 // pred_region
      _
    $region5: #{movie_reviews_forward.5} parent=1 // pred_fallthru
      _
    // Predicated region
    $region6: #{movie_reviews_forward.5} parent=1 // pred_check
      _
    $region7: #{movie_reviews_forward.5} parent=1 // pred_check_branch
      %12 = sbr.rel (0) target = $region9
    $region8: #{movie_reviews_forward.5} parent=1 // pred_region
      _
    $region9: #{movie_reviews_forward.5} parent=1 // pred_fallthru
      _
    // Predicated region
    $region10: #{movie_reviews_forward.5} parent=1 // pred_check
      _
    $region11: #{movie_reviews_forward.5} parent=1 // pred_check_branch
      %14 = sbr.rel (0) target = $region13
    $region12: #{movie_reviews_forward.5} parent=1 // pred_region
      %s16 = ssub.s32 64, 64
      %17 = vsyncadd [#allocation3], %s16
      %s19 = sshll.u32 [#allocation2], 4
      %s20 = int_to_ptr.vmem [resolvable:$true] %s19
      %22 = dma.hbm_to_vmem [thread:$0]  %s2, 64, %s20, [#allocation3]
    $region13: #{movie_reviews_forward.5} parent=1 // pred_fallthru
      _
    // Predicated region
    $region14: #{movie_reviews_forward.5} parent=1 // pred_check
      _
    $region15: #{movie_reviews_forward.5} parent=1 // pred_check_branch
      %24 = sbr.rel (0) target = $region17
    $region16: #{movie_reviews_forward.5} parent=1 // pred_region
      %25 = dma.done [#allocation3], 64
    $region17: #{movie_reviews_forward.5} parent=1 // pred_fallthru
      _
    %v26 = vld [vmem:[%s0] sm:$0xff]
    %v27 = vld [vmem:[%s0 + $0x8] sm:$0xff]
    %v28 = vld [vmem:[%s1] sm:$0xff]
    %v29 = vld [vmem:[%s1 + $0x8] sm:$0xff]
    %v30 = vld [vmem:[%s1 + $0x10] sm:$0xff]
    %v31 = vld [vmem:[%s1 + $0x18] sm:$0xff]
    %v32 = vld [vmem:[%s1 + $0x20] sm:$0xff]
    %v33 = vld [vmem:[%s1 + $0x28] sm:$0xff]
    %v34 = vld [vmem:[%s1 + $0x30] sm:$0xff]
    %v35 = vld [vmem:[%s1 + $0x38] sm:$0xff]
    %v36 = vld [vmem:[%s1 + $0x40] sm:$0xff]
    %v37 = vld [vmem:[%s1 + $0x48] sm:$0xff]
    %v38 = vld [vmem:[%s1 + $0x50] sm:$0xff]
    %v39 = vld [vmem:[%s1 + $0x58] sm:$0xff]
    %v40 = vld [vmem:[%s1 + $0x60] sm:$0xff]
    %v41 = vld [vmem:[%s1 + $0x68] sm:$0xff]
    %v42 = vld [vmem:[%s1 + $0x70] sm:$0xff]
    %v43 = vld [vmem:[%s1 + $0x78] sm:$0xff]
    %v44 = vld [vmem:[#allocation2] sm:$0xf]
    %v46 = vlaneseq
    %v47 = vshrl.u32 %v46, 7
    %v48 = vsub.s32 0, %v47
    %v49 = vrot.slane %v44, %v48
    %v50 = vlaneseq
    %v51 = vshrl.u32 %v50, 7
    %v52 = vsub.s32 1, %v51
    %v53 = vrot.slane %v44, %v52
    %v54 = vlaneseq
    %v55 = vshrl.u32 %v54, 7
    %v56 = vsub.s32 2, %v55
    %v57 = vrot.slane %v44, %v56
    %v58 = vlaneseq
    %v59 = vshrl.u32 %v58, 7
    %v60 = vsub.s32 3, %v59
    %v61 = vrot.slane %v44, %v60
    %vm66 = vcmask 261120
    %v68 = vsel %vm66, %v26, 0
    %v71 = vsel %vm66, %v27, 0
    %73 = vmatprep.subr.mxu0 0.0
    %74 = vmatpush1.msra.mxu0 0.0
    %75 = vmatprep.subr.mxu0 0.0
    %76 = vmatpush1.msra.mxu0 0.0
    %77 = vmatprep.subr.mxu0 0.0
    %78 = vmatpush1.msra.mxu0 0.0
    %79 = vmatprep.subr.mxu0 0.0
    %80 = vmatpush1.msra.mxu0 0.0
    %81 = vmatprep.subr.mxu0 0.0
    %82 = vmatpush1.msra.mxu0 0.0
    %83 = vmatprep.subr.mxu0 0.0
    %84 = vmatpush1.msra.mxu0 0.0
    %85 = vmatprep.subr.mxu0 0.0
    %86 = vmatpush1.msra.mxu0 0.0
    %87 = vmatprep.subr.mxu0 0.0
    %88 = vmatpush1.msra.mxu0 0.0
    %89 = vmatprep.subr.mxu0 0.0
    %90 = vmatpush1.msra.mxu0 0.0
    %91 = vmatprep.subr.mxu0 0.0
    %92 = vmatpush1.msra.mxu0 0.0
    %93 = vmatprep.subr.mxu0 0.0
    %94 = vmatpush1.msra.mxu0 0.0
    %95 = vmatprep.subr.mxu0 0.0
    %96 = vmatpush1.msra.mxu0 0.0
    %97 = vmatprep.subr.mxu0 %v41
    %98 = vmatpush1.msra.mxu0 %v40
    %99 = vmatprep.subr.mxu0 %v37
    %100 = vmatpush1.msra.mxu0 %v36
    %101 = vmatprep.subr.mxu0 %v33
    %102 = vmatpush1.msra.mxu0 %v32
    %103 = vmatprep.subr.mxu0 %v29
    %104 = vmatpush1.msra.mxu0 %v28
    %105 = vmatprep.subr.mxu0 0.0
    %106 = vmatpush2.msra.mxu0 0.0
    %107 = vmatprep.subr.mxu0 0.0
    %108 = vmatpush2.msra.mxu0 0.0
    %109 = vmatprep.subr.mxu0 0.0
    %110 = vmatpush2.msra.mxu0 0.0
    %111 = vmatprep.subr.mxu0 0.0
    %112 = vmatpush2.msra.mxu0 0.0
    %113 = vmatprep.subr.mxu0 0.0
    %114 = vmatpush2.msra.mxu0 0.0
    %115 = vmatprep.subr.mxu0 0.0
    %116 = vmatpush2.msra.mxu0 0.0
    %117 = vmatprep.subr.mxu0 0.0
    %118 = vmatpush2.msra.mxu0 0.0
    %119 = vmatprep.subr.mxu0 0.0
    %120 = vmatpush2.msra.mxu0 0.0
    %121 = vmatprep.subr.mxu0 0.0
    %122 = vmatpush2.msra.mxu0 0.0
    %123 = vmatprep.subr.mxu0 0.0
    %124 = vmatpush2.msra.mxu0 0.0
    %125 = vmatprep.subr.mxu0 0.0
    %126 = vmatpush2.msra.mxu0 0.0
    %127 = vmatprep.subr.mxu0 0.0
    %128 = vmatpush2.msra.mxu0 0.0
    %129 = vmatprep.subr.mxu0 0.0
    %130 = vmatpush2.msra.mxu0 0.0
    %131 = vmatprep.subr.mxu0 0.0
    %132 = vmatpush2.msra.mxu0 0.0
    %133 = vmatprep.subr.mxu0 0.0
    %134 = vmatpush2.msra.mxu0 0.0
    %135 = vmatprep.subr.mxu0 0.0
    %136 = vmatpush2.msra.mxu0 0.0
    %137 = vmatprep.mubr.f32.mxu0 0.0
    %138 = vmatmul.mubr.f32.gmra.mxu0 %v68
    %v139 = vpop.f32.mrf.mxu0
    %v140 = vadd.f32 %v49, %v139
    %v141 = vpop.f32.mrf.mxu0
    %v142 = vadd.f32 %v53, %v141
    %143 = vmatprep.mubr.f32.mxu0 0.0
    %144 = vmatmul.mubr.f32.gmra.mxu0 %v71
    %v145 = vpop.f32.mrf.mxu0
    %v146 = vadd.f32 %v49, %v145
    %v147 = vpop.f32.mrf.mxu0
    %v148 = vadd.f32 %v53, %v147
    %149 = vdwg.mxu0
    %150 = vmatprep.subr.mxu0 0.0
    %151 = vmatpush1.msra.mxu0 0.0
    %152 = vmatprep.subr.mxu0 0.0
    %153 = vmatpush1.msra.mxu0 0.0
    %154 = vmatprep.subr.mxu0 0.0
    %155 = vmatpush1.msra.mxu0 0.0
    %156 = vmatprep.subr.mxu0 0.0
    %157 = vmatpush1.msra.mxu0 0.0
    %158 = vmatprep.subr.mxu0 0.0
    %159 = vmatpush1.msra.mxu0 0.0
    %160 = vmatprep.subr.mxu0 0.0
    %161 = vmatpush1.msra.mxu0 0.0
    %162 = vmatprep.subr.mxu0 0.0
    %163 = vmatpush1.msra.mxu0 0.0
    %164 = vmatprep.subr.mxu0 0.0
    %165 = vmatpush1.msra.mxu0 0.0
    %166 = vmatprep.subr.mxu0 0.0
    %167 = vmatpush1.msra.mxu0 0.0
    %168 = vmatprep.subr.mxu0 0.0
    %169 = vmatpush1.msra.mxu0 0.0
    %170 = vmatprep.subr.mxu0 0.0
    %171 = vmatpush1.msra.mxu0 0.0
    %172 = vmatprep.subr.mxu0 0.0
    %173 = vmatpush1.msra.mxu0 0.0
    %174 = vmatprep.subr.mxu0 %v43
    %175 = vmatpush1.msra.mxu0 %v42
    %176 = vmatprep.subr.mxu0 %v39
    %177 = vmatpush1.msra.mxu0 %v38
    %178 = vmatprep.subr.mxu0 %v35
    %179 = vmatpush1.msra.mxu0 %v34
    %180 = vmatprep.subr.mxu0 %v31
    %181 = vmatpush1.msra.mxu0 %v30
    %182 = vmatprep.subr.mxu0 0.0
    %183 = vmatpush2.msra.mxu0 0.0
    %184 = vmatprep.subr.mxu0 0.0
    %185 = vmatpush2.msra.mxu0 0.0
    %186 = vmatprep.subr.mxu0 0.0
    %187 = vmatpush2.msra.mxu0 0.0
    %188 = vmatprep.subr.mxu0 0.0
    %189 = vmatpush2.msra.mxu0 0.0
    %190 = vmatprep.subr.mxu0 0.0
    %191 = vmatpush2.msra.mxu0 0.0
    %192 = vmatprep.subr.mxu0 0.0
    %193 = vmatpush2.msra.mxu0 0.0
    %194 = vmatprep.subr.mxu0 0.0
    %195 = vmatpush2.msra.mxu0 0.0
    %196 = vmatprep.subr.mxu0 0.0
    %197 = vmatpush2.msra.mxu0 0.0
    %198 = vmatprep.subr.mxu0 0.0
    %199 = vmatpush2.msra.mxu0 0.0
    %200 = vmatprep.subr.mxu0 0.0
    %201 = vmatpush2.msra.mxu0 0.0
    %202 = vmatprep.subr.mxu0 0.0
    %203 = vmatpush2.msra.mxu0 0.0
    %204 = vmatprep.subr.mxu0 0.0
    %205 = vmatpush2.msra.mxu0 0.0
    %206 = vmatprep.subr.mxu0 0.0
    %207 = vmatpush2.msra.mxu0 0.0
    %208 = vmatprep.subr.mxu0 0.0
    %209 = vmatpush2.msra.mxu0 0.0
    %210 = vmatprep.subr.mxu0 0.0
    %211 = vmatpush2.msra.mxu0 0.0
    %212 = vmatprep.subr.mxu0 0.0
    %213 = vmatpush2.msra.mxu0 0.0
    %214 = vmatprep.mubr.f32.mxu0 0.0
    %215 = vmatmul.mubr.f32.gmra.mxu0 %v68
    %v216 = vpop.f32.mrf.mxu0
    %v217 = vadd.f32 %v57, %v216
    %v218 = vpop.f32.mrf.mxu0
    %v219 = vadd.f32 %v61, %v218
    %220 = vmatprep.mubr.f32.mxu0 0.0
    %221 = vmatmul.mubr.f32.gmra.mxu0 %v71
    %v222 = vpop.f32.mrf.mxu0
    %v223 = vadd.f32 %v57, %v222
    %v224 = vpop.f32.mrf.mxu0
    %v225 = vadd.f32 %v61, %v224
    %226 = vdwg.mxu0
    %227 = vst [vmem:[%s3] sm:$0xff] %v140
    %228 = vst [vmem:[%s3 + $0x8] sm:$0xff] %v142
    %229 = vst [vmem:[%s3 + $0x10] sm:$0xff] %v217
    %230 = vst [vmem:[%s3 + $0x18] sm:$0xff] %v219
    %231 = vst [vmem:[%s3 + $0x20] sm:$0xff] %v146
    %232 = vst [vmem:[%s3 + $0x28] sm:$0xff] %v148
    %233 = vst [vmem:[%s3 + $0x30] sm:$0xff] %v223
    %234 = vst [vmem:[%s3 + $0x38] sm:$0xff] %v225
    // Predicated region
    $region18: #{movie_reviews_forward.5} parent=1 // pred_check
      _
    $region19: #{movie_reviews_forward.5} parent=1 // pred_check_branch
      %236 = sbr.rel (0) target = $region21
    $region20: #{movie_reviews_forward.5} parent=1 // pred_region
      _
    $region21: #{movie_reviews_forward.5} parent=1 // pred_fallthru
      _
    // Predicated region
    $region22: #{movie_reviews_forward.5} parent=1 // pred_check
      _
    $region23: #{movie_reviews_forward.5} parent=1 // pred_check_branch
      %238 = sbr.rel (0) target = $region25
    $region24: #{movie_reviews_forward.5} parent=1 // pred_region
      _
    $region25: #{movie_reviews_forward.5} parent=1 // pred_fallthru
      _
    %239 = vsyncpa [#allocation3], 1

// kernel: movie_reviews_forward.9
$region0: #{movie_reviews_forward.9}
  #allocation0 [shape = 'u32[]', space=smem, size = 0x4, offset = 0x4, fixed_abs, tag = 'smem constant byte address 0x4 - core index']
  #allocation1 [shape = 'u32[144,128]{1,0:T(1,128)}', space=vmem, size = 0x12000, scoped, tag = 'internal scratch']
  #allocation2 [shape = 'f32[1,1]{1,0:T(1,128)S(1)}', space=vmem, size = 0x200, scoped, tag = 'scoped memory for movie_reviews_forward.9']
  %s0 = inlined_call_operand.vmem [shape: f32[2,128], index: 0, kind: input, shape index: {}]
  %s1 = inlined_call_operand.vmem [shape: f32[128,1], index: 1, kind: input, shape index: {}]
  %s2 = inlined_call_operand.<no memory space> [shape: f32[1,1], index: 2, kind: input, shape index: {}]
  %s3 = inlined_call_operand.vmem [shape: f32[2,1], index: 3, kind: output, shape index: {}]
  %s4 = sld [smem:[#allocation0]]
  $region22: #{movie_reviews_forward.9} parent=0
    _
  %s6 = ssub.s32 1, %s4
  %s7 = scalar_select 0, %s6, %s4
  %v8 = vstv %s2
  %9 = vst [vmem:[#allocation2] sm:$0x1] %v8
  // Predicated region
  $region2: #{movie_reviews_forward.9} parent=0 // pred_check
    _
  $region3: #{movie_reviews_forward.9} parent=0 // pred_check_branch
    %11 = sbr.rel (0) target = $region5
  $region4: #{movie_reviews_forward.9} parent=0 // pred_region
    _
  $region5: #{movie_reviews_forward.9} parent=0 // pred_fallthru
    _
  // Predicated region
  $region6: #{movie_reviews_forward.9} parent=0 // pred_check
    _
  $region7: #{movie_reviews_forward.9} parent=0 // pred_check_branch
    %13 = sbr.rel (0) target = $region9
  $region8: #{movie_reviews_forward.9} parent=0 // pred_region
    _
  $region9: #{movie_reviews_forward.9} parent=0 // pred_fallthru
    _
  // Predicated region
  $region10: #{movie_reviews_forward.9} parent=0 // pred_check
    _
  $region11: #{movie_reviews_forward.9} parent=0 // pred_check_branch
    %15 = sbr.rel (0) target = $region13
  $region12: #{movie_reviews_forward.9} parent=0 // pred_region
    _
  $region13: #{movie_reviews_forward.9} parent=0 // pred_fallthru
    _
  %v16 = vld [vmem:[%s0] sm:$0x3]
  %v17 = vld [vmem:[%s1] sm:$0xff]
  %v18 = vld [vmem:[%s1 + $0x8] sm:$0xff]
  %v19 = vld [vmem:[%s1 + $0x10] sm:$0xff]
  %v20 = vld [vmem:[%s1 + $0x18] sm:$0xff]
  %v21 = vld [vmem:[%s1 + $0x20] sm:$0xff]
  %v22 = vld [vmem:[%s1 + $0x28] sm:$0xff]
  %v23 = vld [vmem:[%s1 + $0x30] sm:$0xff]
  %v24 = vld [vmem:[%s1 + $0x38] sm:$0xff]
  %v25 = vld [vmem:[%s1 + $0x40] sm:$0xff]
  %v26 = vld [vmem:[%s1 + $0x48] sm:$0xff]
  %v27 = vld [vmem:[%s1 + $0x50] sm:$0xff]
  %v28 = vld [vmem:[%s1 + $0x58] sm:$0xff]
  %v29 = vld [vmem:[%s1 + $0x60] sm:$0xff]
  %v30 = vld [vmem:[%s1 + $0x68] sm:$0xff]
  %v31 = vld [vmem:[%s1 + $0x70] sm:$0xff]
  %v32 = vld [vmem:[%s1 + $0x78] sm:$0xff]
  %v33 = vld [vmem:[#allocation2] sm:$0x1]
  %v35 = vlaneseq
  %v36 = vshrl.u32 %v35, 7
  %v37 = vsub.s32 0, %v36
  %v38 = vrot.slane %v33, %v37
  %40 = vmatprep.subr.mxu0 0.0
  %41 = vmatpush1.msra.mxu0 %v32
  %42 = vmatprep.subr.mxu0 0.0
  %43 = vmatpush1.msra.mxu0 %v31
  %44 = vmatprep.subr.mxu0 0.0
  %45 = vmatpush1.msra.mxu0 %v30
  %46 = vmatprep.subr.mxu0 0.0
  %47 = vmatpush1.msra.mxu0 %v29
  %48 = vmatprep.subr.mxu0 0.0
  %49 = vmatpush1.msra.mxu0 %v28
  %50 = vmatprep.subr.mxu0 0.0
  %51 = vmatpush1.msra.mxu0 %v27
  %52 = vmatprep.subr.mxu0 0.0
  %53 = vmatpush1.msra.mxu0 %v26
  %54 = vmatprep.subr.mxu0 0.0
  %55 = vmatpush1.msra.mxu0 %v25
  %56 = vmatprep.subr.mxu0 0.0
  %57 = vmatpush1.msra.mxu0 %v24
  %58 = vmatprep.subr.mxu0 0.0
  %59 = vmatpush1.msra.mxu0 %v23
  %60 = vmatprep.subr.mxu0 0.0
  %61 = vmatpush1.msra.mxu0 %v22
  %62 = vmatprep.subr.mxu0 0.0
  %63 = vmatpush1.msra.mxu0 %v21
  %64 = vmatprep.subr.mxu0 0.0
  %65 = vmatpush1.msra.mxu0 %v20
  %66 = vmatprep.subr.mxu0 0.0
  %67 = vmatpush1.msra.mxu0 %v19
  %68 = vmatprep.subr.mxu0 0.0
  %69 = vmatpush1.msra.mxu0 %v18
  %70 = vmatprep.subr.mxu0 0.0
  %71 = vmatpush1.msra.mxu0 %v17
  %72 = vmatprep.subr.mxu0 0.0
  %73 = vmatpush2.msra.mxu0 0.0
  %74 = vmatprep.subr.mxu0 0.0
  %75 = vmatpush2.msra.mxu0 0.0
  %76 = vmatprep.subr.mxu0 0.0
  %77 = vmatpush2.msra.mxu0 0.0
  %78 = vmatprep.subr.mxu0 0.0
  %79 = vmatpush2.msra.mxu0 0.0
  %80 = vmatprep.subr.mxu0 0.0
  %81 = vmatpush2.msra.mxu0 0.0
  %82 = vmatprep.subr.mxu0 0.0
  %83 = vmatpush2.msra.mxu0 0.0
  %84 = vmatprep.subr.mxu0 0.0
  %85 = vmatpush2.msra.mxu0 0.0
  %86 = vmatprep.subr.mxu0 0.0
  %87 = vmatpush2.msra.mxu0 0.0
  %88 = vmatprep.subr.mxu0 0.0
  %89 = vmatpush2.msra.mxu0 0.0
  %90 = vmatprep.subr.mxu0 0.0
  %91 = vmatpush2.msra.mxu0 0.0
  %92 = vmatprep.subr.mxu0 0.0
  %93 = vmatpush2.msra.mxu0 0.0
  %94 = vmatprep.subr.mxu0 0.0
  %95 = vmatpush2.msra.mxu0 0.0
  %96 = vmatprep.subr.mxu0 0.0
  %97 = vmatpush2.msra.mxu0 0.0
  %98 = vmatprep.subr.mxu0 0.0
  %99 = vmatpush2.msra.mxu0 0.0
  %100 = vmatprep.subr.mxu0 0.0
  %101 = vmatpush2.msra.mxu0 0.0
  %102 = vmatprep.subr.mxu0 0.0
  %103 = vmatpush2.msra.mxu0 0.0
  %104 = vmatprep.mubr.f32.mxu0 0.0
  %105 = vmatmul.mubr.f32.gmra.mxu0 %v16
  %v106 = vpop.f32.mrf.mxu0
  %v107 = vadd.f32 %v38, %v106
  %v108 = vpop.f32.mrf.mxu0
  %109 = vdwg.mxu0
  %v110 = vxor.u32 %v107, 2147483648
  %v111 = vmul.f32 %v110, 1.442695
  %v112 = vpow.pop %v111
  %v113 = vadd.f32 %v112, 1.0
  %v114 = vrcp.pop %v113
  %v115 = vmul.f32 1.0, %v114
  %vm116 = vcmask 1024
  %117 = vst.msk [vmem:[%s3] sm:$0x3] %vm116, %v115
  // Predicated region
  $region14: #{movie_reviews_forward.9} parent=0 // pred_check
    _
  $region15: #{movie_reviews_forward.9} parent=0 // pred_check_branch
    %119 = sbr.rel (0) target = $region17
  $region16: #{movie_reviews_forward.9} parent=0 // pred_region
    _
  $region17: #{movie_reviews_forward.9} parent=0 // pred_fallthru
    _
  // Predicated region
  $region18: #{movie_reviews_forward.9} parent=0 // pred_check
    _
  $region19: #{movie_reviews_forward.9} parent=0 // pred_check_branch
    %121 = sbr.rel (0) target = $region21
  $region20: #{movie_reviews_forward.9} parent=0 // pred_region
    _
  $region21: #{movie_reviews_forward.9} parent=0 // pred_fallthru
    _

// kernel: movie_reviews_forward.6
$region0: #{movie_reviews_forward.6}
  #allocation0 [shape = 'u32[]', space=smem, size = 0x4, offset = 0x4, fixed_abs, tag = 'smem constant byte address 0x4 - core index']
  #allocation1 [shape = 'u32[144,128]{1,0:T(1,128)}', space=vmem, size = 0x12000, scoped, tag = 'internal scratch']
  #allocation2 [shape = 'f32[2,128]{1,0:T(2,128)}', space=vmem, size = 0x400, scoped, tag = 'scratch operand']
  #allocation3 [shape = 'f32[2,128]{1,0:T(2,128)}', space=vmem, size = 0x400, scoped, tag = 'scratch operand']
  %s0 = inlined_call_operand.vmem [shape: f32[8,2,512], index: 0, kind: input, shape index: {}]
  %s1 = inlined_call_operand.vmem [shape: f32[128,512], index: 1, kind: input, shape index: {}]
  %s2 = inlined_call_operand.vmem [shape: f32[2,128], index: 2, kind: input, shape index: {}]
  %s3 = inlined_call_operand.vmem [shape: f32[2,128], index: 3, kind: input, shape index: {}]
  %s4 = inlined_call_operand.vmem [shape: f32[8,2,128], index: 4, kind: output, shape index: {0}]
  %s5 = inlined_call_operand.vmem [shape: f32[2,128], index: 5, kind: output, shape index: {1}]
  %s6 = inlined_call_operand.vmem [shape: f32[2,128], index: 6, kind: output, shape index: {2}]
  %7 = xla_tuple %s4, %s5, %s6
  %s8 = sld [smem:[#allocation0]]
  $region50: #{movie_reviews_forward.6} parent=0
    _
  %s10 = ssub.s32 1, %s8
  %s11 = scalar_select 0, %s10, %s8
  // Predicated region
  $region2: #{movie_reviews_forward.6} parent=0 // pred_check
    _
  $region3: #{movie_reviews_forward.6} parent=0 // pred_check_branch
    %13 = sbr.rel (0) target = $region5
  $region4: #{movie_reviews_forward.6} parent=0 // pred_region
    _
  $region5: #{movie_reviews_forward.6} parent=0 // pred_fallthru
    _
  // Predicated region
  $region6: #{movie_reviews_forward.6} parent=0 // pred_check
    _
  $region7: #{movie_reviews_forward.6} parent=0 // pred_check_branch
    %15 = sbr.rel (0) target = $region9
  $region8: #{movie_reviews_forward.6} parent=0 // pred_region
    _
  $region9: #{movie_reviews_forward.6} parent=0 // pred_fallthru
    _
  // Predicated region
  $region10: #{movie_reviews_forward.6} parent=0 // pred_check
    _
  $region11: #{movie_reviews_forward.6} parent=0 // pred_check_branch
    %17 = sbr.rel (0) target = $region13
  $region12: #{movie_reviews_forward.6} parent=0 // pred_region
    _
  $region13: #{movie_reviews_forward.6} parent=0 // pred_fallthru
    _
  // Predicated region
  $region14: #{movie_reviews_forward.6} parent=0 // pred_check
    _
  $region15: #{movie_reviews_forward.6} parent=0 // pred_check_branch
    %19 = sbr.rel (0) target = $region17
  $region16: #{movie_reviews_forward.6} parent=0 // pred_region
    _
  $region17: #{movie_reviews_forward.6} parent=0 // pred_fallthru
    _
  %p20 = scmp.eq.s32.totalorder 0, 0
  // Predicated region
  $region18: #{movie_reviews_forward.6} parent=0 // pred_check
    %p21 = pneg %p20
  $region19: #{movie_reviews_forward.6} parent=0 // pred_check_branch
    %23 = sbr.rel (%p21) target = $region21
  $region20: #{movie_reviews_forward.6} parent=0 // pred_region
    %v24 = vld [vmem:[%s2] sm:$0x3]
    %25 = vst [vmem:[#allocation2] sm:$0x3] %v24
    %v26 = vld [vmem:[%s3] sm:$0x3]
    %27 = vst [vmem:[#allocation3] sm:$0x3] %v26
  $region21: #{movie_reviews_forward.6} parent=0 // pred_fallthru
    _
  %v28 = vld [vmem:[#allocation2] sm:$0x3]
  %v29 = vld [vmem:[#allocation3] sm:$0x3]
  %v30 = vld [vmem:[%s0] sm:$0xff]
  %v31 = vld [vmem:[%s1] sm:$0xff]
  %v32 = vld [vmem:[%s1 + $0x8] sm:$0xff]
  %v33 = vld [vmem:[%s1 + $0x10] sm:$0xff]
  %v34 = vld [vmem:[%s1 + $0x18] sm:$0xff]
  %v35 = vld [vmem:[%s1 + $0x20] sm:$0xff]
  %v36 = vld [vmem:[%s1 + $0x28] sm:$0xff]
  %v37 = vld [vmem:[%s1 + $0x30] sm:$0xff]
  %v38 = vld [vmem:[%s1 + $0x38] sm:$0xff]
  %v39 = vld [vmem:[%s1 + $0x40] sm:$0xff]
  %v40 = vld [vmem:[%s1 + $0x48] sm:$0xff]
  %v41 = vld [vmem:[%s1 + $0x50] sm:$0xff]
  %v42 = vld [vmem:[%s1 + $0x58] sm:$0xff]
  %v43 = vld [vmem:[%s1 + $0x60] sm:$0xff]
  %v44 = vld [vmem:[%s1 + $0x68] sm:$0xff]
  %v45 = vld [vmem:[%s1 + $0x70] sm:$0xff]
  %v46 = vld [vmem:[%s1 + $0x78] sm:$0xff]
  %v47 = vld [vmem:[%s1 + $0x80] sm:$0xff]
  %v48 = vld [vmem:[%s1 + $0x88] sm:$0xff]
  %v49 = vld [vmem:[%s1 + $0x90] sm:$0xff]
  %v50 = vld [vmem:[%s1 + $0x98] sm:$0xff]
  %v51 = vld [vmem:[%s1 + $0xa0] sm:$0xff]
  %v52 = vld [vmem:[%s1 + $0xa8] sm:$0xff]
  %v53 = vld [vmem:[%s1 + $0xb0] sm:$0xff]
  %v54 = vld [vmem:[%s1 + $0xb8] sm:$0xff]
  %v55 = vld [vmem:[%s1 + $0xc0] sm:$0xff]
  %v56 = vld [vmem:[%s1 + $0xc8] sm:$0xff]
  %v57 = vld [vmem:[%s1 + $0xd0] sm:$0xff]
  %v58 = vld [vmem:[%s1 + $0xd8] sm:$0xff]
  %v59 = vld [vmem:[%s1 + $0xe0] sm:$0xff]
  %v60 = vld [vmem:[%s1 + $0xe8] sm:$0xff]
  %v61 = vld [vmem:[%s1 + $0xf0] sm:$0xff]
  %v62 = vld [vmem:[%s1 + $0xf8] sm:$0xff]
  %v63 = vld [vmem:[%s1 + $0x100] sm:$0xff]
  %v64 = vld [vmem:[%s1 + $0x108] sm:$0xff]
  %v65 = vld [vmem:[%s1 + $0x110] sm:$0xff]
  %v66 = vld [vmem:[%s1 + $0x118] sm:$0xff]
  %v67 = vld [vmem:[%s1 + $0x120] sm:$0xff]
  %v68 = vld [vmem:[%s1 + $0x128] sm:$0xff]
  %v69 = vld [vmem:[%s1 + $0x130] sm:$0xff]
  %v70 = vld [vmem:[%s1 + $0x138] sm:$0xff]
  %v71 = vld [vmem:[%s1 + $0x140] sm:$0xff]
  %v72 = vld [vmem:[%s1 + $0x148] sm:$0xff]
  %v73 = vld [vmem:[%s1 + $0x150] sm:$0xff]
  %v74 = vld [vmem:[%s1 + $0x158] sm:$0xff]
  %v75 = vld [vmem:[%s1 + $0x160] sm:$0xff]
  %v76 = vld [vmem:[%s1 + $0x168] sm:$0xff]
  %v77 = vld [vmem:[%s1 + $0x170] sm:$0xff]
  %v78 = vld [vmem:[%s1 + $0x178] sm:$0xff]
  %v79 = vld [vmem:[%s1 + $0x180] sm:$0xff]
  %v80 = vld [vmem:[%s1 + $0x188] sm:$0xff]
  %v81 = vld [vmem:[%s1 + $0x190] sm:$0xff]
  %v82 = vld [vmem:[%s1 + $0x198] sm:$0xff]
  %v83 = vld [vmem:[%s1 + $0x1a0] sm:$0xff]
  %v84 = vld [vmem:[%s1 + $0x1a8] sm:$0xff]
  %v85 = vld [vmem:[%s1 + $0x1b0] sm:$0xff]
  %v86 = vld [vmem:[%s1 + $0x1b8] sm:$0xff]
  %v87 = vld [vmem:[%s1 + $0x1c0] sm:$0xff]
  %v88 = vld [vmem:[%s1 + $0x1c8] sm:$0xff]
  %v89 = vld [vmem:[%s1 + $0x1d0] sm:$0xff]
  %v90 = vld [vmem:[%s1 + $0x1d8] sm:$0xff]
  %v91 = vld [vmem:[%s1 + $0x1e0] sm:$0xff]
  %v92 = vld [vmem:[%s1 + $0x1e8] sm:$0xff]
  %v93 = vld [vmem:[%s1 + $0x1f0] sm:$0xff]
  %v94 = vld [vmem:[%s1 + $0x1f8] sm:$0xff]
  %95 = vmatprep.subr.mxu0 %v92
  %96 = vmatpush1.msra.mxu0 %v91
  %97 = vmatprep.subr.mxu0 %v88
  %98 = vmatpush1.msra.mxu0 %v87
  %99 = vmatprep.subr.mxu0 %v84
  %100 = vmatpush1.msra.mxu0 %v83
  %101 = vmatprep.subr.mxu0 %v80
  %102 = vmatpush1.msra.mxu0 %v79
  %103 = vmatprep.subr.mxu0 %v76
  %104 = vmatpush1.msra.mxu0 %v75
  %105 = vmatprep.subr.mxu0 %v72
  %106 = vmatpush1.msra.mxu0 %v71
  %107 = vmatprep.subr.mxu0 %v68
  %108 = vmatpush1.msra.mxu0 %v67
  %109 = vmatprep.subr.mxu0 %v64
  %110 = vmatpush1.msra.mxu0 %v63
  %111 = vmatprep.subr.mxu0 %v60
  %112 = vmatpush1.msra.mxu0 %v59
  %113 = vmatprep.subr.mxu0 %v56
  %114 = vmatpush1.msra.mxu0 %v55
  %115 = vmatprep.subr.mxu0 %v52
  %116 = vmatpush1.msra.mxu0 %v51
  %117 = vmatprep.subr.mxu0 %v48
  %118 = vmatpush1.msra.mxu0 %v47
  %119 = vmatprep.subr.mxu0 %v44
  %120 = vmatpush1.msra.mxu0 %v43
  %121 = vmatprep.subr.mxu0 %v40
  %122 = vmatpush1.msra.mxu0 %v39
  %123 = vmatprep.subr.mxu0 %v36
  %124 = vmatpush1.msra.mxu0 %v35
  %125 = vmatprep.subr.mxu0 %v32
  %126 = vmatpush1.msra.mxu0 %v31
  %127 = vmatprep.subr.mxu0 0.0
  %128 = vmatpush2.msra.mxu0 0.0
  %129 = vmatprep.subr.mxu0 0.0
  %130 = vmatpush2.msra.mxu0 0.0
  %131 = vmatprep.subr.mxu0 0.0
  %132 = vmatpush2.msra.mxu0 0.0
  %133 = vmatprep.subr.mxu0 0.0
  %134 = vmatpush2.msra.mxu0 0.0
  %135 = vmatprep.subr.mxu0 0.0
  %136 = vmatpush2.msra.mxu0 0.0
  %137 = vmatprep.subr.mxu0 0.0
  %138 = vmatpush2.msra.mxu0 0.0
  %139 = vmatprep.subr.mxu0 0.0
  %140 = vmatpush2.msra.mxu0 0.0
  %141 = vmatprep.subr.mxu0 0.0
  %142 = vmatpush2.msra.mxu0 0.0
  %143 = vmatprep.subr.mxu0 0.0
  %144 = vmatpush2.msra.mxu0 0.0
  %145 = vmatprep.subr.mxu0 0.0
  %146 = vmatpush2.msra.mxu0 0.0
  %147 = vmatprep.subr.mxu0 0.0
  %148 = vmatpush2.msra.mxu0 0.0
  %149 = vmatprep.subr.mxu0 0.0
  %150 = vmatpush2.msra.mxu0 0.0
  %151 = vmatprep.subr.mxu0 0.0
  %152 = vmatpush2.msra.mxu0 0.0
  %153 = vmatprep.subr.mxu0 0.0
  %154 = vmatpush2.msra.mxu0 0.0
  %155 = vmatprep.subr.mxu0 0.0
  %156 = vmatpush2.msra.mxu0 0.0
  %157 = vmatprep.subr.mxu0 0.0
  %158 = vmatpush2.msra.mxu0 0.0
  %159 = vmatprep.mubr.f32.mxu0 0.0
  %160 = vmatmul.mubr.f32.gmra.mxu0 %v28
  %v161 = vpop.f32.mrf.mxu0
  %v162 = vadd.f32 0.0, %v161
  %v163 = vpop.f32.mrf.mxu0
  %v164 = vadd.f32 0.0, %v163
  %165 = vdwg.mxu0
  %166 = vmatprep.subr.mxu0 %v94
  %167 = vmatpush1.msra.mxu0 %v93
  %168 = vmatprep.subr.mxu0 %v90
  %169 = vmatpush1.msra.mxu0 %v89
  %170 = vmatprep.subr.mxu0 %v86
  %171 = vmatpush1.msra.mxu0 %v85
  %172 = vmatprep.subr.mxu0 %v82
  %173 = vmatpush1.msra.mxu0 %v81
  %174 = vmatprep.subr.mxu0 %v78
  %175 = vmatpush1.msra.mxu0 %v77
  %176 = vmatprep.subr.mxu0 %v74
  %177 = vmatpush1.msra.mxu0 %v73
  %178 = vmatprep.subr.mxu0 %v70
  %179 = vmatpush1.msra.mxu0 %v69
  %180 = vmatprep.subr.mxu0 %v66
  %181 = vmatpush1.msra.mxu0 %v65
  %182 = vmatprep.subr.mxu0 %v62
  %183 = vmatpush1.msra.mxu0 %v61
  %184 = vmatprep.subr.mxu0 %v58
  %185 = vmatpush1.msra.mxu0 %v57
  %186 = vmatprep.subr.mxu0 %v54
  %187 = vmatpush1.msra.mxu0 %v53
  %188 = vmatprep.subr.mxu0 %v50
  %189 = vmatpush1.msra.mxu0 %v49
  %190 = vmatprep.subr.mxu0 %v46
  %191 = vmatpush1.msra.mxu0 %v45
  %192 = vmatprep.subr.mxu0 %v42
  %193 = vmatpush1.msra.mxu0 %v41
  %194 = vmatprep.subr.mxu0 %v38
  %195 = vmatpush1.msra.mxu0 %v37
  %196 = vmatprep.subr.mxu0 %v34
  %197 = vmatpush1.msra.mxu0 %v33
  %198 = vmatprep.subr.mxu0 0.0
  %199 = vmatpush2.msra.mxu0 0.0
  %200 = vmatprep.subr.mxu0 0.0
  %201 = vmatpush2.msra.mxu0 0.0
  %202 = vmatprep.subr.mxu0 0.0
  %203 = vmatpush2.msra.mxu0 0.0
  %204 = vmatprep.subr.mxu0 0.0
  %205 = vmatpush2.msra.mxu0 0.0
  %206 = vmatprep.subr.mxu0 0.0
  %207 = vmatpush2.msra.mxu0 0.0
  %208 = vmatprep.subr.mxu0 0.0
  %209 = vmatpush2.msra.mxu0 0.0
  %210 = vmatprep.subr.mxu0 0.0
  %211 = vmatpush2.msra.mxu0 0.0
  %212 = vmatprep.subr.mxu0 0.0
  %213 = vmatpush2.msra.mxu0 0.0
  %214 = vmatprep.subr.mxu0 0.0
  %215 = vmatpush2.msra.mxu0 0.0
  %216 = vmatprep.subr.mxu0 0.0
  %217 = vmatpush2.msra.mxu0 0.0
  %218 = vmatprep.subr.mxu0 0.0
  %219 = vmatpush2.msra.mxu0 0.0
  %220 = vmatprep.subr.mxu0 0.0
  %221 = vmatpush2.msra.mxu0 0.0
  %222 = vmatprep.subr.mxu0 0.0
  %223 = vmatpush2.msra.mxu0 0.0
  %224 = vmatprep.subr.mxu0 0.0
  %225 = vmatpush2.msra.mxu0 0.0
  %226 = vmatprep.subr.mxu0 0.0
  %227 = vmatpush2.msra.mxu0 0.0
  %228 = vmatprep.subr.mxu0 0.0
  %229 = vmatpush2.msra.mxu0 0.0
  %230 = vmatprep.mubr.f32.mxu0 0.0
  %231 = vmatmul.mubr.f32.gmra.mxu0 %v28
  %v232 = vpop.f32.mrf.mxu0
  %v233 = vadd.f32 0.0, %v232
  %v234 = vpop.f32.mrf.mxu0
  %v235 = vadd.f32 0.0, %v234
  %236 = vdwg.mxu0
  %v241 = vcombine.low %v162, %v164
  %v242 = vcombine.low %v233, %v235
  %v244 = vunpack.c.l.s4 1983009808
  %v245 = vunpack.c.0.s8 %v244
  %v246 = vlaneseq
  %v247 = vshrl.u32 %v246, 7
  %v248 = vsub.s32 %v245, %v247
  %v249 = vrot.slane %v241, %v248
  %v251 = vunpack.c.l.s4 1983009808
  %v252 = vunpack.c.0.s8 %v251
  %v253 = vlaneseq
  %v254 = vshrl.u32 %v253, 7
  %v255 = vsub.s32 %v252, %v254
  %v256 = vrot.slane %v242, %v255
  %v257 = vcombine.low %v249, %v256
  %v259 = vadd.f32 %v30, %v257
  %v260 = vxor.u32 %v259, 2147483648
  %v261 = vmul.f32 %v260, 1.442695
  %v262 = vpow.pop %v261
  %v263 = vadd.f32 %v262, 1.0
  %v264 = vrcp.pop %v263
  %v265 = vmul.f32 1.0, %v264
  %v267 = vrot.slane %v259, 2
  %v269 = vxor.u32 %v267, 2147483648
  %v270 = vmul.f32 %v269, 1.442695
  %v271 = vpow.pop %v270
  %v272 = vadd.f32 %v271, 1.0
  %v273 = vrcp.pop %v272
  %v274 = vmul.f32 1.0, %v273
  %v275 = vrot.slane %v259, 4
  %v277 = vtanh.pop %v275
  %v278 = vrot.slane %v259, 6
  %v280 = vxor.u32 %v278, 2147483648
  %v281 = vmul.f32 %v280, 1.442695
  %v282 = vpow.pop %v281
  %v283 = vadd.f32 %v282, 1.0
  %v284 = vrcp.pop %v283
  %v285 = vmul.f32 1.0, %v284
  %v286 = vmul.f32 %v274, %v29
  %v287 = vmul.f32 %v265, %v277
  %v288 = vadd.f32 %v286, %v287
  %v289 = vtanh.pop %v288
  %v290 = vmul.f32 %v285, %v289
  %291 = vst [vmem:[%s4] sm:$0x3] %v290
  %s292 = scalar_lea.vmem %s0, 8
  %v293 = vld [vmem:[%s292] sm:$0xff]
  %v294 = vld [vmem:[%s1] sm:$0xff]
  %v295 = vld [vmem:[%s1 + $0x8] sm:$0xff]
  %v296 = vld [vmem:[%s1 + $0x10] sm:$0xff]
  %v297 = vld [vmem:[%s1 + $0x18] sm:$0xff]
  %v298 = vld [vmem:[%s1 + $0x20] sm:$0xff]
  %v299 = vld [vmem:[%s1 + $0x28] sm:$0xff]
  %v300 = vld [vmem:[%s1 + $0x30] sm:$0xff]
  %v301 = vld [vmem:[%s1 + $0x38] sm:$0xff]
  %v302 = vld [vmem:[%s1 + $0x40] sm:$0xff]
  %v303 = vld [vmem:[%s1 + $0x48] sm:$0xff]
  %v304 = vld [vmem:[%s1 + $0x50] sm:$0xff]
  %v305 = vld [vmem:[%s1 + $0x58] sm:$0xff]
  %v306 = vld [vmem:[%s1 + $0x60] sm:$0xff]
  %v307 = vld [vmem:[%s1 + $0x68] sm:$0xff]
  %v308 = vld [vmem:[%s1 + $0x70] sm:$0xff]
  %v309 = vld [vmem:[%s1 + $0x78] sm:$0xff]
  %v310 = vld [vmem:[%s1 + $0x80] sm:$0xff]
  %v311 = vld [vmem:[%s1 + $0x88] sm:$0xff]
  %v312 = vld [vmem:[%s1 + $0x90] sm:$0xff]
  %v313 = vld [vmem:[%s1 + $0x98] sm:$0xff]
  %v314 = vld [vmem:[%s1 + $0xa0] sm:$0xff]
  %v315 = vld [vmem:[%s1 + $0xa8] sm:$0xff]
  %v316 = vld [vmem:[%s1 + $0xb0] sm:$0xff]
  %v317 = vld [vmem:[%s1 + $0xb8] sm:$0xff]
  %v318 = vld [vmem:[%s1 + $0xc0] sm:$0xff]
  %v319 = vld [vmem:[%s1 + $0xc8] sm:$0xff]
  %v320 = vld [vmem:[%s1 + $0xd0] sm:$0xff]
  %v321 = vld [vmem:[%s1 + $0xd8] sm:$0xff]
  %v322 = vld [vmem:[%s1 + $0xe0] sm:$0xff]
  %v323 = vld [vmem:[%s1 + $0xe8] sm:$0xff]
  %v324 = vld [vmem:[%s1 + $0xf0] sm:$0xff]
  %v325 = vld [vmem:[%s1 + $0xf8] sm:$0xff]
  %v326 = vld [vmem:[%s1 + $0x100] sm:$0xff]
  %v327 = vld [vmem:[%s1 + $0x108] sm:$0xff]
  %v328 = vld [vmem:[%s1 + $0x110] sm:$0xff]
  %v329 = vld [vmem:[%s1 + $0x118] sm:$0xff]
  %v330 = vld [vmem:[%s1 + $0x120] sm:$0xff]
  %v331 = vld [vmem:[%s1 + $0x128] sm:$0xff]
  %v332 = vld [vmem:[%s1 + $0x130] sm:$0xff]
  %v333 = vld [vmem:[%s1 + $0x138] sm:$0xff]
  %v334 = vld [vmem:[%s1 + $0x140] sm:$0xff]
  %v335 = vld [vmem:[%s1 + $0x148] sm:$0xff]
  %v336 = vld [vmem:[%s1 + $0x150] sm:$0xff]
  %v337 = vld [vmem:[%s1 + $0x158] sm:$0xff]
  %v338 = vld [vmem:[%s1 + $0x160] sm:$0xff]
  %v339 = vld [vmem:[%s1 + $0x168] sm:$0xff]
  %v340 = vld [vmem:[%s1 + $0x170] sm:$0xff]
  %v341 = vld [vmem:[%s1 + $0x178] sm:$0xff]
  %v342 = vld [vmem:[%s1 + $0x180] sm:$0xff]
  %v343 = vld [vmem:[%s1 + $0x188] sm:$0xff]
  %v344 = vld [vmem:[%s1 + $0x190] sm:$0xff]
  %v345 = vld [vmem:[%s1 + $0x198] sm:$0xff]
  %v346 = vld [vmem:[%s1 + $0x1a0] sm:$0xff]
  %v347 = vld [vmem:[%s1 + $0x1a8] sm:$0xff]
  %v348 = vld [vmem:[%s1 + $0x1b0] sm:$0xff]
  %v349 = vld [vmem:[%s1 + $0x1b8] sm:$0xff]
  %v350 = vld [vmem:[%s1 + $0x1c0] sm:$0xff]
  %v351 = vld [vmem:[%s1 + $0x1c8] sm:$0xff]
  %v352 = vld [vmem:[%s1 + $0x1d0] sm:$0xff]
  %v353 = vld [vmem:[%s1 + $0x1d8] sm:$0xff]
  %v354 = vld [vmem:[%s1 + $0x1e0] sm:$0xff]
  %v355 = vld [vmem:[%s1 + $0x1e8] sm:$0xff]
  %v356 = vld [vmem:[%s1 + $0x1f0] sm:$0xff]
  %v357 = vld [vmem:[%s1 + $0x1f8] sm:$0xff]
  %358 = vmatprep.subr.mxu0 %v355
  %359 = vmatpush1.msra.mxu0 %v354
  %360 = vmatprep.subr.mxu0 %v351
  %361 = vmatpush1.msra.mxu0 %v350
  %362 = vmatprep.subr.mxu0 %v347
  %363 = vmatpush1.msra.mxu0 %v346
  %364 = vmatprep.subr.mxu0 %v343
  %365 = vmatpush1.msra.mxu0 %v342
  %366 = vmatprep.subr.mxu0 %v339
  %367 = vmatpush1.msra.mxu0 %v338
  %368 = vmatprep.subr.mxu0 %v335
  %369 = vmatpush1.msra.mxu0 %v334
  %370 = vmatprep.subr.mxu0 %v331
  %371 = vmatpush1.msra.mxu0 %v330
  %372 = vmatprep.subr.mxu0 %v327
  %373 = vmatpush1.msra.mxu0 %v326
  %374 = vmatprep.subr.mxu0 %v323
  %375 = vmatpush1.msra.mxu0 %v322
  %376 = vmatprep.subr.mxu0 %v319
  %377 = vmatpush1.msra.mxu0 %v318
  %378 = vmatprep.subr.mxu0 %v315
  %379 = vmatpush1.msra.mxu0 %v314
  %380 = vmatprep.subr.mxu0 %v311
  %381 = vmatpush1.msra.mxu0 %v310
  %382 = vmatprep.subr.mxu0 %v307
  %383 = vmatpush1.msra.mxu0 %v306
  %384 = vmatprep.subr.mxu0 %v303
  %385 = vmatpush1.msra.mxu0 %v302
  %386 = vmatprep.subr.mxu0 %v299
  %387 = vmatpush1.msra.mxu0 %v298
  %388 = vmatprep.subr.mxu0 %v295
  %389 = vmatpush1.msra.mxu0 %v294
  %390 = vmatprep.subr.mxu0 0.0
  %391 = vmatpush2.msra.mxu0 0.0
  %392 = vmatprep.subr.mxu0 0.0
  %393 = vmatpush2.msra.mxu0 0.0
  %394 = vmatprep.subr.mxu0 0.0
  %395 = vmatpush2.msra.mxu0 0.0
  %396 = vmatprep.subr.mxu0 0.0
  %397 = vmatpush2.msra.mxu0 0.0
  %398 = vmatprep.subr.mxu0 0.0
  %399 = vmatpush2.msra.mxu0 0.0
  %400 = vmatprep.subr.mxu0 0.0
  %401 = vmatpush2.msra.mxu0 0.0
  %402 = vmatprep.subr.mxu0 0.0
  %403 = vmatpush2.msra.mxu0 0.0
  %404 = vmatprep.subr.mxu0 0.0
  %405 = vmatpush2.msra.mxu0 0.0
  %406 = vmatprep.subr.mxu0 0.0
  %407 = vmatpush2.msra.mxu0 0.0
  %408 = vmatprep.subr.mxu0 0.0
  %409 = vmatpush2.msra.mxu0 0.0
  %410 = vmatprep.subr.mxu0 0.0
  %411 = vmatpush2.msra.mxu0 0.0
  %412 = vmatprep.subr.mxu0 0.0
  %413 = vmatpush2.msra.mxu0 0.0
  %414 = vmatprep.subr.mxu0 0.0
  %415 = vmatpush2.msra.mxu0 0.0
  %416 = vmatprep.subr.mxu0 0.0
  %417 = vmatpush2.msra.mxu0 0.0
  %418 = vmatprep.subr.mxu0 0.0
  %419 = vmatpush2.msra.mxu0 0.0
  %420 = vmatprep.subr.mxu0 0.0
  %421 = vmatpush2.msra.mxu0 0.0
  %422 = vmatprep.mubr.f32.mxu0 0.0
  %423 = vmatmul.mubr.f32.gmra.mxu0 %v290
  %v424 = vpop.f32.mrf.mxu0
  %v425 = vadd.f32 0.0, %v424
  %v426 = vpop.f32.mrf.mxu0
  %v427 = vadd.f32 0.0, %v426
  %428 = vdwg.mxu0
  %429 = vmatprep.subr.mxu0 %v357
  %430 = vmatpush1.msra.mxu0 %v356
  %431 = vmatprep.subr.mxu0 %v353
  %432 = vmatpush1.msra.mxu0 %v352
  %433 = vmatprep.subr.mxu0 %v349
  %434 = vmatpush1.msra.mxu0 %v348
  %435 = vmatprep.subr.mxu0 %v345
  %436 = vmatpush1.msra.mxu0 %v344
  %437 = vmatprep.subr.mxu0 %v341
  %438 = vmatpush1.msra.mxu0 %v340
  %439 = vmatprep.subr.mxu0 %v337
  %440 = vmatpush1.msra.mxu0 %v336
  %441 = vmatprep.subr.mxu0 %v333
  %442 = vmatpush1.msra.mxu0 %v332
  %443 = vmatprep.subr.mxu0 %v329
  %444 = vmatpush1.msra.mxu0 %v328
  %445 = vmatprep.subr.mxu0 %v325
  %446 = vmatpush1.msra.mxu0 %v324
  %447 = vmatprep.subr.mxu0 %v321
  %448 = vmatpush1.msra.mxu0 %v320
  %449 = vmatprep.subr.mxu0 %v317
  %450 = vmatpush1.msra.mxu0 %v316
  %451 = vmatprep.subr.mxu0 %v313
  %452 = vmatpush1.msra.mxu0 %v312
  %453 = vmatprep.subr.mxu0 %v309
  %454 = vmatpush1.msra.mxu0 %v308
  %455 = vmatprep.subr.mxu0 %v305
  %456 = vmatpush1.msra.mxu0 %v304
  %457 = vmatprep.subr.mxu0 %v301
  %458 = vmatpush1.msra.mxu0 %v300
  %459 = vmatprep.subr.mxu0 %v297
  %460 = vmatpush1.msra.mxu0 %v296
  %461 = vmatprep.subr.mxu0 0.0
  %462 = vmatpush2.msra.mxu0 0.0
  %463 = vmatprep.subr.mxu0 0.0
  %464 = vmatpush2.msra.mxu0 0.0
  %465 = vmatprep.subr.mxu0 0.0
  %466 = vmatpush2.msra.mxu0 0.0
  %467 = vmatprep.subr.mxu0 0.0
  %468 = vmatpush2.msra.mxu0 0.0
  %469 = vmatprep.subr.mxu0 0.0
  %470 = vmatpush2.msra.mxu0 0.0
  %471 = vmatprep.subr.mxu0 0.0
  %472 = vmatpush2.msra.mxu0 0.0
  %473 = vmatprep.subr.mxu0 0.0
  %474 = vmatpush2.msra.mxu0 0.0
  %475 = vmatprep.subr.mxu0 0.0
  %476 = vmatpush2.msra.mxu0 0.0
  %477 = vmatprep.subr.mxu0 0.0
  %478 = vmatpush2.msra.mxu0 0.0
  %479 = vmatprep.subr.mxu0 0.0
  %480 = vmatpush2.msra.mxu0 0.0
  %481 = vmatprep.subr.mxu0 0.0
  %482 = vmatpush2.msra.mxu0 0.0
  %483 = vmatprep.subr.mxu0 0.0
  %484 = vmatpush2.msra.mxu0 0.0
  %485 = vmatprep.subr.mxu0 0.0
  %486 = vmatpush2.msra.mxu0 0.0
  %487 = vmatprep.subr.mxu0 0.0
  %488 = vmatpush2.msra.mxu0 0.0
  %489 = vmatprep.subr.mxu0 0.0
  %490 = vmatpush2.msra.mxu0 0.0
  %491 = vmatprep.subr.mxu0 0.0
  %492 = vmatpush2.msra.mxu0 0.0
  %493 = vmatprep.mubr.f32.mxu0 0.0
  %494 = vmatmul.mubr.f32.gmra.mxu0 %v290
  %v495 = vpop.f32.mrf.mxu0
  %v496 = vadd.f32 0.0, %v495
  %v497 = vpop.f32.mrf.mxu0
  %v498 = vadd.f32 0.0, %v497
  %499 = vdwg.mxu0
  %v504 = vcombine.low %v425, %v427
  %v505 = vcombine.low %v496, %v498
  %v507 = vunpack.c.l.s4 1983009808
  %v508 = vunpack.c.0.s8 %v507
  %v509 = vlaneseq
  %v510 = vshrl.u32 %v509, 7
  %v511 = vsub.s32 %v508, %v510
  %v512 = vrot.slane %v504, %v511
  %v514 = vunpack.c.l.s4 1983009808
  %v515 = vunpack.c.0.s8 %v514
  %v516 = vlaneseq
  %v517 = vshrl.u32 %v516, 7
  %v518 = vsub.s32 %v515, %v517
  %v519 = vrot.slane %v505, %v518
  %v520 = vcombine.low %v512, %v519
  %v522 = vadd.f32 %v293, %v520
  %v523 = vxor.u32 %v522, 2147483648
  %v524 = vmul.f32 %v523, 1.442695
  %v525 = vpow.pop %v524
  %v526 = vadd.f32 %v525, 1.0
  %v527 = vrcp.pop %v526
  %v528 = vmul.f32 1.0, %v527
  %v530 = vrot.slane %v522, 2
  %v532 = vxor.u32 %v530, 2147483648
  %v533 = vmul.f32 %v532, 1.442695
  %v534 = vpow.pop %v533
  %v535 = vadd.f32 %v534, 1.0
  %v536 = vrcp.pop %v535
  %v537 = vmul.f32 1.0, %v536
  %v538 = vrot.slane %v522, 4
  %v540 = vtanh.pop %v538
  %v541 = vrot.slane %v522, 6
  %v543 = vxor.u32 %v541, 2147483648
  %v544 = vmul.f32 %v543, 1.442695
  %v545 = vpow.pop %v544
  %v546 = vadd.f32 %v545, 1.0
  %v547 = vrcp.pop %v546
  %v548 = vmul.f32 1.0, %v547
  %v549 = vmul.f32 %v537, %v288
  %v550 = vmul.f32 %v528, %v540
  %v551 = vadd.f32 %v549, %v550
  %v552 = vtanh.pop %v551
  %v553 = vmul.f32 %v548, %v552
  %s554 = scalar_lea.vmem %s4, 2
  %555 = vst [vmem:[%s554] sm:$0x3] %v553
  %s556 = scalar_lea.vmem %s0, 16
  %v557 = vld [vmem:[%s556] sm:$0xff]
  %v558 = vld [vmem:[%s1] sm:$0xff]
  %v559 = vld [vmem:[%s1 + $0x8] sm:$0xff]
  %v560 = vld [vmem:[%s1 + $0x10] sm:$0xff]
  %v561 = vld [vmem:[%s1 + $0x18] sm:$0xff]
  %v562 = vld [vmem:[%s1 + $0x20] sm:$0xff]
  %v563 = vld [vmem:[%s1 + $0x28] sm:$0xff]
  %v564 = vld [vmem:[%s1 + $0x30] sm:$0xff]
  %v565 = vld [vmem:[%s1 + $0x38] sm:$0xff]
  %v566 = vld [vmem:[%s1 + $0x40] sm:$0xff]
  %v567 = vld [vmem:[%s1 + $0x48] sm:$0xff]
  %v568 = vld [vmem:[%s1 + $0x50] sm:$0xff]
  %v569 = vld [vmem:[%s1 + $0x58] sm:$0xff]
  %v570 = vld [vmem:[%s1 + $0x60] sm:$0xff]
  %v571 = vld [vmem:[%s1 + $0x68] sm:$0xff]
  %v572 = vld [vmem:[%s1 + $0x70] sm:$0xff]
  %v573 = vld [vmem:[%s1 + $0x78] sm:$0xff]
  %v574 = vld [vmem:[%s1 + $0x80] sm:$0xff]
  %v575 = vld [vmem:[%s1 + $0x88] sm:$0xff]
  %v576 = vld [vmem:[%s1 + $0x90] sm:$0xff]
  %v577 = vld [vmem:[%s1 + $0x98] sm:$0xff]
  %v578 = vld [vmem:[%s1 + $0xa0] sm:$0xff]
  %v579 = vld [vmem:[%s1 + $0xa8] sm:$0xff]
  %v580 = vld [vmem:[%s1 + $0xb0] sm:$0xff]
  %v581 = vld [vmem:[%s1 + $0xb8] sm:$0xff]
  %v582 = vld [vmem:[%s1 + $0xc0] sm:$0xff]
  %v583 = vld [vmem:[%s1 + $0xc8] sm:$0xff]
  %v584 = vld [vmem:[%s1 + $0xd0] sm:$0xff]
  %v585 = vld [vmem:[%s1 + $0xd8] sm:$0xff]
  %v586 = vld [vmem:[%s1 + $0xe0] sm:$0xff]
  %v587 = vld [vmem:[%s1 + $0xe8] sm:$0xff]
  %v588 = vld [vmem:[%s1 + $0xf0] sm:$0xff]
  %v589 = vld [vmem:[%s1 + $0xf8] sm:$0xff]
  %v590 = vld [vmem:[%s1 + $0x100] sm:$0xff]
  %v591 = vld [vmem:[%s1 + $0x108] sm:$0xff]
  %v592 = vld [vmem:[%s1 + $0x110] sm:$0xff]
  %v593 = vld [vmem:[%s1 + $0x118] sm:$0xff]
  %v594 = vld [vmem:[%s1 + $0x120] sm:$0xff]
  %v595 = vld [vmem:[%s1 + $0x128] sm:$0xff]
  %v596 = vld [vmem:[%s1 + $0x130] sm:$0xff]
  %v597 = vld [vmem:[%s1 + $0x138] sm:$0xff]
  %v598 = vld [vmem:[%s1 + $0x140] sm:$0xff]
  %v599 = vld [vmem:[%s1 + $0x148] sm:$0xff]
  %v600 = vld [vmem:[%s1 + $0x150] sm:$0xff]
  %v601 = vld [vmem:[%s1 + $0x158] sm:$0xff]
  %v602 = vld [vmem:[%s1 + $0x160] sm:$0xff]
  %v603 = vld [vmem:[%s1 + $0x168] sm:$0xff]
  %v604 = vld [vmem:[%s1 + $0x170] sm:$0xff]
  %v605 = vld [vmem:[%s1 + $0x178] sm:$0xff]
  %v606 = vld [vmem:[%s1 + $0x180] sm:$0xff]
  %v607 = vld [vmem:[%s1 + $0x188] sm:$0xff]
  %v608 = vld [vmem:[%s1 + $0x190] sm:$0xff]
  %v609 = vld [vmem:[%s1 + $0x198] sm:$0xff]
  %v610 = vld [vmem:[%s1 + $0x1a0] sm:$0xff]
  %v611 = vld [vmem:[%s1 + $0x1a8] sm:$0xff]
  %v612 = vld [vmem:[%s1 + $0x1b0] sm:$0xff]
  %v613 = vld [vmem:[%s1 + $0x1b8] sm:$0xff]
  %v614 = vld [vmem:[%s1 + $0x1c0] sm:$0xff]
  %v615 = vld [vmem:[%s1 + $0x1c8] sm:$0xff]
  %v616 = vld [vmem:[%s1 + $0x1d0] sm:$0xff]
  %v617 = vld [vmem:[%s1 + $0x1d8] sm:$0xff]
  %v618 = vld [vmem:[%s1 + $0x1e0] sm:$0xff]
  %v619 = vld [vmem:[%s1 + $0x1e8] sm:$0xff]
  %v620 = vld [vmem:[%s1 + $0x1f0] sm:$0xff]
  %v621 = vld [vmem:[%s1 + $0x1f8] sm:$0xff]
  %622 = vmatprep.subr.mxu0 %v619
  %623 = vmatpush1.msra.mxu0 %v618
  %624 = vmatprep.subr.mxu0 %v615
  %625 = vmatpush1.msra.mxu0 %v614
  %626 = vmatprep.subr.mxu0 %v611
  %627 = vmatpush1.msra.mxu0 %v610
  %628 = vmatprep.subr.mxu0 %v607
  %629 = vmatpush1.msra.mxu0 %v606
  %630 = vmatprep.subr.mxu0 %v603
  %631 = vmatpush1.msra.mxu0 %v602
  %632 = vmatprep.subr.mxu0 %v599
  %633 = vmatpush1.msra.mxu0 %v598
  %634 = vmatprep.subr.mxu0 %v595
  %635 = vmatpush1.msra.mxu0 %v594
  %636 = vmatprep.subr.mxu0 %v591
  %637 = vmatpush1.msra.mxu0 %v590
  %638 = vmatprep.subr.mxu0 %v587
  %639 = vmatpush1.msra.mxu0 %v586
  %640 = vmatprep.subr.mxu0 %v583
  %641 = vmatpush1.msra.mxu0 %v582
  %642 = vmatprep.subr.mxu0 %v579
  %643 = vmatpush1.msra.mxu0 %v578
  %644 = vmatprep.subr.mxu0 %v575
  %645 = vmatpush1.msra.mxu0 %v574
  %646 = vmatprep.subr.mxu0 %v571
  %647 = vmatpush1.msra.mxu0 %v570
  %648 = vmatprep.subr.mxu0 %v567
  %649 = vmatpush1.msra.mxu0 %v566
  %650 = vmatprep.subr.mxu0 %v563
  %651 = vmatpush1.msra.mxu0 %v562
  %652 = vmatprep.subr.mxu0 %v559
  %653 = vmatpush1.msra.mxu0 %v558
  %654 = vmatprep.subr.mxu0 0.0
  %655 = vmatpush2.msra.mxu0 0.0
  %656 = vmatprep.subr.mxu0 0.0
  %657 = vmatpush2.msra.mxu0 0.0
  %658 = vmatprep.subr.mxu0 0.0
  %659 = vmatpush2.msra.mxu0 0.0
  %660 = vmatprep.subr.mxu0 0.0
  %661 = vmatpush2.msra.mxu0 0.0
  %662 = vmatprep.subr.mxu0 0.0
  %663 = vmatpush2.msra.mxu0 0.0
  %664 = vmatprep.subr.mxu0 0.0
  %665 = vmatpush2.msra.mxu0 0.0
  %666 = vmatprep.subr.mxu0 0.0
  %667 = vmatpush2.msra.mxu0 0.0
  %668 = vmatprep.subr.mxu0 0.0
  %669 = vmatpush2.msra.mxu0 0.0
  %670 = vmatprep.subr.mxu0 0.0
  %671 = vmatpush2.msra.mxu0 0.0
  %672 = vmatprep.subr.mxu0 0.0
  %673 = vmatpush2.msra.mxu0 0.0
  %674 = vmatprep.subr.mxu0 0.0
  %675 = vmatpush2.msra.mxu0 0.0
  %676 = vmatprep.subr.mxu0 0.0
  %677 = vmatpush2.msra.mxu0 0.0
  %678 = vmatprep.subr.mxu0 0.0
  %679 = vmatpush2.msra.mxu0 0.0
  %680 = vmatprep.subr.mxu0 0.0
  %681 = vmatpush2.msra.mxu0 0.0
  %682 = vmatprep.subr.mxu0 0.0
  %683 = vmatpush2.msra.mxu0 0.0
  %684 = vmatprep.subr.mxu0 0.0
  %685 = vmatpush2.msra.mxu0 0.0
  %686 = vmatprep.mubr.f32.mxu0 0.0
  %687 = vmatmul.mubr.f32.gmra.mxu0 %v553
  %v688 = vpop.f32.mrf.mxu0
  %v689 = vadd.f32 0.0, %v688
  %v690 = vpop.f32.mrf.mxu0
  %v691 = vadd.f32 0.0, %v690
  %692 = vdwg.mxu0
  %693 = vmatprep.subr.mxu0 %v621
  %694 = vmatpush1.msra.mxu0 %v620
  %695 = vmatprep.subr.mxu0 %v617
  %696 = vmatpush1.msra.mxu0 %v616
  %697 = vmatprep.subr.mxu0 %v613
  %698 = vmatpush1.msra.mxu0 %v612
  %699 = vmatprep.subr.mxu0 %v609
  %700 = vmatpush1.msra.mxu0 %v608
  %701 = vmatprep.subr.mxu0 %v605
  %702 = vmatpush1.msra.mxu0 %v604
  %703 = vmatprep.subr.mxu0 %v601
  %704 = vmatpush1.msra.mxu0 %v600
  %705 = vmatprep.subr.mxu0 %v597
  %706 = vmatpush1.msra.mxu0 %v596
  %707 = vmatprep.subr.mxu0 %v593
  %708 = vmatpush1.msra.mxu0 %v592
  %709 = vmatprep.subr.mxu0 %v589
  %710 = vmatpush1.msra.mxu0 %v588
  %711 = vmatprep.subr.mxu0 %v585
  %712 = vmatpush1.msra.mxu0 %v584
  %713 = vmatprep.subr.mxu0 %v581
  %714 = vmatpush1.msra.mxu0 %v580
  %715 = vmatprep.subr.mxu0 %v577
  %716 = vmatpush1.msra.mxu0 %v576
  %717 = vmatprep.subr.mxu0 %v573
  %718 = vmatpush1.msra.mxu0 %v572
  %719 = vmatprep.subr.mxu0 %v569
  %720 = vmatpush1.msra.mxu0 %v568
  %721 = vmatprep.subr.mxu0 %v565
  %722 = vmatpush1.msra.mxu0 %v564
  %723 = vmatprep.subr.mxu0 %v561
  %724 = vmatpush1.msra.mxu0 %v560
  %725 = vmatprep.subr.mxu0 0.0
  %726 = vmatpush2.msra.mxu0 0.0
  %727 = vmatprep.subr.mxu0 0.0
  %728 = vmatpush2.msra.mxu0 0.0
  %729 = vmatprep.subr.mxu0 0.0
  %730 = vmatpush2.msra.mxu0 0.0
  %731 = vmatprep.subr.mxu0 0.0
  %732 = vmatpush2.msra.mxu0 0.0
  %733 = vmatprep.subr.mxu0 0.0
  %734 = vmatpush2.msra.mxu0 0.0
  %735 = vmatprep.subr.mxu0 0.0
  %736 = vmatpush2.msra.mxu0 0.0
  %737 = vmatprep.subr.mxu0 0.0
  %738 = vmatpush2.msra.mxu0 0.0
  %739 = vmatprep.subr.mxu0 0.0
  %740 = vmatpush2.msra.mxu0 0.0
  %741 = vmatprep.subr.mxu0 0.0
  %742 = vmatpush2.msra.mxu0 0.0
  %743 = vmatprep.subr.mxu0 0.0
  %744 = vmatpush2.msra.mxu0 0.0
  %745 = vmatprep.subr.mxu0 0.0
  %746 = vmatpush2.msra.mxu0 0.0
  %747 = vmatprep.subr.mxu0 0.0
  %748 = vmatpush2.msra.mxu0 0.0
  %749 = vmatprep.subr.mxu0 0.0
  %750 = vmatpush2.msra.mxu0 0.0
  %751 = vmatprep.subr.mxu0 0.0
  %752 = vmatpush2.msra.mxu0 0.0
  %753 = vmatprep.subr.mxu0 0.0
  %754 = vmatpush2.msra.mxu0 0.0
  %755 = vmatprep.subr.mxu0 0.0
  %756 = vmatpush2.msra.mxu0 0.0
  %757 = vmatprep.mubr.f32.mxu0 0.0
  %758 = vmatmul.mubr.f32.gmra.mxu0 %v553
  %v759 = vpop.f32.mrf.mxu0
  %v760 = vadd.f32 0.0, %v759
  %v761 = vpop.f32.mrf.mxu0
  %v762 = vadd.f32 0.0, %v761
  %763 = vdwg.mxu0
  %v768 = vcombine.low %v689, %v691
  %v769 = vcombine.low %v760, %v762
  %v771 = vunpack.c.l.s4 1983009808
  %v772 = vunpack.c.0.s8 %v771
  %v773 = vlaneseq
  %v774 = vshrl.u32 %v773, 7
  %v775 = vsub.s32 %v772, %v774
  %v776 = vrot.slane %v768, %v775
  %v778 = vunpack.c.l.s4 1983009808
  %v779 = vunpack.c.0.s8 %v778
  %v780 = vlaneseq
  %v781 = vshrl.u32 %v780, 7
  %v782 = vsub.s32 %v779, %v781
  %v783 = vrot.slane %v769, %v782
  %v784 = vcombine.low %v776, %v783
  %v786 = vadd.f32 %v557, %v784
  %v787 = vxor.u32 %v786, 2147483648
  %v788 = vmul.f32 %v787, 1.442695
  %v789 = vpow.pop %v788
  %v790 = vadd.f32 %v789, 1.0
  %v791 = vrcp.pop %v790
  %v792 = vmul.f32 1.0, %v791
  %v794 = vrot.slane %v786, 2
  %v796 = vxor.u32 %v794, 2147483648
  %v797 = vmul.f32 %v796, 1.442695
  %v798 = vpow.pop %v797
  %v799 = vadd.f32 %v798, 1.0
  %v800 = vrcp.pop %v799
  %v801 = vmul.f32 1.0, %v800
  %v802 = vrot.slane %v786, 4
  %v804 = vtanh.pop %v802
  %v805 = vrot.slane %v786, 6
  %v807 = vxor.u32 %v805, 2147483648
  %v808 = vmul.f32 %v807, 1.442695
  %v809 = vpow.pop %v808
  %v810 = vadd.f32 %v809, 1.0
  %v811 = vrcp.pop %v810
  %v812 = vmul.f32 1.0, %v811
  %v813 = vmul.f32 %v801, %v551
  %v814 = vmul.f32 %v792, %v804
  %v815 = vadd.f32 %v813, %v814
  %v816 = vtanh.pop %v815
  %v817 = vmul.f32 %v812, %v816
  %s818 = scalar_lea.vmem %s4, 4
  %819 = vst [vmem:[%s818] sm:$0x3] %v817
  %s820 = scalar_lea.vmem %s0, 24
  %v821 = vld [vmem:[%s820] sm:$0xff]
  %v822 = vld [vmem:[%s1] sm:$0xff]
  %v823 = vld [vmem:[%s1 + $0x8] sm:$0xff]
  %v824 = vld [vmem:[%s1 + $0x10] sm:$0xff]
  %v825 = vld [vmem:[%s1 + $0x18] sm:$0xff]
  %v826 = vld [vmem:[%s1 + $0x20] sm:$0xff]
  %v827 = vld [vmem:[%s1 + $0x28] sm:$0xff]
  %v828 = vld [vmem:[%s1 + $0x30] sm:$0xff]
  %v829 = vld [vmem:[%s1 + $0x38] sm:$0xff]
  %v830 = vld [vmem:[%s1 + $0x40] sm:$0xff]
  %v831 = vld [vmem:[%s1 + $0x48] sm:$0xff]
  %v832 = vld [vmem:[%s1 + $0x50] sm:$0xff]
  %v833 = vld [vmem:[%s1 + $0x58] sm:$0xff]
  %v834 = vld [vmem:[%s1 + $0x60] sm:$0xff]
  %v835 = vld [vmem:[%s1 + $0x68] sm:$0xff]
  %v836 = vld [vmem:[%s1 + $0x70] sm:$0xff]
  %v837 = vld [vmem:[%s1 + $0x78] sm:$0xff]
  %v838 = vld [vmem:[%s1 + $0x80] sm:$0xff]
  %v839 = vld [vmem:[%s1 + $0x88] sm:$0xff]
  %v840 = vld [vmem:[%s1 + $0x90] sm:$0xff]
  %v841 = vld [vmem:[%s1 + $0x98] sm:$0xff]
  %v842 = vld [vmem:[%s1 + $0xa0] sm:$0xff]
  %v843 = vld [vmem:[%s1 + $0xa8] sm:$0xff]
  %v844 = vld [vmem:[%s1 + $0xb0] sm:$0xff]
  %v845 = vld [vmem:[%s1 + $0xb8] sm:$0xff]
  %v846 = vld [vmem:[%s1 + $0xc0] sm:$0xff]
  %v847 = vld [vmem:[%s1 + $0xc8] sm:$0xff]
  %v848 = vld [vmem:[%s1 + $0xd0] sm:$0xff]
  %v849 = vld [vmem:[%s1 + $0xd8] sm:$0xff]
  %v850 = vld [vmem:[%s1 + $0xe0] sm:$0xff]
  %v851 = vld [vmem:[%s1 + $0xe8] sm:$0xff]
  %v852 = vld [vmem:[%s1 + $0xf0] sm:$0xff]
  %v853 = vld [vmem:[%s1 + $0xf8] sm:$0xff]
  %v854 = vld [vmem:[%s1 + $0x100] sm:$0xff]
  %v855 = vld [vmem:[%s1 + $0x108] sm:$0xff]
  %v856 = vld [vmem:[%s1 + $0x110] sm:$0xff]
  %v857 = vld [vmem:[%s1 + $0x118] sm:$0xff]
  %v858 = vld [vmem:[%s1 + $0x120] sm:$0xff]
  %v859 = vld [vmem:[%s1 + $0x128] sm:$0xff]
  %v860 = vld [vmem:[%s1 + $0x130] sm:$0xff]
  %v861 = vld [vmem:[%s1 + $0x138] sm:$0xff]
  %v862 = vld [vmem:[%s1 + $0x140] sm:$0xff]
  %v863 = vld [vmem:[%s1 + $0x148] sm:$0xff]
  %v864 = vld [vmem:[%s1 + $0x150] sm:$0xff]
  %v865 = vld [vmem:[%s1 + $0x158] sm:$0xff]
  %v866 = vld [vmem:[%s1 + $0x160] sm:$0xff]
  %v867 = vld [vmem:[%s1 + $0x168] sm:$0xff]
  %v868 = vld [vmem:[%s1 + $0x170] sm:$0xff]
  %v869 = vld [vmem:[%s1 + $0x178] sm:$0xff]
  %v870 = vld [vmem:[%s1 + $0x180] sm:$0xff]
  %v871 = vld [vmem:[%s1 + $0x188] sm:$0xff]
  %v872 = vld [vmem:[%s1 + $0x190] sm:$0xff]
  %v873 = vld [vmem:[%s1 + $0x198] sm:$0xff]
  %v874 = vld [vmem:[%s1 + $0x1a0] sm:$0xff]
  %v875 = vld [vmem:[%s1 + $0x1a8] sm:$0xff]
  %v876 = vld [vmem:[%s1 + $0x1b0] sm:$0xff]
  %v877 = vld [vmem:[%s1 + $0x1b8] sm:$0xff]
  %v878 = vld [vmem:[%s1 + $0x1c0] sm:$0xff]
  %v879 = vld [vmem:[%s1 + $0x1c8] sm:$0xff]
  %v880 = vld [vmem:[%s1 + $0x1d0] sm:$0xff]
  %v881 = vld [vmem:[%s1 + $0x1d8] sm:$0xff]
  %v882 = vld [vmem:[%s1 + $0x1e0] sm:$0xff]
  %v883 = vld [vmem:[%s1 + $0x1e8] sm:$0xff]
  %v884 = vld [vmem:[%s1 + $0x1f0] sm:$0xff]
  %v885 = vld [vmem:[%s1 + $0x1f8] sm:$0xff]
  %886 = vmatprep.subr.mxu0 %v883
  %887 = vmatpush1.msra.mxu0 %v882
  %888 = vmatprep.subr.mxu0 %v879
  %889 = vmatpush1.msra.mxu0 %v878
  %890 = vmatprep.subr.mxu0 %v875
  %891 = vmatpush1.msra.mxu0 %v874
  %892 = vmatprep.subr.mxu0 %v871
  %893 = vmatpush1.msra.mxu0 %v870
  %894 = vmatprep.subr.mxu0 %v867
  %895 = vmatpush1.msra.mxu0 %v866
  %896 = vmatprep.subr.mxu0 %v863
  %897 = vmatpush1.msra.mxu0 %v862
  %898 = vmatprep.subr.mxu0 %v859
  %899 = vmatpush1.msra.mxu0 %v858
  %900 = vmatprep.subr.mxu0 %v855
  %901 = vmatpush1.msra.mxu0 %v854
  %902 = vmatprep.subr.mxu0 %v851
  %903 = vmatpush1.msra.mxu0 %v850
  %904 = vmatprep.subr.mxu0 %v847
  %905 = vmatpush1.msra.mxu0 %v846
  %906 = vmatprep.subr.mxu0 %v843
  %907 = vmatpush1.msra.mxu0 %v842
  %908 = vmatprep.subr.mxu0 %v839
  %909 = vmatpush1.msra.mxu0 %v838
  %910 = vmatprep.subr.mxu0 %v835
  %911 = vmatpush1.msra.mxu0 %v834
  %912 = vmatprep.subr.mxu0 %v831
  %913 = vmatpush1.msra.mxu0 %v830
  %914 = vmatprep.subr.mxu0 %v827
  %915 = vmatpush1.msra.mxu0 %v826
  %916 = vmatprep.subr.mxu0 %v823
  %917 = vmatpush1.msra.mxu0 %v822
  %918 = vmatprep.subr.mxu0 0.0
  %919 = vmatpush2.msra.mxu0 0.0
  %920 = vmatprep.subr.mxu0 0.0
  %921 = vmatpush2.msra.mxu0 0.0
  %922 = vmatprep.subr.mxu0 0.0
  %923 = vmatpush2.msra.mxu0 0.0
  %924 = vmatprep.subr.mxu0 0.0
  %925 = vmatpush2.msra.mxu0 0.0
  %926 = vmatprep.subr.mxu0 0.0
  %927 = vmatpush2.msra.mxu0 0.0
  %928 = vmatprep.subr.mxu0 0.0
  %929 = vmatpush2.msra.mxu0 0.0
  %930 = vmatprep.subr.mxu0 0.0
  %931 = vmatpush2.msra.mxu0 0.0
  %932 = vmatprep.subr.mxu0 0.0
  %933 = vmatpush2.msra.mxu0 0.0
  %934 = vmatprep.subr.mxu0 0.0
  %935 = vmatpush2.msra.mxu0 0.0
  %936 = vmatprep.subr.mxu0 0.0
  %937 = vmatpush2.msra.mxu0 0.0
  %938 = vmatprep.subr.mxu0 0.0
  %939 = vmatpush2.msra.mxu0 0.0
  %940 = vmatprep.subr.mxu0 0.0
  %941 = vmatpush2.msra.mxu0 0.0
  %942 = vmatprep.subr.mxu0 0.0
  %943 = vmatpush2.msra.mxu0 0.0
  %944 = vmatprep.subr.mxu0 0.0
  %945 = vmatpush2.msra.mxu0 0.0
  %946 = vmatprep.subr.mxu0 0.0
  %947 = vmatpush2.msra.mxu0 0.0
  %948 = vmatprep.subr.mxu0 0.0
  %949 = vmatpush2.msra.mxu0 0.0
  %950 = vmatprep.mubr.f32.mxu0 0.0
  %951 = vmatmul.mubr.f32.gmra.mxu0 %v817
  %v952 = vpop.f32.mrf.mxu0
  %v953 = vadd.f32 0.0, %v952
  %v954 = vpop.f32.mrf.mxu0
  %v955 = vadd.f32 0.0, %v954
  %956 = vdwg.mxu0
  %957 = vmatprep.subr.mxu0 %v885
  %958 = vmatpush1.msra.mxu0 %v884
  %959 = vmatprep.subr.mxu0 %v881
  %960 = vmatpush1.msra.mxu0 %v880
  %961 = vmatprep.subr.mxu0 %v877
  %962 = vmatpush1.msra.mxu0 %v876
  %963 = vmatprep.subr.mxu0 %v873
  %964 = vmatpush1.msra.mxu0 %v872
  %965 = vmatprep.subr.mxu0 %v869
  %966 = vmatpush1.msra.mxu0 %v868
  %967 = vmatprep.subr.mxu0 %v865
  %968 = vmatpush1.msra.mxu0 %v864
  %969 = vmatprep.subr.mxu0 %v861
  %970 = vmatpush1.msra.mxu0 %v860
  %971 = vmatprep.subr.mxu0 %v857
  %972 = vmatpush1.msra.mxu0 %v856
  %973 = vmatprep.subr.mxu0 %v853
  %974 = vmatpush1.msra.mxu0 %v852
  %975 = vmatprep.subr.mxu0 %v849
  %976 = vmatpush1.msra.mxu0 %v848
  %977 = vmatprep.subr.mxu0 %v845
  %978 = vmatpush1.msra.mxu0 %v844
  %979 = vmatprep.subr.mxu0 %v841
  %980 = vmatpush1.msra.mxu0 %v840
  %981 = vmatprep.subr.mxu0 %v837
  %982 = vmatpush1.msra.mxu0 %v836
  %983 = vmatprep.subr.mxu0 %v833
  %984 = vmatpush1.msra.mxu0 %v832
  %985 = vmatprep.subr.mxu0 %v829
  %986 = vmatpush1.msra.mxu0 %v828
  %987 = vmatprep.subr.mxu0 %v825
  %988 = vmatpush1.msra.mxu0 %v824
  %989 = vmatprep.subr.mxu0 0.0
  %990 = vmatpush2.msra.mxu0 0.0
  %991 = vmatprep.subr.mxu0 0.0
  %992 = vmatpush2.msra.mxu0 0.0
  %993 = vmatprep.subr.mxu0 0.0
  %994 = vmatpush2.msra.mxu0 0.0
  %995 = vmatprep.subr.mxu0 0.0
  %996 = vmatpush2.msra.mxu0 0.0
  %997 = vmatprep.subr.mxu0 0.0
  %998 = vmatpush2.msra.mxu0 0.0
  %999 = vmatprep.subr.mxu0 0.0
  %1000 = vmatpush2.msra.mxu0 0.0
  %1001 = vmatprep.subr.mxu0 0.0
  %1002 = vmatpush2.msra.mxu0 0.0
  %1003 = vmatprep.subr.mxu0 0.0
  %1004 = vmatpush2.msra.mxu0 0.0
  %1005 = vmatprep.subr.mxu0 0.0
  %1006 = vmatpush2.msra.mxu0 0.0
  %1007 = vmatprep.subr.mxu0 0.0
  %1008 = vmatpush2.msra.mxu0 0.0
  %1009 = vmatprep.subr.mxu0 0.0
  %1010 = vmatpush2.msra.mxu0 0.0
  %1011 = vmatprep.subr.mxu0 0.0
  %1012 = vmatpush2.msra.mxu0 0.0
  %1013 = vmatprep.subr.mxu0 0.0
  %1014 = vmatpush2.msra.mxu0 0.0
  %1015 = vmatprep.subr.mxu0 0.0
  %1016 = vmatpush2.msra.mxu0 0.0
  %1017 = vmatprep.subr.mxu0 0.0
  %1018 = vmatpush2.msra.mxu0 0.0
  %1019 = vmatprep.subr.mxu0 0.0
  %1020 = vmatpush2.msra.mxu0 0.0
  %1021 = vmatprep.mubr.f32.mxu0 0.0
  %1022 = vmatmul.mubr.f32.gmra.mxu0 %v817
  %v1023 = vpop.f32.mrf.mxu0
  %v1024 = vadd.f32 0.0, %v1023
  %v1025 = vpop.f32.mrf.mxu0
  %v1026 = vadd.f32 0.0, %v1025
  %1027 = vdwg.mxu0
  %v1032 = vcombine.low %v953, %v955
  %v1033 = vcombine.low %v1024, %v1026
  %v1035 = vunpack.c.l.s4 1983009808
  %v1036 = vunpack.c.0.s8 %v1035
  %v1037 = vlaneseq
  %v1038 = vshrl.u32 %v1037, 7
  %v1039 = vsub.s32 %v1036, %v1038
  %v1040 = vrot.slane %v1032, %v1039
  %v1042 = vunpack.c.l.s4 1983009808
  %v1043 = vunpack.c.0.s8 %v1042
  %v1044 = vlaneseq
  %v1045 = vshrl.u32 %v1044, 7
  %v1046 = vsub.s32 %v1043, %v1045
  %v1047 = vrot.slane %v1033, %v1046
  %v1048 = vcombine.low %v1040, %v1047
  %v1050 = vadd.f32 %v821, %v1048
  %v1051 = vxor.u32 %v1050, 2147483648
  %v1052 = vmul.f32 %v1051, 1.442695
  %v1053 = vpow.pop %v1052
  %v1054 = vadd.f32 %v1053, 1.0
  %v1055 = vrcp.pop %v1054
  %v1056 = vmul.f32 1.0, %v1055
  %v1058 = vrot.slane %v1050, 2
  %v1060 = vxor.u32 %v1058, 2147483648
  %v1061 = vmul.f32 %v1060, 1.442695
  %v1062 = vpow.pop %v1061
  %v1063 = vadd.f32 %v1062, 1.0
  %v1064 = vrcp.pop %v1063
  %v1065 = vmul.f32 1.0, %v1064
  %v1066 = vrot.slane %v1050, 4
  %v1068 = vtanh.pop %v1066
  %v1069 = vrot.slane %v1050, 6
  %v1071 = vxor.u32 %v1069, 2147483648
  %v1072 = vmul.f32 %v1071, 1.442695
  %v1073 = vpow.pop %v1072
  %v1074 = vadd.f32 %v1073, 1.0
  %v1075 = vrcp.pop %v1074
  %v1076 = vmul.f32 1.0, %v1075
  %v1077 = vmul.f32 %v1065, %v815
  %v1078 = vmul.f32 %v1056, %v1068
  %v1079 = vadd.f32 %v1077, %v1078
  %v1080 = vtanh.pop %v1079
  %v1081 = vmul.f32 %v1076, %v1080
  %s1082 = scalar_lea.vmem %s4, 6
  %1083 = vst [vmem:[%s1082] sm:$0x3] %v1081
  %s1084 = scalar_lea.vmem %s0, 32
  %v1085 = vld [vmem:[%s1084] sm:$0xff]
  %v1086 = vld [vmem:[%s1] sm:$0xff]
  %v1087 = vld [vmem:[%s1 + $0x8] sm:$0xff]
  %v1088 = vld [vmem:[%s1 + $0x10] sm:$0xff]
  %v1089 = vld [vmem:[%s1 + $0x18] sm:$0xff]
  %v1090 = vld [vmem:[%s1 + $0x20] sm:$0xff]
  %v1091 = vld [vmem:[%s1 + $0x28] sm:$0xff]
  %v1092 = vld [vmem:[%s1 + $0x30] sm:$0xff]
  %v1093 = vld [vmem:[%s1 + $0x38] sm:$0xff]
  %v1094 = vld [vmem:[%s1 + $0x40] sm:$0xff]
  %v1095 = vld [vmem:[%s1 + $0x48] sm:$0xff]
  %v1096 = vld [vmem:[%s1 + $0x50] sm:$0xff]
  %v1097 = vld [vmem:[%s1 + $0x58] sm:$0xff]
  %v1098 = vld [vmem:[%s1 + $0x60] sm:$0xff]
  %v1099 = vld [vmem:[%s1 + $0x68] sm:$0xff]
  %v1100 = vld [vmem:[%s1 + $0x70] sm:$0xff]
  %v1101 = vld [vmem:[%s1 + $0x78] sm:$0xff]
  %v1102 = vld [vmem:[%s1 + $0x80] sm:$0xff]
  %v1103 = vld [vmem:[%s1 + $0x88] sm:$0xff]
  %v1104 = vld [vmem:[%s1 + $0x90] sm:$0xff]
  %v1105 = vld [vmem:[%s1 + $0x98] sm:$0xff]
  %v1106 = vld [vmem:[%s1 + $0xa0] sm:$0xff]
  %v1107 = vld [vmem:[%s1 + $0xa8] sm:$0xff]
  %v1108 = vld [vmem:[%s1 + $0xb0] sm:$0xff]
  %v1109 = vld [vmem:[%s1 + $0xb8] sm:$0xff]
  %v1110 = vld [vmem:[%s1 + $0xc0] sm:$0xff]
  %v1111 = vld [vmem:[%s1 + $0xc8] sm:$0xff]
  %v1112 = vld [vmem:[%s1 + $0xd0] sm:$0xff]
  %v1113 = vld [vmem:[%s1 + $0xd8] sm:$0xff]
  %v1114 = vld [vmem:[%s1 + $0xe0] sm:$0xff]
  %v1115 = vld [vmem:[%s1 + $0xe8] sm:$0xff]
  %v1116 = vld [vmem:[%s1 + $0xf0] sm:$0xff]
  %v1117 = vld [vmem:[%s1 + $0xf8] sm:$0xff]
  %v1118 = vld [vmem:[%s1 + $0x100] sm:$0xff]
  %v1119 = vld [vmem:[%s1 + $0x108] sm:$0xff]
  %v1120 = vld [vmem:[%s1 + $0x110] sm:$0xff]
  %v1121 = vld [vmem:[%s1 + $0x118] sm:$0xff]
  %v1122 = vld [vmem:[%s1 + $0x120] sm:$0xff]
  %v1123 = vld [vmem:[%s1 + $0x128] sm:$0xff]
  %v1124 = vld [vmem:[%s1 + $0x130] sm:$0xff]
  %v1125 = vld [vmem:[%s1 + $0x138] sm:$0xff]
  %v1126 = vld [vmem:[%s1 + $0x140] sm:$0xff]
  %v1127 = vld [vmem:[%s1 + $0x148] sm:$0xff]
  %v1128 = vld [vmem:[%s1 + $0x150] sm:$0xff]
  %v1129 = vld [vmem:[%s1 + $0x158] sm:$0xff]
  %v1130 = vld [vmem:[%s1 + $0x160] sm:$0xff]
  %v1131 = vld [vmem:[%s1 + $0x168] sm:$0xff]
  %v1132 = vld [vmem:[%s1 + $0x170] sm:$0xff]
  %v1133 = vld [vmem:[%s1 + $0x178] sm:$0xff]
  %v1134 = vld [vmem:[%s1 + $0x180] sm:$0xff]
  %v1135 = vld [vmem:[%s1 + $0x188] sm:$0xff]
  %v1136 = vld [vmem:[%s1 + $0x190] sm:$0xff]
  %v1137 = vld [vmem:[%s1 + $0x198] sm:$0xff]
  %v1138 = vld [vmem:[%s1 + $0x1a0] sm:$0xff]
  %v1139 = vld [vmem:[%s1 + $0x1a8] sm:$0xff]
  %v1140 = vld [vmem:[%s1 + $0x1b0] sm:$0xff]
  %v1141 = vld [vmem:[%s1 + $0x1b8] sm:$0xff]
  %v1142 = vld [vmem:[%s1 + $0x1c0] sm:$0xff]
  %v1143 = vld [vmem:[%s1 + $0x1c8] sm:$0xff]
  %v1144 = vld [vmem:[%s1 + $0x1d0] sm:$0xff]
  %v1145 = vld [vmem:[%s1 + $0x1d8] sm:$0xff]
  %v1146 = vld [vmem:[%s1 + $0x1e0] sm:$0xff]
  %v1147 = vld [vmem:[%s1 + $0x1e8] sm:$0xff]
  %v1148 = vld [vmem:[%s1 + $0x1f0] sm:$0xff]
  %v1149 = vld [vmem:[%s1 + $0x1f8] sm:$0xff]
  %1150 = vmatprep.subr.mxu0 %v1147
  %1151 = vmatpush1.msra.mxu0 %v1146
  %1152 = vmatprep.subr.mxu0 %v1143
  %1153 = vmatpush1.msra.mxu0 %v1142
  %1154 = vmatprep.subr.mxu0 %v1139
  %1155 = vmatpush1.msra.mxu0 %v1138
  %1156 = vmatprep.subr.mxu0 %v1135
  %1157 = vmatpush1.msra.mxu0 %v1134
  %1158 = vmatprep.subr.mxu0 %v1131
  %1159 = vmatpush1.msra.mxu0 %v1130
  %1160 = vmatprep.subr.mxu0 %v1127
  %1161 = vmatpush1.msra.mxu0 %v1126
  %1162 = vmatprep.subr.mxu0 %v1123
  %1163 = vmatpush1.msra.mxu0 %v1122
  %1164 = vmatprep.subr.mxu0 %v1119
  %1165 = vmatpush1.msra.mxu0 %v1118
  %1166 = vmatprep.subr.mxu0 %v1115
  %1167 = vmatpush1.msra.mxu0 %v1114
  %1168 = vmatprep.subr.mxu0 %v1111
  %1169 = vmatpush1.msra.mxu0 %v1110
  %1170 = vmatprep.subr.mxu0 %v1107
  %1171 = vmatpush1.msra.mxu0 %v1106
  %1172 = vmatprep.subr.mxu0 %v1103
  %1173 = vmatpush1.msra.mxu0 %v1102
  %1174 = vmatprep.subr.mxu0 %v1099
  %1175 = vmatpush1.msra.mxu0 %v1098
  %1176 = vmatprep.subr.mxu0 %v1095
  %1177 = vmatpush1.msra.mxu0 %v1094
  %1178 = vmatprep.subr.mxu0 %v1091
  %1179 = vmatpush1.msra.mxu0 %v1090
  %1180 = vmatprep.subr.mxu0 %v1087
  %1181 = vmatpush1.msra.mxu0 %v1086
  %1182 = vmatprep.subr.mxu0 0.0
  %1183 = vmatpush2.msra.mxu0 0.0
  %1184 = vmatprep.subr.mxu0 0.0
  %1185 = vmatpush2.msra.mxu0 0.0
  %1186 = vmatprep.subr.mxu0 0.0
  %1187 = vmatpush2.msra.mxu0 0.0
  %1188 = vmatprep.subr.mxu0 0.0
  %1189 = vmatpush2.msra.mxu0 0.0
  %1190 = vmatprep.subr.mxu0 0.0
  %1191 = vmatpush2.msra.mxu0 0.0
  %1192 = vmatprep.subr.mxu0 0.0
  %1193 = vmatpush2.msra.mxu0 0.0
  %1194 = vmatprep.subr.mxu0 0.0
  %1195 = vmatpush2.msra.mxu0 0.0
  %1196 = vmatprep.subr.mxu0 0.0
  %1197 = vmatpush2.msra.mxu0 0.0
  %1198 = vmatprep.subr.mxu0 0.0
  %1199 = vmatpush2.msra.mxu0 0.0
  %1200 = vmatprep.subr.mxu0 0.0
  %1201 = vmatpush2.msra.mxu0 0.0
  %1202 = vmatprep.subr.mxu0 0.0
  %1203 = vmatpush2.msra.mxu0 0.0
  %1204 = vmatprep.subr.mxu0 0.0
  %1205 = vmatpush2.msra.mxu0 0.0
  %1206 = vmatprep.subr.mxu0 0.0
  %1207 = vmatpush2.msra.mxu0 0.0
  %1208 = vmatprep.subr.mxu0 0.0
  %1209 = vmatpush2.msra.mxu0 0.0
  %1210 = vmatprep.subr.mxu0 0.0
  %1211 = vmatpush2.msra.mxu0 0.0
  %1212 = vmatprep.subr.mxu0 0.0
  %1213 = vmatpush2.msra.mxu0 0.0
  %1214 = vmatprep.mubr.f32.mxu0 0.0
  %1215 = vmatmul.mubr.f32.gmra.mxu0 %v1081
  %v1216 = vpop.f32.mrf.mxu0
  %v1217 = vadd.f32 0.0, %v1216
  %v1218 = vpop.f32.mrf.mxu0
  %v1219 = vadd.f32 0.0, %v1218
  %1220 = vdwg.mxu0
  %1221 = vmatprep.subr.mxu0 %v1149
  %1222 = vmatpush1.msra.mxu0 %v1148
  %1223 = vmatprep.subr.mxu0 %v1145
  %1224 = vmatpush1.msra.mxu0 %v1144
  %1225 = vmatprep.subr.mxu0 %v1141
  %1226 = vmatpush1.msra.mxu0 %v1140
  %1227 = vmatprep.subr.mxu0 %v1137
  %1228 = vmatpush1.msra.mxu0 %v1136
  %1229 = vmatprep.subr.mxu0 %v1133
  %1230 = vmatpush1.msra.mxu0 %v1132
  %1231 = vmatprep.subr.mxu0 %v1129
  %1232 = vmatpush1.msra.mxu0 %v1128
  %1233 = vmatprep.subr.mxu0 %v1125
  %1234 = vmatpush1.msra.mxu0 %v1124
  %1235 = vmatprep.subr.mxu0 %v1121
  %1236 = vmatpush1.msra.mxu0 %v1120
  %1237 = vmatprep.subr.mxu0 %v1117
  %1238 = vmatpush1.msra.mxu0 %v1116
  %1239 = vmatprep.subr.mxu0 %v1113
  %1240 = vmatpush1.msra.mxu0 %v1112
  %1241 = vmatprep.subr.mxu0 %v1109
  %1242 = vmatpush1.msra.mxu0 %v1108
  %1243 = vmatprep.subr.mxu0 %v1105
  %1244 = vmatpush1.msra.mxu0 %v1104
  %1245 = vmatprep.subr.mxu0 %v1101
  %1246 = vmatpush1.msra.mxu0 %v1100
  %1247 = vmatprep.subr.mxu0 %v1097
  %1248 = vmatpush1.msra.mxu0 %v1096
  %1249 = vmatprep.subr.mxu0 %v1093
  %1250 = vmatpush1.msra.mxu0 %v1092
  %1251 = vmatprep.subr.mxu0 %v1089
  %1252 = vmatpush1.msra.mxu0 %v1088
  %1253 = vmatprep.subr.mxu0 0.0
  %1254 = vmatpush2.msra.mxu0 0.0
  %1255 = vmatprep.subr.mxu0 0.0
  %1256 = vmatpush2.msra.mxu0 0.0
  %1257 = vmatprep.subr.mxu0 0.0
  %1258 = vmatpush2.msra.mxu0 0.0
  %1259 = vmatprep.subr.mxu0 0.0
  %1260 = vmatpush2.msra.mxu0 0.0
  %1261 = vmatprep.subr.mxu0 0.0
  %1262 = vmatpush2.msra.mxu0 0.0
  %1263 = vmatprep.subr.mxu0 0.0
  %1264 = vmatpush2.msra.mxu0 0.0
  %1265 = vmatprep.subr.mxu0 0.0
  %1266 = vmatpush2.msra.mxu0 0.0
  %1267 = vmatprep.subr.mxu0 0.0
  %1268 = vmatpush2.msra.mxu0 0.0
  %1269 = vmatprep.subr.mxu0 0.0
  %1270 = vmatpush2.msra.mxu0 0.0
  %1271 = vmatprep.subr.mxu0 0.0
  %1272 = vmatpush2.msra.mxu0 0.0
  %1273 = vmatprep.subr.mxu0 0.0
  %1274 = vmatpush2.msra.mxu0 0.0
  %1275 = vmatprep.subr.mxu0 0.0
  %1276 = vmatpush2.msra.mxu0 0.0
  %1277 = vmatprep.subr.mxu0 0.0
  %1278 = vmatpush2.msra.mxu0 0.0
  %1279 = vmatprep.subr.mxu0 0.0
  %1280 = vmatpush2.msra.mxu0 0.0
  %1281 = vmatprep.subr.mxu0 0.0
  %1282 = vmatpush2.msra.mxu0 0.0
  %1283 = vmatprep.subr.mxu0 0.0
  %1284 = vmatpush2.msra.mxu0 0.0
  %1285 = vmatprep.mubr.f32.mxu0 0.0
  %1286 = vmatmul.mubr.f32.gmra.mxu0 %v1081
  %v1287 = vpop.f32.mrf.mxu0
  %v1288 = vadd.f32 0.0, %v1287
  %v1289 = vpop.f32.mrf.mxu0
  %v1290 = vadd.f32 0.0, %v1289
  %1291 = vdwg.mxu0
  %v1296 = vcombine.low %v1217, %v1219
  %v1297 = vcombine.low %v1288, %v1290
  %v1299 = vunpack.c.l.s4 1983009808
  %v1300 = vunpack.c.0.s8 %v1299
  %v1301 = vlaneseq
  %v1302 = vshrl.u32 %v1301, 7
  %v1303 = vsub.s32 %v1300, %v1302
  %v1304 = vrot.slane %v1296, %v1303
  %v1306 = vunpack.c.l.s4 1983009808
  %v1307 = vunpack.c.0.s8 %v1306
  %v1308 = vlaneseq
  %v1309 = vshrl.u32 %v1308, 7
  %v1310 = vsub.s32 %v1307, %v1309
  %v1311 = vrot.slane %v1297, %v1310
  %v1312 = vcombine.low %v1304, %v1311
  %v1314 = vadd.f32 %v1085, %v1312
  %v1315 = vxor.u32 %v1314, 2147483648
  %v1316 = vmul.f32 %v1315, 1.442695
  %v1317 = vpow.pop %v1316
  %v1318 = vadd.f32 %v1317, 1.0
  %v1319 = vrcp.pop %v1318
  %v1320 = vmul.f32 1.0, %v1319
  %v1322 = vrot.slane %v1314, 2
  %v1324 = vxor.u32 %v1322, 2147483648
  %v1325 = vmul.f32 %v1324, 1.442695
  %v1326 = vpow.pop %v1325
  %v1327 = vadd.f32 %v1326, 1.0
  %v1328 = vrcp.pop %v1327
  %v1329 = vmul.f32 1.0, %v1328
  %v1330 = vrot.slane %v1314, 4
  %v1332 = vtanh.pop %v1330
  %v1333 = vrot.slane %v1314, 6
  %v1335 = vxor.u32 %v1333, 2147483648
  %v1336 = vmul.f32 %v1335, 1.442695
  %v1337 = vpow.pop %v1336
  %v1338 = vadd.f32 %v1337, 1.0
  %v1339 = vrcp.pop %v1338
  %v1340 = vmul.f32 1.0, %v1339
  %v1341 = vmul.f32 %v1329, %v1079
  %v1342 = vmul.f32 %v1320, %v1332
  %v1343 = vadd.f32 %v1341, %v1342
  %v1344 = vtanh.pop %v1343
  %v1345 = vmul.f32 %v1340, %v1344
  %s1346 = scalar_lea.vmem %s4, 8
  %1347 = vst [vmem:[%s1346] sm:$0x3] %v1345
  %s1348 = scalar_lea.vmem %s0, 40
  %v1349 = vld [vmem:[%s1348] sm:$0xff]
  %v1350 = vld [vmem:[%s1] sm:$0xff]
  %v1351 = vld [vmem:[%s1 + $0x8] sm:$0xff]
  %v1352 = vld [vmem:[%s1 + $0x10] sm:$0xff]
  %v1353 = vld [vmem:[%s1 + $0x18] sm:$0xff]
  %v1354 = vld [vmem:[%s1 + $0x20] sm:$0xff]
  %v1355 = vld [vmem:[%s1 + $0x28] sm:$0xff]
  %v1356 = vld [vmem:[%s1 + $0x30] sm:$0xff]
  %v1357 = vld [vmem:[%s1 + $0x38] sm:$0xff]
  %v1358 = vld [vmem:[%s1 + $0x40] sm:$0xff]
  %v1359 = vld [vmem:[%s1 + $0x48] sm:$0xff]
  %v1360 = vld [vmem:[%s1 + $0x50] sm:$0xff]
  %v1361 = vld [vmem:[%s1 + $0x58] sm:$0xff]
  %v1362 = vld [vmem:[%s1 + $0x60] sm:$0xff]
  %v1363 = vld [vmem:[%s1 + $0x68] sm:$0xff]
  %v1364 = vld [vmem:[%s1 + $0x70] sm:$0xff]
  %v1365 = vld [vmem:[%s1 + $0x78] sm:$0xff]
  %v1366 = vld [vmem:[%s1 + $0x80] sm:$0xff]
  %v1367 = vld [vmem:[%s1 + $0x88] sm:$0xff]
  %v1368 = vld [vmem:[%s1 + $0x90] sm:$0xff]
  %v1369 = vld [vmem:[%s1 + $0x98] sm:$0xff]
  %v1370 = vld [vmem:[%s1 + $0xa0] sm:$0xff]
  %v1371 = vld [vmem:[%s1 + $0xa8] sm:$0xff]
  %v1372 = vld [vmem:[%s1 + $0xb0] sm:$0xff]
  %v1373 = vld [vmem:[%s1 + $0xb8] sm:$0xff]
  %v1374 = vld [vmem:[%s1 + $0xc0] sm:$0xff]
  %v1375 = vld [vmem:[%s1 + $0xc8] sm:$0xff]
  %v1376 = vld [vmem:[%s1 + $0xd0] sm:$0xff]
  %v1377 = vld [vmem:[%s1 + $0xd8] sm:$0xff]
  %v1378 = vld [vmem:[%s1 + $0xe0] sm:$0xff]
  %v1379 = vld [vmem:[%s1 + $0xe8] sm:$0xff]
  %v1380 = vld [vmem:[%s1 + $0xf0] sm:$0xff]
  %v1381 = vld [vmem:[%s1 + $0xf8] sm:$0xff]
  %v1382 = vld [vmem:[%s1 + $0x100] sm:$0xff]
  %v1383 = vld [vmem:[%s1 + $0x108] sm:$0xff]
  %v1384 = vld [vmem:[%s1 + $0x110] sm:$0xff]
  %v1385 = vld [vmem:[%s1 + $0x118] sm:$0xff]
  %v1386 = vld [vmem:[%s1 + $0x120] sm:$0xff]
  %v1387 = vld [vmem:[%s1 + $0x128] sm:$0xff]
  %v1388 = vld [vmem:[%s1 + $0x130] sm:$0xff]
  %v1389 = vld [vmem:[%s1 + $0x138] sm:$0xff]
  %v1390 = vld [vmem:[%s1 + $0x140] sm:$0xff]
  %v1391 = vld [vmem:[%s1 + $0x148] sm:$0xff]
  %v1392 = vld [vmem:[%s1 + $0x150] sm:$0xff]
  %v1393 = vld [vmem:[%s1 + $0x158] sm:$0xff]
  %v1394 = vld [vmem:[%s1 + $0x160] sm:$0xff]
  %v1395 = vld [vmem:[%s1 + $0x168] sm:$0xff]
  %v1396 = vld [vmem:[%s1 + $0x170] sm:$0xff]
  %v1397 = vld [vmem:[%s1 + $0x178] sm:$0xff]
  %v1398 = vld [vmem:[%s1 + $0x180] sm:$0xff]
  %v1399 = vld [vmem:[%s1 + $0x188] sm:$0xff]
  %v1400 = vld [vmem:[%s1 + $0x190] sm:$0xff]
  %v1401 = vld [vmem:[%s1 + $0x198] sm:$0xff]
  %v1402 = vld [vmem:[%s1 + $0x1a0] sm:$0xff]
  %v1403 = vld [vmem:[%s1 + $0x1a8] sm:$0xff]
  %v1404 = vld [vmem:[%s1 + $0x1b0] sm:$0xff]
  %v1405 = vld [vmem:[%s1 + $0x1b8] sm:$0xff]
  %v1406 = vld [vmem:[%s1 + $0x1c0] sm:$0xff]
  %v1407 = vld [vmem:[%s1 + $0x1c8] sm:$0xff]
  %v1408 = vld [vmem:[%s1 + $0x1d0] sm:$0xff]
  %v1409 = vld [vmem:[%s1 + $0x1d8] sm:$0xff]
  %v1410 = vld [vmem:[%s1 + $0x1e0] sm:$0xff]
  %v1411 = vld [vmem:[%s1 + $0x1e8] sm:$0xff]
  %v1412 = vld [vmem:[%s1 + $0x1f0] sm:$0xff]
  %v1413 = vld [vmem:[%s1 + $0x1f8] sm:$0xff]
  %1414 = vmatprep.subr.mxu0 %v1411
  %1415 = vmatpush1.msra.mxu0 %v1410
  %1416 = vmatprep.subr.mxu0 %v1407
  %1417 = vmatpush1.msra.mxu0 %v1406
  %1418 = vmatprep.subr.mxu0 %v1403
  %1419 = vmatpush1.msra.mxu0 %v1402
  %1420 = vmatprep.subr.mxu0 %v1399
  %1421 = vmatpush1.msra.mxu0 %v1398
  %1422 = vmatprep.subr.mxu0 %v1395
  %1423 = vmatpush1.msra.mxu0 %v1394
  %1424 = vmatprep.subr.mxu0 %v1391
  %1425 = vmatpush1.msra.mxu0 %v1390
  %1426 = vmatprep.subr.mxu0 %v1387
  %1427 = vmatpush1.msra.mxu0 %v1386
  %1428 = vmatprep.subr.mxu0 %v1383
  %1429 = vmatpush1.msra.mxu0 %v1382
  %1430 = vmatprep.subr.mxu0 %v1379
  %1431 = vmatpush1.msra.mxu0 %v1378
  %1432 = vmatprep.subr.mxu0 %v1375
  %1433 = vmatpush1.msra.mxu0 %v1374
  %1434 = vmatprep.subr.mxu0 %v1371
  %1435 = vmatpush1.msra.mxu0 %v1370
  %1436 = vmatprep.subr.mxu0 %v1367
  %1437 = vmatpush1.msra.mxu0 %v1366
  %1438 = vmatprep.subr.mxu0 %v1363
  %1439 = vmatpush1.msra.mxu0 %v1362
  %1440 = vmatprep.subr.mxu0 %v1359
  %1441 = vmatpush1.msra.mxu0 %v1358
  %1442 = vmatprep.subr.mxu0 %v1355
  %1443 = vmatpush1.msra.mxu0 %v1354
  %1444 = vmatprep.subr.mxu0 %v1351
  %1445 = vmatpush1.msra.mxu0 %v1350
  %1446 = vmatprep.subr.mxu0 0.0
  %1447 = vmatpush2.msra.mxu0 0.0
  %1448 = vmatprep.subr.mxu0 0.0
  %1449 = vmatpush2.msra.mxu0 0.0
  %1450 = vmatprep.subr.mxu0 0.0
  %1451 = vmatpush2.msra.mxu0 0.0
  %1452 = vmatprep.subr.mxu0 0.0
  %1453 = vmatpush2.msra.mxu0 0.0
  %1454 = vmatprep.subr.mxu0 0.0
  %1455 = vmatpush2.msra.mxu0 0.0
  %1456 = vmatprep.subr.mxu0 0.0
  %1457 = vmatpush2.msra.mxu0 0.0
  %1458 = vmatprep.subr.mxu0 0.0
  %1459 = vmatpush2.msra.mxu0 0.0
  %1460 = vmatprep.subr.mxu0 0.0
  %1461 = vmatpush2.msra.mxu0 0.0
  %1462 = vmatprep.subr.mxu0 0.0
  %1463 = vmatpush2.msra.mxu0 0.0
  %1464 = vmatprep.subr.mxu0 0.0
  %1465 = vmatpush2.msra.mxu0 0.0
  %1466 = vmatprep.subr.mxu0 0.0
  %1467 = vmatpush2.msra.mxu0 0.0
  %1468 = vmatprep.subr.mxu0 0.0
  %1469 = vmatpush2.msra.mxu0 0.0
  %1470 = vmatprep.subr.mxu0 0.0
  %1471 = vmatpush2.msra.mxu0 0.0
  %1472 = vmatprep.subr.mxu0 0.0
  %1473 = vmatpush2.msra.mxu0 0.0
  %1474 = vmatprep.subr.mxu0 0.0
  %1475 = vmatpush2.msra.mxu0 0.0
  %1476 = vmatprep.subr.mxu0 0.0
  %1477 = vmatpush2.msra.mxu0 0.0
  %1478 = vmatprep.mubr.f32.mxu0 0.0
  %1479 = vmatmul.mubr.f32.gmra.mxu0 %v1345
  %v1480 = vpop.f32.mrf.mxu0
  %v1481 = vadd.f32 0.0, %v1480
  %v1482 = vpop.f32.mrf.mxu0
  %v1483 = vadd.f32 0.0, %v1482
  %1484 = vdwg.mxu0
  %1485 = vmatprep.subr.mxu0 %v1413
  %1486 = vmatpush1.msra.mxu0 %v1412
  %1487 = vmatprep.subr.mxu0 %v1409
  %1488 = vmatpush1.msra.mxu0 %v1408
  %1489 = vmatprep.subr.mxu0 %v1405
  %1490 = vmatpush1.msra.mxu0 %v1404
  %1491 = vmatprep.subr.mxu0 %v1401
  %1492 = vmatpush1.msra.mxu0 %v1400
  %1493 = vmatprep.subr.mxu0 %v1397
  %1494 = vmatpush1.msra.mxu0 %v1396
  %1495 = vmatprep.subr.mxu0 %v1393
  %1496 = vmatpush1.msra.mxu0 %v1392
  %1497 = vmatprep.subr.mxu0 %v1389
  %1498 = vmatpush1.msra.mxu0 %v1388
  %1499 = vmatprep.subr.mxu0 %v1385
  %1500 = vmatpush1.msra.mxu0 %v1384
  %1501 = vmatprep.subr.mxu0 %v1381
  %1502 = vmatpush1.msra.mxu0 %v1380
  %1503 = vmatprep.subr.mxu0 %v1377
  %1504 = vmatpush1.msra.mxu0 %v1376
  %1505 = vmatprep.subr.mxu0 %v1373
  %1506 = vmatpush1.msra.mxu0 %v1372
  %1507 = vmatprep.subr.mxu0 %v1369
  %1508 = vmatpush1.msra.mxu0 %v1368
  %1509 = vmatprep.subr.mxu0 %v1365
  %1510 = vmatpush1.msra.mxu0 %v1364
  %1511 = vmatprep.subr.mxu0 %v1361
  %1512 = vmatpush1.msra.mxu0 %v1360
  %1513 = vmatprep.subr.mxu0 %v1357
  %1514 = vmatpush1.msra.mxu0 %v1356
  %1515 = vmatprep.subr.mxu0 %v1353
  %1516 = vmatpush1.msra.mxu0 %v1352
  %1517 = vmatprep.subr.mxu0 0.0
  %1518 = vmatpush2.msra.mxu0 0.0
  %1519 = vmatprep.subr.mxu0 0.0
  %1520 = vmatpush2.msra.mxu0 0.0
  %1521 = vmatprep.subr.mxu0 0.0
  %1522 = vmatpush2.msra.mxu0 0.0
  %1523 = vmatprep.subr.mxu0 0.0
  %1524 = vmatpush2.msra.mxu0 0.0
  %1525 = vmatprep.subr.mxu0 0.0
  %1526 = vmatpush2.msra.mxu0 0.0
  %1527 = vmatprep.subr.mxu0 0.0
  %1528 = vmatpush2.msra.mxu0 0.0
  %1529 = vmatprep.subr.mxu0 0.0
  %1530 = vmatpush2.msra.mxu0 0.0
  %1531 = vmatprep.subr.mxu0 0.0
  %1532 = vmatpush2.msra.mxu0 0.0
  %1533 = vmatprep.subr.mxu0 0.0
  %1534 = vmatpush2.msra.mxu0 0.0
  %1535 = vmatprep.subr.mxu0 0.0
  %1536 = vmatpush2.msra.mxu0 0.0
  %1537 = vmatprep.subr.mxu0 0.0
  %1538 = vmatpush2.msra.mxu0 0.0
  %1539 = vmatprep.subr.mxu0 0.0
  %1540 = vmatpush2.msra.mxu0 0.0
  %1541 = vmatprep.subr.mxu0 0.0
  %1542 = vmatpush2.msra.mxu0 0.0
  %1543 = vmatprep.subr.mxu0 0.0
  %1544 = vmatpush2.msra.mxu0 0.0
  %1545 = vmatprep.subr.mxu0 0.0
  %1546 = vmatpush2.msra.mxu0 0.0
  %1547 = vmatprep.subr.mxu0 0.0
  %1548 = vmatpush2.msra.mxu0 0.0
  %1549 = vmatprep.mubr.f32.mxu0 0.0
  %1550 = vmatmul.mubr.f32.gmra.mxu0 %v1345
  %v1551 = vpop.f32.mrf.mxu0
  %v1552 = vadd.f32 0.0, %v1551
  %v1553 = vpop.f32.mrf.mxu0
  %v1554 = vadd.f32 0.0, %v1553
  %1555 = vdwg.mxu0
  %v1560 = vcombine.low %v1481, %v1483
  %v1561 = vcombine.low %v1552, %v1554
  %v1563 = vunpack.c.l.s4 1983009808
  %v1564 = vunpack.c.0.s8 %v1563
  %v1565 = vlaneseq
  %v1566 = vshrl.u32 %v1565, 7
  %v1567 = vsub.s32 %v1564, %v1566
  %v1568 = vrot.slane %v1560, %v1567
  %v1570 = vunpack.c.l.s4 1983009808
  %v1571 = vunpack.c.0.s8 %v1570
  %v1572 = vlaneseq
  %v1573 = vshrl.u32 %v1572, 7
  %v1574 = vsub.s32 %v1571, %v1573
  %v1575 = vrot.slane %v1561, %v1574
  %v1576 = vcombine.low %v1568, %v1575
  %v1578 = vadd.f32 %v1349, %v1576
  %v1579 = vxor.u32 %v1578, 2147483648
  %v1580 = vmul.f32 %v1579, 1.442695
  %v1581 = vpow.pop %v1580
  %v1582 = vadd.f32 %v1581, 1.0
  %v1583 = vrcp.pop %v1582
  %v1584 = vmul.f32 1.0, %v1583
  %v1586 = vrot.slane %v1578, 2
  %v1588 = vxor.u32 %v1586, 2147483648
  %v1589 = vmul.f32 %v1588, 1.442695
  %v1590 = vpow.pop %v1589
  %v1591 = vadd.f32 %v1590, 1.0
  %v1592 = vrcp.pop %v1591
  %v1593 = vmul.f32 1.0, %v1592
  %v1594 = vrot.slane %v1578, 4
  %v1596 = vtanh.pop %v1594
  %v1597 = vrot.slane %v1578, 6
  %v1599 = vxor.u32 %v1597, 2147483648
  %v1600 = vmul.f32 %v1599, 1.442695
  %v1601 = vpow.pop %v1600
  %v1602 = vadd.f32 %v1601, 1.0
  %v1603 = vrcp.pop %v1602
  %v1604 = vmul.f32 1.0, %v1603
  %v1605 = vmul.f32 %v1593, %v1343
  %v1606 = vmul.f32 %v1584, %v1596
  %v1607 = vadd.f32 %v1605, %v1606
  %v1608 = vtanh.pop %v1607
  %v1609 = vmul.f32 %v1604, %v1608
  %s1610 = scalar_lea.vmem %s4, 10
  %1611 = vst [vmem:[%s1610] sm:$0x3] %v1609
  %s1612 = scalar_lea.vmem %s0, 48
  %v1613 = vld [vmem:[%s1612] sm:$0xff]
  %v1614 = vld [vmem:[%s1] sm:$0xff]
  %v1615 = vld [vmem:[%s1 + $0x8] sm:$0xff]
  %v1616 = vld [vmem:[%s1 + $0x10] sm:$0xff]
  %v1617 = vld [vmem:[%s1 + $0x18] sm:$0xff]
  %v1618 = vld [vmem:[%s1 + $0x20] sm:$0xff]
  %v1619 = vld [vmem:[%s1 + $0x28] sm:$0xff]
  %v1620 = vld [vmem:[%s1 + $0x30] sm:$0xff]
  %v1621 = vld [vmem:[%s1 + $0x38] sm:$0xff]
  %v1622 = vld [vmem:[%s1 + $0x40] sm:$0xff]
  %v1623 = vld [vmem:[%s1 + $0x48] sm:$0xff]
  %v1624 = vld [vmem:[%s1 + $0x50] sm:$0xff]
  %v1625 = vld [vmem:[%s1 + $0x58] sm:$0xff]
  %v1626 = vld [vmem:[%s1 + $0x60] sm:$0xff]
  %v1627 = vld [vmem:[%s1 + $0x68] sm:$0xff]
  %v1628 = vld [vmem:[%s1 + $0x70] sm:$0xff]
  %v1629 = vld [vmem:[%s1 + $0x78] sm:$0xff]
  %v1630 = vld [vmem:[%s1 + $0x80] sm:$0xff]
  %v1631 = vld [vmem:[%s1 + $0x88] sm:$0xff]
  %v1632 = vld [vmem:[%s1 + $0x90] sm:$0xff]
  %v1633 = vld [vmem:[%s1 + $0x98] sm:$0xff]
  %v1634 = vld [vmem:[%s1 + $0xa0] sm:$0xff]
  %v1635 = vld [vmem:[%s1 + $0xa8] sm:$0xff]
  %v1636 = vld [vmem:[%s1 + $0xb0] sm:$0xff]
  %v1637 = vld [vmem:[%s1 + $0xb8] sm:$0xff]
  %v1638 = vld [vmem:[%s1 + $0xc0] sm:$0xff]
  %v1639 = vld [vmem:[%s1 + $0xc8] sm:$0xff]
  %v1640 = vld [vmem:[%s1 + $0xd0] sm:$0xff]
  %v1641 = vld [vmem:[%s1 + $0xd8] sm:$0xff]
  %v1642 = vld [vmem:[%s1 + $0xe0] sm:$0xff]
  %v1643 = vld [vmem:[%s1 + $0xe8] sm:$0xff]
  %v1644 = vld [vmem:[%s1 + $0xf0] sm:$0xff]
  %v1645 = vld [vmem:[%s1 + $0xf8] sm:$0xff]
  %v1646 = vld [vmem:[%s1 + $0x100] sm:$0xff]
  %v1647 = vld [vmem:[%s1 + $0x108] sm:$0xff]
  %v1648 = vld [vmem:[%s1 + $0x110] sm:$0xff]
  %v1649 = vld [vmem:[%s1 + $0x118] sm:$0xff]
  %v1650 = vld [vmem:[%s1 + $0x120] sm:$0xff]
  %v1651 = vld [vmem:[%s1 + $0x128] sm:$0xff]
  %v1652 = vld [vmem:[%s1 + $0x130] sm:$0xff]
  %v1653 = vld [vmem:[%s1 + $0x138] sm:$0xff]
  %v1654 = vld [vmem:[%s1 + $0x140] sm:$0xff]
  %v1655 = vld [vmem:[%s1 + $0x148] sm:$0xff]
  %v1656 = vld [vmem:[%s1 + $0x150] sm:$0xff]
  %v1657 = vld [vmem:[%s1 + $0x158] sm:$0xff]
  %v1658 = vld [vmem:[%s1 + $0x160] sm:$0xff]
  %v1659 = vld [vmem:[%s1 + $0x168] sm:$0xff]
  %v1660 = vld [vmem:[%s1 + $0x170] sm:$0xff]
  %v1661 = vld [vmem:[%s1 + $0x178] sm:$0xff]
  %v1662 = vld [vmem:[%s1 + $0x180] sm:$0xff]
  %v1663 = vld [vmem:[%s1 + $0x188] sm:$0xff]
  %v1664 = vld [vmem:[%s1 + $0x190] sm:$0xff]
  %v1665 = vld [vmem:[%s1 + $0x198] sm:$0xff]
  %v1666 = vld [vmem:[%s1 + $0x1a0] sm:$0xff]
  %v1667 = vld [vmem:[%s1 + $0x1a8] sm:$0xff]
  %v1668 = vld [vmem:[%s1 + $0x1b0] sm:$0xff]
  %v1669 = vld [vmem:[%s1 + $0x1b8] sm:$0xff]
  %v1670 = vld [vmem:[%s1 + $0x1c0] sm:$0xff]
  %v1671 = vld [vmem:[%s1 + $0x1c8] sm:$0xff]
  %v1672 = vld [vmem:[%s1 + $0x1d0] sm:$0xff]
  %v1673 = vld [vmem:[%s1 + $0x1d8] sm:$0xff]
  %v1674 = vld [vmem:[%s1 + $0x1e0] sm:$0xff]
  %v1675 = vld [vmem:[%s1 + $0x1e8] sm:$0xff]
  %v1676 = vld [vmem:[%s1 + $0x1f0] sm:$0xff]
  %v1677 = vld [vmem:[%s1 + $0x1f8] sm:$0xff]
  %1678 = vmatprep.subr.mxu0 %v1675
  %1679 = vmatpush1.msra.mxu0 %v1674
  %1680 = vmatprep.subr.mxu0 %v1671
  %1681 = vmatpush1.msra.mxu0 %v1670
  %1682 = vmatprep.subr.mxu0 %v1667
  %1683 = vmatpush1.msra.mxu0 %v1666
  %1684 = vmatprep.subr.mxu0 %v1663
  %1685 = vmatpush1.msra.mxu0 %v1662
  %1686 = vmatprep.subr.mxu0 %v1659
  %1687 = vmatpush1.msra.mxu0 %v1658
  %1688 = vmatprep.subr.mxu0 %v1655
  %1689 = vmatpush1.msra.mxu0 %v1654
  %1690 = vmatprep.subr.mxu0 %v1651
  %1691 = vmatpush1.msra.mxu0 %v1650
  %1692 = vmatprep.subr.mxu0 %v1647
  %1693 = vmatpush1.msra.mxu0 %v1646
  %1694 = vmatprep.subr.mxu0 %v1643
  %1695 = vmatpush1.msra.mxu0 %v1642
  %1696 = vmatprep.subr.mxu0 %v1639
  %1697 = vmatpush1.msra.mxu0 %v1638
  %1698 = vmatprep.subr.mxu0 %v1635
  %1699 = vmatpush1.msra.mxu0 %v1634
  %1700 = vmatprep.subr.mxu0 %v1631
  %1701 = vmatpush1.msra.mxu0 %v1630
  %1702 = vmatprep.subr.mxu0 %v1627
  %1703 = vmatpush1.msra.mxu0 %v1626
  %1704 = vmatprep.subr.mxu0 %v1623
  %1705 = vmatpush1.msra.mxu0 %v1622
  %1706 = vmatprep.subr.mxu0 %v1619
  %1707 = vmatpush1.msra.mxu0 %v1618
  %1708 = vmatprep.subr.mxu0 %v1615
  %1709 = vmatpush1.msra.mxu0 %v1614
  %1710 = vmatprep.subr.mxu0 0.0
  %1711 = vmatpush2.msra.mxu0 0.0
  %1712 = vmatprep.subr.mxu0 0.0
  %1713 = vmatpush2.msra.mxu0 0.0
  %1714 = vmatprep.subr.mxu0 0.0
  %1715 = vmatpush2.msra.mxu0 0.0
  %1716 = vmatprep.subr.mxu0 0.0
  %1717 = vmatpush2.msra.mxu0 0.0
  %1718 = vmatprep.subr.mxu0 0.0
  %1719 = vmatpush2.msra.mxu0 0.0
  %1720 = vmatprep.subr.mxu0 0.0
  %1721 = vmatpush2.msra.mxu0 0.0
  %1722 = vmatprep.subr.mxu0 0.0
  %1723 = vmatpush2.msra.mxu0 0.0
  %1724 = vmatprep.subr.mxu0 0.0
  %1725 = vmatpush2.msra.mxu0 0.0
  %1726 = vmatprep.subr.mxu0 0.0
  %1727 = vmatpush2.msra.mxu0 0.0
  %1728 = vmatprep.subr.mxu0 0.0
  %1729 = vmatpush2.msra.mxu0 0.0
  %1730 = vmatprep.subr.mxu0 0.0
  %1731 = vmatpush2.msra.mxu0 0.0
  %1732 = vmatprep.subr.mxu0 0.0
  %1733 = vmatpush2.msra.mxu0 0.0
  %1734 = vmatprep.subr.mxu0 0.0
  %1735 = vmatpush2.msra.mxu0 0.0
  %1736 = vmatprep.subr.mxu0 0.0
  %1737 = vmatpush2.msra.mxu0 0.0
  %1738 = vmatprep.subr.mxu0 0.0
  %1739 = vmatpush2.msra.mxu0 0.0
  %1740 = vmatprep.subr.mxu0 0.0
  %1741 = vmatpush2.msra.mxu0 0.0
  %1742 = vmatprep.mubr.f32.mxu0 0.0
  %1743 = vmatmul.mubr.f32.gmra.mxu0 %v1609
  %v1744 = vpop.f32.mrf.mxu0
  %v1745 = vadd.f32 0.0, %v1744
  %v1746 = vpop.f32.mrf.mxu0
  %v1747 = vadd.f32 0.0, %v1746
  %1748 = vdwg.mxu0
  %1749 = vmatprep.subr.mxu0 %v1677
  %1750 = vmatpush1.msra.mxu0 %v1676
  %1751 = vmatprep.subr.mxu0 %v1673
  %1752 = vmatpush1.msra.mxu0 %v1672
  %1753 = vmatprep.subr.mxu0 %v1669
  %1754 = vmatpush1.msra.mxu0 %v1668
  %1755 = vmatprep.subr.mxu0 %v1665
  %1756 = vmatpush1.msra.mxu0 %v1664
  %1757 = vmatprep.subr.mxu0 %v1661
  %1758 = vmatpush1.msra.mxu0 %v1660
  %1759 = vmatprep.subr.mxu0 %v1657
  %1760 = vmatpush1.msra.mxu0 %v1656
  %1761 = vmatprep.subr.mxu0 %v1653
  %1762 = vmatpush1.msra.mxu0 %v1652
  %1763 = vmatprep.subr.mxu0 %v1649
  %1764 = vmatpush1.msra.mxu0 %v1648
  %1765 = vmatprep.subr.mxu0 %v1645
  %1766 = vmatpush1.msra.mxu0 %v1644
  %1767 = vmatprep.subr.mxu0 %v1641
  %1768 = vmatpush1.msra.mxu0 %v1640
  %1769 = vmatprep.subr.mxu0 %v1637
  %1770 = vmatpush1.msra.mxu0 %v1636
  %1771 = vmatprep.subr.mxu0 %v1633
  %1772 = vmatpush1.msra.mxu0 %v1632
  %1773 = vmatprep.subr.mxu0 %v1629
  %1774 = vmatpush1.msra.mxu0 %v1628
  %1775 = vmatprep.subr.mxu0 %v1625
  %1776 = vmatpush1.msra.mxu0 %v1624
  %1777 = vmatprep.subr.mxu0 %v1621
  %1778 = vmatpush1.msra.mxu0 %v1620
  %1779 = vmatprep.subr.mxu0 %v1617
  %1780 = vmatpush1.msra.mxu0 %v1616
  %1781 = vmatprep.subr.mxu0 0.0
  %1782 = vmatpush2.msra.mxu0 0.0
  %1783 = vmatprep.subr.mxu0 0.0
  %1784 = vmatpush2.msra.mxu0 0.0
  %1785 = vmatprep.subr.mxu0 0.0
  %1786 = vmatpush2.msra.mxu0 0.0
  %1787 = vmatprep.subr.mxu0 0.0
  %1788 = vmatpush2.msra.mxu0 0.0
  %1789 = vmatprep.subr.mxu0 0.0
  %1790 = vmatpush2.msra.mxu0 0.0
  %1791 = vmatprep.subr.mxu0 0.0
  %1792 = vmatpush2.msra.mxu0 0.0
  %1793 = vmatprep.subr.mxu0 0.0
  %1794 = vmatpush2.msra.mxu0 0.0
  %1795 = vmatprep.subr.mxu0 0.0
  %1796 = vmatpush2.msra.mxu0 0.0
  %1797 = vmatprep.subr.mxu0 0.0
  %1798 = vmatpush2.msra.mxu0 0.0
  %1799 = vmatprep.subr.mxu0 0.0
  %1800 = vmatpush2.msra.mxu0 0.0
  %1801 = vmatprep.subr.mxu0 0.0
  %1802 = vmatpush2.msra.mxu0 0.0
  %1803 = vmatprep.subr.mxu0 0.0
  %1804 = vmatpush2.msra.mxu0 0.0
  %1805 = vmatprep.subr.mxu0 0.0
  %1806 = vmatpush2.msra.mxu0 0.0
  %1807 = vmatprep.subr.mxu0 0.0
  %1808 = vmatpush2.msra.mxu0 0.0
  %1809 = vmatprep.subr.mxu0 0.0
  %1810 = vmatpush2.msra.mxu0 0.0
  %1811 = vmatprep.subr.mxu0 0.0
  %1812 = vmatpush2.msra.mxu0 0.0
  %1813 = vmatprep.mubr.f32.mxu0 0.0
  %1814 = vmatmul.mubr.f32.gmra.mxu0 %v1609
  %v1815 = vpop.f32.mrf.mxu0
  %v1816 = vadd.f32 0.0, %v1815
  %v1817 = vpop.f32.mrf.mxu0
  %v1818 = vadd.f32 0.0, %v1817
  %1819 = vdwg.mxu0
  %v1824 = vcombine.low %v1745, %v1747
  %v1825 = vcombine.low %v1816, %v1818
  %v1827 = vunpack.c.l.s4 1983009808
  %v1828 = vunpack.c.0.s8 %v1827
  %v1829 = vlaneseq
  %v1830 = vshrl.u32 %v1829, 7
  %v1831 = vsub.s32 %v1828, %v1830
  %v1832 = vrot.slane %v1824, %v1831
  %v1834 = vunpack.c.l.s4 1983009808
  %v1835 = vunpack.c.0.s8 %v1834
  %v1836 = vlaneseq
  %v1837 = vshrl.u32 %v1836, 7
  %v1838 = vsub.s32 %v1835, %v1837
  %v1839 = vrot.slane %v1825, %v1838
  %v1840 = vcombine.low %v1832, %v1839
  %v1842 = vadd.f32 %v1613, %v1840
  %v1843 = vxor.u32 %v1842, 2147483648
  %v1844 = vmul.f32 %v1843, 1.442695
  %v1845 = vpow.pop %v1844
  %v1846 = vadd.f32 %v1845, 1.0
  %v1847 = vrcp.pop %v1846
  %v1848 = vmul.f32 1.0, %v1847
  %v1850 = vrot.slane %v1842, 2
  %v1852 = vxor.u32 %v1850, 2147483648
  %v1853 = vmul.f32 %v1852, 1.442695
  %v1854 = vpow.pop %v1853
  %v1855 = vadd.f32 %v1854, 1.0
  %v1856 = vrcp.pop %v1855
  %v1857 = vmul.f32 1.0, %v1856
  %v1858 = vrot.slane %v1842, 4
  %v1860 = vtanh.pop %v1858
  %v1861 = vrot.slane %v1842, 6
  %v1863 = vxor.u32 %v1861, 2147483648
  %v1864 = vmul.f32 %v1863, 1.442695
  %v1865 = vpow.pop %v1864
  %v1866 = vadd.f32 %v1865, 1.0
  %v1867 = vrcp.pop %v1866
  %v1868 = vmul.f32 1.0, %v1867
  %v1869 = vmul.f32 %v1857, %v1607
  %v1870 = vmul.f32 %v1848, %v1860
  %v1871 = vadd.f32 %v1869, %v1870
  %v1872 = vtanh.pop %v1871
  %v1873 = vmul.f32 %v1868, %v1872
  %s1874 = scalar_lea.vmem %s4, 12
  %1875 = vst [vmem:[%s1874] sm:$0x3] %v1873
  %s1876 = scalar_lea.vmem %s0, 56
  %v1877 = vld [vmem:[%s1876] sm:$0xff]
  %v1878 = vld [vmem:[%s1] sm:$0xff]
  %v1879 = vld [vmem:[%s1 + $0x8] sm:$0xff]
  %v1880 = vld [vmem:[%s1 + $0x10] sm:$0xff]
  %v1881 = vld [vmem:[%s1 + $0x18] sm:$0xff]
  %v1882 = vld [vmem:[%s1 + $0x20] sm:$0xff]
  %v1883 = vld [vmem:[%s1 + $0x28] sm:$0xff]
  %v1884 = vld [vmem:[%s1 + $0x30] sm:$0xff]
  %v1885 = vld [vmem:[%s1 + $0x38] sm:$0xff]
  %v1886 = vld [vmem:[%s1 + $0x40] sm:$0xff]
  %v1887 = vld [vmem:[%s1 + $0x48] sm:$0xff]
  %v1888 = vld [vmem:[%s1 + $0x50] sm:$0xff]
  %v1889 = vld [vmem:[%s1 + $0x58] sm:$0xff]
  %v1890 = vld [vmem:[%s1 + $0x60] sm:$0xff]
  %v1891 = vld [vmem:[%s1 + $0x68] sm:$0xff]
  %v1892 = vld [vmem:[%s1 + $0x70] sm:$0xff]
  %v1893 = vld [vmem:[%s1 + $0x78] sm:$0xff]
  %v1894 = vld [vmem:[%s1 + $0x80] sm:$0xff]
  %v1895 = vld [vmem:[%s1 + $0x88] sm:$0xff]
  %v1896 = vld [vmem:[%s1 + $0x90] sm:$0xff]
  %v1897 = vld [vmem:[%s1 + $0x98] sm:$0xff]
  %v1898 = vld [vmem:[%s1 + $0xa0] sm:$0xff]
  %v1899 = vld [vmem:[%s1 + $0xa8] sm:$0xff]
  %v1900 = vld [vmem:[%s1 + $0xb0] sm:$0xff]
  %v1901 = vld [vmem:[%s1 + $0xb8] sm:$0xff]
  %v1902 = vld [vmem:[%s1 + $0xc0] sm:$0xff]
  %v1903 = vld [vmem:[%s1 + $0xc8] sm:$0xff]
  %v1904 = vld [vmem:[%s1 + $0xd0] sm:$0xff]
  %v1905 = vld [vmem:[%s1 + $0xd8] sm:$0xff]
  %v1906 = vld [vmem:[%s1 + $0xe0] sm:$0xff]
  %v1907 = vld [vmem:[%s1 + $0xe8] sm:$0xff]
  %v1908 = vld [vmem:[%s1 + $0xf0] sm:$0xff]
  %v1909 = vld [vmem:[%s1 + $0xf8] sm:$0xff]
  %v1910 = vld [vmem:[%s1 + $0x100] sm:$0xff]
  %v1911 = vld [vmem:[%s1 + $0x108] sm:$0xff]
  %v1912 = vld [vmem:[%s1 + $0x110] sm:$0xff]
  %v1913 = vld [vmem:[%s1 + $0x118] sm:$0xff]
  %v1914 = vld [vmem:[%s1 + $0x120] sm:$0xff]
  %v1915 = vld [vmem:[%s1 + $0x128] sm:$0xff]
  %v1916 = vld [vmem:[%s1 + $0x130] sm:$0xff]
  %v1917 = vld [vmem:[%s1 + $0x138] sm:$0xff]
  %v1918 = vld [vmem:[%s1 + $0x140] sm:$0xff]
  %v1919 = vld [vmem:[%s1 + $0x148] sm:$0xff]
  %v1920 = vld [vmem:[%s1 + $0x150] sm:$0xff]
  %v1921 = vld [vmem:[%s1 + $0x158] sm:$0xff]
  %v1922 = vld [vmem:[%s1 + $0x160] sm:$0xff]
  %v1923 = vld [vmem:[%s1 + $0x168] sm:$0xff]
  %v1924 = vld [vmem:[%s1 + $0x170] sm:$0xff]
  %v1925 = vld [vmem:[%s1 + $0x178] sm:$0xff]
  %v1926 = vld [vmem:[%s1 + $0x180] sm:$0xff]
  %v1927 = vld [vmem:[%s1 + $0x188] sm:$0xff]
  %v1928 = vld [vmem:[%s1 + $0x190] sm:$0xff]
  %v1929 = vld [vmem:[%s1 + $0x198] sm:$0xff]
  %v1930 = vld [vmem:[%s1 + $0x1a0] sm:$0xff]
  %v1931 = vld [vmem:[%s1 + $0x1a8] sm:$0xff]
  %v1932 = vld [vmem:[%s1 + $0x1b0] sm:$0xff]
  %v1933 = vld [vmem:[%s1 + $0x1b8] sm:$0xff]
  %v1934 = vld [vmem:[%s1 + $0x1c0] sm:$0xff]
  %v1935 = vld [vmem:[%s1 + $0x1c8] sm:$0xff]
  %v1936 = vld [vmem:[%s1 + $0x1d0] sm:$0xff]
  %v1937 = vld [vmem:[%s1 + $0x1d8] sm:$0xff]
  %v1938 = vld [vmem:[%s1 + $0x1e0] sm:$0xff]
  %v1939 = vld [vmem:[%s1 + $0x1e8] sm:$0xff]
  %v1940 = vld [vmem:[%s1 + $0x1f0] sm:$0xff]
  %v1941 = vld [vmem:[%s1 + $0x1f8] sm:$0xff]
  %1942 = vmatprep.subr.mxu0 %v1939
  %1943 = vmatpush1.msra.mxu0 %v1938
  %1944 = vmatprep.subr.mxu0 %v1935
  %1945 = vmatpush1.msra.mxu0 %v1934
  %1946 = vmatprep.subr.mxu0 %v1931
  %1947 = vmatpush1.msra.mxu0 %v1930
  %1948 = vmatprep.subr.mxu0 %v1927
  %1949 = vmatpush1.msra.mxu0 %v1926
  %1950 = vmatprep.subr.mxu0 %v1923
  %1951 = vmatpush1.msra.mxu0 %v1922
  %1952 = vmatprep.subr.mxu0 %v1919
  %1953 = vmatpush1.msra.mxu0 %v1918
  %1954 = vmatprep.subr.mxu0 %v1915
  %1955 = vmatpush1.msra.mxu0 %v1914
  %1956 = vmatprep.subr.mxu0 %v1911
  %1957 = vmatpush1.msra.mxu0 %v1910
  %1958 = vmatprep.subr.mxu0 %v1907
  %1959 = vmatpush1.msra.mxu0 %v1906
  %1960 = vmatprep.subr.mxu0 %v1903
  %1961 = vmatpush1.msra.mxu0 %v1902
  %1962 = vmatprep.subr.mxu0 %v1899
  %1963 = vmatpush1.msra.mxu0 %v1898
  %1964 = vmatprep.subr.mxu0 %v1895
  %1965 = vmatpush1.msra.mxu0 %v1894
  %1966 = vmatprep.subr.mxu0 %v1891
  %1967 = vmatpush1.msra.mxu0 %v1890
  %1968 = vmatprep.subr.mxu0 %v1887
  %1969 = vmatpush1.msra.mxu0 %v1886
  %1970 = vmatprep.subr.mxu0 %v1883
  %1971 = vmatpush1.msra.mxu0 %v1882
  %1972 = vmatprep.subr.mxu0 %v1879
  %1973 = vmatpush1.msra.mxu0 %v1878
  %1974 = vmatprep.subr.mxu0 0.0
  %1975 = vmatpush2.msra.mxu0 0.0
  %1976 = vmatprep.subr.mxu0 0.0
  %1977 = vmatpush2.msra.mxu0 0.0
  %1978 = vmatprep.subr.mxu0 0.0
  %1979 = vmatpush2.msra.mxu0 0.0
  %1980 = vmatprep.subr.mxu0 0.0
  %1981 = vmatpush2.msra.mxu0 0.0
  %1982 = vmatprep.subr.mxu0 0.0
  %1983 = vmatpush2.msra.mxu0 0.0
  %1984 = vmatprep.subr.mxu0 0.0
  %1985 = vmatpush2.msra.mxu0 0.0
  %1986 = vmatprep.subr.mxu0 0.0
  %1987 = vmatpush2.msra.mxu0 0.0
  %1988 = vmatprep.subr.mxu0 0.0
  %1989 = vmatpush2.msra.mxu0 0.0
  %1990 = vmatprep.subr.mxu0 0.0
  %1991 = vmatpush2.msra.mxu0 0.0
  %1992 = vmatprep.subr.mxu0 0.0
  %1993 = vmatpush2.msra.mxu0 0.0
  %1994 = vmatprep.subr.mxu0 0.0
  %1995 = vmatpush2.msra.mxu0 0.0
  %1996 = vmatprep.subr.mxu0 0.0
  %1997 = vmatpush2.msra.mxu0 0.0
  %1998 = vmatprep.subr.mxu0 0.0
  %1999 = vmatpush2.msra.mxu0 0.0
  %2000 = vmatprep.subr.mxu0 0.0
  %2001 = vmatpush2.msra.mxu0 0.0
  %2002 = vmatprep.subr.mxu0 0.0
  %2003 = vmatpush2.msra.mxu0 0.0
  %2004 = vmatprep.subr.mxu0 0.0
  %2005 = vmatpush2.msra.mxu0 0.0
  %2006 = vmatprep.mubr.f32.mxu0 0.0
  %2007 = vmatmul.mubr.f32.gmra.mxu0 %v1873
  %v2008 = vpop.f32.mrf.mxu0
  %v2009 = vadd.f32 0.0, %v2008
  %v2010 = vpop.f32.mrf.mxu0
  %v2011 = vadd.f32 0.0, %v2010
  %2012 = vdwg.mxu0
  %2013 = vmatprep.subr.mxu0 %v1941
  %2014 = vmatpush1.msra.mxu0 %v1940
  %2015 = vmatprep.subr.mxu0 %v1937
  %2016 = vmatpush1.msra.mxu0 %v1936
  %2017 = vmatprep.subr.mxu0 %v1933
  %2018 = vmatpush1.msra.mxu0 %v1932
  %2019 = vmatprep.subr.mxu0 %v1929
  %2020 = vmatpush1.msra.mxu0 %v1928
  %2021 = vmatprep.subr.mxu0 %v1925
  %2022 = vmatpush1.msra.mxu0 %v1924
  %2023 = vmatprep.subr.mxu0 %v1921
  %2024 = vmatpush1.msra.mxu0 %v1920
  %2025 = vmatprep.subr.mxu0 %v1917
  %2026 = vmatpush1.msra.mxu0 %v1916
  %2027 = vmatprep.subr.mxu0 %v1913
  %2028 = vmatpush1.msra.mxu0 %v1912
  %2029 = vmatprep.subr.mxu0 %v1909
  %2030 = vmatpush1.msra.mxu0 %v1908
  %2031 = vmatprep.subr.mxu0 %v1905
  %2032 = vmatpush1.msra.mxu0 %v1904
  %2033 = vmatprep.subr.mxu0 %v1901
  %2034 = vmatpush1.msra.mxu0 %v1900
  %2035 = vmatprep.subr.mxu0 %v1897
  %2036 = vmatpush1.msra.mxu0 %v1896
  %2037 = vmatprep.subr.mxu0 %v1893
  %2038 = vmatpush1.msra.mxu0 %v1892
  %2039 = vmatprep.subr.mxu0 %v1889
  %2040 = vmatpush1.msra.mxu0 %v1888
  %2041 = vmatprep.subr.mxu0 %v1885
  %2042 = vmatpush1.msra.mxu0 %v1884
  %2043 = vmatprep.subr.mxu0 %v1881
  %2044 = vmatpush1.msra.mxu0 %v1880
  %2045 = vmatprep.subr.mxu0 0.0
  %2046 = vmatpush2.msra.mxu0 0.0
  %2047 = vmatprep.subr.mxu0 0.0
  %2048 = vmatpush2.msra.mxu0 0.0
  %2049 = vmatprep.subr.mxu0 0.0
  %2050 = vmatpush2.msra.mxu0 0.0
  %2051 = vmatprep.subr.mxu0 0.0
  %2052 = vmatpush2.msra.mxu0 0.0
  %2053 = vmatprep.subr.mxu0 0.0
  %2054 = vmatpush2.msra.mxu0 0.0
  %2055 = vmatprep.subr.mxu0 0.0
  %2056 = vmatpush2.msra.mxu0 0.0
  %2057 = vmatprep.subr.mxu0 0.0
  %2058 = vmatpush2.msra.mxu0 0.0
  %2059 = vmatprep.subr.mxu0 0.0
  %2060 = vmatpush2.msra.mxu0 0.0
  %2061 = vmatprep.subr.mxu0 0.0
  %2062 = vmatpush2.msra.mxu0 0.0
  %2063 = vmatprep.subr.mxu0 0.0
  %2064 = vmatpush2.msra.mxu0 0.0
  %2065 = vmatprep.subr.mxu0 0.0
  %2066 = vmatpush2.msra.mxu0 0.0
  %2067 = vmatprep.subr.mxu0 0.0
  %2068 = vmatpush2.msra.mxu0 0.0
  %2069 = vmatprep.subr.mxu0 0.0
  %2070 = vmatpush2.msra.mxu0 0.0
  %2071 = vmatprep.subr.mxu0 0.0
  %2072 = vmatpush2.msra.mxu0 0.0
  %2073 = vmatprep.subr.mxu0 0.0
  %2074 = vmatpush2.msra.mxu0 0.0
  %2075 = vmatprep.subr.mxu0 0.0
  %2076 = vmatpush2.msra.mxu0 0.0
  %2077 = vmatprep.mubr.f32.mxu0 0.0
  %2078 = vmatmul.mubr.f32.gmra.mxu0 %v1873
  %v2079 = vpop.f32.mrf.mxu0
  %v2080 = vadd.f32 0.0, %v2079
  %v2081 = vpop.f32.mrf.mxu0
  %v2082 = vadd.f32 0.0, %v2081
  %2083 = vdwg.mxu0
  %v2088 = vcombine.low %v2009, %v2011
  %v2089 = vcombine.low %v2080, %v2082
  %v2091 = vunpack.c.l.s4 1983009808
  %v2092 = vunpack.c.0.s8 %v2091
  %v2093 = vlaneseq
  %v2094 = vshrl.u32 %v2093, 7
  %v2095 = vsub.s32 %v2092, %v2094
  %v2096 = vrot.slane %v2088, %v2095
  %v2098 = vunpack.c.l.s4 1983009808
  %v2099 = vunpack.c.0.s8 %v2098
  %v2100 = vlaneseq
  %v2101 = vshrl.u32 %v2100, 7
  %v2102 = vsub.s32 %v2099, %v2101
  %v2103 = vrot.slane %v2089, %v2102
  %v2104 = vcombine.low %v2096, %v2103
  %v2106 = vadd.f32 %v1877, %v2104
  %v2107 = vxor.u32 %v2106, 2147483648
  %v2108 = vmul.f32 %v2107, 1.442695
  %v2109 = vpow.pop %v2108
  %v2110 = vadd.f32 %v2109, 1.0
  %v2111 = vrcp.pop %v2110
  %v2112 = vmul.f32 1.0, %v2111
  %v2114 = vrot.slane %v2106, 2
  %v2116 = vxor.u32 %v2114, 2147483648
  %v2117 = vmul.f32 %v2116, 1.442695
  %v2118 = vpow.pop %v2117
  %v2119 = vadd.f32 %v2118, 1.0
  %v2120 = vrcp.pop %v2119
  %v2121 = vmul.f32 1.0, %v2120
  %v2122 = vrot.slane %v2106, 4
  %v2124 = vtanh.pop %v2122
  %v2125 = vrot.slane %v2106, 6
  %v2127 = vxor.u32 %v2125, 2147483648
  %v2128 = vmul.f32 %v2127, 1.442695
  %v2129 = vpow.pop %v2128
  %v2130 = vadd.f32 %v2129, 1.0
  %v2131 = vrcp.pop %v2130
  %v2132 = vmul.f32 1.0, %v2131
  %v2133 = vmul.f32 %v2121, %v1871
  %v2134 = vmul.f32 %v2112, %v2124
  %v2135 = vadd.f32 %v2133, %v2134
  %v2136 = vtanh.pop %v2135
  %v2137 = vmul.f32 %v2132, %v2136
  %s2138 = scalar_lea.vmem %s4, 14
  %2139 = vst [vmem:[%s2138] sm:$0x3] %v2137
  %2140 = vst [vmem:[#allocation2] sm:$0x3] %v2137
  %2141 = vst [vmem:[#allocation3] sm:$0x3] %v2135
  // Predicated region
  $region22: #{movie_reviews_forward.6} parent=0 // pred_check
    %p2142 = pneg %p20
  $region23: #{movie_reviews_forward.6} parent=0 // pred_check_branch
    %2144 = sbr.rel (%p2142) target = $region25
  $region24: #{movie_reviews_forward.6} parent=0 // pred_region
    %2145 = vst [vmem:[%s5] sm:$0x3] %v2137
    %2146 = vst [vmem:[%s6] sm:$0x3] %v2135
  $region25: #{movie_reviews_forward.6} parent=0 // pred_fallthru
    _
  // Predicated region
  $region26: #{movie_reviews_forward.6} parent=0 // pred_check
    _
  $region27: #{movie_reviews_forward.6} parent=0 // pred_check_branch
    %2148 = sbr.rel (0) target = $region29
  $region28: #{movie_reviews_forward.6} parent=0 // pred_region
    _
  $region29: #{movie_reviews_forward.6} parent=0 // pred_fallthru
    _
  // Predicated region
  $region30: #{movie_reviews_forward.6} parent=0 // pred_check
    _
  $region31: #{movie_reviews_forward.6} parent=0 // pred_check_branch
    %2150 = sbr.rel (0) target = $region33
  $region32: #{movie_reviews_forward.6} parent=0 // pred_region
    _
  $region33: #{movie_reviews_forward.6} parent=0 // pred_fallthru
    _
  // Predicated region
  $region34: #{movie_reviews_forward.6} parent=0 // pred_check
    _
  $region35: #{movie_reviews_forward.6} parent=0 // pred_check_branch
    %2152 = sbr.rel (0) target = $region37
  $region36: #{movie_reviews_forward.6} parent=0 // pred_region
    _
  $region37: #{movie_reviews_forward.6} parent=0 // pred_fallthru
    _
  // Predicated region
  $region38: #{movie_reviews_forward.6} parent=0 // pred_check
    _
  $region39: #{movie_reviews_forward.6} parent=0 // pred_check_branch
    %2154 = sbr.rel (0) target = $region41
  $region40: #{movie_reviews_forward.6} parent=0 // pred_region
    _
  $region41: #{movie_reviews_forward.6} parent=0 // pred_fallthru
    _
  // Predicated region
  $region42: #{movie_reviews_forward.6} parent=0 // pred_check
    _
  $region43: #{movie_reviews_forward.6} parent=0 // pred_check_branch
    %2156 = sbr.rel (0) target = $region45
  $region44: #{movie_reviews_forward.6} parent=0 // pred_region
    _
  $region45: #{movie_reviews_forward.6} parent=0 // pred_fallthru
    _
  // Predicated region
  $region46: #{movie_reviews_forward.6} parent=0 // pred_check
    _
  $region47: #{movie_reviews_forward.6} parent=0 // pred_check_branch
    %2158 = sbr.rel (0) target = $region49
  $region48: #{movie_reviews_forward.6} parent=0 // pred_region
    _
  $region49: #{movie_reviews_forward.6} parent=0 // pred_fallthru
    _

// kernel: movie_reviews_forward.8
$region0: #{movie_reviews_forward.8}
  #allocation0 [shape = 'u32[]', space=smem, size = 0x4, offset = 0x4, fixed_abs, tag = 'smem constant byte address 0x4 - core index']
  #allocation1 [shape = 'u32[144,128]{1,0:T(1,128)}', space=vmem, size = 0x12000, scoped, tag = 'internal scratch']
  #allocation2 [shape = 'f32[2,128]{1,0:T(2,128)}', space=vmem, size = 0x400, scoped, tag = 'scratch operand']
  #allocation3 [shape = 'f32[2,128]{1,0:T(2,128)}', space=vmem, size = 0x400, scoped, tag = 'scratch operand']
  %s0 = inlined_call_operand.vmem [shape: f32[8,2,512], index: 0, kind: input, shape index: {}]
  %s1 = inlined_call_operand.vmem [shape: f32[128,512], index: 1, kind: input, shape index: {}]
  %s2 = inlined_call_operand.vmem [shape: f32[2,128], index: 2, kind: input, shape index: {}]
  %s3 = inlined_call_operand.vmem [shape: f32[2,128], index: 3, kind: input, shape index: {}]
  %s4 = inlined_call_operand.hbm [shape: f32[8,2,128], index: 4, kind: output, shape index: {0}]
  %s5 = inlined_call_operand.vmem [shape: f32[2,128], index: 5, kind: output, shape index: {1}]
  %s6 = inlined_call_operand.vmem [shape: f32[2,128], index: 6, kind: output, shape index: {2}]
  %7 = xla_tuple %s4, %s5, %s6
  %s8 = sld [smem:[#allocation0]]
  $region50: #{movie_reviews_forward.8} parent=0
    _
  %s10 = ssub.s32 1, %s8
  %s11 = scalar_select 0, %s10, %s8
  $region1: #{movie_reviews_forward.8} parent=0
    #allocation4 [shape = 'u8[8192]{0}', space=vmem, size = 0x2000, scoped, tag = 'output window, operand 0, single buffered']
    #allocation5 [shape = 's32[1]{0}', space=sflag, size = 0x4, scoped, tag = 'scoped memory for movie_reviews_forward.8']
    %12 = vsyncpa [#allocation5], 0
    // Predicated region
    $region2: #{movie_reviews_forward.8} parent=1 // pred_check
      _
    $region3: #{movie_reviews_forward.8} parent=1 // pred_check_branch
      %14 = sbr.rel (0) target = $region5
    $region4: #{movie_reviews_forward.8} parent=1 // pred_region
      _
    $region5: #{movie_reviews_forward.8} parent=1 // pred_fallthru
      _
    // Predicated region
    $region6: #{movie_reviews_forward.8} parent=1 // pred_check
      _
    $region7: #{movie_reviews_forward.8} parent=1 // pred_check_branch
      %16 = sbr.rel (0) target = $region9
    $region8: #{movie_reviews_forward.8} parent=1 // pred_region
      _
    $region9: #{movie_reviews_forward.8} parent=1 // pred_fallthru
      _
    // Predicated region
    $region10: #{movie_reviews_forward.8} parent=1 // pred_check
      _
    $region11: #{movie_reviews_forward.8} parent=1 // pred_check_branch
      %18 = sbr.rel (0) target = $region13
    $region12: #{movie_reviews_forward.8} parent=1 // pred_region
      _
    $region13: #{movie_reviews_forward.8} parent=1 // pred_fallthru
      _
    // Predicated region
    $region14: #{movie_reviews_forward.8} parent=1 // pred_check
      _
    $region15: #{movie_reviews_forward.8} parent=1 // pred_check_branch
      %20 = sbr.rel (0) target = $region17
    $region16: #{movie_reviews_forward.8} parent=1 // pred_region
      _
    $region17: #{movie_reviews_forward.8} parent=1 // pred_fallthru
      _
    %p21 = scmp.eq.s32.totalorder 0, 0
    // Predicated region
    $region18: #{movie_reviews_forward.8} parent=1 // pred_check
      %p22 = pneg %p21
    $region19: #{movie_reviews_forward.8} parent=1 // pred_check_branch
      %24 = sbr.rel (%p22) target = $region21
    $region20: #{movie_reviews_forward.8} parent=1 // pred_region
      %v25 = vld [vmem:[%s2] sm:$0x3]
      %26 = vst [vmem:[#allocation2] sm:$0x3] %v25
      %v27 = vld [vmem:[%s3] sm:$0x3]
      %28 = vst [vmem:[#allocation3] sm:$0x3] %v27
    $region21: #{movie_reviews_forward.8} parent=1 // pred_fallthru
      _
    %v29 = vld [vmem:[#allocation2] sm:$0x3]
    %v30 = vld [vmem:[#allocation3] sm:$0x3]
    %v31 = vld [vmem:[%s0] sm:$0xff]
    %v32 = vld [vmem:[%s1] sm:$0xff]
    %v33 = vld [vmem:[%s1 + $0x8] sm:$0xff]
    %v34 = vld [vmem:[%s1 + $0x10] sm:$0xff]
    %v35 = vld [vmem:[%s1 + $0x18] sm:$0xff]
    %v36 = vld [vmem:[%s1 + $0x20] sm:$0xff]
    %v37 = vld [vmem:[%s1 + $0x28] sm:$0xff]
    %v38 = vld [vmem:[%s1 + $0x30] sm:$0xff]
    %v39 = vld [vmem:[%s1 + $0x38] sm:$0xff]
    %v40 = vld [vmem:[%s1 + $0x40] sm:$0xff]
    %v41 = vld [vmem:[%s1 + $0x48] sm:$0xff]
    %v42 = vld [vmem:[%s1 + $0x50] sm:$0xff]
    %v43 = vld [vmem:[%s1 + $0x58] sm:$0xff]
    %v44 = vld [vmem:[%s1 + $0x60] sm:$0xff]
    %v45 = vld [vmem:[%s1 + $0x68] sm:$0xff]
    %v46 = vld [vmem:[%s1 + $0x70] sm:$0xff]
    %v47 = vld [vmem:[%s1 + $0x78] sm:$0xff]
    %v48 = vld [vmem:[%s1 + $0x80] sm:$0xff]
    %v49 = vld [vmem:[%s1 + $0x88] sm:$0xff]
    %v50 = vld [vmem:[%s1 + $0x90] sm:$0xff]
    %v51 = vld [vmem:[%s1 + $0x98] sm:$0xff]
    %v52 = vld [vmem:[%s1 + $0xa0] sm:$0xff]
    %v53 = vld [vmem:[%s1 + $0xa8] sm:$0xff]
    %v54 = vld [vmem:[%s1 + $0xb0] sm:$0xff]
    %v55 = vld [vmem:[%s1 + $0xb8] sm:$0xff]
    %v56 = vld [vmem:[%s1 + $0xc0] sm:$0xff]
    %v57 = vld [vmem:[%s1 + $0xc8] sm:$0xff]
    %v58 = vld [vmem:[%s1 + $0xd0] sm:$0xff]
    %v59 = vld [vmem:[%s1 + $0xd8] sm:$0xff]
    %v60 = vld [vmem:[%s1 + $0xe0] sm:$0xff]
    %v61 = vld [vmem:[%s1 + $0xe8] sm:$0xff]
    %v62 = vld [vmem:[%s1 + $0xf0] sm:$0xff]
    %v63 = vld [vmem:[%s1 + $0xf8] sm:$0xff]
    %v64 = vld [vmem:[%s1 + $0x100] sm:$0xff]
    %v65 = vld [vmem:[%s1 + $0x108] sm:$0xff]
    %v66 = vld [vmem:[%s1 + $0x110] sm:$0xff]
    %v67 = vld [vmem:[%s1 + $0x118] sm:$0xff]
    %v68 = vld [vmem:[%s1 + $0x120] sm:$0xff]
    %v69 = vld [vmem:[%s1 + $0x128] sm:$0xff]
    %v70 = vld [vmem:[%s1 + $0x130] sm:$0xff]
    %v71 = vld [vmem:[%s1 + $0x138] sm:$0xff]
    %v72 = vld [vmem:[%s1 + $0x140] sm:$0xff]
    %v73 = vld [vmem:[%s1 + $0x148] sm:$0xff]
    %v74 = vld [vmem:[%s1 + $0x150] sm:$0xff]
    %v75 = vld [vmem:[%s1 + $0x158] sm:$0xff]
    %v76 = vld [vmem:[%s1 + $0x160] sm:$0xff]
    %v77 = vld [vmem:[%s1 + $0x168] sm:$0xff]
    %v78 = vld [vmem:[%s1 + $0x170] sm:$0xff]
    %v79 = vld [vmem:[%s1 + $0x178] sm:$0xff]
    %v80 = vld [vmem:[%s1 + $0x180] sm:$0xff]
    %v81 = vld [vmem:[%s1 + $0x188] sm:$0xff]
    %v82 = vld [vmem:[%s1 + $0x190] sm:$0xff]
    %v83 = vld [vmem:[%s1 + $0x198] sm:$0xff]
    %v84 = vld [vmem:[%s1 + $0x1a0] sm:$0xff]
    %v85 = vld [vmem:[%s1 + $0x1a8] sm:$0xff]
    %v86 = vld [vmem:[%s1 + $0x1b0] sm:$0xff]
    %v87 = vld [vmem:[%s1 + $0x1b8] sm:$0xff]
    %v88 = vld [vmem:[%s1 + $0x1c0] sm:$0xff]
    %v89 = vld [vmem:[%s1 + $0x1c8] sm:$0xff]
    %v90 = vld [vmem:[%s1 + $0x1d0] sm:$0xff]
    %v91 = vld [vmem:[%s1 + $0x1d8] sm:$0xff]
    %v92 = vld [vmem:[%s1 + $0x1e0] sm:$0xff]
    %v93 = vld [vmem:[%s1 + $0x1e8] sm:$0xff]
    %v94 = vld [vmem:[%s1 + $0x1f0] sm:$0xff]
    %v95 = vld [vmem:[%s1 + $0x1f8] sm:$0xff]
    %96 = vmatprep.subr.mxu0 %v93
    %97 = vmatpush1.msra.mxu0 %v92
    %98 = vmatprep.subr.mxu0 %v89
    %99 = vmatpush1.msra.mxu0 %v88
    %100 = vmatprep.subr.mxu0 %v85
    %101 = vmatpush1.msra.mxu0 %v84
    %102 = vmatprep.subr.mxu0 %v81
    %103 = vmatpush1.msra.mxu0 %v80
    %104 = vmatprep.subr.mxu0 %v77
    %105 = vmatpush1.msra.mxu0 %v76
    %106 = vmatprep.subr.mxu0 %v73
    %107 = vmatpush1.msra.mxu0 %v72
    %108 = vmatprep.subr.mxu0 %v69
    %109 = vmatpush1.msra.mxu0 %v68
    %110 = vmatprep.subr.mxu0 %v65
    %111 = vmatpush1.msra.mxu0 %v64
    %112 = vmatprep.subr.mxu0 %v61
    %113 = vmatpush1.msra.mxu0 %v60
    %114 = vmatprep.subr.mxu0 %v57
    %115 = vmatpush1.msra.mxu0 %v56
    %116 = vmatprep.subr.mxu0 %v53
    %117 = vmatpush1.msra.mxu0 %v52
    %118 = vmatprep.subr.mxu0 %v49
    %119 = vmatpush1.msra.mxu0 %v48
    %120 = vmatprep.subr.mxu0 %v45
    %121 = vmatpush1.msra.mxu0 %v44
    %122 = vmatprep.subr.mxu0 %v41
    %123 = vmatpush1.msra.mxu0 %v40
    %124 = vmatprep.subr.mxu0 %v37
    %125 = vmatpush1.msra.mxu0 %v36
    %126 = vmatprep.subr.mxu0 %v33
    %127 = vmatpush1.msra.mxu0 %v32
    %128 = vmatprep.subr.mxu0 0.0
    %129 = vmatpush2.msra.mxu0 0.0
    %130 = vmatprep.subr.mxu0 0.0
    %131 = vmatpush2.msra.mxu0 0.0
    %132 = vmatprep.subr.mxu0 0.0
    %133 = vmatpush2.msra.mxu0 0.0
    %134 = vmatprep.subr.mxu0 0.0
    %135 = vmatpush2.msra.mxu0 0.0
    %136 = vmatprep.subr.mxu0 0.0
    %137 = vmatpush2.msra.mxu0 0.0
    %138 = vmatprep.subr.mxu0 0.0
    %139 = vmatpush2.msra.mxu0 0.0
    %140 = vmatprep.subr.mxu0 0.0
    %141 = vmatpush2.msra.mxu0 0.0
    %142 = vmatprep.subr.mxu0 0.0
    %143 = vmatpush2.msra.mxu0 0.0
    %144 = vmatprep.subr.mxu0 0.0
    %145 = vmatpush2.msra.mxu0 0.0
    %146 = vmatprep.subr.mxu0 0.0
    %147 = vmatpush2.msra.mxu0 0.0
    %148 = vmatprep.subr.mxu0 0.0
    %149 = vmatpush2.msra.mxu0 0.0
    %150 = vmatprep.subr.mxu0 0.0
    %151 = vmatpush2.msra.mxu0 0.0
    %152 = vmatprep.subr.mxu0 0.0
    %153 = vmatpush2.msra.mxu0 0.0
    %154 = vmatprep.subr.mxu0 0.0
    %155 = vmatpush2.msra.mxu0 0.0
    %156 = vmatprep.subr.mxu0 0.0
    %157 = vmatpush2.msra.mxu0 0.0
    %158 = vmatprep.subr.mxu0 0.0
    %159 = vmatpush2.msra.mxu0 0.0
    %160 = vmatprep.mubr.f32.mxu0 0.0
    %161 = vmatmul.mubr.f32.gmra.mxu0 %v29
    %v162 = vpop.f32.mrf.mxu0
    %v163 = vadd.f32 0.0, %v162
    %v164 = vpop.f32.mrf.mxu0
    %v165 = vadd.f32 0.0, %v164
    %166 = vdwg.mxu0
    %167 = vmatprep.subr.mxu0 %v95
    %168 = vmatpush1.msra.mxu0 %v94
    %169 = vmatprep.subr.mxu0 %v91
    %170 = vmatpush1.msra.mxu0 %v90
    %171 = vmatprep.subr.mxu0 %v87
    %172 = vmatpush1.msra.mxu0 %v86
    %173 = vmatprep.subr.mxu0 %v83
    %174 = vmatpush1.msra.mxu0 %v82
    %175 = vmatprep.subr.mxu0 %v79
    %176 = vmatpush1.msra.mxu0 %v78
    %177 = vmatprep.subr.mxu0 %v75
    %178 = vmatpush1.msra.mxu0 %v74
    %179 = vmatprep.subr.mxu0 %v71
    %180 = vmatpush1.msra.mxu0 %v70
    %181 = vmatprep.subr.mxu0 %v67
    %182 = vmatpush1.msra.mxu0 %v66
    %183 = vmatprep.subr.mxu0 %v63
    %184 = vmatpush1.msra.mxu0 %v62
    %185 = vmatprep.subr.mxu0 %v59
    %186 = vmatpush1.msra.mxu0 %v58
    %187 = vmatprep.subr.mxu0 %v55
    %188 = vmatpush1.msra.mxu0 %v54
    %189 = vmatprep.subr.mxu0 %v51
    %190 = vmatpush1.msra.mxu0 %v50
    %191 = vmatprep.subr.mxu0 %v47
    %192 = vmatpush1.msra.mxu0 %v46
    %193 = vmatprep.subr.mxu0 %v43
    %194 = vmatpush1.msra.mxu0 %v42
    %195 = vmatprep.subr.mxu0 %v39
    %196 = vmatpush1.msra.mxu0 %v38
    %197 = vmatprep.subr.mxu0 %v35
    %198 = vmatpush1.msra.mxu0 %v34
    %199 = vmatprep.subr.mxu0 0.0
    %200 = vmatpush2.msra.mxu0 0.0
    %201 = vmatprep.subr.mxu0 0.0
    %202 = vmatpush2.msra.mxu0 0.0
    %203 = vmatprep.subr.mxu0 0.0
    %204 = vmatpush2.msra.mxu0 0.0
    %205 = vmatprep.subr.mxu0 0.0
    %206 = vmatpush2.msra.mxu0 0.0
    %207 = vmatprep.subr.mxu0 0.0
    %208 = vmatpush2.msra.mxu0 0.0
    %209 = vmatprep.subr.mxu0 0.0
    %210 = vmatpush2.msra.mxu0 0.0
    %211 = vmatprep.subr.mxu0 0.0
    %212 = vmatpush2.msra.mxu0 0.0
    %213 = vmatprep.subr.mxu0 0.0
    %214 = vmatpush2.msra.mxu0 0.0
    %215 = vmatprep.subr.mxu0 0.0
    %216 = vmatpush2.msra.mxu0 0.0
    %217 = vmatprep.subr.mxu0 0.0
    %218 = vmatpush2.msra.mxu0 0.0
    %219 = vmatprep.subr.mxu0 0.0
    %220 = vmatpush2.msra.mxu0 0.0
    %221 = vmatprep.subr.mxu0 0.0
    %222 = vmatpush2.msra.mxu0 0.0
    %223 = vmatprep.subr.mxu0 0.0
    %224 = vmatpush2.msra.mxu0 0.0
    %225 = vmatprep.subr.mxu0 0.0
    %226 = vmatpush2.msra.mxu0 0.0
    %227 = vmatprep.subr.mxu0 0.0
    %228 = vmatpush2.msra.mxu0 0.0
    %229 = vmatprep.subr.mxu0 0.0
    %230 = vmatpush2.msra.mxu0 0.0
    %231 = vmatprep.mubr.f32.mxu0 0.0
    %232 = vmatmul.mubr.f32.gmra.mxu0 %v29
    %v233 = vpop.f32.mrf.mxu0
    %v234 = vadd.f32 0.0, %v233
    %v235 = vpop.f32.mrf.mxu0
    %v236 = vadd.f32 0.0, %v235
    %237 = vdwg.mxu0
    %v242 = vcombine.low %v163, %v165
    %v243 = vcombine.low %v234, %v236
    %v245 = vunpack.c.l.s4 1983009808
    %v246 = vunpack.c.0.s8 %v245
    %v247 = vlaneseq
    %v248 = vshrl.u32 %v247, 7
    %v249 = vsub.s32 %v246, %v248
    %v250 = vrot.slane %v242, %v249
    %v252 = vunpack.c.l.s4 1983009808
    %v253 = vunpack.c.0.s8 %v252
    %v254 = vlaneseq
    %v255 = vshrl.u32 %v254, 7
    %v256 = vsub.s32 %v253, %v255
    %v257 = vrot.slane %v243, %v256
    %v258 = vcombine.low %v250, %v257
    %v260 = vadd.f32 %v31, %v258
    %v261 = vxor.u32 %v260, 2147483648
    %v262 = vmul.f32 %v261, 1.442695
    %v263 = vpow.pop %v262
    %v264 = vadd.f32 %v263, 1.0
    %v265 = vrcp.pop %v264
    %v266 = vmul.f32 1.0, %v265
    %v268 = vrot.slane %v260, 2
    %v270 = vxor.u32 %v268, 2147483648
    %v271 = vmul.f32 %v270, 1.442695
    %v272 = vpow.pop %v271
    %v273 = vadd.f32 %v272, 1.0
    %v274 = vrcp.pop %v273
    %v275 = vmul.f32 1.0, %v274
    %v276 = vrot.slane %v260, 4
    %v278 = vtanh.pop %v276
    %v279 = vrot.slane %v260, 6
    %v281 = vxor.u32 %v279, 2147483648
    %v282 = vmul.f32 %v281, 1.442695
    %v283 = vpow.pop %v282
    %v284 = vadd.f32 %v283, 1.0
    %v285 = vrcp.pop %v284
    %v286 = vmul.f32 1.0, %v285
    %v287 = vmul.f32 %v275, %v30
    %v288 = vmul.f32 %v266, %v278
    %v289 = vadd.f32 %v287, %v288
    %v290 = vtanh.pop %v289
    %v291 = vmul.f32 %v286, %v290
    %292 = vst [vmem:[#allocation4] sm:$0x3] %v291
    %s293 = scalar_lea.vmem %s0, 8
    %v294 = vld [vmem:[%s293] sm:$0xff]
    %v295 = vld [vmem:[%s1] sm:$0xff]
    %v296 = vld [vmem:[%s1 + $0x8] sm:$0xff]
    %v297 = vld [vmem:[%s1 + $0x10] sm:$0xff]
    %v298 = vld [vmem:[%s1 + $0x18] sm:$0xff]
    %v299 = vld [vmem:[%s1 + $0x20] sm:$0xff]
    %v300 = vld [vmem:[%s1 + $0x28] sm:$0xff]
    %v301 = vld [vmem:[%s1 + $0x30] sm:$0xff]
    %v302 = vld [vmem:[%s1 + $0x38] sm:$0xff]
    %v303 = vld [vmem:[%s1 + $0x40] sm:$0xff]
    %v304 = vld [vmem:[%s1 + $0x48] sm:$0xff]
    %v305 = vld [vmem:[%s1 + $0x50] sm:$0xff]
    %v306 = vld [vmem:[%s1 + $0x58] sm:$0xff]
    %v307 = vld [vmem:[%s1 + $0x60] sm:$0xff]
    %v308 = vld [vmem:[%s1 + $0x68] sm:$0xff]
    %v309 = vld [vmem:[%s1 + $0x70] sm:$0xff]
    %v310 = vld [vmem:[%s1 + $0x78] sm:$0xff]
    %v311 = vld [vmem:[%s1 + $0x80] sm:$0xff]
    %v312 = vld [vmem:[%s1 + $0x88] sm:$0xff]
    %v313 = vld [vmem:[%s1 + $0x90] sm:$0xff]
    %v314 = vld [vmem:[%s1 + $0x98] sm:$0xff]
    %v315 = vld [vmem:[%s1 + $0xa0] sm:$0xff]
    %v316 = vld [vmem:[%s1 + $0xa8] sm:$0xff]
    %v317 = vld [vmem:[%s1 + $0xb0] sm:$0xff]
    %v318 = vld [vmem:[%s1 + $0xb8] sm:$0xff]
    %v319 = vld [vmem:[%s1 + $0xc0] sm:$0xff]
    %v320 = vld [vmem:[%s1 + $0xc8] sm:$0xff]
    %v321 = vld [vmem:[%s1 + $0xd0] sm:$0xff]
    %v322 = vld [vmem:[%s1 + $0xd8] sm:$0xff]
    %v323 = vld [vmem:[%s1 + $0xe0] sm:$0xff]
    %v324 = vld [vmem:[%s1 + $0xe8] sm:$0xff]
    %v325 = vld [vmem:[%s1 + $0xf0] sm:$0xff]
    %v326 = vld [vmem:[%s1 + $0xf8] sm:$0xff]
    %v327 = vld [vmem:[%s1 + $0x100] sm:$0xff]
    %v328 = vld [vmem:[%s1 + $0x108] sm:$0xff]
    %v329 = vld [vmem:[%s1 + $0x110] sm:$0xff]
    %v330 = vld [vmem:[%s1 + $0x118] sm:$0xff]
    %v331 = vld [vmem:[%s1 + $0x120] sm:$0xff]
    %v332 = vld [vmem:[%s1 + $0x128] sm:$0xff]
    %v333 = vld [vmem:[%s1 + $0x130] sm:$0xff]
    %v334 = vld [vmem:[%s1 + $0x138] sm:$0xff]
    %v335 = vld [vmem:[%s1 + $0x140] sm:$0xff]
    %v336 = vld [vmem:[%s1 + $0x148] sm:$0xff]
    %v337 = vld [vmem:[%s1 + $0x150] sm:$0xff]
    %v338 = vld [vmem:[%s1 + $0x158] sm:$0xff]
    %v339 = vld [vmem:[%s1 + $0x160] sm:$0xff]
    %v340 = vld [vmem:[%s1 + $0x168] sm:$0xff]
    %v341 = vld [vmem:[%s1 + $0x170] sm:$0xff]
    %v342 = vld [vmem:[%s1 + $0x178] sm:$0xff]
    %v343 = vld [vmem:[%s1 + $0x180] sm:$0xff]
    %v344 = vld [vmem:[%s1 + $0x188] sm:$0xff]
    %v345 = vld [vmem:[%s1 + $0x190] sm:$0xff]
    %v346 = vld [vmem:[%s1 + $0x198] sm:$0xff]
    %v347 = vld [vmem:[%s1 + $0x1a0] sm:$0xff]
    %v348 = vld [vmem:[%s1 + $0x1a8] sm:$0xff]
    %v349 = vld [vmem:[%s1 + $0x1b0] sm:$0xff]
    %v350 = vld [vmem:[%s1 + $0x1b8] sm:$0xff]
    %v351 = vld [vmem:[%s1 + $0x1c0] sm:$0xff]
    %v352 = vld [vmem:[%s1 + $0x1c8] sm:$0xff]
    %v353 = vld [vmem:[%s1 + $0x1d0] sm:$0xff]
    %v354 = vld [vmem:[%s1 + $0x1d8] sm:$0xff]
    %v355 = vld [vmem:[%s1 + $0x1e0] sm:$0xff]
    %v356 = vld [vmem:[%s1 + $0x1e8] sm:$0xff]
    %v357 = vld [vmem:[%s1 + $0x1f0] sm:$0xff]
    %v358 = vld [vmem:[%s1 + $0x1f8] sm:$0xff]
    %359 = vmatprep.subr.mxu0 %v356
    %360 = vmatpush1.msra.mxu0 %v355
    %361 = vmatprep.subr.mxu0 %v352
    %362 = vmatpush1.msra.mxu0 %v351
    %363 = vmatprep.subr.mxu0 %v348
    %364 = vmatpush1.msra.mxu0 %v347
    %365 = vmatprep.subr.mxu0 %v344
    %366 = vmatpush1.msra.mxu0 %v343
    %367 = vmatprep.subr.mxu0 %v340
    %368 = vmatpush1.msra.mxu0 %v339
    %369 = vmatprep.subr.mxu0 %v336
    %370 = vmatpush1.msra.mxu0 %v335
    %371 = vmatprep.subr.mxu0 %v332
    %372 = vmatpush1.msra.mxu0 %v331
    %373 = vmatprep.subr.mxu0 %v328
    %374 = vmatpush1.msra.mxu0 %v327
    %375 = vmatprep.subr.mxu0 %v324
    %376 = vmatpush1.msra.mxu0 %v323
    %377 = vmatprep.subr.mxu0 %v320
    %378 = vmatpush1.msra.mxu0 %v319
    %379 = vmatprep.subr.mxu0 %v316
    %380 = vmatpush1.msra.mxu0 %v315
    %381 = vmatprep.subr.mxu0 %v312
    %382 = vmatpush1.msra.mxu0 %v311
    %383 = vmatprep.subr.mxu0 %v308
    %384 = vmatpush1.msra.mxu0 %v307
    %385 = vmatprep.subr.mxu0 %v304
    %386 = vmatpush1.msra.mxu0 %v303
    %387 = vmatprep.subr.mxu0 %v300
    %388 = vmatpush1.msra.mxu0 %v299
    %389 = vmatprep.subr.mxu0 %v296
    %390 = vmatpush1.msra.mxu0 %v295
    %391 = vmatprep.subr.mxu0 0.0
    %392 = vmatpush2.msra.mxu0 0.0
    %393 = vmatprep.subr.mxu0 0.0
    %394 = vmatpush2.msra.mxu0 0.0
    %395 = vmatprep.subr.mxu0 0.0
    %396 = vmatpush2.msra.mxu0 0.0
    %397 = vmatprep.subr.mxu0 0.0
    %398 = vmatpush2.msra.mxu0 0.0
    %399 = vmatprep.subr.mxu0 0.0
    %400 = vmatpush2.msra.mxu0 0.0
    %401 = vmatprep.subr.mxu0 0.0
    %402 = vmatpush2.msra.mxu0 0.0
    %403 = vmatprep.subr.mxu0 0.0
    %404 = vmatpush2.msra.mxu0 0.0
    %405 = vmatprep.subr.mxu0 0.0
    %406 = vmatpush2.msra.mxu0 0.0
    %407 = vmatprep.subr.mxu0 0.0
    %408 = vmatpush2.msra.mxu0 0.0
    %409 = vmatprep.subr.mxu0 0.0
    %410 = vmatpush2.msra.mxu0 0.0
    %411 = vmatprep.subr.mxu0 0.0
    %412 = vmatpush2.msra.mxu0 0.0
    %413 = vmatprep.subr.mxu0 0.0
    %414 = vmatpush2.msra.mxu0 0.0
    %415 = vmatprep.subr.mxu0 0.0
    %416 = vmatpush2.msra.mxu0 0.0
    %417 = vmatprep.subr.mxu0 0.0
    %418 = vmatpush2.msra.mxu0 0.0
    %419 = vmatprep.subr.mxu0 0.0
    %420 = vmatpush2.msra.mxu0 0.0
    %421 = vmatprep.subr.mxu0 0.0
    %422 = vmatpush2.msra.mxu0 0.0
    %423 = vmatprep.mubr.f32.mxu0 0.0
    %424 = vmatmul.mubr.f32.gmra.mxu0 %v291
    %v425 = vpop.f32.mrf.mxu0
    %v426 = vadd.f32 0.0, %v425
    %v427 = vpop.f32.mrf.mxu0
    %v428 = vadd.f32 0.0, %v427
    %429 = vdwg.mxu0
    %430 = vmatprep.subr.mxu0 %v358
    %431 = vmatpush1.msra.mxu0 %v357
    %432 = vmatprep.subr.mxu0 %v354
    %433 = vmatpush1.msra.mxu0 %v353
    %434 = vmatprep.subr.mxu0 %v350
    %435 = vmatpush1.msra.mxu0 %v349
    %436 = vmatprep.subr.mxu0 %v346
    %437 = vmatpush1.msra.mxu0 %v345
    %438 = vmatprep.subr.mxu0 %v342
    %439 = vmatpush1.msra.mxu0 %v341
    %440 = vmatprep.subr.mxu0 %v338
    %441 = vmatpush1.msra.mxu0 %v337
    %442 = vmatprep.subr.mxu0 %v334
    %443 = vmatpush1.msra.mxu0 %v333
    %444 = vmatprep.subr.mxu0 %v330
    %445 = vmatpush1.msra.mxu0 %v329
    %446 = vmatprep.subr.mxu0 %v326
    %447 = vmatpush1.msra.mxu0 %v325
    %448 = vmatprep.subr.mxu0 %v322
    %449 = vmatpush1.msra.mxu0 %v321
    %450 = vmatprep.subr.mxu0 %v318
    %451 = vmatpush1.msra.mxu0 %v317
    %452 = vmatprep.subr.mxu0 %v314
    %453 = vmatpush1.msra.mxu0 %v313
    %454 = vmatprep.subr.mxu0 %v310
    %455 = vmatpush1.msra.mxu0 %v309
    %456 = vmatprep.subr.mxu0 %v306
    %457 = vmatpush1.msra.mxu0 %v305
    %458 = vmatprep.subr.mxu0 %v302
    %459 = vmatpush1.msra.mxu0 %v301
    %460 = vmatprep.subr.mxu0 %v298
    %461 = vmatpush1.msra.mxu0 %v297
    %462 = vmatprep.subr.mxu0 0.0
    %463 = vmatpush2.msra.mxu0 0.0
    %464 = vmatprep.subr.mxu0 0.0
    %465 = vmatpush2.msra.mxu0 0.0
    %466 = vmatprep.subr.mxu0 0.0
    %467 = vmatpush2.msra.mxu0 0.0
    %468 = vmatprep.subr.mxu0 0.0
    %469 = vmatpush2.msra.mxu0 0.0
    %470 = vmatprep.subr.mxu0 0.0
    %471 = vmatpush2.msra.mxu0 0.0
    %472 = vmatprep.subr.mxu0 0.0
    %473 = vmatpush2.msra.mxu0 0.0
    %474 = vmatprep.subr.mxu0 0.0
    %475 = vmatpush2.msra.mxu0 0.0
    %476 = vmatprep.subr.mxu0 0.0
    %477 = vmatpush2.msra.mxu0 0.0
    %478 = vmatprep.subr.mxu0 0.0
    %479 = vmatpush2.msra.mxu0 0.0
    %480 = vmatprep.subr.mxu0 0.0
    %481 = vmatpush2.msra.mxu0 0.0
    %482 = vmatprep.subr.mxu0 0.0
    %483 = vmatpush2.msra.mxu0 0.0
    %484 = vmatprep.subr.mxu0 0.0
    %485 = vmatpush2.msra.mxu0 0.0
    %486 = vmatprep.subr.mxu0 0.0
    %487 = vmatpush2.msra.mxu0 0.0
    %488 = vmatprep.subr.mxu0 0.0
    %489 = vmatpush2.msra.mxu0 0.0
    %490 = vmatprep.subr.mxu0 0.0
    %491 = vmatpush2.msra.mxu0 0.0
    %492 = vmatprep.subr.mxu0 0.0
    %493 = vmatpush2.msra.mxu0 0.0
    %494 = vmatprep.mubr.f32.mxu0 0.0
    %495 = vmatmul.mubr.f32.gmra.mxu0 %v291
    %v496 = vpop.f32.mrf.mxu0
    %v497 = vadd.f32 0.0, %v496
    %v498 = vpop.f32.mrf.mxu0
    %v499 = vadd.f32 0.0, %v498
    %500 = vdwg.mxu0
    %v505 = vcombine.low %v426, %v428
    %v506 = vcombine.low %v497, %v499
    %v508 = vunpack.c.l.s4 1983009808
    %v509 = vunpack.c.0.s8 %v508
    %v510 = vlaneseq
    %v511 = vshrl.u32 %v510, 7
    %v512 = vsub.s32 %v509, %v511
    %v513 = vrot.slane %v505, %v512
    %v515 = vunpack.c.l.s4 1983009808
    %v516 = vunpack.c.0.s8 %v515
    %v517 = vlaneseq
    %v518 = vshrl.u32 %v517, 7
    %v519 = vsub.s32 %v516, %v518
    %v520 = vrot.slane %v506, %v519
    %v521 = vcombine.low %v513, %v520
    %v523 = vadd.f32 %v294, %v521
    %v524 = vxor.u32 %v523, 2147483648
    %v525 = vmul.f32 %v524, 1.442695
    %v526 = vpow.pop %v525
    %v527 = vadd.f32 %v526, 1.0
    %v528 = vrcp.pop %v527
    %v529 = vmul.f32 1.0, %v528
    %v531 = vrot.slane %v523, 2
    %v533 = vxor.u32 %v531, 2147483648
    %v534 = vmul.f32 %v533, 1.442695
    %v535 = vpow.pop %v534
    %v536 = vadd.f32 %v535, 1.0
    %v537 = vrcp.pop %v536
    %v538 = vmul.f32 1.0, %v537
    %v539 = vrot.slane %v523, 4
    %v541 = vtanh.pop %v539
    %v542 = vrot.slane %v523, 6
    %v544 = vxor.u32 %v542, 2147483648
    %v545 = vmul.f32 %v544, 1.442695
    %v546 = vpow.pop %v545
    %v547 = vadd.f32 %v546, 1.0
    %v548 = vrcp.pop %v547
    %v549 = vmul.f32 1.0, %v548
    %v550 = vmul.f32 %v538, %v289
    %v551 = vmul.f32 %v529, %v541
    %v552 = vadd.f32 %v550, %v551
    %v553 = vtanh.pop %v552
    %v554 = vmul.f32 %v549, %v553
    %s555 = scalar_lea.vmem [#allocation4], 2
    %556 = vst [vmem:[%s555] sm:$0x3] %v554
    %s557 = scalar_lea.vmem %s0, 16
    %v558 = vld [vmem:[%s557] sm:$0xff]
    %v559 = vld [vmem:[%s1] sm:$0xff]
    %v560 = vld [vmem:[%s1 + $0x8] sm:$0xff]
    %v561 = vld [vmem:[%s1 + $0x10] sm:$0xff]
    %v562 = vld [vmem:[%s1 + $0x18] sm:$0xff]
    %v563 = vld [vmem:[%s1 + $0x20] sm:$0xff]
    %v564 = vld [vmem:[%s1 + $0x28] sm:$0xff]
    %v565 = vld [vmem:[%s1 + $0x30] sm:$0xff]
    %v566 = vld [vmem:[%s1 + $0x38] sm:$0xff]
    %v567 = vld [vmem:[%s1 + $0x40] sm:$0xff]
    %v568 = vld [vmem:[%s1 + $0x48] sm:$0xff]
    %v569 = vld [vmem:[%s1 + $0x50] sm:$0xff]
    %v570 = vld [vmem:[%s1 + $0x58] sm:$0xff]
    %v571 = vld [vmem:[%s1 + $0x60] sm:$0xff]
    %v572 = vld [vmem:[%s1 + $0x68] sm:$0xff]
    %v573 = vld [vmem:[%s1 + $0x70] sm:$0xff]
    %v574 = vld [vmem:[%s1 + $0x78] sm:$0xff]
    %v575 = vld [vmem:[%s1 + $0x80] sm:$0xff]
    %v576 = vld [vmem:[%s1 + $0x88] sm:$0xff]
    %v577 = vld [vmem:[%s1 + $0x90] sm:$0xff]
    %v578 = vld [vmem:[%s1 + $0x98] sm:$0xff]
    %v579 = vld [vmem:[%s1 + $0xa0] sm:$0xff]
    %v580 = vld [vmem:[%s1 + $0xa8] sm:$0xff]
    %v581 = vld [vmem:[%s1 + $0xb0] sm:$0xff]
    %v582 = vld [vmem:[%s1 + $0xb8] sm:$0xff]
    %v583 = vld [vmem:[%s1 + $0xc0] sm:$0xff]
    %v584 = vld [vmem:[%s1 + $0xc8] sm:$0xff]
    %v585 = vld [vmem:[%s1 + $0xd0] sm:$0xff]
    %v586 = vld [vmem:[%s1 + $0xd8] sm:$0xff]
    %v587 = vld [vmem:[%s1 + $0xe0] sm:$0xff]
    %v588 = vld [vmem:[%s1 + $0xe8] sm:$0xff]
    %v589 = vld [vmem:[%s1 + $0xf0] sm:$0xff]
    %v590 = vld [vmem:[%s1 + $0xf8] sm:$0xff]
    %v591 = vld [vmem:[%s1 + $0x100] sm:$0xff]
    %v592 = vld [vmem:[%s1 + $0x108] sm:$0xff]
    %v593 = vld [vmem:[%s1 + $0x110] sm:$0xff]
    %v594 = vld [vmem:[%s1 + $0x118] sm:$0xff]
    %v595 = vld [vmem:[%s1 + $0x120] sm:$0xff]
    %v596 = vld [vmem:[%s1 + $0x128] sm:$0xff]
    %v597 = vld [vmem:[%s1 + $0x130] sm:$0xff]
    %v598 = vld [vmem:[%s1 + $0x138] sm:$0xff]
    %v599 = vld [vmem:[%s1 + $0x140] sm:$0xff]
    %v600 = vld [vmem:[%s1 + $0x148] sm:$0xff]
    %v601 = vld [vmem:[%s1 + $0x150] sm:$0xff]
    %v602 = vld [vmem:[%s1 + $0x158] sm:$0xff]
    %v603 = vld [vmem:[%s1 + $0x160] sm:$0xff]
    %v604 = vld [vmem:[%s1 + $0x168] sm:$0xff]
    %v605 = vld [vmem:[%s1 + $0x170] sm:$0xff]
    %v606 = vld [vmem:[%s1 + $0x178] sm:$0xff]
    %v607 = vld [vmem:[%s1 + $0x180] sm:$0xff]
    %v608 = vld [vmem:[%s1 + $0x188] sm:$0xff]
    %v609 = vld [vmem:[%s1 + $0x190] sm:$0xff]
    %v610 = vld [vmem:[%s1 + $0x198] sm:$0xff]
    %v611 = vld [vmem:[%s1 + $0x1a0] sm:$0xff]
    %v612 = vld [vmem:[%s1 + $0x1a8] sm:$0xff]
    %v613 = vld [vmem:[%s1 + $0x1b0] sm:$0xff]
    %v614 = vld [vmem:[%s1 + $0x1b8] sm:$0xff]
    %v615 = vld [vmem:[%s1 + $0x1c0] sm:$0xff]
    %v616 = vld [vmem:[%s1 + $0x1c8] sm:$0xff]
    %v617 = vld [vmem:[%s1 + $0x1d0] sm:$0xff]
    %v618 = vld [vmem:[%s1 + $0x1d8] sm:$0xff]
    %v619 = vld [vmem:[%s1 + $0x1e0] sm:$0xff]
    %v620 = vld [vmem:[%s1 + $0x1e8] sm:$0xff]
    %v621 = vld [vmem:[%s1 + $0x1f0] sm:$0xff]
    %v622 = vld [vmem:[%s1 + $0x1f8] sm:$0xff]
    %623 = vmatprep.subr.mxu0 %v620
    %624 = vmatpush1.msra.mxu0 %v619
    %625 = vmatprep.subr.mxu0 %v616
    %626 = vmatpush1.msra.mxu0 %v615
    %627 = vmatprep.subr.mxu0 %v612
    %628 = vmatpush1.msra.mxu0 %v611
    %629 = vmatprep.subr.mxu0 %v608
    %630 = vmatpush1.msra.mxu0 %v607
    %631 = vmatprep.subr.mxu0 %v604
    %632 = vmatpush1.msra.mxu0 %v603
    %633 = vmatprep.subr.mxu0 %v600
    %634 = vmatpush1.msra.mxu0 %v599
    %635 = vmatprep.subr.mxu0 %v596
    %636 = vmatpush1.msra.mxu0 %v595
    %637 = vmatprep.subr.mxu0 %v592
    %638 = vmatpush1.msra.mxu0 %v591
    %639 = vmatprep.subr.mxu0 %v588
    %640 = vmatpush1.msra.mxu0 %v587
    %641 = vmatprep.subr.mxu0 %v584
    %642 = vmatpush1.msra.mxu0 %v583
    %643 = vmatprep.subr.mxu0 %v580
    %644 = vmatpush1.msra.mxu0 %v579
    %645 = vmatprep.subr.mxu0 %v576
    %646 = vmatpush1.msra.mxu0 %v575
    %647 = vmatprep.subr.mxu0 %v572
    %648 = vmatpush1.msra.mxu0 %v571
    %649 = vmatprep.subr.mxu0 %v568
    %650 = vmatpush1.msra.mxu0 %v567
    %651 = vmatprep.subr.mxu0 %v564
    %652 = vmatpush1.msra.mxu0 %v563
    %653 = vmatprep.subr.mxu0 %v560
    %654 = vmatpush1.msra.mxu0 %v559
    %655 = vmatprep.subr.mxu0 0.0
    %656 = vmatpush2.msra.mxu0 0.0
    %657 = vmatprep.subr.mxu0 0.0
    %658 = vmatpush2.msra.mxu0 0.0
    %659 = vmatprep.subr.mxu0 0.0
    %660 = vmatpush2.msra.mxu0 0.0
    %661 = vmatprep.subr.mxu0 0.0
    %662 = vmatpush2.msra.mxu0 0.0
    %663 = vmatprep.subr.mxu0 0.0
    %664 = vmatpush2.msra.mxu0 0.0
    %665 = vmatprep.subr.mxu0 0.0
    %666 = vmatpush2.msra.mxu0 0.0
    %667 = vmatprep.subr.mxu0 0.0
    %668 = vmatpush2.msra.mxu0 0.0
    %669 = vmatprep.subr.mxu0 0.0
    %670 = vmatpush2.msra.mxu0 0.0
    %671 = vmatprep.subr.mxu0 0.0
    %672 = vmatpush2.msra.mxu0 0.0
    %673 = vmatprep.subr.mxu0 0.0
    %674 = vmatpush2.msra.mxu0 0.0
    %675 = vmatprep.subr.mxu0 0.0
    %676 = vmatpush2.msra.mxu0 0.0
    %677 = vmatprep.subr.mxu0 0.0
    %678 = vmatpush2.msra.mxu0 0.0
    %679 = vmatprep.subr.mxu0 0.0
    %680 = vmatpush2.msra.mxu0 0.0
    %681 = vmatprep.subr.mxu0 0.0
    %682 = vmatpush2.msra.mxu0 0.0
    %683 = vmatprep.subr.mxu0 0.0
    %684 = vmatpush2.msra.mxu0 0.0
    %685 = vmatprep.subr.mxu0 0.0
    %686 = vmatpush2.msra.mxu0 0.0
    %687 = vmatprep.mubr.f32.mxu0 0.0
    %688 = vmatmul.mubr.f32.gmra.mxu0 %v554
    %v689 = vpop.f32.mrf.mxu0
    %v690 = vadd.f32 0.0, %v689
    %v691 = vpop.f32.mrf.mxu0
    %v692 = vadd.f32 0.0, %v691
    %693 = vdwg.mxu0
    %694 = vmatprep.subr.mxu0 %v622
    %695 = vmatpush1.msra.mxu0 %v621
    %696 = vmatprep.subr.mxu0 %v618
    %697 = vmatpush1.msra.mxu0 %v617
    %698 = vmatprep.subr.mxu0 %v614
    %699 = vmatpush1.msra.mxu0 %v613
    %700 = vmatprep.subr.mxu0 %v610
    %701 = vmatpush1.msra.mxu0 %v609
    %702 = vmatprep.subr.mxu0 %v606
    %703 = vmatpush1.msra.mxu0 %v605
    %704 = vmatprep.subr.mxu0 %v602
    %705 = vmatpush1.msra.mxu0 %v601
    %706 = vmatprep.subr.mxu0 %v598
    %707 = vmatpush1.msra.mxu0 %v597
    %708 = vmatprep.subr.mxu0 %v594
    %709 = vmatpush1.msra.mxu0 %v593
    %710 = vmatprep.subr.mxu0 %v590
    %711 = vmatpush1.msra.mxu0 %v589
    %712 = vmatprep.subr.mxu0 %v586
    %713 = vmatpush1.msra.mxu0 %v585
    %714 = vmatprep.subr.mxu0 %v582
    %715 = vmatpush1.msra.mxu0 %v581
    %716 = vmatprep.subr.mxu0 %v578
    %717 = vmatpush1.msra.mxu0 %v577
    %718 = vmatprep.subr.mxu0 %v574
    %719 = vmatpush1.msra.mxu0 %v573
    %720 = vmatprep.subr.mxu0 %v570
    %721 = vmatpush1.msra.mxu0 %v569
    %722 = vmatprep.subr.mxu0 %v566
    %723 = vmatpush1.msra.mxu0 %v565
    %724 = vmatprep.subr.mxu0 %v562
    %725 = vmatpush1.msra.mxu0 %v561
    %726 = vmatprep.subr.mxu0 0.0
    %727 = vmatpush2.msra.mxu0 0.0
    %728 = vmatprep.subr.mxu0 0.0
    %729 = vmatpush2.msra.mxu0 0.0
    %730 = vmatprep.subr.mxu0 0.0
    %731 = vmatpush2.msra.mxu0 0.0
    %732 = vmatprep.subr.mxu0 0.0
    %733 = vmatpush2.msra.mxu0 0.0
    %734 = vmatprep.subr.mxu0 0.0
    %735 = vmatpush2.msra.mxu0 0.0
    %736 = vmatprep.subr.mxu0 0.0
    %737 = vmatpush2.msra.mxu0 0.0
    %738 = vmatprep.subr.mxu0 0.0
    %739 = vmatpush2.msra.mxu0 0.0
    %740 = vmatprep.subr.mxu0 0.0
    %741 = vmatpush2.msra.mxu0 0.0
    %742 = vmatprep.subr.mxu0 0.0
    %743 = vmatpush2.msra.mxu0 0.0
    %744 = vmatprep.subr.mxu0 0.0
    %745 = vmatpush2.msra.mxu0 0.0
    %746 = vmatprep.subr.mxu0 0.0
    %747 = vmatpush2.msra.mxu0 0.0
    %748 = vmatprep.subr.mxu0 0.0
    %749 = vmatpush2.msra.mxu0 0.0
    %750 = vmatprep.subr.mxu0 0.0
    %751 = vmatpush2.msra.mxu0 0.0
    %752 = vmatprep.subr.mxu0 0.0
    %753 = vmatpush2.msra.mxu0 0.0
    %754 = vmatprep.subr.mxu0 0.0
    %755 = vmatpush2.msra.mxu0 0.0
    %756 = vmatprep.subr.mxu0 0.0
    %757 = vmatpush2.msra.mxu0 0.0
    %758 = vmatprep.mubr.f32.mxu0 0.0
    %759 = vmatmul.mubr.f32.gmra.mxu0 %v554
    %v760 = vpop.f32.mrf.mxu0
    %v761 = vadd.f32 0.0, %v760
    %v762 = vpop.f32.mrf.mxu0
    %v763 = vadd.f32 0.0, %v762
    %764 = vdwg.mxu0
    %v769 = vcombine.low %v690, %v692
    %v770 = vcombine.low %v761, %v763
    %v772 = vunpack.c.l.s4 1983009808
    %v773 = vunpack.c.0.s8 %v772
    %v774 = vlaneseq
    %v775 = vshrl.u32 %v774, 7
    %v776 = vsub.s32 %v773, %v775
    %v777 = vrot.slane %v769, %v776
    %v779 = vunpack.c.l.s4 1983009808
    %v780 = vunpack.c.0.s8 %v779
    %v781 = vlaneseq
    %v782 = vshrl.u32 %v781, 7
    %v783 = vsub.s32 %v780, %v782
    %v784 = vrot.slane %v770, %v783
    %v785 = vcombine.low %v777, %v784
    %v787 = vadd.f32 %v558, %v785
    %v788 = vxor.u32 %v787, 2147483648
    %v789 = vmul.f32 %v788, 1.442695
    %v790 = vpow.pop %v789
    %v791 = vadd.f32 %v790, 1.0
    %v792 = vrcp.pop %v791
    %v793 = vmul.f32 1.0, %v792
    %v795 = vrot.slane %v787, 2
    %v797 = vxor.u32 %v795, 2147483648
    %v798 = vmul.f32 %v797, 1.442695
    %v799 = vpow.pop %v798
    %v800 = vadd.f32 %v799, 1.0
    %v801 = vrcp.pop %v800
    %v802 = vmul.f32 1.0, %v801
    %v803 = vrot.slane %v787, 4
    %v805 = vtanh.pop %v803
    %v806 = vrot.slane %v787, 6
    %v808 = vxor.u32 %v806, 2147483648
    %v809 = vmul.f32 %v808, 1.442695
    %v810 = vpow.pop %v809
    %v811 = vadd.f32 %v810, 1.0
    %v812 = vrcp.pop %v811
    %v813 = vmul.f32 1.0, %v812
    %v814 = vmul.f32 %v802, %v552
    %v815 = vmul.f32 %v793, %v805
    %v816 = vadd.f32 %v814, %v815
    %v817 = vtanh.pop %v816
    %v818 = vmul.f32 %v813, %v817
    %s819 = scalar_lea.vmem [#allocation4], 4
    %820 = vst [vmem:[%s819] sm:$0x3] %v818
    %s821 = scalar_lea.vmem %s0, 24
    %v822 = vld [vmem:[%s821] sm:$0xff]
    %v823 = vld [vmem:[%s1] sm:$0xff]
    %v824 = vld [vmem:[%s1 + $0x8] sm:$0xff]
    %v825 = vld [vmem:[%s1 + $0x10] sm:$0xff]
    %v826 = vld [vmem:[%s1 + $0x18] sm:$0xff]
    %v827 = vld [vmem:[%s1 + $0x20] sm:$0xff]
    %v828 = vld [vmem:[%s1 + $0x28] sm:$0xff]
    %v829 = vld [vmem:[%s1 + $0x30] sm:$0xff]
    %v830 = vld [vmem:[%s1 + $0x38] sm:$0xff]
    %v831 = vld [vmem:[%s1 + $0x40] sm:$0xff]
    %v832 = vld [vmem:[%s1 + $0x48] sm:$0xff]
    %v833 = vld [vmem:[%s1 + $0x50] sm:$0xff]
    %v834 = vld [vmem:[%s1 + $0x58] sm:$0xff]
    %v835 = vld [vmem:[%s1 + $0x60] sm:$0xff]
    %v836 = vld [vmem:[%s1 + $0x68] sm:$0xff]
    %v837 = vld [vmem:[%s1 + $0x70] sm:$0xff]
    %v838 = vld [vmem:[%s1 + $0x78] sm:$0xff]
    %v839 = vld [vmem:[%s1 + $0x80] sm:$0xff]
    %v840 = vld [vmem:[%s1 + $0x88] sm:$0xff]
    %v841 = vld [vmem:[%s1 + $0x90] sm:$0xff]
    %v842 = vld [vmem:[%s1 + $0x98] sm:$0xff]
    %v843 = vld [vmem:[%s1 + $0xa0] sm:$0xff]
    %v844 = vld [vmem:[%s1 + $0xa8] sm:$0xff]
    %v845 = vld [vmem:[%s1 + $0xb0] sm:$0xff]
    %v846 = vld [vmem:[%s1 + $0xb8] sm:$0xff]
    %v847 = vld [vmem:[%s1 + $0xc0] sm:$0xff]
    %v848 = vld [vmem:[%s1 + $0xc8] sm:$0xff]
    %v849 = vld [vmem:[%s1 + $0xd0] sm:$0xff]
    %v850 = vld [vmem:[%s1 + $0xd8] sm:$0xff]
    %v851 = vld [vmem:[%s1 + $0xe0] sm:$0xff]
    %v852 = vld [vmem:[%s1 + $0xe8] sm:$0xff]
    %v853 = vld [vmem:[%s1 + $0xf0] sm:$0xff]
    %v854 = vld [vmem:[%s1 + $0xf8] sm:$0xff]
    %v855 = vld [vmem:[%s1 + $0x100] sm:$0xff]
    %v856 = vld [vmem:[%s1 + $0x108] sm:$0xff]
    %v857 = vld [vmem:[%s1 + $0x110] sm:$0xff]
    %v858 = vld [vmem:[%s1 + $0x118] sm:$0xff]
    %v859 = vld [vmem:[%s1 + $0x120] sm:$0xff]
    %v860 = vld [vmem:[%s1 + $0x128] sm:$0xff]
    %v861 = vld [vmem:[%s1 + $0x130] sm:$0xff]
    %v862 = vld [vmem:[%s1 + $0x138] sm:$0xff]
    %v863 = vld [vmem:[%s1 + $0x140] sm:$0xff]
    %v864 = vld [vmem:[%s1 + $0x148] sm:$0xff]
    %v865 = vld [vmem:[%s1 + $0x150] sm:$0xff]
    %v866 = vld [vmem:[%s1 + $0x158] sm:$0xff]
    %v867 = vld [vmem:[%s1 + $0x160] sm:$0xff]
    %v868 = vld [vmem:[%s1 + $0x168] sm:$0xff]
    %v869 = vld [vmem:[%s1 + $0x170] sm:$0xff]
    %v870 = vld [vmem:[%s1 + $0x178] sm:$0xff]
    %v871 = vld [vmem:[%s1 + $0x180] sm:$0xff]
    %v872 = vld [vmem:[%s1 + $0x188] sm:$0xff]
    %v873 = vld [vmem:[%s1 + $0x190] sm:$0xff]
    %v874 = vld [vmem:[%s1 + $0x198] sm:$0xff]
    %v875 = vld [vmem:[%s1 + $0x1a0] sm:$0xff]
    %v876 = vld [vmem:[%s1 + $0x1a8] sm:$0xff]
    %v877 = vld [vmem:[%s1 + $0x1b0] sm:$0xff]
    %v878 = vld [vmem:[%s1 + $0x1b8] sm:$0xff]
    %v879 = vld [vmem:[%s1 + $0x1c0] sm:$0xff]
    %v880 = vld [vmem:[%s1 + $0x1c8] sm:$0xff]
    %v881 = vld [vmem:[%s1 + $0x1d0] sm:$0xff]
    %v882 = vld [vmem:[%s1 + $0x1d8] sm:$0xff]
    %v883 = vld [vmem:[%s1 + $0x1e0] sm:$0xff]
    %v884 = vld [vmem:[%s1 + $0x1e8] sm:$0xff]
    %v885 = vld [vmem:[%s1 + $0x1f0] sm:$0xff]
    %v886 = vld [vmem:[%s1 + $0x1f8] sm:$0xff]
    %887 = vmatprep.subr.mxu0 %v884
    %888 = vmatpush1.msra.mxu0 %v883
    %889 = vmatprep.subr.mxu0 %v880
    %890 = vmatpush1.msra.mxu0 %v879
    %891 = vmatprep.subr.mxu0 %v876
    %892 = vmatpush1.msra.mxu0 %v875
    %893 = vmatprep.subr.mxu0 %v872
    %894 = vmatpush1.msra.mxu0 %v871
    %895 = vmatprep.subr.mxu0 %v868
    %896 = vmatpush1.msra.mxu0 %v867
    %897 = vmatprep.subr.mxu0 %v864
    %898 = vmatpush1.msra.mxu0 %v863
    %899 = vmatprep.subr.mxu0 %v860
    %900 = vmatpush1.msra.mxu0 %v859
    %901 = vmatprep.subr.mxu0 %v856
    %902 = vmatpush1.msra.mxu0 %v855
    %903 = vmatprep.subr.mxu0 %v852
    %904 = vmatpush1.msra.mxu0 %v851
    %905 = vmatprep.subr.mxu0 %v848
    %906 = vmatpush1.msra.mxu0 %v847
    %907 = vmatprep.subr.mxu0 %v844
    %908 = vmatpush1.msra.mxu0 %v843
    %909 = vmatprep.subr.mxu0 %v840
    %910 = vmatpush1.msra.mxu0 %v839
    %911 = vmatprep.subr.mxu0 %v836
    %912 = vmatpush1.msra.mxu0 %v835
    %913 = vmatprep.subr.mxu0 %v832
    %914 = vmatpush1.msra.mxu0 %v831
    %915 = vmatprep.subr.mxu0 %v828
    %916 = vmatpush1.msra.mxu0 %v827
    %917 = vmatprep.subr.mxu0 %v824
    %918 = vmatpush1.msra.mxu0 %v823
    %919 = vmatprep.subr.mxu0 0.0
    %920 = vmatpush2.msra.mxu0 0.0
    %921 = vmatprep.subr.mxu0 0.0
    %922 = vmatpush2.msra.mxu0 0.0
    %923 = vmatprep.subr.mxu0 0.0
    %924 = vmatpush2.msra.mxu0 0.0
    %925 = vmatprep.subr.mxu0 0.0
    %926 = vmatpush2.msra.mxu0 0.0
    %927 = vmatprep.subr.mxu0 0.0
    %928 = vmatpush2.msra.mxu0 0.0
    %929 = vmatprep.subr.mxu0 0.0
    %930 = vmatpush2.msra.mxu0 0.0
    %931 = vmatprep.subr.mxu0 0.0
    %932 = vmatpush2.msra.mxu0 0.0
    %933 = vmatprep.subr.mxu0 0.0
    %934 = vmatpush2.msra.mxu0 0.0
    %935 = vmatprep.subr.mxu0 0.0
    %936 = vmatpush2.msra.mxu0 0.0
    %937 = vmatprep.subr.mxu0 0.0
    %938 = vmatpush2.msra.mxu0 0.0
    %939 = vmatprep.subr.mxu0 0.0
    %940 = vmatpush2.msra.mxu0 0.0
    %941 = vmatprep.subr.mxu0 0.0
    %942 = vmatpush2.msra.mxu0 0.0
    %943 = vmatprep.subr.mxu0 0.0
    %944 = vmatpush2.msra.mxu0 0.0
    %945 = vmatprep.subr.mxu0 0.0
    %946 = vmatpush2.msra.mxu0 0.0
    %947 = vmatprep.subr.mxu0 0.0
    %948 = vmatpush2.msra.mxu0 0.0
    %949 = vmatprep.subr.mxu0 0.0
    %950 = vmatpush2.msra.mxu0 0.0
    %951 = vmatprep.mubr.f32.mxu0 0.0
    %952 = vmatmul.mubr.f32.gmra.mxu0 %v818
    %v953 = vpop.f32.mrf.mxu0
    %v954 = vadd.f32 0.0, %v953
    %v955 = vpop.f32.mrf.mxu0
    %v956 = vadd.f32 0.0, %v955
    %957 = vdwg.mxu0
    %958 = vmatprep.subr.mxu0 %v886
    %959 = vmatpush1.msra.mxu0 %v885
    %960 = vmatprep.subr.mxu0 %v882
    %961 = vmatpush1.msra.mxu0 %v881
    %962 = vmatprep.subr.mxu0 %v878
    %963 = vmatpush1.msra.mxu0 %v877
    %964 = vmatprep.subr.mxu0 %v874
    %965 = vmatpush1.msra.mxu0 %v873
    %966 = vmatprep.subr.mxu0 %v870
    %967 = vmatpush1.msra.mxu0 %v869
    %968 = vmatprep.subr.mxu0 %v866
    %969 = vmatpush1.msra.mxu0 %v865
    %970 = vmatprep.subr.mxu0 %v862
    %971 = vmatpush1.msra.mxu0 %v861
    %972 = vmatprep.subr.mxu0 %v858
    %973 = vmatpush1.msra.mxu0 %v857
    %974 = vmatprep.subr.mxu0 %v854
    %975 = vmatpush1.msra.mxu0 %v853
    %976 = vmatprep.subr.mxu0 %v850
    %977 = vmatpush1.msra.mxu0 %v849
    %978 = vmatprep.subr.mxu0 %v846
    %979 = vmatpush1.msra.mxu0 %v845
    %980 = vmatprep.subr.mxu0 %v842
    %981 = vmatpush1.msra.mxu0 %v841
    %982 = vmatprep.subr.mxu0 %v838
    %983 = vmatpush1.msra.mxu0 %v837
    %984 = vmatprep.subr.mxu0 %v834
    %985 = vmatpush1.msra.mxu0 %v833
    %986 = vmatprep.subr.mxu0 %v830
    %987 = vmatpush1.msra.mxu0 %v829
    %988 = vmatprep.subr.mxu0 %v826
    %989 = vmatpush1.msra.mxu0 %v825
    %990 = vmatprep.subr.mxu0 0.0
    %991 = vmatpush2.msra.mxu0 0.0
    %992 = vmatprep.subr.mxu0 0.0
    %993 = vmatpush2.msra.mxu0 0.0
    %994 = vmatprep.subr.mxu0 0.0
    %995 = vmatpush2.msra.mxu0 0.0
    %996 = vmatprep.subr.mxu0 0.0
    %997 = vmatpush2.msra.mxu0 0.0
    %998 = vmatprep.subr.mxu0 0.0
    %999 = vmatpush2.msra.mxu0 0.0
    %1000 = vmatprep.subr.mxu0 0.0
    %1001 = vmatpush2.msra.mxu0 0.0
    %1002 = vmatprep.subr.mxu0 0.0
    %1003 = vmatpush2.msra.mxu0 0.0
    %1004 = vmatprep.subr.mxu0 0.0
    %1005 = vmatpush2.msra.mxu0 0.0
    %1006 = vmatprep.subr.mxu0 0.0
    %1007 = vmatpush2.msra.mxu0 0.0
    %1008 = vmatprep.subr.mxu0 0.0
    %1009 = vmatpush2.msra.mxu0 0.0
    %1010 = vmatprep.subr.mxu0 0.0
    %1011 = vmatpush2.msra.mxu0 0.0
    %1012 = vmatprep.subr.mxu0 0.0
    %1013 = vmatpush2.msra.mxu0 0.0
    %1014 = vmatprep.subr.mxu0 0.0
    %1015 = vmatpush2.msra.mxu0 0.0
    %1016 = vmatprep.subr.mxu0 0.0
    %1017 = vmatpush2.msra.mxu0 0.0
    %1018 = vmatprep.subr.mxu0 0.0
    %1019 = vmatpush2.msra.mxu0 0.0
    %1020 = vmatprep.subr.mxu0 0.0
    %1021 = vmatpush2.msra.mxu0 0.0
    %1022 = vmatprep.mubr.f32.mxu0 0.0
    %1023 = vmatmul.mubr.f32.gmra.mxu0 %v818
    %v1024 = vpop.f32.mrf.mxu0
    %v1025 = vadd.f32 0.0, %v1024
    %v1026 = vpop.f32.mrf.mxu0
    %v1027 = vadd.f32 0.0, %v1026
    %1028 = vdwg.mxu0
    %v1033 = vcombine.low %v954, %v956
    %v1034 = vcombine.low %v1025, %v1027
    %v1036 = vunpack.c.l.s4 1983009808
    %v1037 = vunpack.c.0.s8 %v1036
    %v1038 = vlaneseq
    %v1039 = vshrl.u32 %v1038, 7
    %v1040 = vsub.s32 %v1037, %v1039
    %v1041 = vrot.slane %v1033, %v1040
    %v1043 = vunpack.c.l.s4 1983009808
    %v1044 = vunpack.c.0.s8 %v1043
    %v1045 = vlaneseq
    %v1046 = vshrl.u32 %v1045, 7
    %v1047 = vsub.s32 %v1044, %v1046
    %v1048 = vrot.slane %v1034, %v1047
    %v1049 = vcombine.low %v1041, %v1048
    %v1051 = vadd.f32 %v822, %v1049
    %v1052 = vxor.u32 %v1051, 2147483648
    %v1053 = vmul.f32 %v1052, 1.442695
    %v1054 = vpow.pop %v1053
    %v1055 = vadd.f32 %v1054, 1.0
    %v1056 = vrcp.pop %v1055
    %v1057 = vmul.f32 1.0, %v1056
    %v1059 = vrot.slane %v1051, 2
    %v1061 = vxor.u32 %v1059, 2147483648
    %v1062 = vmul.f32 %v1061, 1.442695
    %v1063 = vpow.pop %v1062
    %v1064 = vadd.f32 %v1063, 1.0
    %v1065 = vrcp.pop %v1064
    %v1066 = vmul.f32 1.0, %v1065
    %v1067 = vrot.slane %v1051, 4
    %v1069 = vtanh.pop %v1067
    %v1070 = vrot.slane %v1051, 6
    %v1072 = vxor.u32 %v1070, 2147483648
    %v1073 = vmul.f32 %v1072, 1.442695
    %v1074 = vpow.pop %v1073
    %v1075 = vadd.f32 %v1074, 1.0
    %v1076 = vrcp.pop %v1075
    %v1077 = vmul.f32 1.0, %v1076
    %v1078 = vmul.f32 %v1066, %v816
    %v1079 = vmul.f32 %v1057, %v1069
    %v1080 = vadd.f32 %v1078, %v1079
    %v1081 = vtanh.pop %v1080
    %v1082 = vmul.f32 %v1077, %v1081
    %s1083 = scalar_lea.vmem [#allocation4], 6
    %1084 = vst [vmem:[%s1083] sm:$0x3] %v1082
    %s1085 = scalar_lea.vmem %s0, 32
    %v1086 = vld [vmem:[%s1085] sm:$0xff]
    %v1087 = vld [vmem:[%s1] sm:$0xff]
    %v1088 = vld [vmem:[%s1 + $0x8] sm:$0xff]
    %v1089 = vld [vmem:[%s1 + $0x10] sm:$0xff]
    %v1090 = vld [vmem:[%s1 + $0x18] sm:$0xff]
    %v1091 = vld [vmem:[%s1 + $0x20] sm:$0xff]
    %v1092 = vld [vmem:[%s1 + $0x28] sm:$0xff]
    %v1093 = vld [vmem:[%s1 + $0x30] sm:$0xff]
    %v1094 = vld [vmem:[%s1 + $0x38] sm:$0xff]
    %v1095 = vld [vmem:[%s1 + $0x40] sm:$0xff]
    %v1096 = vld [vmem:[%s1 + $0x48] sm:$0xff]
    %v1097 = vld [vmem:[%s1 + $0x50] sm:$0xff]
    %v1098 = vld [vmem:[%s1 + $0x58] sm:$0xff]
    %v1099 = vld [vmem:[%s1 + $0x60] sm:$0xff]
    %v1100 = vld [vmem:[%s1 + $0x68] sm:$0xff]
    %v1101 = vld [vmem:[%s1 + $0x70] sm:$0xff]
    %v1102 = vld [vmem:[%s1 + $0x78] sm:$0xff]
    %v1103 = vld [vmem:[%s1 + $0x80] sm:$0xff]
    %v1104 = vld [vmem:[%s1 + $0x88] sm:$0xff]
    %v1105 = vld [vmem:[%s1 + $0x90] sm:$0xff]
    %v1106 = vld [vmem:[%s1 + $0x98] sm:$0xff]
    %v1107 = vld [vmem:[%s1 + $0xa0] sm:$0xff]
    %v1108 = vld [vmem:[%s1 + $0xa8] sm:$0xff]
    %v1109 = vld [vmem:[%s1 + $0xb0] sm:$0xff]
    %v1110 = vld [vmem:[%s1 + $0xb8] sm:$0xff]
    %v1111 = vld [vmem:[%s1 + $0xc0] sm:$0xff]
    %v1112 = vld [vmem:[%s1 + $0xc8] sm:$0xff]
    %v1113 = vld [vmem:[%s1 + $0xd0] sm:$0xff]
    %v1114 = vld [vmem:[%s1 + $0xd8] sm:$0xff]
    %v1115 = vld [vmem:[%s1 + $0xe0] sm:$0xff]
    %v1116 = vld [vmem:[%s1 + $0xe8] sm:$0xff]
    %v1117 = vld [vmem:[%s1 + $0xf0] sm:$0xff]
    %v1118 = vld [vmem:[%s1 + $0xf8] sm:$0xff]
    %v1119 = vld [vmem:[%s1 + $0x100] sm:$0xff]
    %v1120 = vld [vmem:[%s1 + $0x108] sm:$0xff]
    %v1121 = vld [vmem:[%s1 + $0x110] sm:$0xff]
    %v1122 = vld [vmem:[%s1 + $0x118] sm:$0xff]
    %v1123 = vld [vmem:[%s1 + $0x120] sm:$0xff]
    %v1124 = vld [vmem:[%s1 + $0x128] sm:$0xff]
    %v1125 = vld [vmem:[%s1 + $0x130] sm:$0xff]
    %v1126 = vld [vmem:[%s1 + $0x138] sm:$0xff]
    %v1127 = vld [vmem:[%s1 + $0x140] sm:$0xff]
    %v1128 = vld [vmem:[%s1 + $0x148] sm:$0xff]
    %v1129 = vld [vmem:[%s1 + $0x150] sm:$0xff]
    %v1130 = vld [vmem:[%s1 + $0x158] sm:$0xff]
    %v1131 = vld [vmem:[%s1 + $0x160] sm:$0xff]
    %v1132 = vld [vmem:[%s1 + $0x168] sm:$0xff]
    %v1133 = vld [vmem:[%s1 + $0x170] sm:$0xff]
    %v1134 = vld [vmem:[%s1 + $0x178] sm:$0xff]
    %v1135 = vld [vmem:[%s1 + $0x180] sm:$0xff]
    %v1136 = vld [vmem:[%s1 + $0x188] sm:$0xff]
    %v1137 = vld [vmem:[%s1 + $0x190] sm:$0xff]
    %v1138 = vld [vmem:[%s1 + $0x198] sm:$0xff]
    %v1139 = vld [vmem:[%s1 + $0x1a0] sm:$0xff]
    %v1140 = vld [vmem:[%s1 + $0x1a8] sm:$0xff]
    %v1141 = vld [vmem:[%s1 + $0x1b0] sm:$0xff]
    %v1142 = vld [vmem:[%s1 + $0x1b8] sm:$0xff]
    %v1143 = vld [vmem:[%s1 + $0x1c0] sm:$0xff]
    %v1144 = vld [vmem:[%s1 + $0x1c8] sm:$0xff]
    %v1145 = vld [vmem:[%s1 + $0x1d0] sm:$0xff]
    %v1146 = vld [vmem:[%s1 + $0x1d8] sm:$0xff]
    %v1147 = vld [vmem:[%s1 + $0x1e0] sm:$0xff]
    %v1148 = vld [vmem:[%s1 + $0x1e8] sm:$0xff]
    %v1149 = vld [vmem:[%s1 + $0x1f0] sm:$0xff]
    %v1150 = vld [vmem:[%s1 + $0x1f8] sm:$0xff]
    %1151 = vmatprep.subr.mxu0 %v1148
    %1152 = vmatpush1.msra.mxu0 %v1147
    %1153 = vmatprep.subr.mxu0 %v1144
    %1154 = vmatpush1.msra.mxu0 %v1143
    %1155 = vmatprep.subr.mxu0 %v1140
    %1156 = vmatpush1.msra.mxu0 %v1139
    %1157 = vmatprep.subr.mxu0 %v1136
    %1158 = vmatpush1.msra.mxu0 %v1135
    %1159 = vmatprep.subr.mxu0 %v1132
    %1160 = vmatpush1.msra.mxu0 %v1131
    %1161 = vmatprep.subr.mxu0 %v1128
    %1162 = vmatpush1.msra.mxu0 %v1127
    %1163 = vmatprep.subr.mxu0 %v1124
    %1164 = vmatpush1.msra.mxu0 %v1123
    %1165 = vmatprep.subr.mxu0 %v1120
    %1166 = vmatpush1.msra.mxu0 %v1119
    %1167 = vmatprep.subr.mxu0 %v1116
    %1168 = vmatpush1.msra.mxu0 %v1115
    %1169 = vmatprep.subr.mxu0 %v1112
    %1170 = vmatpush1.msra.mxu0 %v1111
    %1171 = vmatprep.subr.mxu0 %v1108
    %1172 = vmatpush1.msra.mxu0 %v1107
    %1173 = vmatprep.subr.mxu0 %v1104
    %1174 = vmatpush1.msra.mxu0 %v1103
    %1175 = vmatprep.subr.mxu0 %v1100
    %1176 = vmatpush1.msra.mxu0 %v1099
    %1177 = vmatprep.subr.mxu0 %v1096
    %1178 = vmatpush1.msra.mxu0 %v1095
    %1179 = vmatprep.subr.mxu0 %v1092
    %1180 = vmatpush1.msra.mxu0 %v1091
    %1181 = vmatprep.subr.mxu0 %v1088
    %1182 = vmatpush1.msra.mxu0 %v1087
    %1183 = vmatprep.subr.mxu0 0.0
    %1184 = vmatpush2.msra.mxu0 0.0
    %1185 = vmatprep.subr.mxu0 0.0
    %1186 = vmatpush2.msra.mxu0 0.0
    %1187 = vmatprep.subr.mxu0 0.0
    %1188 = vmatpush2.msra.mxu0 0.0
    %1189 = vmatprep.subr.mxu0 0.0
    %1190 = vmatpush2.msra.mxu0 0.0
    %1191 = vmatprep.subr.mxu0 0.0
    %1192 = vmatpush2.msra.mxu0 0.0
    %1193 = vmatprep.subr.mxu0 0.0
    %1194 = vmatpush2.msra.mxu0 0.0
    %1195 = vmatprep.subr.mxu0 0.0
    %1196 = vmatpush2.msra.mxu0 0.0
    %1197 = vmatprep.subr.mxu0 0.0
    %1198 = vmatpush2.msra.mxu0 0.0
    %1199 = vmatprep.subr.mxu0 0.0
    %1200 = vmatpush2.msra.mxu0 0.0
    %1201 = vmatprep.subr.mxu0 0.0
    %1202 = vmatpush2.msra.mxu0 0.0
    %1203 = vmatprep.subr.mxu0 0.0
    %1204 = vmatpush2.msra.mxu0 0.0
    %1205 = vmatprep.subr.mxu0 0.0
    %1206 = vmatpush2.msra.mxu0 0.0
    %1207 = vmatprep.subr.mxu0 0.0
    %1208 = vmatpush2.msra.mxu0 0.0
    %1209 = vmatprep.subr.mxu0 0.0
    %1210 = vmatpush2.msra.mxu0 0.0
    %1211 = vmatprep.subr.mxu0 0.0
    %1212 = vmatpush2.msra.mxu0 0.0
    %1213 = vmatprep.subr.mxu0 0.0
    %1214 = vmatpush2.msra.mxu0 0.0
    %1215 = vmatprep.mubr.f32.mxu0 0.0
    %1216 = vmatmul.mubr.f32.gmra.mxu0 %v1082
    %v1217 = vpop.f32.mrf.mxu0
    %v1218 = vadd.f32 0.0, %v1217
    %v1219 = vpop.f32.mrf.mxu0
    %v1220 = vadd.f32 0.0, %v1219
    %1221 = vdwg.mxu0
    %1222 = vmatprep.subr.mxu0 %v1150
    %1223 = vmatpush1.msra.mxu0 %v1149
    %1224 = vmatprep.subr.mxu0 %v1146
    %1225 = vmatpush1.msra.mxu0 %v1145
    %1226 = vmatprep.subr.mxu0 %v1142
    %1227 = vmatpush1.msra.mxu0 %v1141
    %1228 = vmatprep.subr.mxu0 %v1138
    %1229 = vmatpush1.msra.mxu0 %v1137
    %1230 = vmatprep.subr.mxu0 %v1134
    %1231 = vmatpush1.msra.mxu0 %v1133
    %1232 = vmatprep.subr.mxu0 %v1130
    %1233 = vmatpush1.msra.mxu0 %v1129
    %1234 = vmatprep.subr.mxu0 %v1126
    %1235 = vmatpush1.msra.mxu0 %v1125
    %1236 = vmatprep.subr.mxu0 %v1122
    %1237 = vmatpush1.msra.mxu0 %v1121
    %1238 = vmatprep.subr.mxu0 %v1118
    %1239 = vmatpush1.msra.mxu0 %v1117
    %1240 = vmatprep.subr.mxu0 %v1114
    %1241 = vmatpush1.msra.mxu0 %v1113
    %1242 = vmatprep.subr.mxu0 %v1110
    %1243 = vmatpush1.msra.mxu0 %v1109
    %1244 = vmatprep.subr.mxu0 %v1106
    %1245 = vmatpush1.msra.mxu0 %v1105
    %1246 = vmatprep.subr.mxu0 %v1102
    %1247 = vmatpush1.msra.mxu0 %v1101
    %1248 = vmatprep.subr.mxu0 %v1098
    %1249 = vmatpush1.msra.mxu0 %v1097
    %1250 = vmatprep.subr.mxu0 %v1094
    %1251 = vmatpush1.msra.mxu0 %v1093
    %1252 = vmatprep.subr.mxu0 %v1090
    %1253 = vmatpush1.msra.mxu0 %v1089
    %1254 = vmatprep.subr.mxu0 0.0
    %1255 = vmatpush2.msra.mxu0 0.0
    %1256 = vmatprep.subr.mxu0 0.0
    %1257 = vmatpush2.msra.mxu0 0.0
    %1258 = vmatprep.subr.mxu0 0.0
    %1259 = vmatpush2.msra.mxu0 0.0
    %1260 = vmatprep.subr.mxu0 0.0
    %1261 = vmatpush2.msra.mxu0 0.0
    %1262 = vmatprep.subr.mxu0 0.0
    %1263 = vmatpush2.msra.mxu0 0.0
    %1264 = vmatprep.subr.mxu0 0.0
    %1265 = vmatpush2.msra.mxu0 0.0
    %1266 = vmatprep.subr.mxu0 0.0
    %1267 = vmatpush2.msra.mxu0 0.0
    %1268 = vmatprep.subr.mxu0 0.0
    %1269 = vmatpush2.msra.mxu0 0.0
    %1270 = vmatprep.subr.mxu0 0.0
    %1271 = vmatpush2.msra.mxu0 0.0
    %1272 = vmatprep.subr.mxu0 0.0
    %1273 = vmatpush2.msra.mxu0 0.0
    %1274 = vmatprep.subr.mxu0 0.0
    %1275 = vmatpush2.msra.mxu0 0.0
    %1276 = vmatprep.subr.mxu0 0.0
    %1277 = vmatpush2.msra.mxu0 0.0
    %1278 = vmatprep.subr.mxu0 0.0
    %1279 = vmatpush2.msra.mxu0 0.0
    %1280 = vmatprep.subr.mxu0 0.0
    %1281 = vmatpush2.msra.mxu0 0.0
    %1282 = vmatprep.subr.mxu0 0.0
    %1283 = vmatpush2.msra.mxu0 0.0
    %1284 = vmatprep.subr.mxu0 0.0
    %1285 = vmatpush2.msra.mxu0 0.0
    %1286 = vmatprep.mubr.f32.mxu0 0.0
    %1287 = vmatmul.mubr.f32.gmra.mxu0 %v1082
    %v1288 = vpop.f32.mrf.mxu0
    %v1289 = vadd.f32 0.0, %v1288
    %v1290 = vpop.f32.mrf.mxu0
    %v1291 = vadd.f32 0.0, %v1290
    %1292 = vdwg.mxu0
    %v1297 = vcombine.low %v1218, %v1220
    %v1298 = vcombine.low %v1289, %v1291
    %v1300 = vunpack.c.l.s4 1983009808
    %v1301 = vunpack.c.0.s8 %v1300
    %v1302 = vlaneseq
    %v1303 = vshrl.u32 %v1302, 7
    %v1304 = vsub.s32 %v1301, %v1303
    %v1305 = vrot.slane %v1297, %v1304
    %v1307 = vunpack.c.l.s4 1983009808
    %v1308 = vunpack.c.0.s8 %v1307
    %v1309 = vlaneseq
    %v1310 = vshrl.u32 %v1309, 7
    %v1311 = vsub.s32 %v1308, %v1310
    %v1312 = vrot.slane %v1298, %v1311
    %v1313 = vcombine.low %v1305, %v1312
    %v1315 = vadd.f32 %v1086, %v1313
    %v1316 = vxor.u32 %v1315, 2147483648
    %v1317 = vmul.f32 %v1316, 1.442695
    %v1318 = vpow.pop %v1317
    %v1319 = vadd.f32 %v1318, 1.0
    %v1320 = vrcp.pop %v1319
    %v1321 = vmul.f32 1.0, %v1320
    %v1323 = vrot.slane %v1315, 2
    %v1325 = vxor.u32 %v1323, 2147483648
    %v1326 = vmul.f32 %v1325, 1.442695
    %v1327 = vpow.pop %v1326
    %v1328 = vadd.f32 %v1327, 1.0
    %v1329 = vrcp.pop %v1328
    %v1330 = vmul.f32 1.0, %v1329
    %v1331 = vrot.slane %v1315, 4
    %v1333 = vtanh.pop %v1331
    %v1334 = vrot.slane %v1315, 6
    %v1336 = vxor.u32 %v1334, 2147483648
    %v1337 = vmul.f32 %v1336, 1.442695
    %v1338 = vpow.pop %v1337
    %v1339 = vadd.f32 %v1338, 1.0
    %v1340 = vrcp.pop %v1339
    %v1341 = vmul.f32 1.0, %v1340
    %v1342 = vmul.f32 %v1330, %v1080
    %v1343 = vmul.f32 %v1321, %v1333
    %v1344 = vadd.f32 %v1342, %v1343
    %v1345 = vtanh.pop %v1344
    %v1346 = vmul.f32 %v1341, %v1345
    %s1347 = scalar_lea.vmem [#allocation4], 8
    %1348 = vst [vmem:[%s1347] sm:$0x3] %v1346
    %s1349 = scalar_lea.vmem %s0, 40
    %v1350 = vld [vmem:[%s1349] sm:$0xff]
    %v1351 = vld [vmem:[%s1] sm:$0xff]
    %v1352 = vld [vmem:[%s1 + $0x8] sm:$0xff]
    %v1353 = vld [vmem:[%s1 + $0x10] sm:$0xff]
    %v1354 = vld [vmem:[%s1 + $0x18] sm:$0xff]
    %v1355 = vld [vmem:[%s1 + $0x20] sm:$0xff]
    %v1356 = vld [vmem:[%s1 + $0x28] sm:$0xff]
    %v1357 = vld [vmem:[%s1 + $0x30] sm:$0xff]
    %v1358 = vld [vmem:[%s1 + $0x38] sm:$0xff]
    %v1359 = vld [vmem:[%s1 + $0x40] sm:$0xff]
    %v1360 = vld [vmem:[%s1 + $0x48] sm:$0xff]
    %v1361 = vld [vmem:[%s1 + $0x50] sm:$0xff]
    %v1362 = vld [vmem:[%s1 + $0x58] sm:$0xff]
    %v1363 = vld [vmem:[%s1 + $0x60] sm:$0xff]
    %v1364 = vld [vmem:[%s1 + $0x68] sm:$0xff]
    %v1365 = vld [vmem:[%s1 + $0x70] sm:$0xff]
    %v1366 = vld [vmem:[%s1 + $0x78] sm:$0xff]
    %v1367 = vld [vmem:[%s1 + $0x80] sm:$0xff]
    %v1368 = vld [vmem:[%s1 + $0x88] sm:$0xff]
    %v1369 = vld [vmem:[%s1 + $0x90] sm:$0xff]
    %v1370 = vld [vmem:[%s1 + $0x98] sm:$0xff]
    %v1371 = vld [vmem:[%s1 + $0xa0] sm:$0xff]
    %v1372 = vld [vmem:[%s1 + $0xa8] sm:$0xff]
    %v1373 = vld [vmem:[%s1 + $0xb0] sm:$0xff]
    %v1374 = vld [vmem:[%s1 + $0xb8] sm:$0xff]
    %v1375 = vld [vmem:[%s1 + $0xc0] sm:$0xff]
    %v1376 = vld [vmem:[%s1 + $0xc8] sm:$0xff]
    %v1377 = vld [vmem:[%s1 + $0xd0] sm:$0xff]
    %v1378 = vld [vmem:[%s1 + $0xd8] sm:$0xff]
    %v1379 = vld [vmem:[%s1 + $0xe0] sm:$0xff]
    %v1380 = vld [vmem:[%s1 + $0xe8] sm:$0xff]
    %v1381 = vld [vmem:[%s1 + $0xf0] sm:$0xff]
    %v1382 = vld [vmem:[%s1 + $0xf8] sm:$0xff]
    %v1383 = vld [vmem:[%s1 + $0x100] sm:$0xff]
    %v1384 = vld [vmem:[%s1 + $0x108] sm:$0xff]
    %v1385 = vld [vmem:[%s1 + $0x110] sm:$0xff]
    %v1386 = vld [vmem:[%s1 + $0x118] sm:$0xff]
    %v1387 = vld [vmem:[%s1 + $0x120] sm:$0xff]
    %v1388 = vld [vmem:[%s1 + $0x128] sm:$0xff]
    %v1389 = vld [vmem:[%s1 + $0x130] sm:$0xff]
    %v1390 = vld [vmem:[%s1 + $0x138] sm:$0xff]
    %v1391 = vld [vmem:[%s1 + $0x140] sm:$0xff]
    %v1392 = vld [vmem:[%s1 + $0x148] sm:$0xff]
    %v1393 = vld [vmem:[%s1 + $0x150] sm:$0xff]
    %v1394 = vld [vmem:[%s1 + $0x158] sm:$0xff]
    %v1395 = vld [vmem:[%s1 + $0x160] sm:$0xff]
    %v1396 = vld [vmem:[%s1 + $0x168] sm:$0xff]
    %v1397 = vld [vmem:[%s1 + $0x170] sm:$0xff]
    %v1398 = vld [vmem:[%s1 + $0x178] sm:$0xff]
    %v1399 = vld [vmem:[%s1 + $0x180] sm:$0xff]
    %v1400 = vld [vmem:[%s1 + $0x188] sm:$0xff]
    %v1401 = vld [vmem:[%s1 + $0x190] sm:$0xff]
    %v1402 = vld [vmem:[%s1 + $0x198] sm:$0xff]
    %v1403 = vld [vmem:[%s1 + $0x1a0] sm:$0xff]
    %v1404 = vld [vmem:[%s1 + $0x1a8] sm:$0xff]
    %v1405 = vld [vmem:[%s1 + $0x1b0] sm:$0xff]
    %v1406 = vld [vmem:[%s1 + $0x1b8] sm:$0xff]
    %v1407 = vld [vmem:[%s1 + $0x1c0] sm:$0xff]
    %v1408 = vld [vmem:[%s1 + $0x1c8] sm:$0xff]
    %v1409 = vld [vmem:[%s1 + $0x1d0] sm:$0xff]
    %v1410 = vld [vmem:[%s1 + $0x1d8] sm:$0xff]
    %v1411 = vld [vmem:[%s1 + $0x1e0] sm:$0xff]
    %v1412 = vld [vmem:[%s1 + $0x1e8] sm:$0xff]
    %v1413 = vld [vmem:[%s1 + $0x1f0] sm:$0xff]
    %v1414 = vld [vmem:[%s1 + $0x1f8] sm:$0xff]
    %1415 = vmatprep.subr.mxu0 %v1412
    %1416 = vmatpush1.msra.mxu0 %v1411
    %1417 = vmatprep.subr.mxu0 %v1408
    %1418 = vmatpush1.msra.mxu0 %v1407
    %1419 = vmatprep.subr.mxu0 %v1404
    %1420 = vmatpush1.msra.mxu0 %v1403
    %1421 = vmatprep.subr.mxu0 %v1400
    %1422 = vmatpush1.msra.mxu0 %v1399
    %1423 = vmatprep.subr.mxu0 %v1396
    %1424 = vmatpush1.msra.mxu0 %v1395
    %1425 = vmatprep.subr.mxu0 %v1392
    %1426 = vmatpush1.msra.mxu0 %v1391
    %1427 = vmatprep.subr.mxu0 %v1388
    %1428 = vmatpush1.msra.mxu0 %v1387
    %1429 = vmatprep.subr.mxu0 %v1384
    %1430 = vmatpush1.msra.mxu0 %v1383
    %1431 = vmatprep.subr.mxu0 %v1380
    %1432 = vmatpush1.msra.mxu0 %v1379
    %1433 = vmatprep.subr.mxu0 %v1376
    %1434 = vmatpush1.msra.mxu0 %v1375
    %1435 = vmatprep.subr.mxu0 %v1372
    %1436 = vmatpush1.msra.mxu0 %v1371
    %1437 = vmatprep.subr.mxu0 %v1368
    %1438 = vmatpush1.msra.mxu0 %v1367
    %1439 = vmatprep.subr.mxu0 %v1364
    %1440 = vmatpush1.msra.mxu0 %v1363
    %1441 = vmatprep.subr.mxu0 %v1360
    %1442 = vmatpush1.msra.mxu0 %v1359
    %1443 = vmatprep.subr.mxu0 %v1356
    %1444 = vmatpush1.msra.mxu0 %v1355
    %1445 = vmatprep.subr.mxu0 %v1352
    %1446 = vmatpush1.msra.mxu0 %v1351
    %1447 = vmatprep.subr.mxu0 0.0
    %1448 = vmatpush2.msra.mxu0 0.0
    %1449 = vmatprep.subr.mxu0 0.0
    %1450 = vmatpush2.msra.mxu0 0.0
    %1451 = vmatprep.subr.mxu0 0.0
    %1452 = vmatpush2.msra.mxu0 0.0
    %1453 = vmatprep.subr.mxu0 0.0
    %1454 = vmatpush2.msra.mxu0 0.0
    %1455 = vmatprep.subr.mxu0 0.0
    %1456 = vmatpush2.msra.mxu0 0.0
    %1457 = vmatprep.subr.mxu0 0.0
    %1458 = vmatpush2.msra.mxu0 0.0
    %1459 = vmatprep.subr.mxu0 0.0
    %1460 = vmatpush2.msra.mxu0 0.0
    %1461 = vmatprep.subr.mxu0 0.0
    %1462 = vmatpush2.msra.mxu0 0.0
    %1463 = vmatprep.subr.mxu0 0.0
    %1464 = vmatpush2.msra.mxu0 0.0
    %1465 = vmatprep.subr.mxu0 0.0
    %1466 = vmatpush2.msra.mxu0 0.0
    %1467 = vmatprep.subr.mxu0 0.0
    %1468 = vmatpush2.msra.mxu0 0.0
    %1469 = vmatprep.subr.mxu0 0.0
    %1470 = vmatpush2.msra.mxu0 0.0
    %1471 = vmatprep.subr.mxu0 0.0
    %1472 = vmatpush2.msra.mxu0 0.0
    %1473 = vmatprep.subr.mxu0 0.0
    %1474 = vmatpush2.msra.mxu0 0.0
    %1475 = vmatprep.subr.mxu0 0.0
    %1476 = vmatpush2.msra.mxu0 0.0
    %1477 = vmatprep.subr.mxu0 0.0
    %1478 = vmatpush2.msra.mxu0 0.0
    %1479 = vmatprep.mubr.f32.mxu0 0.0
    %1480 = vmatmul.mubr.f32.gmra.mxu0 %v1346
    %v1481 = vpop.f32.mrf.mxu0
    %v1482 = vadd.f32 0.0, %v1481
    %v1483 = vpop.f32.mrf.mxu0
    %v1484 = vadd.f32 0.0, %v1483
    %1485 = vdwg.mxu0
    %1486 = vmatprep.subr.mxu0 %v1414
    %1487 = vmatpush1.msra.mxu0 %v1413
    %1488 = vmatprep.subr.mxu0 %v1410
    %1489 = vmatpush1.msra.mxu0 %v1409
    %1490 = vmatprep.subr.mxu0 %v1406
    %1491 = vmatpush1.msra.mxu0 %v1405
    %1492 = vmatprep.subr.mxu0 %v1402
    %1493 = vmatpush1.msra.mxu0 %v1401
    %1494 = vmatprep.subr.mxu0 %v1398
    %1495 = vmatpush1.msra.mxu0 %v1397
    %1496 = vmatprep.subr.mxu0 %v1394
    %1497 = vmatpush1.msra.mxu0 %v1393
    %1498 = vmatprep.subr.mxu0 %v1390
    %1499 = vmatpush1.msra.mxu0 %v1389
    %1500 = vmatprep.subr.mxu0 %v1386
    %1501 = vmatpush1.msra.mxu0 %v1385
    %1502 = vmatprep.subr.mxu0 %v1382
    %1503 = vmatpush1.msra.mxu0 %v1381
    %1504 = vmatprep.subr.mxu0 %v1378
    %1505 = vmatpush1.msra.mxu0 %v1377
    %1506 = vmatprep.subr.mxu0 %v1374
    %1507 = vmatpush1.msra.mxu0 %v1373
    %1508 = vmatprep.subr.mxu0 %v1370
    %1509 = vmatpush1.msra.mxu0 %v1369
    %1510 = vmatprep.subr.mxu0 %v1366
    %1511 = vmatpush1.msra.mxu0 %v1365
    %1512 = vmatprep.subr.mxu0 %v1362
    %1513 = vmatpush1.msra.mxu0 %v1361
    %1514 = vmatprep.subr.mxu0 %v1358
    %1515 = vmatpush1.msra.mxu0 %v1357
    %1516 = vmatprep.subr.mxu0 %v1354
    %1517 = vmatpush1.msra.mxu0 %v1353
    %1518 = vmatprep.subr.mxu0 0.0
    %1519 = vmatpush2.msra.mxu0 0.0
    %1520 = vmatprep.subr.mxu0 0.0
    %1521 = vmatpush2.msra.mxu0 0.0
    %1522 = vmatprep.subr.mxu0 0.0
    %1523 = vmatpush2.msra.mxu0 0.0
    %1524 = vmatprep.subr.mxu0 0.0
    %1525 = vmatpush2.msra.mxu0 0.0
    %1526 = vmatprep.subr.mxu0 0.0
    %1527 = vmatpush2.msra.mxu0 0.0
    %1528 = vmatprep.subr.mxu0 0.0
    %1529 = vmatpush2.msra.mxu0 0.0
    %1530 = vmatprep.subr.mxu0 0.0
    %1531 = vmatpush2.msra.mxu0 0.0
    %1532 = vmatprep.subr.mxu0 0.0
    %1533 = vmatpush2.msra.mxu0 0.0
    %1534 = vmatprep.subr.mxu0 0.0
    %1535 = vmatpush2.msra.mxu0 0.0
    %1536 = vmatprep.subr.mxu0 0.0
    %1537 = vmatpush2.msra.mxu0 0.0
    %1538 = vmatprep.subr.mxu0 0.0
    %1539 = vmatpush2.msra.mxu0 0.0
    %1540 = vmatprep.subr.mxu0 0.0
    %1541 = vmatpush2.msra.mxu0 0.0
    %1542 = vmatprep.subr.mxu0 0.0
    %1543 = vmatpush2.msra.mxu0 0.0
    %1544 = vmatprep.subr.mxu0 0.0
    %1545 = vmatpush2.msra.mxu0 0.0
    %1546 = vmatprep.subr.mxu0 0.0
    %1547 = vmatpush2.msra.mxu0 0.0
    %1548 = vmatprep.subr.mxu0 0.0
    %1549 = vmatpush2.msra.mxu0 0.0
    %1550 = vmatprep.mubr.f32.mxu0 0.0
    %1551 = vmatmul.mubr.f32.gmra.mxu0 %v1346
    %v1552 = vpop.f32.mrf.mxu0
    %v1553 = vadd.f32 0.0, %v1552
    %v1554 = vpop.f32.mrf.mxu0
    %v1555 = vadd.f32 0.0, %v1554
    %1556 = vdwg.mxu0
    %v1561 = vcombine.low %v1482, %v1484
    %v1562 = vcombine.low %v1553, %v1555
    %v1564 = vunpack.c.l.s4 1983009808
    %v1565 = vunpack.c.0.s8 %v1564
    %v1566 = vlaneseq
    %v1567 = vshrl.u32 %v1566, 7
    %v1568 = vsub.s32 %v1565, %v1567
    %v1569 = vrot.slane %v1561, %v1568
    %v1571 = vunpack.c.l.s4 1983009808
    %v1572 = vunpack.c.0.s8 %v1571
    %v1573 = vlaneseq
    %v1574 = vshrl.u32 %v1573, 7
    %v1575 = vsub.s32 %v1572, %v1574
    %v1576 = vrot.slane %v1562, %v1575
    %v1577 = vcombine.low %v1569, %v1576
    %v1579 = vadd.f32 %v1350, %v1577
    %v1580 = vxor.u32 %v1579, 2147483648
    %v1581 = vmul.f32 %v1580, 1.442695
    %v1582 = vpow.pop %v1581
    %v1583 = vadd.f32 %v1582, 1.0
    %v1584 = vrcp.pop %v1583
    %v1585 = vmul.f32 1.0, %v1584
    %v1587 = vrot.slane %v1579, 2
    %v1589 = vxor.u32 %v1587, 2147483648
    %v1590 = vmul.f32 %v1589, 1.442695
    %v1591 = vpow.pop %v1590
    %v1592 = vadd.f32 %v1591, 1.0
    %v1593 = vrcp.pop %v1592
    %v1594 = vmul.f32 1.0, %v1593
    %v1595 = vrot.slane %v1579, 4
    %v1597 = vtanh.pop %v1595
    %v1598 = vrot.slane %v1579, 6
    %v1600 = vxor.u32 %v1598, 2147483648
    %v1601 = vmul.f32 %v1600, 1.442695
    %v1602 = vpow.pop %v1601
    %v1603 = vadd.f32 %v1602, 1.0
    %v1604 = vrcp.pop %v1603
    %v1605 = vmul.f32 1.0, %v1604
    %v1606 = vmul.f32 %v1594, %v1344
    %v1607 = vmul.f32 %v1585, %v1597
    %v1608 = vadd.f32 %v1606, %v1607
    %v1609 = vtanh.pop %v1608
    %v1610 = vmul.f32 %v1605, %v1609
    %s1611 = scalar_lea.vmem [#allocation4], 10
    %1612 = vst [vmem:[%s1611] sm:$0x3] %v1610
    %s1613 = scalar_lea.vmem %s0, 48
    %v1614 = vld [vmem:[%s1613] sm:$0xff]
    %v1615 = vld [vmem:[%s1] sm:$0xff]
    %v1616 = vld [vmem:[%s1 + $0x8] sm:$0xff]
    %v1617 = vld [vmem:[%s1 + $0x10] sm:$0xff]
    %v1618 = vld [vmem:[%s1 + $0x18] sm:$0xff]
    %v1619 = vld [vmem:[%s1 + $0x20] sm:$0xff]
    %v1620 = vld [vmem:[%s1 + $0x28] sm:$0xff]
    %v1621 = vld [vmem:[%s1 + $0x30] sm:$0xff]
    %v1622 = vld [vmem:[%s1 + $0x38] sm:$0xff]
    %v1623 = vld [vmem:[%s1 + $0x40] sm:$0xff]
    %v1624 = vld [vmem:[%s1 + $0x48] sm:$0xff]
    %v1625 = vld [vmem:[%s1 + $0x50] sm:$0xff]
    %v1626 = vld [vmem:[%s1 + $0x58] sm:$0xff]
    %v1627 = vld [vmem:[%s1 + $0x60] sm:$0xff]
    %v1628 = vld [vmem:[%s1 + $0x68] sm:$0xff]
    %v1629 = vld [vmem:[%s1 + $0x70] sm:$0xff]
    %v1630 = vld [vmem:[%s1 + $0x78] sm:$0xff]
    %v1631 = vld [vmem:[%s1 + $0x80] sm:$0xff]
    %v1632 = vld [vmem:[%s1 + $0x88] sm:$0xff]
    %v1633 = vld [vmem:[%s1 + $0x90] sm:$0xff]
    %v1634 = vld [vmem:[%s1 + $0x98] sm:$0xff]
    %v1635 = vld [vmem:[%s1 + $0xa0] sm:$0xff]
    %v1636 = vld [vmem:[%s1 + $0xa8] sm:$0xff]
    %v1637 = vld [vmem:[%s1 + $0xb0] sm:$0xff]
    %v1638 = vld [vmem:[%s1 + $0xb8] sm:$0xff]
    %v1639 = vld [vmem:[%s1 + $0xc0] sm:$0xff]
    %v1640 = vld [vmem:[%s1 + $0xc8] sm:$0xff]
    %v1641 = vld [vmem:[%s1 + $0xd0] sm:$0xff]
    %v1642 = vld [vmem:[%s1 + $0xd8] sm:$0xff]
    %v1643 = vld [vmem:[%s1 + $0xe0] sm:$0xff]
    %v1644 = vld [vmem:[%s1 + $0xe8] sm:$0xff]
    %v1645 = vld [vmem:[%s1 + $0xf0] sm:$0xff]
    %v1646 = vld [vmem:[%s1 + $0xf8] sm:$0xff]
    %v1647 = vld [vmem:[%s1 + $0x100] sm:$0xff]
    %v1648 = vld [vmem:[%s1 + $0x108] sm:$0xff]
    %v1649 = vld [vmem:[%s1 + $0x110] sm:$0xff]
    %v1650 = vld [vmem:[%s1 + $0x118] sm:$0xff]
    %v1651 = vld [vmem:[%s1 + $0x120] sm:$0xff]
    %v1652 = vld [vmem:[%s1 + $0x128] sm:$0xff]
    %v1653 = vld [vmem:[%s1 + $0x130] sm:$0xff]
    %v1654 = vld [vmem:[%s1 + $0x138] sm:$0xff]
    %v1655 = vld [vmem:[%s1 + $0x140] sm:$0xff]
    %v1656 = vld [vmem:[%s1 + $0x148] sm:$0xff]
    %v1657 = vld [vmem:[%s1 + $0x150] sm:$0xff]
    %v1658 = vld [vmem:[%s1 + $0x158] sm:$0xff]
    %v1659 = vld [vmem:[%s1 + $0x160] sm:$0xff]
    %v1660 = vld [vmem:[%s1 + $0x168] sm:$0xff]
    %v1661 = vld [vmem:[%s1 + $0x170] sm:$0xff]
    %v1662 = vld [vmem:[%s1 + $0x178] sm:$0xff]
    %v1663 = vld [vmem:[%s1 + $0x180] sm:$0xff]
    %v1664 = vld [vmem:[%s1 + $0x188] sm:$0xff]
    %v1665 = vld [vmem:[%s1 + $0x190] sm:$0xff]
    %v1666 = vld [vmem:[%s1 + $0x198] sm:$0xff]
    %v1667 = vld [vmem:[%s1 + $0x1a0] sm:$0xff]
    %v1668 = vld [vmem:[%s1 + $0x1a8] sm:$0xff]
    %v1669 = vld [vmem:[%s1 + $0x1b0] sm:$0xff]
    %v1670 = vld [vmem:[%s1 + $0x1b8] sm:$0xff]
    %v1671 = vld [vmem:[%s1 + $0x1c0] sm:$0xff]
    %v1672 = vld [vmem:[%s1 + $0x1c8] sm:$0xff]
    %v1673 = vld [vmem:[%s1 + $0x1d0] sm:$0xff]
    %v1674 = vld [vmem:[%s1 + $0x1d8] sm:$0xff]
    %v1675 = vld [vmem:[%s1 + $0x1e0] sm:$0xff]
    %v1676 = vld [vmem:[%s1 + $0x1e8] sm:$0xff]
    %v1677 = vld [vmem:[%s1 + $0x1f0] sm:$0xff]
    %v1678 = vld [vmem:[%s1 + $0x1f8] sm:$0xff]
    %1679 = vmatprep.subr.mxu0 %v1676
    %1680 = vmatpush1.msra.mxu0 %v1675
    %1681 = vmatprep.subr.mxu0 %v1672
    %1682 = vmatpush1.msra.mxu0 %v1671
    %1683 = vmatprep.subr.mxu0 %v1668
    %1684 = vmatpush1.msra.mxu0 %v1667
    %1685 = vmatprep.subr.mxu0 %v1664
    %1686 = vmatpush1.msra.mxu0 %v1663
    %1687 = vmatprep.subr.mxu0 %v1660
    %1688 = vmatpush1.msra.mxu0 %v1659
    %1689 = vmatprep.subr.mxu0 %v1656
    %1690 = vmatpush1.msra.mxu0 %v1655
    %1691 = vmatprep.subr.mxu0 %v1652
    %1692 = vmatpush1.msra.mxu0 %v1651
    %1693 = vmatprep.subr.mxu0 %v1648
    %1694 = vmatpush1.msra.mxu0 %v1647
    %1695 = vmatprep.subr.mxu0 %v1644
    %1696 = vmatpush1.msra.mxu0 %v1643
    %1697 = vmatprep.subr.mxu0 %v1640
    %1698 = vmatpush1.msra.mxu0 %v1639
    %1699 = vmatprep.subr.mxu0 %v1636
    %1700 = vmatpush1.msra.mxu0 %v1635
    %1701 = vmatprep.subr.mxu0 %v1632
    %1702 = vmatpush1.msra.mxu0 %v1631
    %1703 = vmatprep.subr.mxu0 %v1628
    %1704 = vmatpush1.msra.mxu0 %v1627
    %1705 = vmatprep.subr.mxu0 %v1624
    %1706 = vmatpush1.msra.mxu0 %v1623
    %1707 = vmatprep.subr.mxu0 %v1620
    %1708 = vmatpush1.msra.mxu0 %v1619
    %1709 = vmatprep.subr.mxu0 %v1616
    %1710 = vmatpush1.msra.mxu0 %v1615
    %1711 = vmatprep.subr.mxu0 0.0
    %1712 = vmatpush2.msra.mxu0 0.0
    %1713 = vmatprep.subr.mxu0 0.0
    %1714 = vmatpush2.msra.mxu0 0.0
    %1715 = vmatprep.subr.mxu0 0.0
    %1716 = vmatpush2.msra.mxu0 0.0
    %1717 = vmatprep.subr.mxu0 0.0
    %1718 = vmatpush2.msra.mxu0 0.0
    %1719 = vmatprep.subr.mxu0 0.0
    %1720 = vmatpush2.msra.mxu0 0.0
    %1721 = vmatprep.subr.mxu0 0.0
    %1722 = vmatpush2.msra.mxu0 0.0
    %1723 = vmatprep.subr.mxu0 0.0
    %1724 = vmatpush2.msra.mxu0 0.0
    %1725 = vmatprep.subr.mxu0 0.0
    %1726 = vmatpush2.msra.mxu0 0.0
    %1727 = vmatprep.subr.mxu0 0.0
    %1728 = vmatpush2.msra.mxu0 0.0
    %1729 = vmatprep.subr.mxu0 0.0
    %1730 = vmatpush2.msra.mxu0 0.0
    %1731 = vmatprep.subr.mxu0 0.0
    %1732 = vmatpush2.msra.mxu0 0.0
    %1733 = vmatprep.subr.mxu0 0.0
    %1734 = vmatpush2.msra.mxu0 0.0
    %1735 = vmatprep.subr.mxu0 0.0
    %1736 = vmatpush2.msra.mxu0 0.0
    %1737 = vmatprep.subr.mxu0 0.0
    %1738 = vmatpush2.msra.mxu0 0.0
    %1739 = vmatprep.subr.mxu0 0.0
    %1740 = vmatpush2.msra.mxu0 0.0
    %1741 = vmatprep.subr.mxu0 0.0
    %1742 = vmatpush2.msra.mxu0 0.0
    %1743 = vmatprep.mubr.f32.mxu0 0.0
    %1744 = vmatmul.mubr.f32.gmra.mxu0 %v1610
    %v1745 = vpop.f32.mrf.mxu0
    %v1746 = vadd.f32 0.0, %v1745
    %v1747 = vpop.f32.mrf.mxu0
    %v1748 = vadd.f32 0.0, %v1747
    %1749 = vdwg.mxu0
    %1750 = vmatprep.subr.mxu0 %v1678
    %1751 = vmatpush1.msra.mxu0 %v1677
    %1752 = vmatprep.subr.mxu0 %v1674
    %1753 = vmatpush1.msra.mxu0 %v1673
    %1754 = vmatprep.subr.mxu0 %v1670
    %1755 = vmatpush1.msra.mxu0 %v1669
    %1756 = vmatprep.subr.mxu0 %v1666
    %1757 = vmatpush1.msra.mxu0 %v1665
    %1758 = vmatprep.subr.mxu0 %v1662
    %1759 = vmatpush1.msra.mxu0 %v1661
    %1760 = vmatprep.subr.mxu0 %v1658
    %1761 = vmatpush1.msra.mxu0 %v1657
    %1762 = vmatprep.subr.mxu0 %v1654
    %1763 = vmatpush1.msra.mxu0 %v1653
    %1764 = vmatprep.subr.mxu0 %v1650
    %1765 = vmatpush1.msra.mxu0 %v1649
    %1766 = vmatprep.subr.mxu0 %v1646
    %1767 = vmatpush1.msra.mxu0 %v1645
    %1768 = vmatprep.subr.mxu0 %v1642
    %1769 = vmatpush1.msra.mxu0 %v1641
    %1770 = vmatprep.subr.mxu0 %v1638
    %1771 = vmatpush1.msra.mxu0 %v1637
    %1772 = vmatprep.subr.mxu0 %v1634
    %1773 = vmatpush1.msra.mxu0 %v1633
    %1774 = vmatprep.subr.mxu0 %v1630
    %1775 = vmatpush1.msra.mxu0 %v1629
    %1776 = vmatprep.subr.mxu0 %v1626
    %1777 = vmatpush1.msra.mxu0 %v1625
    %1778 = vmatprep.subr.mxu0 %v1622
    %1779 = vmatpush1.msra.mxu0 %v1621
    %1780 = vmatprep.subr.mxu0 %v1618
    %1781 = vmatpush1.msra.mxu0 %v1617
    %1782 = vmatprep.subr.mxu0 0.0
    %1783 = vmatpush2.msra.mxu0 0.0
    %1784 = vmatprep.subr.mxu0 0.0
    %1785 = vmatpush2.msra.mxu0 0.0
    %1786 = vmatprep.subr.mxu0 0.0
    %1787 = vmatpush2.msra.mxu0 0.0
    %1788 = vmatprep.subr.mxu0 0.0
    %1789 = vmatpush2.msra.mxu0 0.0
    %1790 = vmatprep.subr.mxu0 0.0
    %1791 = vmatpush2.msra.mxu0 0.0
    %1792 = vmatprep.subr.mxu0 0.0
    %1793 = vmatpush2.msra.mxu0 0.0
    %1794 = vmatprep.subr.mxu0 0.0
    %1795 = vmatpush2.msra.mxu0 0.0
    %1796 = vmatprep.subr.mxu0 0.0
    %1797 = vmatpush2.msra.mxu0 0.0
    %1798 = vmatprep.subr.mxu0 0.0
    %1799 = vmatpush2.msra.mxu0 0.0
    %1800 = vmatprep.subr.mxu0 0.0
    %1801 = vmatpush2.msra.mxu0 0.0
    %1802 = vmatprep.subr.mxu0 0.0
    %1803 = vmatpush2.msra.mxu0 0.0
    %1804 = vmatprep.subr.mxu0 0.0
    %1805 = vmatpush2.msra.mxu0 0.0
    %1806 = vmatprep.subr.mxu0 0.0
    %1807 = vmatpush2.msra.mxu0 0.0
    %1808 = vmatprep.subr.mxu0 0.0
    %1809 = vmatpush2.msra.mxu0 0.0
    %1810 = vmatprep.subr.mxu0 0.0
    %1811 = vmatpush2.msra.mxu0 0.0
    %1812 = vmatprep.subr.mxu0 0.0
    %1813 = vmatpush2.msra.mxu0 0.0
    %1814 = vmatprep.mubr.f32.mxu0 0.0
    %1815 = vmatmul.mubr.f32.gmra.mxu0 %v1610
    %v1816 = vpop.f32.mrf.mxu0
    %v1817 = vadd.f32 0.0, %v1816
    %v1818 = vpop.f32.mrf.mxu0
    %v1819 = vadd.f32 0.0, %v1818
    %1820 = vdwg.mxu0
    %v1825 = vcombine.low %v1746, %v1748
    %v1826 = vcombine.low %v1817, %v1819
    %v1828 = vunpack.c.l.s4 1983009808
    %v1829 = vunpack.c.0.s8 %v1828
    %v1830 = vlaneseq
    %v1831 = vshrl.u32 %v1830, 7
    %v1832 = vsub.s32 %v1829, %v1831
    %v1833 = vrot.slane %v1825, %v1832
    %v1835 = vunpack.c.l.s4 1983009808
    %v1836 = vunpack.c.0.s8 %v1835
    %v1837 = vlaneseq
    %v1838 = vshrl.u32 %v1837, 7
    %v1839 = vsub.s32 %v1836, %v1838
    %v1840 = vrot.slane %v1826, %v1839
    %v1841 = vcombine.low %v1833, %v1840
    %v1843 = vadd.f32 %v1614, %v1841
    %v1844 = vxor.u32 %v1843, 2147483648
    %v1845 = vmul.f32 %v1844, 1.442695
    %v1846 = vpow.pop %v1845
    %v1847 = vadd.f32 %v1846, 1.0
    %v1848 = vrcp.pop %v1847
    %v1849 = vmul.f32 1.0, %v1848
    %v1851 = vrot.slane %v1843, 2
    %v1853 = vxor.u32 %v1851, 2147483648
    %v1854 = vmul.f32 %v1853, 1.442695
    %v1855 = vpow.pop %v1854
    %v1856 = vadd.f32 %v1855, 1.0
    %v1857 = vrcp.pop %v1856
    %v1858 = vmul.f32 1.0, %v1857
    %v1859 = vrot.slane %v1843, 4
    %v1861 = vtanh.pop %v1859
    %v1862 = vrot.slane %v1843, 6
    %v1864 = vxor.u32 %v1862, 2147483648
    %v1865 = vmul.f32 %v1864, 1.442695
    %v1866 = vpow.pop %v1865
    %v1867 = vadd.f32 %v1866, 1.0
    %v1868 = vrcp.pop %v1867
    %v1869 = vmul.f32 1.0, %v1868
    %v1870 = vmul.f32 %v1858, %v1608
    %v1871 = vmul.f32 %v1849, %v1861
    %v1872 = vadd.f32 %v1870, %v1871
    %v1873 = vtanh.pop %v1872
    %v1874 = vmul.f32 %v1869, %v1873
    %s1875 = scalar_lea.vmem [#allocation4], 12
    %1876 = vst [vmem:[%s1875] sm:$0x3] %v1874
    %s1877 = scalar_lea.vmem %s0, 56
    %v1878 = vld [vmem:[%s1877] sm:$0xff]
    %v1879 = vld [vmem:[%s1] sm:$0xff]
    %v1880 = vld [vmem:[%s1 + $0x8] sm:$0xff]
    %v1881 = vld [vmem:[%s1 + $0x10] sm:$0xff]
    %v1882 = vld [vmem:[%s1 + $0x18] sm:$0xff]
    %v1883 = vld [vmem:[%s1 + $0x20] sm:$0xff]
    %v1884 = vld [vmem:[%s1 + $0x28] sm:$0xff]
    %v1885 = vld [vmem:[%s1 + $0x30] sm:$0xff]
    %v1886 = vld [vmem:[%s1 + $0x38] sm:$0xff]
    %v1887 = vld [vmem:[%s1 + $0x40] sm:$0xff]
    %v1888 = vld [vmem:[%s1 + $0x48] sm:$0xff]
    %v1889 = vld [vmem:[%s1 + $0x50] sm:$0xff]
    %v1890 = vld [vmem:[%s1 + $0x58] sm:$0xff]
    %v1891 = vld [vmem:[%s1 + $0x60] sm:$0xff]
    %v1892 = vld [vmem:[%s1 + $0x68] sm:$0xff]
    %v1893 = vld [vmem:[%s1 + $0x70] sm:$0xff]
    %v1894 = vld [vmem:[%s1 + $0x78] sm:$0xff]
    %v1895 = vld [vmem:[%s1 + $0x80] sm:$0xff]
    %v1896 = vld [vmem:[%s1 + $0x88] sm:$0xff]
    %v1897 = vld [vmem:[%s1 + $0x90] sm:$0xff]
    %v1898 = vld [vmem:[%s1 + $0x98] sm:$0xff]
    %v1899 = vld [vmem:[%s1 + $0xa0] sm:$0xff]
    %v1900 = vld [vmem:[%s1 + $0xa8] sm:$0xff]
    %v1901 = vld [vmem:[%s1 + $0xb0] sm:$0xff]
    %v1902 = vld [vmem:[%s1 + $0xb8] sm:$0xff]
    %v1903 = vld [vmem:[%s1 + $0xc0] sm:$0xff]
    %v1904 = vld [vmem:[%s1 + $0xc8] sm:$0xff]
    %v1905 = vld [vmem:[%s1 + $0xd0] sm:$0xff]
    %v1906 = vld [vmem:[%s1 + $0xd8] sm:$0xff]
    %v1907 = vld [vmem:[%s1 + $0xe0] sm:$0xff]
    %v1908 = vld [vmem:[%s1 + $0xe8] sm:$0xff]
    %v1909 = vld [vmem:[%s1 + $0xf0] sm:$0xff]
    %v1910 = vld [vmem:[%s1 + $0xf8] sm:$0xff]
    %v1911 = vld [vmem:[%s1 + $0x100] sm:$0xff]
    %v1912 = vld [vmem:[%s1 + $0x108] sm:$0xff]
    %v1913 = vld [vmem:[%s1 + $0x110] sm:$0xff]
    %v1914 = vld [vmem:[%s1 + $0x118] sm:$0xff]
    %v1915 = vld [vmem:[%s1 + $0x120] sm:$0xff]
    %v1916 = vld [vmem:[%s1 + $0x128] sm:$0xff]
    %v1917 = vld [vmem:[%s1 + $0x130] sm:$0xff]
    %v1918 = vld [vmem:[%s1 + $0x138] sm:$0xff]
    %v1919 = vld [vmem:[%s1 + $0x140] sm:$0xff]
    %v1920 = vld [vmem:[%s1 + $0x148] sm:$0xff]
    %v1921 = vld [vmem:[%s1 + $0x150] sm:$0xff]
    %v1922 = vld [vmem:[%s1 + $0x158] sm:$0xff]
    %v1923 = vld [vmem:[%s1 + $0x160] sm:$0xff]
    %v1924 = vld [vmem:[%s1 + $0x168] sm:$0xff]
    %v1925 = vld [vmem:[%s1 + $0x170] sm:$0xff]
    %v1926 = vld [vmem:[%s1 + $0x178] sm:$0xff]
    %v1927 = vld [vmem:[%s1 + $0x180] sm:$0xff]
    %v1928 = vld [vmem:[%s1 + $0x188] sm:$0xff]
    %v1929 = vld [vmem:[%s1 + $0x190] sm:$0xff]
    %v1930 = vld [vmem:[%s1 + $0x198] sm:$0xff]
    %v1931 = vld [vmem:[%s1 + $0x1a0] sm:$0xff]
    %v1932 = vld [vmem:[%s1 + $0x1a8] sm:$0xff]
    %v1933 = vld [vmem:[%s1 + $0x1b0] sm:$0xff]
    %v1934 = vld [vmem:[%s1 + $0x1b8] sm:$0xff]
    %v1935 = vld [vmem:[%s1 + $0x1c0] sm:$0xff]
    %v1936 = vld [vmem:[%s1 + $0x1c8] sm:$0xff]
    %v1937 = vld [vmem:[%s1 + $0x1d0] sm:$0xff]
    %v1938 = vld [vmem:[%s1 + $0x1d8] sm:$0xff]
    %v1939 = vld [vmem:[%s1 + $0x1e0] sm:$0xff]
    %v1940 = vld [vmem:[%s1 + $0x1e8] sm:$0xff]
    %v1941 = vld [vmem:[%s1 + $0x1f0] sm:$0xff]
    %v1942 = vld [vmem:[%s1 + $0x1f8] sm:$0xff]
    %1943 = vmatprep.subr.mxu0 %v1940
    %1944 = vmatpush1.msra.mxu0 %v1939
    %1945 = vmatprep.subr.mxu0 %v1936
    %1946 = vmatpush1.msra.mxu0 %v1935
    %1947 = vmatprep.subr.mxu0 %v1932
    %1948 = vmatpush1.msra.mxu0 %v1931
    %1949 = vmatprep.subr.mxu0 %v1928
    %1950 = vmatpush1.msra.mxu0 %v1927
    %1951 = vmatprep.subr.mxu0 %v1924
    %1952 = vmatpush1.msra.mxu0 %v1923
    %1953 = vmatprep.subr.mxu0 %v1920
    %1954 = vmatpush1.msra.mxu0 %v1919
    %1955 = vmatprep.subr.mxu0 %v1916
    %1956 = vmatpush1.msra.mxu0 %v1915
    %1957 = vmatprep.subr.mxu0 %v1912
    %1958 = vmatpush1.msra.mxu0 %v1911
    %1959 = vmatprep.subr.mxu0 %v1908
    %1960 = vmatpush1.msra.mxu0 %v1907
    %1961 = vmatprep.subr.mxu0 %v1904
    %1962 = vmatpush1.msra.mxu0 %v1903
    %1963 = vmatprep.subr.mxu0 %v1900
    %1964 = vmatpush1.msra.mxu0 %v1899
    %1965 = vmatprep.subr.mxu0 %v1896
    %1966 = vmatpush1.msra.mxu0 %v1895
    %1967 = vmatprep.subr.mxu0 %v1892
    %1968 = vmatpush1.msra.mxu0 %v1891
    %1969 = vmatprep.subr.mxu0 %v1888
    %1970 = vmatpush1.msra.mxu0 %v1887
    %1971 = vmatprep.subr.mxu0 %v1884
    %1972 = vmatpush1.msra.mxu0 %v1883
    %1973 = vmatprep.subr.mxu0 %v1880
    %1974 = vmatpush1.msra.mxu0 %v1879
    %1975 = vmatprep.subr.mxu0 0.0
    %1976 = vmatpush2.msra.mxu0 0.0
    %1977 = vmatprep.subr.mxu0 0.0
    %1978 = vmatpush2.msra.mxu0 0.0
    %1979 = vmatprep.subr.mxu0 0.0
    %1980 = vmatpush2.msra.mxu0 0.0
    %1981 = vmatprep.subr.mxu0 0.0
    %1982 = vmatpush2.msra.mxu0 0.0
    %1983 = vmatprep.subr.mxu0 0.0
    %1984 = vmatpush2.msra.mxu0 0.0
    %1985 = vmatprep.subr.mxu0 0.0
    %1986 = vmatpush2.msra.mxu0 0.0
    %1987 = vmatprep.subr.mxu0 0.0
    %1988 = vmatpush2.msra.mxu0 0.0
    %1989 = vmatprep.subr.mxu0 0.0
    %1990 = vmatpush2.msra.mxu0 0.0
    %1991 = vmatprep.subr.mxu0 0.0
    %1992 = vmatpush2.msra.mxu0 0.0
    %1993 = vmatprep.subr.mxu0 0.0
    %1994 = vmatpush2.msra.mxu0 0.0
    %1995 = vmatprep.subr.mxu0 0.0
    %1996 = vmatpush2.msra.mxu0 0.0
    %1997 = vmatprep.subr.mxu0 0.0
    %1998 = vmatpush2.msra.mxu0 0.0
    %1999 = vmatprep.subr.mxu0 0.0
    %2000 = vmatpush2.msra.mxu0 0.0
    %2001 = vmatprep.subr.mxu0 0.0
    %2002 = vmatpush2.msra.mxu0 0.0
    %2003 = vmatprep.subr.mxu0 0.0
    %2004 = vmatpush2.msra.mxu0 0.0
    %2005 = vmatprep.subr.mxu0 0.0
    %2006 = vmatpush2.msra.mxu0 0.0
    %2007 = vmatprep.mubr.f32.mxu0 0.0
    %2008 = vmatmul.mubr.f32.gmra.mxu0 %v1874
    %v2009 = vpop.f32.mrf.mxu0
    %v2010 = vadd.f32 0.0, %v2009
    %v2011 = vpop.f32.mrf.mxu0
    %v2012 = vadd.f32 0.0, %v2011
    %2013 = vdwg.mxu0
    %2014 = vmatprep.subr.mxu0 %v1942
    %2015 = vmatpush1.msra.mxu0 %v1941
    %2016 = vmatprep.subr.mxu0 %v1938
    %2017 = vmatpush1.msra.mxu0 %v1937
    %2018 = vmatprep.subr.mxu0 %v1934
    %2019 = vmatpush1.msra.mxu0 %v1933
    %2020 = vmatprep.subr.mxu0 %v1930
    %2021 = vmatpush1.msra.mxu0 %v1929
    %2022 = vmatprep.subr.mxu0 %v1926
    %2023 = vmatpush1.msra.mxu0 %v1925
    %2024 = vmatprep.subr.mxu0 %v1922
    %2025 = vmatpush1.msra.mxu0 %v1921
    %2026 = vmatprep.subr.mxu0 %v1918
    %2027 = vmatpush1.msra.mxu0 %v1917
    %2028 = vmatprep.subr.mxu0 %v1914
    %2029 = vmatpush1.msra.mxu0 %v1913
    %2030 = vmatprep.subr.mxu0 %v1910
    %2031 = vmatpush1.msra.mxu0 %v1909
    %2032 = vmatprep.subr.mxu0 %v1906
    %2033 = vmatpush1.msra.mxu0 %v1905
    %2034 = vmatprep.subr.mxu0 %v1902
    %2035 = vmatpush1.msra.mxu0 %v1901
    %2036 = vmatprep.subr.mxu0 %v1898
    %2037 = vmatpush1.msra.mxu0 %v1897
    %2038 = vmatprep.subr.mxu0 %v1894
    %2039 = vmatpush1.msra.mxu0 %v1893
    %2040 = vmatprep.subr.mxu0 %v1890
    %2041 = vmatpush1.msra.mxu0 %v1889
    %2042 = vmatprep.subr.mxu0 %v1886
    %2043 = vmatpush1.msra.mxu0 %v1885
    %2044 = vmatprep.subr.mxu0 %v1882
    %2045 = vmatpush1.msra.mxu0 %v1881
    %2046 = vmatprep.subr.mxu0 0.0
    %2047 = vmatpush2.msra.mxu0 0.0
    %2048 = vmatprep.subr.mxu0 0.0
    %2049 = vmatpush2.msra.mxu0 0.0
    %2050 = vmatprep.subr.mxu0 0.0
    %2051 = vmatpush2.msra.mxu0 0.0
    %2052 = vmatprep.subr.mxu0 0.0
    %2053 = vmatpush2.msra.mxu0 0.0
    %2054 = vmatprep.subr.mxu0 0.0
    %2055 = vmatpush2.msra.mxu0 0.0
    %2056 = vmatprep.subr.mxu0 0.0
    %2057 = vmatpush2.msra.mxu0 0.0
    %2058 = vmatprep.subr.mxu0 0.0
    %2059 = vmatpush2.msra.mxu0 0.0
    %2060 = vmatprep.subr.mxu0 0.0
    %2061 = vmatpush2.msra.mxu0 0.0
    %2062 = vmatprep.subr.mxu0 0.0
    %2063 = vmatpush2.msra.mxu0 0.0
    %2064 = vmatprep.subr.mxu0 0.0
    %2065 = vmatpush2.msra.mxu0 0.0
    %2066 = vmatprep.subr.mxu0 0.0
    %2067 = vmatpush2.msra.mxu0 0.0
    %2068 = vmatprep.subr.mxu0 0.0
    %2069 = vmatpush2.msra.mxu0 0.0
    %2070 = vmatprep.subr.mxu0 0.0
    %2071 = vmatpush2.msra.mxu0 0.0
    %2072 = vmatprep.subr.mxu0 0.0
    %2073 = vmatpush2.msra.mxu0 0.0
    %2074 = vmatprep.subr.mxu0 0.0
    %2075 = vmatpush2.msra.mxu0 0.0
    %2076 = vmatprep.subr.mxu0 0.0
    %2077 = vmatpush2.msra.mxu0 0.0
    %2078 = vmatprep.mubr.f32.mxu0 0.0
    %2079 = vmatmul.mubr.f32.gmra.mxu0 %v1874
    %v2080 = vpop.f32.mrf.mxu0
    %v2081 = vadd.f32 0.0, %v2080
    %v2082 = vpop.f32.mrf.mxu0
    %v2083 = vadd.f32 0.0, %v2082
    %2084 = vdwg.mxu0
    %v2089 = vcombine.low %v2010, %v2012
    %v2090 = vcombine.low %v2081, %v2083
    %v2092 = vunpack.c.l.s4 1983009808
    %v2093 = vunpack.c.0.s8 %v2092
    %v2094 = vlaneseq
    %v2095 = vshrl.u32 %v2094, 7
    %v2096 = vsub.s32 %v2093, %v2095
    %v2097 = vrot.slane %v2089, %v2096
    %v2099 = vunpack.c.l.s4 1983009808
    %v2100 = vunpack.c.0.s8 %v2099
    %v2101 = vlaneseq
    %v2102 = vshrl.u32 %v2101, 7
    %v2103 = vsub.s32 %v2100, %v2102
    %v2104 = vrot.slane %v2090, %v2103
    %v2105 = vcombine.low %v2097, %v2104
    %v2107 = vadd.f32 %v1878, %v2105
    %v2108 = vxor.u32 %v2107, 2147483648
    %v2109 = vmul.f32 %v2108, 1.442695
    %v2110 = vpow.pop %v2109
    %v2111 = vadd.f32 %v2110, 1.0
    %v2112 = vrcp.pop %v2111
    %v2113 = vmul.f32 1.0, %v2112
    %v2115 = vrot.slane %v2107, 2
    %v2117 = vxor.u32 %v2115, 2147483648
    %v2118 = vmul.f32 %v2117, 1.442695
    %v2119 = vpow.pop %v2118
    %v2120 = vadd.f32 %v2119, 1.0
    %v2121 = vrcp.pop %v2120
    %v2122 = vmul.f32 1.0, %v2121
    %v2123 = vrot.slane %v2107, 4
    %v2125 = vtanh.pop %v2123
    %v2126 = vrot.slane %v2107, 6
    %v2128 = vxor.u32 %v2126, 2147483648
    %v2129 = vmul.f32 %v2128, 1.442695
    %v2130 = vpow.pop %v2129
    %v2131 = vadd.f32 %v2130, 1.0
    %v2132 = vrcp.pop %v2131
    %v2133 = vmul.f32 1.0, %v2132
    %v2134 = vmul.f32 %v2122, %v1872
    %v2135 = vmul.f32 %v2113, %v2125
    %v2136 = vadd.f32 %v2134, %v2135
    %v2137 = vtanh.pop %v2136
    %v2138 = vmul.f32 %v2133, %v2137
    %s2139 = scalar_lea.vmem [#allocation4], 14
    %2140 = vst [vmem:[%s2139] sm:$0x3] %v2138
    %2141 = vst [vmem:[#allocation2] sm:$0x3] %v2138
    %2142 = vst [vmem:[#allocation3] sm:$0x3] %v2136
    // Predicated region
    $region22: #{movie_reviews_forward.8} parent=1 // pred_check
      %p2143 = pneg %p21
    $region23: #{movie_reviews_forward.8} parent=1 // pred_check_branch
      %2145 = sbr.rel (%p2143) target = $region25
    $region24: #{movie_reviews_forward.8} parent=1 // pred_region
      %2146 = vst [vmem:[%s5] sm:$0x3] %v2138
      %2147 = vst [vmem:[%s6] sm:$0x3] %v2136
    $region25: #{movie_reviews_forward.8} parent=1 // pred_fallthru
      _
    // Predicated region
    $region26: #{movie_reviews_forward.8} parent=1 // pred_check
      _
    $region27: #{movie_reviews_forward.8} parent=1 // pred_check_branch
      %2149 = sbr.rel (0) target = $region29
    $region28: #{movie_reviews_forward.8} parent=1 // pred_region
      %s2151 = ssub.s32 256, 256
      %2152 = vsyncadd [#allocation5], %s2151
      %s2153 = sshll.u32 [#allocation4], 4
      %s2154 = int_to_ptr.vmem [resolvable:$true] %s2153
      %2159 = dma.vmem_to_hbm [thread:$0]  %s2154, 256, %s4, [#allocation5], 32, 32, 2
    $region29: #{movie_reviews_forward.8} parent=1 // pred_fallthru
      _
    // Predicated region
    $region30: #{movie_reviews_forward.8} parent=1 // pred_check
      _
    $region31: #{movie_reviews_forward.8} parent=1 // pred_check_branch
      %2161 = sbr.rel (0) target = $region33
    $region32: #{movie_reviews_forward.8} parent=1 // pred_region
      _
    $region33: #{movie_reviews_forward.8} parent=1 // pred_fallthru
      _
    // Predicated region
    $region34: #{movie_reviews_forward.8} parent=1 // pred_check
      _
    $region35: #{movie_reviews_forward.8} parent=1 // pred_check_branch
      %2163 = sbr.rel (0) target = $region37
    $region36: #{movie_reviews_forward.8} parent=1 // pred_region
      _
    $region37: #{movie_reviews_forward.8} parent=1 // pred_fallthru
      _
    // Predicated region
    $region38: #{movie_reviews_forward.8} parent=1 // pred_check
      _
    $region39: #{movie_reviews_forward.8} parent=1 // pred_check_branch
      %2165 = sbr.rel (0) target = $region41
    $region40: #{movie_reviews_forward.8} parent=1 // pred_region
      %2166 = dma.done [#allocation5], 256
    $region41: #{movie_reviews_forward.8} parent=1 // pred_fallthru
      _
    // Predicated region
    $region42: #{movie_reviews_forward.8} parent=1 // pred_check
      _
    $region43: #{movie_reviews_forward.8} parent=1 // pred_check_branch
      %2168 = sbr.rel (0) target = $region45
    $region44: #{movie_reviews_forward.8} parent=1 // pred_region
      _
    $region45: #{movie_reviews_forward.8} parent=1 // pred_fallthru
      _
    // Predicated region
    $region46: #{movie_reviews_forward.8} parent=1 // pred_check
      _
    $region47: #{movie_reviews_forward.8} parent=1 // pred_check_branch
      %2170 = sbr.rel (0) target = $region49
    $region48: #{movie_reviews_forward.8} parent=1 // pred_region
      _
    $region49: #{movie_reviews_forward.8} parent=1 // pred_fallthru
      _
    %2171 = vsyncpa [#allocation5], 1

</llo_original>
